<compile_context>
chip_gen: v6e
topology: v6e:2x2x1
jax: 0.10.0
libtpu: 0.0.40
codegen_flags: <defaults>
</compile_context>

<pallas_src>
import jax
import jax.numpy as jnp
import numpy as np
from jax import lax
from jax.experimental import pallas as pl
from jax.experimental.pallas import tpu as pltpu


# --------------------------------------------------------------------------------------
# Wrapper-side data preparation (single padded+windowed copy, banded weights).
# The (ci, dy) im2col is folded into the weights at trace time; matmul operands are bf16.
# --------------------------------------------------------------------------------------
def _conv_windows(x, row_tile, row_win):
    """x: (N, C, H, W) -> bf16 windows (N, H//row_tile, 2, C*row_win, (W+2)//2).

    Window [n, c, p] holds rows [c*row_tile, c*row_tile + row_win) of the zero-padded
    (SAME) input, restricted to the even (p=0) / odd (p=1) padded columns, with the
    (channel, row) axes pre-flattened so the kernel uses it directly as a matmul RHS.
    """
    x = x.astype(jnp.bfloat16)                                 # bf16 MXU operand, half the DMA
    n, ch, H, W = x.shape
    n_chunks = H // row_tile
    pad_hi = (n_chunks - 1) * row_tile + row_win - (H + 1)     # == 1 (bottom SAME pad)
    xp = jnp.pad(x, ((0, 0), (0, 0), (1, pad_hi), (1, 1)))
    xeo = jnp.stack([xp[..., 0::2], xp[..., 1::2]], axis=1)    # (N, 2, C, rows, Wc)
    wins = jnp.stack(
        [xeo[:, :, :, c * row_tile:c * row_tile + row_win, :] for c in range(n_chunks)],
        axis=1)                                                # (N, nc, 2, C, row_win, Wc)
    return wins.reshape(n, n_chunks, 2, ch * row_win, (W + 2) // 2)


def _banded_weights(w, row_tile, row_win):
    """w: (cout, cin, 3, 3) OIHW -> bf16 (3, cout*row_tile, cin*row_win) banded matrices.

    Output row m = p*(cout*row_tile//2) + co*(row_tile//2) + r encodes chunk row y' = 2r+p;
    column k = ci*row_win + t encodes window row t of channel ci.  Entry = w[co, ci, t-y', dx]
    for 0 <= t-y' <= 2, else 0.  One (M,K)@(K,N) matmul per dx tap evaluates every 3x3 row tap
    of the chunk at once (the (ci,dy) "im2col" lives in the weights).
    """
    cout, cin = w.shape[0], w.shape[1]
    sel = np.zeros((row_tile, row_win, 3), np.float32)
    for yp in range(row_tile):
        for dy in range(3):
            sel[yp, yp + dy, dy] = 1.0
    wb = jnp.einsum('oidx,ytd->xoyit', w, jnp.asarray(sel))
    wb = wb.reshape(3, cout, row_tile // 2, 2, cin, row_win)
    wb = wb.transpose(0, 3, 1, 2, 4, 5)                        # (dx, p, co, r, ci, t)
    return wb.reshape(3, cout * row_tile, cin * row_win).astype(jnp.bfloat16)


def _bias_rows(b, row_tile):
    cout = b.shape[0]
    return jnp.broadcast_to(b[None, :, None],
                            (2, cout, row_tile // 2)).reshape(cout * row_tile, 1)


# --------------------------------------------------------------------------------------
# In-kernel fused conv3x3 + bias + ReLU + 2x2 maxpool for one row chunk
# --------------------------------------------------------------------------------------
def _conv_pool_block(xw_ref, wb_ref, bias_ref):
    """Returns (cout*row_tile//2, W//2) f32: rows ordered (co, pooled_row_in_chunk)."""
    xe = xw_ref[0, 0, 0]                      # (K, W/2 + 1)  even padded columns, bf16
    xo = xw_ref[0, 0, 1]                      # (K, W/2 + 1)  odd  padded columns, bf16
    w2 = xe.shape[1] - 1
    bias = bias_ref[...]                      # (M, 1) f32

    e0, e1 = xe[:, 0:w2], xe[:, 1:w2 + 1]
    o0, o1 = xo[:, 0:w2], xo[:, 1:w2 + 1]
    # even output cols x=2q   read padded cols (2q,   2q+1, 2q+2) -> taps (e0, o0, e1)
    # odd  output cols x=2q+1 read padded cols (2q+1, 2q+2, 2q+3) -> taps (o0, e1, o1)
    # Fuse both parities along lanes: 3 wider-N MXU pushes instead of 6.
    rhs0 = jnp.concatenate([e0, o0], axis=1)  # (K, 2*w2)
    rhs1 = jnp.concatenate([o0, e1], axis=1)
    rhs2 = jnp.concatenate([e1, o1], axis=1)

    def mm(a, b):
        return jnp.dot(a, b, preferred_element_type=jnp.float32)

    acc = mm(wb_ref[0], rhs0) + mm(wb_ref[1], rhs1) + mm(wb_ref[2], rhs2)   # (M, 2*w2) f32
    acc = jnp.maximum(acc + bias, 0.0)
    acc_e, acc_o = acc[:, :w2], acc[:, w2:]
    cmax = jnp.maximum(acc_e, acc_o)          # 2x1 column pool  -> (M, W/2)
    m = cmax.shape[0]
    return jnp.maximum(cmax[:m // 2], cmax[m // 2:])   # 1x2 row pool (parity halves)


def _conv_pool_kernel(xw_ref, wb_ref, bias_ref, o_ref):
    pooled = _conv_pool_block(xw_ref, wb_ref, bias_ref)       # (cout*tile/2, W/2) f32
    _, cout, th_half, w2 = o_ref.shape
    o_ref[0] = pooled.reshape(cout, th_half, w2).astype(o_ref.dtype)   # aligned split -> free


def _conv_pool_fc_kernel(xw_ref, wb_ref, bias_ref, wfc_ref, bfc_ref, o_ref, acc_ref):
    pooled = _conv_pool_block(xw_ref, wb_ref, bias_ref)       # (rows_half, W/2) f32
    c = pl.program_id(1)

    @pl.when(c == 0)
    def _():
        acc_ref[...] = jnp.zeros_like(acc_ref)
        o_ref[...] = jnp.zeros_like(o_ref)

    # Element-wise partial product only; the expensive cross-lane/sublane reduction is done
    # once, at the last chunk (keeps the XLU slot clear on every other step).
    acc_ref[...] += pooled * wfc_ref[0]

    @pl.when(c == pl.num_programs(1) - 1)
    def _():
        o_ref[...] += jnp.maximum(jnp.sum(acc_ref[...]) + bfc_ref[0, 0], 0.0)


# --------------------------------------------------------------------------------------
# pallas_call wrappers
# --------------------------------------------------------------------------------------
def conv3x3_relu_maxpool(x, w, b, row_tile=32):
    """x: (N, Cin, H, W), w: (Cout, Cin, 3, 3), b: (Cout,) -> bf16 (N, Cout, H//2, W//2)."""
    n, cin, H, W = x.shape
    cout = w.shape[0]
    assert H % row_tile == 0 and row_tile % 2 == 0 and W % 2 == 0
    row_win = row_tile + 2                      # no per-channel K rounding (full-K blocks)
    n_chunks = H // row_tile
    K = cin * row_win
    wc = (W + 2) // 2
    w2 = W // 2
    M = cout * row_tile

    wins = _conv_windows(x, row_tile, row_win)
    wb = _banded_weights(w, row_tile, row_win)
    bias = _bias_rows(b, row_tile)

    return pl.pallas_call(
        _conv_pool_kernel,
        out_shape=jax.ShapeDtypeStruct((n, cout, H // 2, w2), jnp.bfloat16),
        grid=(n, n_chunks),
        in_specs=[
            pl.BlockSpec((1, 1, 2, K, wc), lambda i, c: (i, c, 0, 0, 0)),
            pl.BlockSpec((3, M, K), lambda i, c: (0, 0, 0)),
            pl.BlockSpec((M, 1), lambda i, c: (0, 0)),
        ],
        out_specs=pl.BlockSpec((1, cout, row_tile // 2, w2),
                               lambda i, c: (i, 0, c, 0)),
        compiler_params=pltpu.CompilerParams(
            dimension_semantics=("parallel", "parallel"),
            vmem_limit_bytes=32 * 1024 * 1024),
    )(wins, wb, bias)


def conv3x3_relu_maxpool_fc(x, w, b, w_fc, b_fc, row_tile=16):
    """Second conv block with the fc (+ReLU) fused into its epilogue.  Returns (N, 1) f32."""
    n, cin, H, W = x.shape
    cout = w.shape[0]
    assert H % row_tile == 0 and row_tile % 2 == 0 and W % 2 == 0
    row_win = row_tile + 2
    n_chunks = H // row_tile
    K = cin * row_win
    wc = (W + 2) // 2
    w2 = W // 2
    M = cout * row_tile
    rows_half = cout * (row_tile // 2)
    assert w_fc.shape[0] == cout * (H // 2) * w2

    wins = _conv_windows(x, row_tile, row_win)
    wb = _banded_weights(w, row_tile, row_win)
    bias = _bias_rows(b, row_tile)
    # w_fc in torch's NCHW flatten order -> per-chunk blocks matching the pooled layout
    # (kept f32: it feeds the VPU product, not the MXU).
    wfc_blk = (w_fc.reshape(cout, n_chunks, row_tile // 2, w2)
               .transpose(1, 0, 2, 3).reshape(n_chunks, rows_half, w2))
    bfc = b_fc.reshape(1, 1)

    # NOTE: the fc accumulation (acc_ref scratch + revisited o_ref block) requires the chunk
    # axis to be the innermost (fastest-varying) grid axis; grid must stay (n, n_chunks).
    out = pl.pallas_call(
        _conv_pool_fc_kernel,
        out_shape=jax.ShapeDtypeStruct((n, 1, 128), jnp.float32),
        grid=(n, n_chunks),
        in_specs=[
            pl.BlockSpec((1, 1, 2, K, wc), lambda i, c: (i, c, 0, 0, 0)),
            pl.BlockSpec((3, M, K), lambda i, c: (0, 0, 0)),
            pl.BlockSpec((M, 1), lambda i, c: (0, 0)),
            pl.BlockSpec((1, rows_half, w2), lambda i, c: (c, 0, 0)),
            pl.BlockSpec((1, 1), lambda i, c: (0, 0)),
        ],
        out_specs=pl.BlockSpec((1, 1, 128), lambda i, c: (i, 0, 0)),
        scratch_shapes=[pltpu.VMEM((rows_half, w2), jnp.float32)],
        compiler_params=pltpu.CompilerParams(
            dimension_semantics=("parallel", "arbitrary"),
            vmem_limit_bytes=32 * 1024 * 1024),
    )(wins, wb, bias, wfc_blk, bfc)
    return out[:, 0, :1]


# --------------------------------------------------------------------------------------
# Full forward pass (PyTorch BaselineCNN semantics; input is NCHW like torch)
# --------------------------------------------------------------------------------------
def baseline_cnn_forward(x_nchw, params):
    x = x_nchw.astype(jnp.float32)
    # h1 goes through HBM in bf16 (half the inter-layer traffic); conv2's matmuls want bf16 anyway.
    h1 = conv3x3_relu_maxpool(x, params["w1"], params["b1"], row_tile=32)   # (N,16,128,128) bf16
    return conv3x3_relu_maxpool_fc(h1, params["w2"], params["b2"],
                                   params["w_fc"], params["b_fc"],
                                   row_tile=16)                              # (N, 1) f32


# --------------------------------------------------------------------------------------
# Pure-JAX reference for verification (f32, HIGHEST precision)
# --------------------------------------------------------------------------------------
def reference_forward(x_nchw, params):
    x = x_nchw.astype(jnp.float32)

    def conv_block(h, w, b):
        y = lax.conv_general_dilated(
            h, w, window_strides=(1, 1), padding="SAME",
            dimension_numbers=("NCHW", "OIHW", "NCHW"),
            precision=lax.Precision.HIGHEST)
        y = jnp.maximum(y + b[None, :, None, None], 0.0)
        return lax.reduce_window(y, -jnp.inf, lax.max,
                                 (1, 1, 2, 2), (1, 1, 2, 2), "VALID")

    h1 = conv_block(x, params["w1"], params["b1"])
    h2 = conv_block(h1, params["w2"], params["b2"])
    feat = h2.reshape(h2.shape[0], -1)                       # torch NCHW flatten
    out = jnp.dot(feat, params["w_fc"].reshape(-1, 1),
                  precision=lax.Precision.HIGHEST) + params["b_fc"].reshape(1, 1)
    return jnp.maximum(out, 0.0)


if __name__ == "__main__":
    key = jax.random.PRNGKey(0)
    ks = jax.random.split(key, 7)
    # deterministic synthetic parameters, shapes from BaselineCNN.__init__ (OIHW like torch)
    params = {
        "w1": jax.random.normal(ks[0], (16, 3, 3, 3), jnp.float32) * 0.1,
        "b1": jax.random.normal(ks[1], (16,), jnp.float32) * 0.1,
        "w2": jax.random.normal(ks[2], (32, 16, 3, 3), jnp.float32) * 0.05,
        "b2": jax.random.normal(ks[3], (32,), jnp.float32) * 0.05,
        "w_fc": jax.random.normal(ks[4], (32 * 64 * 64,), jnp.float32) * 1e-3,
        "b_fc": jax.random.normal(ks[5], (1,), jnp.float32) * 0.1,
    }
    # fc expects 32*64*64 features after two 2x pools -> spatial must be 256x256
    x = jax.random.normal(ks[6], (2, 3, 256, 256), jnp.float32)

    out = jax.block_until_ready(jax.jit(baseline_cnn_forward)(x, params))
    ref = jax.block_until_ready(jax.jit(reference_forward)(x, params))

    assert out.shape == (2, 1) and out.dtype == jnp.float32
    # bf16 matmul operands + bf16 h1 through HBM -> relaxed vs the f32 reference.
    if not jnp.allclose(out, ref, rtol=2e-2, atol=2e-2):
        raise AssertionError(f"mismatch: pallas={out.ravel()} ref={ref.ravel()}")
    print("KERNEL_OK")
</pallas_src>

<mosaic_0001>
module attributes {stable_mosaic.version = 11 : i64} {
  func.func @_conv_pool_kernel(%arg0: i32, %arg1: i32, %arg2: memref<1x1x2x102x129xbf16, #tpu.memory_space<vmem>>, %arg3: memref<3x512x102xbf16, #tpu.memory_space<vmem>>, %arg4: memref<512x1xf32, #tpu.memory_space<vmem>>, %arg5: memref<1x16x16x128xbf16, #tpu.memory_space<vmem>>) attributes {dimension_semantics = [#tpu.dimension_semantics<parallel>, #tpu.dimension_semantics<parallel>], iteration_bounds = array<i64: 2, 8>, scalar_prefetch = 0 : i64, scratch_operands = 0 : i64, tpu.core_type = #tpu.core_type<tc>, window_params = [{transform_indices = @transform_0, window_bounds = array<i64: 1, 1, 2, 102, 129>}, {pipeline_mode = #tpu.pipeline_mode<synchronous>, transform_indices = @transform_1, window_bounds = array<i64: 3, 512, 102>}, {pipeline_mode = #tpu.pipeline_mode<synchronous>, transform_indices = @transform_2, window_bounds = array<i64: 512, 1>}, {transform_indices = @transform_3, window_bounds = array<i64: 1, 16, 16, 128>}]} {
    %c0 = arith.constant 0 : index
    %c0_0 = arith.constant 0 : index
    %c0_1 = arith.constant 0 : index
    %c0_2 = arith.constant 0 : index
    %c0_3 = arith.constant 0 : index
    %0 = vector.load %arg2[%c0, %c0_0, %c0_1, %c0_2, %c0_3] : memref<1x1x2x102x129xbf16, #tpu.memory_space<vmem>>, vector<1x1x1x102x129xbf16>
    %1 = vector.shape_cast %0 : vector<1x1x1x102x129xbf16> to vector<102x129xbf16>
    %c0_4 = arith.constant 0 : index
    %c0_5 = arith.constant 0 : index
    %c1 = arith.constant 1 : index
    %c0_6 = arith.constant 0 : index
    %c0_7 = arith.constant 0 : index
    %2 = vector.load %arg2[%c0_4, %c0_5, %c1, %c0_6, %c0_7] : memref<1x1x2x102x129xbf16, #tpu.memory_space<vmem>>, vector<1x1x1x102x129xbf16>
    %3 = vector.shape_cast %2 : vector<1x1x1x102x129xbf16> to vector<102x129xbf16>
    %c0_8 = arith.constant 0 : index
    %c0_9 = arith.constant 0 : index
    %4 = vector.load %arg4[%c0_8, %c0_9] : memref<512x1xf32, #tpu.memory_space<vmem>>, vector<512x1xf32>
    %5 = vector.extract_strided_slice %1 {offsets = [0, 0], sizes = [102, 128], strides = [1, 1]} : vector<102x129xbf16> to vector<102x128xbf16>
    %6 = vector.extract_strided_slice %1 {offsets = [0, 1], sizes = [102, 128], strides = [1, 1]} : vector<102x129xbf16> to vector<102x128xbf16>
    %7 = vector.extract_strided_slice %3 {offsets = [0, 0], sizes = [102, 128], strides = [1, 1]} : vector<102x129xbf16> to vector<102x128xbf16>
    %8 = vector.extract_strided_slice %3 {offsets = [0, 1], sizes = [102, 128], strides = [1, 1]} : vector<102x129xbf16> to vector<102x128xbf16>
    %9 = tpu.concatenate %5, %7 in 1 : vector<102x128xbf16>, vector<102x128xbf16> -> vector<102x256xbf16>
    %10 = tpu.concatenate %7, %6 in 1 : vector<102x128xbf16>, vector<102x128xbf16> -> vector<102x256xbf16>
    %11 = tpu.concatenate %6, %8 in 1 : vector<102x128xbf16>, vector<102x128xbf16> -> vector<102x256xbf16>
    %c0_10 = arith.constant 0 : index
    %c0_11 = arith.constant 0 : index
    %c0_12 = arith.constant 0 : index
    %12 = vector.load %arg3[%c0_10, %c0_11, %c0_12] : memref<3x512x102xbf16, #tpu.memory_space<vmem>>, vector<1x512x102xbf16>
    %13 = vector.shape_cast %12 : vector<1x512x102xbf16> to vector<512x102xbf16>
    %cst = arith.constant dense<0.000000e+00> : vector<512x256xf32>
    %14 = tpu.matmul %13, %9, %cst {dimension_numbers = #tpu.dot_dimension_numbers<[1], [0], [0], [1], [0, 0, 1, 1], [], []>} : vector<512x102xbf16>, vector<102x256xbf16>, vector<512x256xf32> -> vector<512x256xf32>
    %c1_13 = arith.constant 1 : index
    %c0_14 = arith.constant 0 : index
    %c0_15 = arith.constant 0 : index
    %15 = vector.load %arg3[%c1_13, %c0_14, %c0_15] : memref<3x512x102xbf16, #tpu.memory_space<vmem>>, vector<1x512x102xbf16>
    %16 = vector.shape_cast %15 : vector<1x512x102xbf16> to vector<512x102xbf16>
    %cst_16 = arith.constant dense<0.000000e+00> : vector<512x256xf32>
    %17 = tpu.matmul %16, %10, %cst_16 {dimension_numbers = #tpu.dot_dimension_numbers<[1], [0], [0], [1], [0, 0, 1, 1], [], []>} : vector<512x102xbf16>, vector<102x256xbf16>, vector<512x256xf32> -> vector<512x256xf32>
    %18 = arith.addf %14, %17 : vector<512x256xf32>
    %c2 = arith.constant 2 : index
    %c0_17 = arith.constant 0 : index
    %c0_18 = arith.constant 0 : index
    %19 = vector.load %arg3[%c2, %c0_17, %c0_18] : memref<3x512x102xbf16, #tpu.memory_space<vmem>>, vector<1x512x102xbf16>
    %20 = vector.shape_cast %19 : vector<1x512x102xbf16> to vector<512x102xbf16>
    %cst_19 = arith.constant dense<0.000000e+00> : vector<512x256xf32>
    %21 = tpu.matmul %20, %11, %cst_19 {dimension_numbers = #tpu.dot_dimension_numbers<[1], [0], [0], [1], [0, 0, 1, 1], [], []>} : vector<512x102xbf16>, vector<102x256xbf16>, vector<512x256xf32> -> vector<512x256xf32>
    %22 = arith.addf %18, %21 : vector<512x256xf32>
    %23 = vector.broadcast %4 : vector<512x1xf32> to vector<512x256xf32>
    %24 = arith.addf %22, %23 : vector<512x256xf32>
    %cst_20 = arith.constant 0.000000e+00 : f32
    %25 = vector.broadcast %cst_20 : f32 to vector<512x256xf32>
    %26 = arith.maximumf %24, %25 : vector<512x256xf32>
    %27 = vector.extract_strided_slice %26 {offsets = [0, 0], sizes = [512, 128], strides = [1, 1]} : vector<512x256xf32> to vector<512x128xf32>
    %28 = vector.extract_strided_slice %26 {offsets = [0, 128], sizes = [512, 128], strides = [1, 1]} : vector<512x256xf32> to vector<512x128xf32>
    %29 = arith.maximumf %27, %28 : vector<512x128xf32>
    %30 = vector.extract_strided_slice %29 {offsets = [0, 0], sizes = [256, 128], strides = [1, 1]} : vector<512x128xf32> to vector<256x128xf32>
    %31 = vector.extract_strided_slice %29 {offsets = [256, 0], sizes = [256, 128], strides = [1, 1]} : vector<512x128xf32> to vector<256x128xf32>
    %32 = arith.maximumf %30, %31 : vector<256x128xf32>
    %33 = vector.shape_cast %32 : vector<256x128xf32> to vector<16x16x128xf32>
    %34 = arith.truncf %33 : vector<16x16x128xf32> to vector<16x16x128xbf16>
    %c0_21 = arith.constant 0 : index
    %c0_22 = arith.constant 0 : index
    %c0_23 = arith.constant 0 : index
    %c0_24 = arith.constant 0 : index
    %35 = vector.load %arg5[%c0_21, %c0_22, %c0_23, %c0_24] : memref<1x16x16x128xbf16, #tpu.memory_space<vmem>>, vector<1x16x16x128xbf16>
    %36 = vector.shape_cast %35 : vector<1x16x16x128xbf16> to vector<16x16x128xbf16>
    %37 = vector.shape_cast %34 : vector<16x16x128xbf16> to vector<1x16x16x128xbf16>
    tpu.vector_store %arg5[%c0_21, %c0_22, %c0_23, %c0_24], %37 {strides = array<i32>} : memref<1x16x16x128xbf16, #tpu.memory_space<vmem>>, vector<1x16x16x128xbf16>,
    return
  }
  func.func @transform_0(%arg0: i32, %arg1: i32) -> (i32, i32, i32, i32, i32) {
    %c0_i32 = arith.constant 0 : i32
    %c0_i32_0 = arith.constant 0 : i32
    %c0_i32_1 = arith.constant 0 : i32
    %c0_i32_2 = arith.constant 0 : i32
    return %arg0, %arg1, %c0_i32, %c0_i32_0, %c0_i32_1 : i32, i32, i32, i32, i32
  }
  func.func @transform_1(%arg0: i32, %arg1: i32) -> (i32, i32, i32) {
    %c0_i32 = arith.constant 0 : i32
    %c0_i32_0 = arith.constant 0 : i32
    %c0_i32_1 = arith.constant 0 : i32
    %c0_i32_2 = arith.constant 0 : i32
    return %c0_i32, %c0_i32_0, %c0_i32_1 : i32, i32, i32
  }
  func.func @transform_2(%arg0: i32, %arg1: i32) -> (i32, i32) {
    %c0_i32 = arith.constant 0 : i32
    %c0_i32_0 = arith.constant 0 : i32
    %c0_i32_1 = arith.constant 0 : i32
    return %c0_i32, %c0_i32_0 : i32, i32
  }
  func.func @transform_3(%arg0: i32, %arg1: i32) -> (i32, i32, i32, i32) {
    %c0_i32 = arith.constant 0 : i32
    %c0_i32_0 = arith.constant 0 : i32
    %c0_i32_1 = arith.constant 0 : i32
    return %arg0, %c0_i32, %arg1, %c0_i32_0 : i32, i32, i32, i32
  }
}

module attributes {stable_mosaic.version = 11 : i64} {
  func.func @_conv_pool_fc_kernel(%arg0: i32, %arg1: i32, %arg2: memref<1x1x2x288x65xbf16, #tpu.memory_space<vmem>>, %arg3: memref<3x512x288xbf16, #tpu.memory_space<vmem>>, %arg4: memref<512x1xf32, #tpu.memory_space<vmem>>, %arg5: memref<1x256x64xf32, #tpu.memory_space<vmem>>, %arg6: memref<1x1xf32, #tpu.memory_space<vmem>>, %arg7: memref<1x1x128xf32, #tpu.memory_space<vmem>>, %arg8: memref<256x64xf32, #tpu.memory_space<vmem>>) attributes {dimension_semantics = [#tpu.dimension_semantics<parallel>, #tpu.dimension_semantics<arbitrary>], iteration_bounds = array<i64: 2, 8>, scalar_prefetch = 0 : i64, scratch_operands = 1 : i64, tpu.core_type = #tpu.core_type<tc>, window_params = [{transform_indices = @transform_0, window_bounds = array<i64: 1, 1, 2, 288, 65>}, {pipeline_mode = #tpu.pipeline_mode<synchronous>, transform_indices = @transform_1, window_bounds = array<i64: 3, 512, 288>}, {pipeline_mode = #tpu.pipeline_mode<synchronous>, transform_indices = @transform_2, window_bounds = array<i64: 512, 1>}, {transform_indices = @transform_3, window_bounds = array<i64: 1, 256, 64>}, {pipeline_mode = #tpu.pipeline_mode<synchronous>, transform_indices = @transform_4, window_bounds = array<i64: 1, 1>}, {transform_indices = @transform_5, window_bounds = array<i64: 1, 1, 128>}]} {
    %c0 = arith.constant 0 : index
    %c0_0 = arith.constant 0 : index
    %c0_1 = arith.constant 0 : index
    %c0_2 = arith.constant 0 : index
    %c0_3 = arith.constant 0 : index
    %0 = vector.load %arg2[%c0, %c0_0, %c0_1, %c0_2, %c0_3] : memref<1x1x2x288x65xbf16, #tpu.memory_space<vmem>>, vector<1x1x1x288x65xbf16>
    %1 = vector.shape_cast %0 : vector<1x1x1x288x65xbf16> to vector<288x65xbf16>
    %c0_4 = arith.constant 0 : index
    %c0_5 = arith.constant 0 : index
    %c1 = arith.constant 1 : index
    %c0_6 = arith.constant 0 : index
    %c0_7 = arith.constant 0 : index
    %2 = vector.load %arg2[%c0_4, %c0_5, %c1, %c0_6, %c0_7] : memref<1x1x2x288x65xbf16, #tpu.memory_space<vmem>>, vector<1x1x1x288x65xbf16>
    %3 = vector.shape_cast %2 : vector<1x1x1x288x65xbf16> to vector<288x65xbf16>
    %c0_8 = arith.constant 0 : index
    %c0_9 = arith.constant 0 : index
    %4 = vector.load %arg4[%c0_8, %c0_9] : memref<512x1xf32, #tpu.memory_space<vmem>>, vector<512x1xf32>
    %5 = vector.extract_strided_slice %1 {offsets = [0, 0], sizes = [288, 64], strides = [1, 1]} : vector<288x65xbf16> to vector<288x64xbf16>
    %6 = vector.extract_strided_slice %1 {offsets = [0, 1], sizes = [288, 64], strides = [1, 1]} : vector<288x65xbf16> to vector<288x64xbf16>
    %7 = vector.extract_strided_slice %3 {offsets = [0, 0], sizes = [288, 64], strides = [1, 1]} : vector<288x65xbf16> to vector<288x64xbf16>
    %8 = vector.extract_strided_slice %3 {offsets = [0, 1], sizes = [288, 64], strides = [1, 1]} : vector<288x65xbf16> to vector<288x64xbf16>
    %9 = tpu.concatenate %5, %7 in 1 : vector<288x64xbf16>, vector<288x64xbf16> -> vector<288x128xbf16>
    %10 = tpu.concatenate %7, %6 in 1 : vector<288x64xbf16>, vector<288x64xbf16> -> vector<288x128xbf16>
    %11 = tpu.concatenate %6, %8 in 1 : vector<288x64xbf16>, vector<288x64xbf16> -> vector<288x128xbf16>
    %c0_10 = arith.constant 0 : index
    %c0_11 = arith.constant 0 : index
    %c0_12 = arith.constant 0 : index
    %12 = vector.load %arg3[%c0_10, %c0_11, %c0_12] : memref<3x512x288xbf16, #tpu.memory_space<vmem>>, vector<1x512x288xbf16>
    %13 = vector.shape_cast %12 : vector<1x512x288xbf16> to vector<512x288xbf16>
    %cst = arith.constant dense<0.000000e+00> : vector<512x128xf32>
    %14 = tpu.matmul %13, %9, %cst {dimension_numbers = #tpu.dot_dimension_numbers<[1], [0], [0], [1], [0, 0, 1, 1], [], []>} : vector<512x288xbf16>, vector<288x128xbf16>, vector<512x128xf32> -> vector<512x128xf32>
    %c1_13 = arith.constant 1 : index
    %c0_14 = arith.constant 0 : index
    %c0_15 = arith.constant 0 : index
    %15 = vector.load %arg3[%c1_13, %c0_14, %c0_15] : memref<3x512x288xbf16, #tpu.memory_space<vmem>>, vector<1x512x288xbf16>
    %16 = vector.shape_cast %15 : vector<1x512x288xbf16> to vector<512x288xbf16>
    %cst_16 = arith.constant dense<0.000000e+00> : vector<512x128xf32>
    %17 = tpu.matmul %16, %10, %cst_16 {dimension_numbers = #tpu.dot_dimension_numbers<[1], [0], [0], [1], [0, 0, 1, 1], [], []>} : vector<512x288xbf16>, vector<288x128xbf16>, vector<512x128xf32> -> vector<512x128xf32>
    %18 = arith.addf %14, %17 : vector<512x128xf32>
    %c2 = arith.constant 2 : index
    %c0_17 = arith.constant 0 : index
    %c0_18 = arith.constant 0 : index
    %19 = vector.load %arg3[%c2, %c0_17, %c0_18] : memref<3x512x288xbf16, #tpu.memory_space<vmem>>, vector<1x512x288xbf16>
    %20 = vector.shape_cast %19 : vector<1x512x288xbf16> to vector<512x288xbf16>
    %cst_19 = arith.constant dense<0.000000e+00> : vector<512x128xf32>
    %21 = tpu.matmul %20, %11, %cst_19 {dimension_numbers = #tpu.dot_dimension_numbers<[1], [0], [0], [1], [0, 0, 1, 1], [], []>} : vector<512x288xbf16>, vector<288x128xbf16>, vector<512x128xf32> -> vector<512x128xf32>
    %22 = arith.addf %18, %21 : vector<512x128xf32>
    %23 = vector.broadcast %4 : vector<512x1xf32> to vector<512x128xf32>
    %24 = arith.addf %22, %23 : vector<512x128xf32>
    %cst_20 = arith.constant 0.000000e+00 : f32
    %25 = vector.broadcast %cst_20 : f32 to vector<512x128xf32>
    %26 = arith.maximumf %24, %25 : vector<512x128xf32>
    %27 = vector.extract_strided_slice %26 {offsets = [0, 0], sizes = [512, 64], strides = [1, 1]} : vector<512x128xf32> to vector<512x64xf32>
    %28 = vector.extract_strided_slice %26 {offsets = [0, 64], sizes = [512, 64], strides = [1, 1]} : vector<512x128xf32> to vector<512x64xf32>
    %29 = arith.maximumf %27, %28 : vector<512x64xf32>
    %30 = vector.extract_strided_slice %29 {offsets = [0, 0], sizes = [256, 64], strides = [1, 1]} : vector<512x64xf32> to vector<256x64xf32>
    %31 = vector.extract_strided_slice %29 {offsets = [256, 0], sizes = [256, 64], strides = [1, 1]} : vector<512x64xf32> to vector<256x64xf32>
    %32 = arith.maximumf %30, %31 : vector<256x64xf32>
    %c0_i32 = arith.constant 0 : i32
    %33 = arith.cmpi eq, %arg1, %c0_i32 : i32
    %34 = arith.extui %33 : i1 to i32
    %c0_i32_21 = arith.constant 0 : i32
    %35 = arith.cmpi ne, %34, %c0_i32_21 : i32
    scf.if %35 {
      %cst_30 = arith.constant 0.000000e+00 : f32
      %45 = vector.broadcast %cst_30 : f32 to vector<256x64xf32>
      %c0_31 = arith.constant 0 : index
      %c0_32 = arith.constant 0 : index
      %46 = vector.load %arg8[%c0_31, %c0_32] : memref<256x64xf32, #tpu.memory_space<vmem>>, vector<256x64xf32>
      tpu.vector_store %arg8[%c0_31, %c0_32], %45 {strides = array<i32>} : memref<256x64xf32, #tpu.memory_space<vmem>>, vector<256x64xf32>,
      %cst_33 = arith.constant 0.000000e+00 : f32
      %47 = vector.broadcast %cst_33 : f32 to vector<1x1x128xf32>
      %c0_34 = arith.constant 0 : index
      %c0_35 = arith.constant 0 : index
      %c0_36 = arith.constant 0 : index
      %48 = vector.load %arg7[%c0_34, %c0_35, %c0_36] : memref<1x1x128xf32, #tpu.memory_space<vmem>>, vector<1x1x128xf32>
      tpu.vector_store %arg7[%c0_34, %c0_35, %c0_36], %47 {strides = array<i32>} : memref<1x1x128xf32, #tpu.memory_space<vmem>>, vector<1x1x128xf32>,
    } else {
    }
    %c0_22 = arith.constant 0 : index
    %c0_23 = arith.constant 0 : index
    %36 = vector.load %arg8[%c0_22, %c0_23] : memref<256x64xf32, #tpu.memory_space<vmem>>, vector<256x64xf32>
    %c0_24 = arith.constant 0 : index
    %c0_25 = arith.constant 0 : index
    %c0_26 = arith.constant 0 : index
    %37 = vector.load %arg5[%c0_24, %c0_25, %c0_26] : memref<1x256x64xf32, #tpu.memory_space<vmem>>, vector<1x256x64xf32>
    %38 = vector.shape_cast %37 : vector<1x256x64xf32> to vector<256x64xf32>
    %39 = arith.mulf %32, %38 : vector<256x64xf32>
    %40 = arith.addf %36, %39 : vector<256x64xf32>
    %c0_27 = arith.constant 0 : index
    %c0_28 = arith.constant 0 : index
    %41 = vector.load %arg8[%c0_27, %c0_28] : memref<256x64xf32, #tpu.memory_space<vmem>>, vector<256x64xf32>
    tpu.vector_store %arg8[%c0_27, %c0_28], %40 {strides = array<i32>} : memref<256x64xf32, #tpu.memory_space<vmem>>, vector<256x64xf32>,
    %c7_i32 = arith.constant 7 : i32
    %42 = arith.cmpi eq, %arg1, %c7_i32 : i32
    %43 = arith.extui %42 : i1 to i32
    %c0_i32_29 = arith.constant 0 : i32
    %44 = arith.cmpi ne, %43, %c0_i32_29 : i32
    scf.if %44 {
      %c0_30 = arith.constant 0 : index
      %c0_31 = arith.constant 0 : index
      %c0_32 = arith.constant 0 : index
      %45 = vector.load %arg7[%c0_30, %c0_31, %c0_32] : memref<1x1x128xf32, #tpu.memory_space<vmem>>, vector<1x1x128xf32>
      %c0_33 = arith.constant 0 : index
      %c0_34 = arith.constant 0 : index
      %46 = vector.load %arg8[%c0_33, %c0_34] : memref<256x64xf32, #tpu.memory_space<vmem>>, vector<256x64xf32>
      %47 = vector.shape_cast %46 : vector<256x64xf32> to vector<1x256x64xf32>
      %cst_35 = arith.constant dense<0.000000e+00> : vector<1xf32>
      %48 = vector.multi_reduction <add>, %47, %cst_35 [1, 2] : vector<1x256x64xf32> to vector<1xf32>
      %49 = vector.shape_cast %48 : vector<1xf32> to vector<1x1x1xf32>
      %50 = vector.extract %49[0, 0, 0] : f32 from vector<1x1x1xf32>
      %c0_36 = arith.constant 0 : index
      %c0_37 = arith.constant 0 : index
      %51 = vector.load %arg6[%c0_36, %c0_37] : memref<1x1xf32, #tpu.memory_space<vmem>>, vector<1x1xf32>
      %52 = vector.extract %51[0, 0] : f32 from vector<1x1xf32>
      %53 = arith.addf %50, %52 : f32
      %cst_38 = arith.constant 0.000000e+00 : f32
      %54 = arith.maximumf %53, %cst_38 : f32
      %55 = vector.broadcast %54 : f32 to vector<1x1x128xf32>
      %56 = arith.addf %45, %55 : vector<1x1x128xf32>
      %c0_39 = arith.constant 0 : index
      %c0_40 = arith.constant 0 : index
      %c0_41 = arith.constant 0 : index
      %57 = vector.load %arg7[%c0_39, %c0_40, %c0_41] : memref<1x1x128xf32, #tpu.memory_space<vmem>>, vector<1x1x128xf32>
      tpu.vector_store %arg7[%c0_39, %c0_40, %c0_41], %56 {strides = array<i32>} : memref<1x1x128xf32, #tpu.memory_space<vmem>>, vector<1x1x128xf32>,
    } else {
    }
    return
  }
  func.func @transform_0(%arg0: i32, %arg1: i32) -> (i32, i32, i32, i32, i32) {
    %c0_i32 = arith.constant 0 : i32
    %c0_i32_0 = arith.constant 0 : i32
    %c0_i32_1 = arith.constant 0 : i32
    %c0_i32_2 = arith.constant 0 : i32
    return %arg0, %arg1, %c0_i32, %c0_i32_0, %c0_i32_1 : i32, i32, i32, i32, i32
  }
  func.func @transform_1(%arg0: i32, %arg1: i32) -> (i32, i32, i32) {
    %c0_i32 = arith.constant 0 : i32
    %c0_i32_0 = arith.constant 0 : i32
    %c0_i32_1 = arith.constant 0 : i32
    %c0_i32_2 = arith.constant 0 : i32
    return %c0_i32, %c0_i32_0, %c0_i32_1 : i32, i32, i32
  }
  func.func @transform_2(%arg0: i32, %arg1: i32) -> (i32, i32) {
    %c0_i32 = arith.constant 0 : i32
    %c0_i32_0 = arith.constant 0 : i32
    %c0_i32_1 = arith.constant 0 : i32
    return %c0_i32, %c0_i32_0 : i32, i32
  }
  func.func @transform_3(%arg0: i32, %arg1: i32) -> (i32, i32, i32) {
    %c0_i32 = arith.constant 0 : i32
    %c0_i32_0 = arith.constant 0 : i32
    %c0_i32_1 = arith.constant 0 : i32
    return %arg1, %c0_i32, %c0_i32_0 : i32, i32, i32
  }
  func.func @transform_4(%arg0: i32, %arg1: i32) -> (i32, i32) {
    %c0_i32 = arith.constant 0 : i32
    %c0_i32_0 = arith.constant 0 : i32
    %c0_i32_1 = arith.constant 0 : i32
    return %c0_i32, %c0_i32_0 : i32, i32
  }
  func.func @transform_5(%arg0: i32, %arg1: i32) -> (i32, i32, i32) {
    %c0_i32 = arith.constant 0 : i32
    %c0_i32_0 = arith.constant 0 : i32
    %c0_i32_1 = arith.constant 0 : i32
    return %arg0, %c0_i32, %c0_i32_0 : i32, i32, i32
  }
}

</mosaic_0001>

<llo_original>
// kernel: baseline_cnn_forward.2
$region0: #{baseline_cnn_forward.2}
  #allocation0 [shape = 'u32[]', space=smem, size = 0x4, offset = 0x4, fixed_abs, tag = 'smem constant byte address 0x4 - core index']
  #allocation1 [shape = 'u32[144,128]{1,0:T(1,128)}', space=vmem, size = 0x12000, scoped, tag = 'internal scratch']
  %s0 = inlined_call_operand.vmem [shape: bf16[2,8,2,102,129], index: 0, kind: input, shape index: {}]
  %s1 = inlined_call_operand.vmem [shape: bf16[3,512,102], index: 1, kind: input, shape index: {}]
  %s2 = inlined_call_operand.vmem [shape: f32[512,1], index: 2, kind: input, shape index: {}]
  %s3 = inlined_call_operand.vmem [shape: bf16[2,16,128,128], index: 3, kind: output, shape index: {}]
  %s4 = sld [smem:[#allocation0]]
  $region82: #{baseline_cnn_forward.2} parent=0
    _
  %s6 = ssub.s32 1, %s4
  %s7 = scalar_select 0, %s6, %s4
  $region1: #{baseline_cnn_forward.2} parent=0
    #allocation2 [shape = 'u8[131072]{0}', space=vmem, size = 0x20000, scoped, tag = 'output window, operand 0']
    loop: start=0, step=1, limit=18
    $region2: #{baseline_cnn_forward.2} parent=1 // loop_pre_header
      _
    $region3: #{baseline_cnn_forward.2} parent=1 // loop_header
      %s9 = sphi 0, %s13
      %p10 = scmp.ge.s32.totalorder %s9, 18
      %s16 = sphi 0, %s28
      %s17 = sphi 0, %s24
      %s18 = sphi 0, %s16
      %s19 = sphi 0, %s17
      %s20 = sphi 0, %s18
      %s21 = sphi 0, %s19
      %s33 = sphi 0, %s35
      %s36 = sphi 0, %s33
      %s37 = sphi 0, %s36
      %s53 = sphi 0, %s37
      %s57 = sphi 0, %s57
      %s59 = sphi 0, %s57
      %s60 = sphi 0, %s59
      %s74 = sphi 0, %s60
      %s78 = sphi 0, %s78
      %s80 = sphi 0, %s78
      %s81 = sphi 0, %s80
      %s95 = sphi 0, %s81
      %s103 = sphi 0, %s105
      %s106 = sphi 0, %s103
      %s107 = sphi 0, %s106
      %s123 = sphi 0, %s107
    $region4: #{baseline_cnn_forward.2} parent=1 // loop_header_branch
      %12 = sbr.rel (%p10) target = $region8
    $region5: #{baseline_cnn_forward.2} parent=1 // loop_body
      %s14 = ssub.s32 %s9, 1
      %s15 = ssub.s32 %s9, 2
      %s22 = sadd.s32 1, %s17
      %p23 = scmp.ge.s32.totalorder %s22, 8
      %s24 = scalar_select %p23, 0, %s22
      %s25 = sadd.s32 1, %s16
      %s26 = scalar_select %p23, %s25, %s16
      %p27 = scmp.ge.s32.totalorder %s26, 2
      %s28 = scalar_select %p27, 0, %s26
      %s29 = ssub.s32 %s16, %s28
      %s30 = ssub.s32 %s17, %s24
      %s31 = sor.u32 %s29, %s30
      %p32 = scmp.eq.s32.totalorder %s31, 0
      %s34 = sadd.s32 %s33, 1
      %s35 = scalar_select %p32, %s33, %s34
      %p38 = pneg %p32
      %p39 = scmp.eq.s32.totalorder %s9, 15
      %p40 = por %p38, %p39
      %p41 = scmp.ne.s32.totalorder %s33, %s36
      %p42 = scmp.eq.s32.totalorder %s9, 0
      %p43 = por %p41, %p42
      %p44 = scmp.ne.s32.totalorder %s33, %s36
      %p45 = scmp.eq.s32.totalorder %s14, 15
      %p46 = por %p44, %p45
      %p47 = scmp.ne.s32.totalorder %s36, %s37
      %p48 = scmp.eq.s32.totalorder %s14, 0
      %p49 = por %p47, %p48
      %p50 = scmp.ne.s32.totalorder %s36, %s37
      %p51 = scmp.eq.s32.totalorder %s15, 15
      %p52 = por %p50, %p51
      %p54 = scmp.ne.s32.totalorder %s37, %s53
      %p55 = scmp.eq.s32.totalorder %s15, 0
      %p56 = por %p54, %p55
      %s58 = sadd.s32 %s57, 1
      %p61 = scmp.eq.s32.totalorder %s9, 15
      %p62 = scmp.ne.s32.totalorder %s57, %s59
      %p63 = scmp.eq.s32.totalorder %s9, 0
      %p64 = por %p62, %p63
      %p65 = scmp.ne.s32.totalorder %s57, %s59
      %p66 = scmp.eq.s32.totalorder %s14, 15
      %p67 = por %p65, %p66
      %p68 = scmp.ne.s32.totalorder %s59, %s60
      %p69 = scmp.eq.s32.totalorder %s14, 0
      %p70 = por %p68, %p69
      %p71 = scmp.ne.s32.totalorder %s59, %s60
      %p72 = scmp.eq.s32.totalorder %s15, 15
      %p73 = por %p71, %p72
      %p75 = scmp.ne.s32.totalorder %s60, %s74
      %p76 = scmp.eq.s32.totalorder %s15, 0
      %p77 = por %p75, %p76
      %s79 = sadd.s32 %s78, 1
      %p82 = scmp.eq.s32.totalorder %s9, 15
      %p83 = scmp.ne.s32.totalorder %s78, %s80
      %p84 = scmp.eq.s32.totalorder %s9, 0
      %p85 = por %p83, %p84
      %p86 = scmp.ne.s32.totalorder %s78, %s80
      %p87 = scmp.eq.s32.totalorder %s14, 15
      %p88 = por %p86, %p87
      %p89 = scmp.ne.s32.totalorder %s80, %s81
      %p90 = scmp.eq.s32.totalorder %s14, 0
      %p91 = por %p89, %p90
      %p92 = scmp.ne.s32.totalorder %s80, %s81
      %p93 = scmp.eq.s32.totalorder %s15, 15
      %p94 = por %p92, %p93
      %p96 = scmp.ne.s32.totalorder %s81, %s95
      %p97 = scmp.eq.s32.totalorder %s15, 0
      %p98 = por %p96, %p97
      %s99 = ssub.s32 %s16, %s28
      %s100 = ssub.s32 %s17, %s24
      %s101 = sor.u32 %s99, %s100
      %p102 = scmp.eq.s32.totalorder %s101, 0
      %s104 = sadd.s32 %s103, 1
      %s105 = scalar_select %p102, %s103, %s104
      %p108 = pneg %p102
      %p109 = scmp.eq.s32.totalorder %s9, 15
      %p110 = por %p108, %p109
      %p111 = scmp.ne.s32.totalorder %s103, %s106
      %p112 = scmp.eq.s32.totalorder %s9, 0
      %p113 = por %p111, %p112
      %p114 = scmp.ne.s32.totalorder %s103, %s106
      %p115 = scmp.eq.s32.totalorder %s14, 15
      %p116 = por %p114, %p115
      %p117 = scmp.ne.s32.totalorder %s106, %s107
      %p118 = scmp.eq.s32.totalorder %s14, 0
      %p119 = por %p117, %p118
      %p120 = scmp.ne.s32.totalorder %s106, %s107
      %p121 = scmp.eq.s32.totalorder %s15, 15
      %p122 = por %p120, %p121
      %p124 = scmp.ne.s32.totalorder %s107, %s123
      %p125 = scmp.eq.s32.totalorder %s15, 0
      %p126 = por %p124, %p125
      %p127 = scmp.le.s32.totalorder 1, %s9
      %p128 = scmp.lt.s32.totalorder %s9, 17
      %p129 = pnand %p127, %p128
      %p130 = pneg %p129
      // Predicated region
      $region9: #{baseline_cnn_forward.2} parent=5 // pred_check
        _
      $region10: #{baseline_cnn_forward.2} parent=5 // pred_check_branch
        %132 = sbr.rel (%p129) target = $region12
      $region11: #{baseline_cnn_forward.2} parent=5 // pred_region
        %s133 = ssub.s32 %s9, 1
        // Predicated region
        $region13: #{baseline_cnn_forward.2} parent=11 // pred_check
          %p134 = pneg %p70
        $region14: #{baseline_cnn_forward.2} parent=11 // pred_check_branch
          %136 = sbr.rel (%p134) target = $region16
        $region15: #{baseline_cnn_forward.2} parent=11 // pred_region
          _
        $region16: #{baseline_cnn_forward.2} parent=11 // pred_fallthru
          _
        // Predicated region
        $region17: #{baseline_cnn_forward.2} parent=11 // pred_check
          %p137 = pneg %p91
        $region18: #{baseline_cnn_forward.2} parent=11 // pred_check_branch
          %139 = sbr.rel (%p137) target = $region20
        $region19: #{baseline_cnn_forward.2} parent=11 // pred_region
          _
        $region20: #{baseline_cnn_forward.2} parent=11 // pred_fallthru
          _
      $region12: #{baseline_cnn_forward.2} parent=5 // pred_fallthru
        _
      %p140 = scmp.lt.s32.totalorder %s9, 16
      // Predicated region
      $region21: #{baseline_cnn_forward.2} parent=5 // pred_check
        %p141 = pneg %p140
      $region22: #{baseline_cnn_forward.2} parent=5 // pred_check_branch
        %143 = sbr.rel (%p141) target = $region24
      $region23: #{baseline_cnn_forward.2} parent=5 // pred_region
        // Predicated region
        $region25: #{baseline_cnn_forward.2} parent=23 // pred_check
          %p144 = pneg %p43
        $region26: #{baseline_cnn_forward.2} parent=23 // pred_check_branch
          %146 = sbr.rel (%p144) target = $region28
        $region27: #{baseline_cnn_forward.2} parent=23 // pred_region
          %p147 = scmp.lt.s32.totalorder %s16, 1
          %s148 = scalar_select %p147, %s16, 1
          %p149 = scmp.lt.s32.totalorder %s17, 7
          %s150 = scalar_select %p149, %s17, 7
          %s151 = smul.addr %s150, 52
          %s152 = smul.addr %s148, 416
          %s153 = sadd.s32 %s151, %s152
          %s154 = smul.addr %s153, 4
          %s155 = scalar_lea.vmem %s0, %s154
        $region28: #{baseline_cnn_forward.2} parent=23 // pred_fallthru
          _
      $region24: #{baseline_cnn_forward.2} parent=5 // pred_fallthru
        _
      %p156 = scmp.le.s32.totalorder 1, %s9
      %p157 = scmp.lt.s32.totalorder %s9, 17
      %p158 = pnand %p156, %p157
      %p159 = pneg %p158
      // Predicated region
      $region29: #{baseline_cnn_forward.2} parent=5 // pred_check
        _
      $region30: #{baseline_cnn_forward.2} parent=5 // pred_check_branch
        %161 = sbr.rel (%p158) target = $region32
      $region31: #{baseline_cnn_forward.2} parent=5 // pred_region
        %s162 = ssub.s32 %s9, 1
        %p163 = scmp.lt.s32.totalorder %s18, 1
        %s164 = scalar_select %p163, %s18, 1
        %p165 = scmp.lt.s32.totalorder %s19, 7
        %s166 = scalar_select %p165, %s19, 7
        %s167 = smul.addr %s166, 52
        %s168 = smul.addr %s164, 416
        %s169 = sadd.s32 %s167, %s168
        %s170 = smul.addr %s169, 4
        %s171 = scalar_lea.vmem %s0, %s170
        %p172 = pneg %p49
        %p173 = pneg %p46
        %p174 = pneg %p70
        %p175 = pneg %p67
        %p176 = pneg %p91
        %p177 = pneg %p88
        %p178 = pneg %p119
        %p179 = pneg %p116
        %s180 = sand.u32 %s106, 1
        %s181 = sand.u32 %s106, 1
        %s182 = smul.addr %s181, 128
        %s183 = scalar_lea.vmem [#allocation2], %s182
        %p184 = scmp.lt.s32.totalorder %s18, 1
        %s185 = scalar_select %p184, %s18, 1
        %p186 = scmp.lt.s32.totalorder %s19, 7
        %s187 = scalar_select %p186, %s19, 7
        %s188 = smul.addr %s187, 52
        %s189 = smul.addr %s185, 416
        %s190 = sadd.s32 %s188, %s189
        %s191 = smul.addr %s190, 4
        %s192 = scalar_lea.vmem %s0, %s191
        %s193 = smul.u32 2, %s19
        %v195 = vld [vmem:[%s192] sm:$0xff]
        %v196 = vld [vmem:[%s192 + $0x8] sm:$0xff]
        %v197 = vld [vmem:[%s192 + $0x10] sm:$0xff]
        %v198 = vld [vmem:[%s192 + $0x18] sm:$0xff]
        %v199 = vld [vmem:[%s192 + $0x20] sm:$0xff]
        %v200 = vld [vmem:[%s192 + $0x28] sm:$0xff]
        %v201 = vld [vmem:[%s192 + $0x30] sm:$0xff]
        %v202 = vld [vmem:[%s192 + $0x38] sm:$0xff]
        %v203 = vld [vmem:[%s192 + $0x40] sm:$0xff]
        %v204 = vld [vmem:[%s192 + $0x48] sm:$0xff]
        %v205 = vld [vmem:[%s192 + $0x50] sm:$0xff]
        %v206 = vld [vmem:[%s192 + $0x58] sm:$0xff]
        %v207 = vld [vmem:[%s192 + $0x60] sm:$0x77]
        %s208 = scalar_lea.vmem %s192, 104
        %v209 = vld [vmem:[%s208] sm:$0xff]
        %v210 = vld [vmem:[%s208 + $0x8] sm:$0xff]
        %v211 = vld [vmem:[%s208 + $0x10] sm:$0xff]
        %v212 = vld [vmem:[%s208 + $0x18] sm:$0xff]
        %v213 = vld [vmem:[%s208 + $0x20] sm:$0xff]
        %v214 = vld [vmem:[%s208 + $0x28] sm:$0xff]
        %v215 = vld [vmem:[%s208 + $0x30] sm:$0xff]
        %v216 = vld [vmem:[%s208 + $0x38] sm:$0xff]
        %v217 = vld [vmem:[%s208 + $0x40] sm:$0xff]
        %v218 = vld [vmem:[%s208 + $0x48] sm:$0xff]
        %v219 = vld [vmem:[%s208 + $0x50] sm:$0xff]
        %v220 = vld [vmem:[%s208 + $0x58] sm:$0xff]
        %v221 = vld [vmem:[%s208 + $0x60] sm:$0x77]
        %v222 = vld [vmem:[%s2] sm:$0xff]
        %v223 = vld [vmem:[%s2 + $0x8] sm:$0xff]
        %v224 = vld [vmem:[%s2 + $0x10] sm:$0xff]
        %v225 = vld [vmem:[%s2 + $0x18] sm:$0xff]
        %v226 = vld [vmem:[%s2 + $0x20] sm:$0xff]
        %v227 = vld [vmem:[%s2 + $0x28] sm:$0xff]
        %v228 = vld [vmem:[%s2 + $0x30] sm:$0xff]
        %v229 = vld [vmem:[%s2 + $0x38] sm:$0xff]
        %v230 = vld [vmem:[%s2 + $0x40] sm:$0xff]
        %v231 = vld [vmem:[%s2 + $0x48] sm:$0xff]
        %v232 = vld [vmem:[%s2 + $0x50] sm:$0xff]
        %v233 = vld [vmem:[%s2 + $0x58] sm:$0xff]
        %v234 = vld [vmem:[%s2 + $0x60] sm:$0xff]
        %v235 = vld [vmem:[%s2 + $0x68] sm:$0xff]
        %v236 = vld [vmem:[%s2 + $0x70] sm:$0xff]
        %v237 = vld [vmem:[%s2 + $0x78] sm:$0xff]
        %v238 = vld [vmem:[%s2 + $0x80] sm:$0xff]
        %v239 = vld [vmem:[%s2 + $0x88] sm:$0xff]
        %v240 = vld [vmem:[%s2 + $0x90] sm:$0xff]
        %v241 = vld [vmem:[%s2 + $0x98] sm:$0xff]
        %v242 = vld [vmem:[%s2 + $0xa0] sm:$0xff]
        %v243 = vld [vmem:[%s2 + $0xa8] sm:$0xff]
        %v244 = vld [vmem:[%s2 + $0xb0] sm:$0xff]
        %v245 = vld [vmem:[%s2 + $0xb8] sm:$0xff]
        %v246 = vld [vmem:[%s2 + $0xc0] sm:$0xff]
        %v247 = vld [vmem:[%s2 + $0xc8] sm:$0xff]
        %v248 = vld [vmem:[%s2 + $0xd0] sm:$0xff]
        %v249 = vld [vmem:[%s2 + $0xd8] sm:$0xff]
        %v250 = vld [vmem:[%s2 + $0xe0] sm:$0xff]
        %v251 = vld [vmem:[%s2 + $0xe8] sm:$0xff]
        %v252 = vld [vmem:[%s2 + $0xf0] sm:$0xff]
        %v253 = vld [vmem:[%s2 + $0xf8] sm:$0xff]
        %v254 = vld [vmem:[%s2 + $0x100] sm:$0xff]
        %v255 = vld [vmem:[%s2 + $0x108] sm:$0xff]
        %v256 = vld [vmem:[%s2 + $0x110] sm:$0xff]
        %v257 = vld [vmem:[%s2 + $0x118] sm:$0xff]
        %v258 = vld [vmem:[%s2 + $0x120] sm:$0xff]
        %v259 = vld [vmem:[%s2 + $0x128] sm:$0xff]
        %v260 = vld [vmem:[%s2 + $0x130] sm:$0xff]
        %v261 = vld [vmem:[%s2 + $0x138] sm:$0xff]
        %v262 = vld [vmem:[%s2 + $0x140] sm:$0xff]
        %v263 = vld [vmem:[%s2 + $0x148] sm:$0xff]
        %v264 = vld [vmem:[%s2 + $0x150] sm:$0xff]
        %v265 = vld [vmem:[%s2 + $0x158] sm:$0xff]
        %v266 = vld [vmem:[%s2 + $0x160] sm:$0xff]
        %v267 = vld [vmem:[%s2 + $0x168] sm:$0xff]
        %v268 = vld [vmem:[%s2 + $0x170] sm:$0xff]
        %v269 = vld [vmem:[%s2 + $0x178] sm:$0xff]
        %v270 = vld [vmem:[%s2 + $0x180] sm:$0xff]
        %v271 = vld [vmem:[%s2 + $0x188] sm:$0xff]
        %v272 = vld [vmem:[%s2 + $0x190] sm:$0xff]
        %v273 = vld [vmem:[%s2 + $0x198] sm:$0xff]
        %v274 = vld [vmem:[%s2 + $0x1a0] sm:$0xff]
        %v275 = vld [vmem:[%s2 + $0x1a8] sm:$0xff]
        %v276 = vld [vmem:[%s2 + $0x1b0] sm:$0xff]
        %v277 = vld [vmem:[%s2 + $0x1b8] sm:$0xff]
        %v278 = vld [vmem:[%s2 + $0x1c0] sm:$0xff]
        %v279 = vld [vmem:[%s2 + $0x1c8] sm:$0xff]
        %v280 = vld [vmem:[%s2 + $0x1d0] sm:$0xff]
        %v281 = vld [vmem:[%s2 + $0x1d8] sm:$0xff]
        %v282 = vld [vmem:[%s2 + $0x1e0] sm:$0xff]
        %v283 = vld [vmem:[%s2 + $0x1e8] sm:$0xff]
        %v284 = vld [vmem:[%s2 + $0x1f0] sm:$0xff]
        %v285 = vld [vmem:[%s2 + $0x1f8] sm:$0xff]
        %v299 = vunpack.c.l.b16 %v195
        %v300 = vunpack.c.l.b16 %v196
        %v301 = vunpack.c.l.b16 %v197
        %v302 = vunpack.c.l.b16 %v198
        %v303 = vunpack.c.l.b16 %v199
        %v304 = vunpack.c.l.b16 %v200
        %v305 = vunpack.c.l.b16 %v201
        %v306 = vunpack.c.l.b16 %v202
        %v307 = vunpack.c.l.b16 %v203
        %v308 = vunpack.c.l.b16 %v204
        %v309 = vunpack.c.l.b16 %v205
        %v310 = vunpack.c.l.b16 %v206
        %v311 = vunpack.c.l.b16 %v207
        %v312 = vpack.c.b16 %v300, %v299
        %v313 = vpack.c.b16 %v302, %v301
        %v314 = vpack.c.b16 %v304, %v303
        %v315 = vpack.c.b16 %v306, %v305
        %v316 = vpack.c.b16 %v308, %v307
        %v317 = vpack.c.b16 %v310, %v309
        %v318 = vpack.c.b16 %v311, %v311
        %v338 = vunpack.c.l.b16 %v209
        %v339 = vunpack.c.l.b16 %v210
        %v340 = vunpack.c.l.b16 %v211
        %v341 = vunpack.c.l.b16 %v212
        %v342 = vunpack.c.l.b16 %v213
        %v343 = vunpack.c.l.b16 %v214
        %v344 = vunpack.c.l.b16 %v215
        %v345 = vunpack.c.l.b16 %v216
        %v346 = vunpack.c.l.b16 %v217
        %v347 = vunpack.c.l.b16 %v218
        %v348 = vunpack.c.l.b16 %v219
        %v349 = vunpack.c.l.b16 %v220
        %v350 = vunpack.c.l.b16 %v221
        %v351 = vpack.c.b16 %v339, %v338
        %v352 = vpack.c.b16 %v341, %v340
        %v353 = vpack.c.b16 %v343, %v342
        %v354 = vpack.c.b16 %v345, %v344
        %v355 = vpack.c.b16 %v347, %v346
        %v356 = vpack.c.b16 %v349, %v348
        %v357 = vpack.c.b16 %v350, %v350
        %v364 = vunpack.c.h.b16 %v195
        %v365 = vunpack.c.h.b16 %v196
        %v366 = vunpack.c.h.b16 %v197
        %v367 = vunpack.c.h.b16 %v198
        %v368 = vunpack.c.h.b16 %v199
        %v369 = vunpack.c.h.b16 %v200
        %v370 = vunpack.c.h.b16 %v201
        %v371 = vunpack.c.h.b16 %v202
        %v372 = vunpack.c.h.b16 %v203
        %v373 = vunpack.c.h.b16 %v204
        %v374 = vunpack.c.h.b16 %v205
        %v375 = vunpack.c.h.b16 %v206
        %v376 = vunpack.c.h.b16 %v207
        %v377 = vpack.c.b16 %v365, %v364
        %v378 = vpack.c.b16 %v367, %v366
        %v379 = vpack.c.b16 %v369, %v368
        %v380 = vpack.c.b16 %v371, %v370
        %v381 = vpack.c.b16 %v373, %v372
        %v382 = vpack.c.b16 %v375, %v374
        %v383 = vpack.c.b16 %v376, %v376
        %384 = vrot.lane.b32.xlu0 %v312, 127
        %v385 = vpop.permute.xlu0 %384
        %386 = vrot.lane.b32.xlu0 %v377, 127
        %v387 = vpop.permute.xlu0 %386
        %388 = vrot.lane.b32.xlu0 %v313, 127
        %v389 = vpop.permute.xlu0 %388
        %390 = vrot.lane.b32.xlu0 %v378, 127
        %v391 = vpop.permute.xlu0 %390
        %392 = vrot.lane.b32.xlu0 %v314, 127
        %v393 = vpop.permute.xlu0 %392
        %394 = vrot.lane.b32.xlu0 %v379, 127
        %v395 = vpop.permute.xlu0 %394
        %396 = vrot.lane.b32.xlu0 %v315, 127
        %v397 = vpop.permute.xlu0 %396
        %398 = vrot.lane.b32.xlu0 %v380, 127
        %v399 = vpop.permute.xlu0 %398
        %400 = vrot.lane.b32.xlu0 %v316, 127
        %v401 = vpop.permute.xlu0 %400
        %402 = vrot.lane.b32.xlu0 %v381, 127
        %v403 = vpop.permute.xlu0 %402
        %404 = vrot.lane.b32.xlu0 %v317, 127
        %v405 = vpop.permute.xlu0 %404
        %406 = vrot.lane.b32.xlu0 %v382, 127
        %v407 = vpop.permute.xlu0 %406
        %408 = vrot.lane.b32.xlu0 %v318, 127
        %v409 = vpop.permute.xlu0 %408
        %410 = vrot.lane.b32.xlu0 %v383, 127
        %v411 = vpop.permute.xlu0 %410
        %vm412 = vcmask 1039360
        %v413 = vsel %vm412, %v385, %v387
        %v414 = vsel %vm412, %v389, %v391
        %v415 = vsel %vm412, %v393, %v395
        %v416 = vsel %vm412, %v397, %v399
        %v417 = vsel %vm412, %v401, %v403
        %v418 = vsel %vm412, %v405, %v407
        %v419 = vsel %vm412, %v409, %v411
        %v426 = vunpack.c.h.b16 %v209
        %v427 = vunpack.c.h.b16 %v210
        %v428 = vunpack.c.h.b16 %v211
        %v429 = vunpack.c.h.b16 %v212
        %v430 = vunpack.c.h.b16 %v213
        %v431 = vunpack.c.h.b16 %v214
        %v432 = vunpack.c.h.b16 %v215
        %v433 = vunpack.c.h.b16 %v216
        %v434 = vunpack.c.h.b16 %v217
        %v435 = vunpack.c.h.b16 %v218
        %v436 = vunpack.c.h.b16 %v219
        %v437 = vunpack.c.h.b16 %v220
        %v438 = vunpack.c.h.b16 %v221
        %v439 = vpack.c.b16 %v427, %v426
        %v440 = vpack.c.b16 %v429, %v428
        %v441 = vpack.c.b16 %v431, %v430
        %v442 = vpack.c.b16 %v433, %v432
        %v443 = vpack.c.b16 %v435, %v434
        %v444 = vpack.c.b16 %v437, %v436
        %v445 = vpack.c.b16 %v438, %v438
        %446 = vrot.lane.b32.xlu0 %v351, 127
        %v447 = vpop.permute.xlu0 %446
        %448 = vrot.lane.b32.xlu0 %v439, 127
        %v449 = vpop.permute.xlu0 %448
        %450 = vrot.lane.b32.xlu0 %v352, 127
        %v451 = vpop.permute.xlu0 %450
        %452 = vrot.lane.b32.xlu0 %v440, 127
        %v453 = vpop.permute.xlu0 %452
        %454 = vrot.lane.b32.xlu0 %v353, 127
        %v455 = vpop.permute.xlu0 %454
        %456 = vrot.lane.b32.xlu0 %v441, 127
        %v457 = vpop.permute.xlu0 %456
        %458 = vrot.lane.b32.xlu0 %v354, 127
        %v459 = vpop.permute.xlu0 %458
        %460 = vrot.lane.b32.xlu0 %v442, 127
        %v461 = vpop.permute.xlu0 %460
        %462 = vrot.lane.b32.xlu0 %v355, 127
        %v463 = vpop.permute.xlu0 %462
        %464 = vrot.lane.b32.xlu0 %v443, 127
        %v465 = vpop.permute.xlu0 %464
        %466 = vrot.lane.b32.xlu0 %v356, 127
        %v467 = vpop.permute.xlu0 %466
        %468 = vrot.lane.b32.xlu0 %v444, 127
        %v469 = vpop.permute.xlu0 %468
        %470 = vrot.lane.b32.xlu0 %v357, 127
        %v471 = vpop.permute.xlu0 %470
        %472 = vrot.lane.b32.xlu0 %v445, 127
        %v473 = vpop.permute.xlu0 %472
        %v474 = vsel %vm412, %v447, %v449
        %v475 = vsel %vm412, %v451, %v453
        %v476 = vsel %vm412, %v455, %v457
        %v477 = vsel %vm412, %v459, %v461
        %v478 = vsel %vm412, %v463, %v465
        %v479 = vsel %vm412, %v467, %v469
        %v480 = vsel %vm412, %v471, %v473
        %v487 = vld [vmem:[%s1] sm:$0xf]
        %v488 = vld [vmem:[%s1 + $0x4] sm:$0xf]
        %v489 = vld [vmem:[%s1 + $0x8] sm:$0xf]
        %v490 = vld [vmem:[%s1 + $0xc] sm:$0xf]
        %v491 = vld [vmem:[%s1 + $0x10] sm:$0xf]
        %v492 = vld [vmem:[%s1 + $0x14] sm:$0xf]
        %v493 = vld [vmem:[%s1 + $0x18] sm:$0xf]
        %v494 = vld [vmem:[%s1 + $0x1c] sm:$0xf]
        %v495 = vld [vmem:[%s1 + $0x20] sm:$0xf]
        %v496 = vld [vmem:[%s1 + $0x24] sm:$0xf]
        %v497 = vld [vmem:[%s1 + $0x28] sm:$0xf]
        %v498 = vld [vmem:[%s1 + $0x2c] sm:$0xf]
        %v499 = vld [vmem:[%s1 + $0x30] sm:$0xf]
        %v500 = vld [vmem:[%s1 + $0x34] sm:$0xf]
        %v501 = vld [vmem:[%s1 + $0x38] sm:$0xf]
        %v502 = vld [vmem:[%s1 + $0x3c] sm:$0xf]
        %v503 = vld [vmem:[%s1 + $0x40] sm:$0xf]
        %v504 = vld [vmem:[%s1 + $0x44] sm:$0xf]
        %v505 = vld [vmem:[%s1 + $0x48] sm:$0xf]
        %v506 = vld [vmem:[%s1 + $0x4c] sm:$0xf]
        %v507 = vld [vmem:[%s1 + $0x50] sm:$0xf]
        %v508 = vld [vmem:[%s1 + $0x54] sm:$0xf]
        %v509 = vld [vmem:[%s1 + $0x58] sm:$0xf]
        %v510 = vld [vmem:[%s1 + $0x5c] sm:$0xf]
        %v511 = vld [vmem:[%s1 + $0x60] sm:$0xf]
        %v512 = vld [vmem:[%s1 + $0x64] sm:$0xf]
        %v513 = vld [vmem:[%s1 + $0x68] sm:$0xf]
        %v514 = vld [vmem:[%s1 + $0x6c] sm:$0xf]
        %v515 = vld [vmem:[%s1 + $0x70] sm:$0xf]
        %v516 = vld [vmem:[%s1 + $0x74] sm:$0xf]
        %v517 = vld [vmem:[%s1 + $0x78] sm:$0xf]
        %v518 = vld [vmem:[%s1 + $0x7c] sm:$0xf]
        %v519 = vld [vmem:[%s1 + $0x80] sm:$0xf]
        %v520 = vld [vmem:[%s1 + $0x84] sm:$0xf]
        %v521 = vld [vmem:[%s1 + $0x88] sm:$0xf]
        %v522 = vld [vmem:[%s1 + $0x8c] sm:$0xf]
        %v523 = vld [vmem:[%s1 + $0x90] sm:$0xf]
        %v524 = vld [vmem:[%s1 + $0x94] sm:$0xf]
        %v525 = vld [vmem:[%s1 + $0x98] sm:$0xf]
        %v526 = vld [vmem:[%s1 + $0x9c] sm:$0xf]
        %v527 = vld [vmem:[%s1 + $0xa0] sm:$0xf]
        %v528 = vld [vmem:[%s1 + $0xa4] sm:$0xf]
        %v529 = vld [vmem:[%s1 + $0xa8] sm:$0xf]
        %v530 = vld [vmem:[%s1 + $0xac] sm:$0xf]
        %v531 = vld [vmem:[%s1 + $0xb0] sm:$0xf]
        %v532 = vld [vmem:[%s1 + $0xb4] sm:$0xf]
        %v533 = vld [vmem:[%s1 + $0xb8] sm:$0xf]
        %v534 = vld [vmem:[%s1 + $0xbc] sm:$0xf]
        %v535 = vld [vmem:[%s1 + $0xc0] sm:$0xf]
        %v536 = vld [vmem:[%s1 + $0xc4] sm:$0xf]
        %v537 = vld [vmem:[%s1 + $0xc8] sm:$0xf]
        %v538 = vld [vmem:[%s1 + $0xcc] sm:$0xf]
        %v539 = vld [vmem:[%s1 + $0xd0] sm:$0xf]
        %v540 = vld [vmem:[%s1 + $0xd4] sm:$0xf]
        %v541 = vld [vmem:[%s1 + $0xd8] sm:$0xf]
        %v542 = vld [vmem:[%s1 + $0xdc] sm:$0xf]
        %v543 = vld [vmem:[%s1 + $0xe0] sm:$0xf]
        %v544 = vld [vmem:[%s1 + $0xe4] sm:$0xf]
        %v545 = vld [vmem:[%s1 + $0xe8] sm:$0xf]
        %v546 = vld [vmem:[%s1 + $0xec] sm:$0xf]
        %v547 = vld [vmem:[%s1 + $0xf0] sm:$0xf]
        %v548 = vld [vmem:[%s1 + $0xf4] sm:$0xf]
        %v549 = vld [vmem:[%s1 + $0xf8] sm:$0xf]
        %v550 = vld [vmem:[%s1 + $0xfc] sm:$0xf]
        %s551 = scalar_lea.vmem %s1, 256
        %v552 = vld [vmem:[%s551] sm:$0xf]
        %v553 = vld [vmem:[%s551 + $0x4] sm:$0xf]
        %v554 = vld [vmem:[%s551 + $0x8] sm:$0xf]
        %v555 = vld [vmem:[%s551 + $0xc] sm:$0xf]
        %v556 = vld [vmem:[%s551 + $0x10] sm:$0xf]
        %v557 = vld [vmem:[%s551 + $0x14] sm:$0xf]
        %v558 = vld [vmem:[%s551 + $0x18] sm:$0xf]
        %v559 = vld [vmem:[%s551 + $0x1c] sm:$0xf]
        %v560 = vld [vmem:[%s551 + $0x20] sm:$0xf]
        %v561 = vld [vmem:[%s551 + $0x24] sm:$0xf]
        %v562 = vld [vmem:[%s551 + $0x28] sm:$0xf]
        %v563 = vld [vmem:[%s551 + $0x2c] sm:$0xf]
        %v564 = vld [vmem:[%s551 + $0x30] sm:$0xf]
        %v565 = vld [vmem:[%s551 + $0x34] sm:$0xf]
        %v566 = vld [vmem:[%s551 + $0x38] sm:$0xf]
        %v567 = vld [vmem:[%s551 + $0x3c] sm:$0xf]
        %v568 = vld [vmem:[%s551 + $0x40] sm:$0xf]
        %v569 = vld [vmem:[%s551 + $0x44] sm:$0xf]
        %v570 = vld [vmem:[%s551 + $0x48] sm:$0xf]
        %v571 = vld [vmem:[%s551 + $0x4c] sm:$0xf]
        %v572 = vld [vmem:[%s551 + $0x50] sm:$0xf]
        %v573 = vld [vmem:[%s551 + $0x54] sm:$0xf]
        %v574 = vld [vmem:[%s551 + $0x58] sm:$0xf]
        %v575 = vld [vmem:[%s551 + $0x5c] sm:$0xf]
        %v576 = vld [vmem:[%s551 + $0x60] sm:$0xf]
        %v577 = vld [vmem:[%s551 + $0x64] sm:$0xf]
        %v578 = vld [vmem:[%s551 + $0x68] sm:$0xf]
        %v579 = vld [vmem:[%s551 + $0x6c] sm:$0xf]
        %v580 = vld [vmem:[%s551 + $0x70] sm:$0xf]
        %v581 = vld [vmem:[%s551 + $0x74] sm:$0xf]
        %v582 = vld [vmem:[%s551 + $0x78] sm:$0xf]
        %v583 = vld [vmem:[%s551 + $0x7c] sm:$0xf]
        %v584 = vld [vmem:[%s551 + $0x80] sm:$0xf]
        %v585 = vld [vmem:[%s551 + $0x84] sm:$0xf]
        %v586 = vld [vmem:[%s551 + $0x88] sm:$0xf]
        %v587 = vld [vmem:[%s551 + $0x8c] sm:$0xf]
        %v588 = vld [vmem:[%s551 + $0x90] sm:$0xf]
        %v589 = vld [vmem:[%s551 + $0x94] sm:$0xf]
        %v590 = vld [vmem:[%s551 + $0x98] sm:$0xf]
        %v591 = vld [vmem:[%s551 + $0x9c] sm:$0xf]
        %v592 = vld [vmem:[%s551 + $0xa0] sm:$0xf]
        %v593 = vld [vmem:[%s551 + $0xa4] sm:$0xf]
        %v594 = vld [vmem:[%s551 + $0xa8] sm:$0xf]
        %v595 = vld [vmem:[%s551 + $0xac] sm:$0xf]
        %v596 = vld [vmem:[%s551 + $0xb0] sm:$0xf]
        %v597 = vld [vmem:[%s551 + $0xb4] sm:$0xf]
        %v598 = vld [vmem:[%s551 + $0xb8] sm:$0xf]
        %v599 = vld [vmem:[%s551 + $0xbc] sm:$0xf]
        %v600 = vld [vmem:[%s551 + $0xc0] sm:$0xf]
        %v601 = vld [vmem:[%s551 + $0xc4] sm:$0xf]
        %v602 = vld [vmem:[%s551 + $0xc8] sm:$0xf]
        %v603 = vld [vmem:[%s551 + $0xcc] sm:$0xf]
        %v604 = vld [vmem:[%s551 + $0xd0] sm:$0xf]
        %v605 = vld [vmem:[%s551 + $0xd4] sm:$0xf]
        %v606 = vld [vmem:[%s551 + $0xd8] sm:$0xf]
        %v607 = vld [vmem:[%s551 + $0xdc] sm:$0xf]
        %v608 = vld [vmem:[%s551 + $0xe0] sm:$0xf]
        %v609 = vld [vmem:[%s551 + $0xe4] sm:$0xf]
        %v610 = vld [vmem:[%s551 + $0xe8] sm:$0xf]
        %v611 = vld [vmem:[%s551 + $0xec] sm:$0xf]
        %v612 = vld [vmem:[%s551 + $0xf0] sm:$0xf]
        %v613 = vld [vmem:[%s551 + $0xf4] sm:$0xf]
        %v614 = vld [vmem:[%s551 + $0xf8] sm:$0xf]
        %v615 = vld [vmem:[%s551 + $0xfc] sm:$0xf]
        %v680 = vunpack.c.l.b16 %v552
        %v681 = vunpack.c.l.b16 %v553
        %v682 = vunpack.c.l.b16 %v554
        %v683 = vunpack.c.l.b16 %v555
        %v684 = vunpack.c.l.b16 %v556
        %v685 = vunpack.c.l.b16 %v557
        %v686 = vunpack.c.l.b16 %v558
        %v687 = vunpack.c.l.b16 %v559
        %v688 = vunpack.c.l.b16 %v560
        %v689 = vunpack.c.l.b16 %v561
        %v690 = vunpack.c.l.b16 %v562
        %v691 = vunpack.c.l.b16 %v563
        %v692 = vunpack.c.l.b16 %v564
        %v693 = vunpack.c.l.b16 %v565
        %v694 = vunpack.c.l.b16 %v566
        %v695 = vunpack.c.l.b16 %v567
        %v696 = vunpack.c.l.b16 %v568
        %v697 = vunpack.c.l.b16 %v569
        %v698 = vunpack.c.l.b16 %v570
        %v699 = vunpack.c.l.b16 %v571
        %v700 = vunpack.c.l.b16 %v572
        %v701 = vunpack.c.l.b16 %v573
        %v702 = vunpack.c.l.b16 %v574
        %v703 = vunpack.c.l.b16 %v575
        %v704 = vunpack.c.l.b16 %v576
        %v705 = vunpack.c.l.b16 %v577
        %v706 = vunpack.c.l.b16 %v578
        %v707 = vunpack.c.l.b16 %v579
        %v708 = vunpack.c.l.b16 %v580
        %v709 = vunpack.c.l.b16 %v581
        %v710 = vunpack.c.l.b16 %v582
        %v711 = vunpack.c.l.b16 %v583
        %v712 = vunpack.c.l.b16 %v584
        %v713 = vunpack.c.l.b16 %v585
        %v714 = vunpack.c.l.b16 %v586
        %v715 = vunpack.c.l.b16 %v587
        %v716 = vunpack.c.l.b16 %v588
        %v717 = vunpack.c.l.b16 %v589
        %v718 = vunpack.c.l.b16 %v590
        %v719 = vunpack.c.l.b16 %v591
        %v720 = vunpack.c.l.b16 %v592
        %v721 = vunpack.c.l.b16 %v593
        %v722 = vunpack.c.l.b16 %v594
        %v723 = vunpack.c.l.b16 %v595
        %v724 = vunpack.c.l.b16 %v596
        %v725 = vunpack.c.l.b16 %v597
        %v726 = vunpack.c.l.b16 %v598
        %v727 = vunpack.c.l.b16 %v599
        %v728 = vunpack.c.l.b16 %v600
        %v729 = vunpack.c.l.b16 %v601
        %v730 = vunpack.c.l.b16 %v602
        %v731 = vunpack.c.l.b16 %v603
        %v732 = vunpack.c.l.b16 %v604
        %v733 = vunpack.c.l.b16 %v605
        %v734 = vunpack.c.l.b16 %v606
        %v735 = vunpack.c.l.b16 %v607
        %v736 = vunpack.c.l.b16 %v608
        %v737 = vunpack.c.l.b16 %v609
        %v738 = vunpack.c.l.b16 %v610
        %v739 = vunpack.c.l.b16 %v611
        %v740 = vunpack.c.l.b16 %v612
        %v741 = vunpack.c.l.b16 %v613
        %v742 = vunpack.c.l.b16 %v614
        %v743 = vunpack.c.l.b16 %v615
        %v744 = vpack.c.b16 %v681, %v680
        %v745 = vpack.c.b16 %v683, %v682
        %v746 = vpack.c.b16 %v685, %v684
        %v747 = vpack.c.b16 %v687, %v686
        %v748 = vpack.c.b16 %v689, %v688
        %v749 = vpack.c.b16 %v691, %v690
        %v750 = vpack.c.b16 %v693, %v692
        %v751 = vpack.c.b16 %v695, %v694
        %v752 = vpack.c.b16 %v697, %v696
        %v753 = vpack.c.b16 %v699, %v698
        %v754 = vpack.c.b16 %v701, %v700
        %v755 = vpack.c.b16 %v703, %v702
        %v756 = vpack.c.b16 %v705, %v704
        %v757 = vpack.c.b16 %v707, %v706
        %v758 = vpack.c.b16 %v709, %v708
        %v759 = vpack.c.b16 %v711, %v710
        %v760 = vpack.c.b16 %v713, %v712
        %v761 = vpack.c.b16 %v715, %v714
        %v762 = vpack.c.b16 %v717, %v716
        %v763 = vpack.c.b16 %v719, %v718
        %v764 = vpack.c.b16 %v721, %v720
        %v765 = vpack.c.b16 %v723, %v722
        %v766 = vpack.c.b16 %v725, %v724
        %v767 = vpack.c.b16 %v727, %v726
        %v768 = vpack.c.b16 %v729, %v728
        %v769 = vpack.c.b16 %v731, %v730
        %v770 = vpack.c.b16 %v733, %v732
        %v771 = vpack.c.b16 %v735, %v734
        %v772 = vpack.c.b16 %v737, %v736
        %v773 = vpack.c.b16 %v739, %v738
        %v774 = vpack.c.b16 %v741, %v740
        %v775 = vpack.c.b16 %v743, %v742
        %vm776 = vcmask 834560
        %v778 = vsel %vm776, %v744, 0
        %v781 = vsel %vm776, %v745, 0
        %v784 = vsel %vm776, %v746, 0
        %v787 = vsel %vm776, %v747, 0
        %v790 = vsel %vm776, %v748, 0
        %v793 = vsel %vm776, %v749, 0
        %v796 = vsel %vm776, %v750, 0
        %v799 = vsel %vm776, %v751, 0
        %v802 = vsel %vm776, %v752, 0
        %v805 = vsel %vm776, %v753, 0
        %v808 = vsel %vm776, %v754, 0
        %v811 = vsel %vm776, %v755, 0
        %v814 = vsel %vm776, %v756, 0
        %v817 = vsel %vm776, %v757, 0
        %v820 = vsel %vm776, %v758, 0
        %v823 = vsel %vm776, %v759, 0
        %v826 = vsel %vm776, %v760, 0
        %v829 = vsel %vm776, %v761, 0
        %v832 = vsel %vm776, %v762, 0
        %v835 = vsel %vm776, %v763, 0
        %v838 = vsel %vm776, %v764, 0
        %v841 = vsel %vm776, %v765, 0
        %v844 = vsel %vm776, %v766, 0
        %v847 = vsel %vm776, %v767, 0
        %v850 = vsel %vm776, %v768, 0
        %v853 = vsel %vm776, %v769, 0
        %v856 = vsel %vm776, %v770, 0
        %v859 = vsel %vm776, %v771, 0
        %v862 = vsel %vm776, %v772, 0
        %v865 = vsel %vm776, %v773, 0
        %v868 = vsel %vm776, %v774, 0
        %v871 = vsel %vm776, %v775, 0
        %vm873 = vcmask 1042432
        %v875 = vsel %vm873, %v357, 0
        %v878 = vsel %vm873, %v419, 0
        %880 = vmatprep.subr.bf16.mxu0 0
        %881 = vmatpush1.bf16.msra.mxu0 0
        %882 = vmatprep.subr.bf16.mxu0 %v878
        %883 = vmatpush1.bf16.msra.mxu0 %v875
        %884 = vmatprep.subr.bf16.mxu0 %v418
        %885 = vmatpush1.bf16.msra.mxu0 %v356
        %886 = vmatprep.subr.bf16.mxu0 %v417
        %887 = vmatpush1.bf16.msra.mxu0 %v355
        %888 = vmatprep.subr.bf16.mxu0 %v416
        %889 = vmatpush1.bf16.msra.mxu0 %v354
        %890 = vmatprep.subr.bf16.mxu0 %v415
        %891 = vmatpush1.bf16.msra.mxu0 %v353
        %892 = vmatprep.subr.bf16.mxu0 %v414
        %893 = vmatpush1.bf16.msra.mxu0 %v352
        %894 = vmatprep.subr.bf16.mxu0 %v413
        %895 = vmatpush1.bf16.msra.mxu0 %v351
        %896 = vmatprep.subr.bf16.mxu0 0
        %897 = vmatpush2.bf16.msra.mxu0 0
        %898 = vmatprep.subr.bf16.mxu0 0
        %899 = vmatpush2.bf16.msra.mxu0 0
        %900 = vmatprep.subr.bf16.mxu0 0
        %901 = vmatpush2.bf16.msra.mxu0 0
        %902 = vmatprep.subr.bf16.mxu0 0
        %903 = vmatpush2.bf16.msra.mxu0 0
        %904 = vmatprep.subr.bf16.mxu0 0
        %905 = vmatpush2.bf16.msra.mxu0 0
        %906 = vmatprep.subr.bf16.mxu0 0
        %907 = vmatpush2.bf16.msra.mxu0 0
        %908 = vmatprep.subr.bf16.mxu0 0
        %909 = vmatpush2.bf16.msra.mxu0 0
        %910 = vmatprep.subr.bf16.mxu0 0
        %911 = vmatpush2.bf16.msra.mxu0 0
        %912 = vmatprep.mubr.bf16.mxu0 0
        %913 = vmatmul.mubr.bf16.gmra.mxu0 %v778
        %v914 = vpop.f32.mrf.mxu0
        %v915 = vadd.f32 0.0, %v914
        %v916 = vpop.f32.mrf.mxu0
        %v917 = vadd.f32 0.0, %v916
        %v918 = vpop.f32.mrf.mxu0
        %v919 = vadd.f32 0.0, %v918
        %v920 = vpop.f32.mrf.mxu0
        %v921 = vadd.f32 0.0, %v920
        %922 = vmatprep.mubr.bf16.mxu0 0
        %923 = vmatmul.mubr.bf16.gmra.mxu0 %v781
        %v924 = vpop.f32.mrf.mxu0
        %v925 = vadd.f32 0.0, %v924
        %v926 = vpop.f32.mrf.mxu0
        %v927 = vadd.f32 0.0, %v926
        %v928 = vpop.f32.mrf.mxu0
        %v929 = vadd.f32 0.0, %v928
        %v930 = vpop.f32.mrf.mxu0
        %v931 = vadd.f32 0.0, %v930
        %932 = vmatprep.mubr.bf16.mxu0 0
        %933 = vmatmul.mubr.bf16.gmra.mxu0 %v784
        %v934 = vpop.f32.mrf.mxu0
        %v935 = vadd.f32 0.0, %v934
        %v936 = vpop.f32.mrf.mxu0
        %v937 = vadd.f32 0.0, %v936
        %v938 = vpop.f32.mrf.mxu0
        %v939 = vadd.f32 0.0, %v938
        %v940 = vpop.f32.mrf.mxu0
        %v941 = vadd.f32 0.0, %v940
        %942 = vmatprep.mubr.bf16.mxu0 0
        %943 = vmatmul.mubr.bf16.gmra.mxu0 %v787
        %v944 = vpop.f32.mrf.mxu0
        %v945 = vadd.f32 0.0, %v944
        %v946 = vpop.f32.mrf.mxu0
        %v947 = vadd.f32 0.0, %v946
        %v948 = vpop.f32.mrf.mxu0
        %v949 = vadd.f32 0.0, %v948
        %v950 = vpop.f32.mrf.mxu0
        %v951 = vadd.f32 0.0, %v950
        %952 = vmatprep.mubr.bf16.mxu0 0
        %953 = vmatmul.mubr.bf16.gmra.mxu0 %v790
        %v954 = vpop.f32.mrf.mxu0
        %v955 = vadd.f32 0.0, %v954
        %v956 = vpop.f32.mrf.mxu0
        %v957 = vadd.f32 0.0, %v956
        %v958 = vpop.f32.mrf.mxu0
        %v959 = vadd.f32 0.0, %v958
        %v960 = vpop.f32.mrf.mxu0
        %v961 = vadd.f32 0.0, %v960
        %962 = vmatprep.mubr.bf16.mxu0 0
        %963 = vmatmul.mubr.bf16.gmra.mxu0 %v793
        %v964 = vpop.f32.mrf.mxu0
        %v965 = vadd.f32 0.0, %v964
        %v966 = vpop.f32.mrf.mxu0
        %v967 = vadd.f32 0.0, %v966
        %v968 = vpop.f32.mrf.mxu0
        %v969 = vadd.f32 0.0, %v968
        %v970 = vpop.f32.mrf.mxu0
        %v971 = vadd.f32 0.0, %v970
        %972 = vmatprep.mubr.bf16.mxu0 0
        %973 = vmatmul.mubr.bf16.gmra.mxu0 %v796
        %v974 = vpop.f32.mrf.mxu0
        %v975 = vadd.f32 0.0, %v974
        %v976 = vpop.f32.mrf.mxu0
        %v977 = vadd.f32 0.0, %v976
        %v978 = vpop.f32.mrf.mxu0
        %v979 = vadd.f32 0.0, %v978
        %v980 = vpop.f32.mrf.mxu0
        %v981 = vadd.f32 0.0, %v980
        %982 = vmatprep.mubr.bf16.mxu0 0
        %983 = vmatmul.mubr.bf16.gmra.mxu0 %v799
        %v984 = vpop.f32.mrf.mxu0
        %v985 = vadd.f32 0.0, %v984
        %v986 = vpop.f32.mrf.mxu0
        %v987 = vadd.f32 0.0, %v986
        %v988 = vpop.f32.mrf.mxu0
        %v989 = vadd.f32 0.0, %v988
        %v990 = vpop.f32.mrf.mxu0
        %v991 = vadd.f32 0.0, %v990
        %992 = vmatprep.mubr.bf16.mxu0 0
        %993 = vmatmul.mubr.bf16.gmra.mxu0 %v802
        %v994 = vpop.f32.mrf.mxu0
        %v995 = vadd.f32 0.0, %v994
        %v996 = vpop.f32.mrf.mxu0
        %v997 = vadd.f32 0.0, %v996
        %v998 = vpop.f32.mrf.mxu0
        %v999 = vadd.f32 0.0, %v998
        %v1000 = vpop.f32.mrf.mxu0
        %v1001 = vadd.f32 0.0, %v1000
        %1002 = vmatprep.mubr.bf16.mxu0 0
        %1003 = vmatmul.mubr.bf16.gmra.mxu0 %v805
        %v1004 = vpop.f32.mrf.mxu0
        %v1005 = vadd.f32 0.0, %v1004
        %v1006 = vpop.f32.mrf.mxu0
        %v1007 = vadd.f32 0.0, %v1006
        %v1008 = vpop.f32.mrf.mxu0
        %v1009 = vadd.f32 0.0, %v1008
        %v1010 = vpop.f32.mrf.mxu0
        %v1011 = vadd.f32 0.0, %v1010
        %1012 = vmatprep.mubr.bf16.mxu0 0
        %1013 = vmatmul.mubr.bf16.gmra.mxu0 %v808
        %v1014 = vpop.f32.mrf.mxu0
        %v1015 = vadd.f32 0.0, %v1014
        %v1016 = vpop.f32.mrf.mxu0
        %v1017 = vadd.f32 0.0, %v1016
        %v1018 = vpop.f32.mrf.mxu0
        %v1019 = vadd.f32 0.0, %v1018
        %v1020 = vpop.f32.mrf.mxu0
        %v1021 = vadd.f32 0.0, %v1020
        %1022 = vmatprep.mubr.bf16.mxu0 0
        %1023 = vmatmul.mubr.bf16.gmra.mxu0 %v811
        %v1024 = vpop.f32.mrf.mxu0
        %v1025 = vadd.f32 0.0, %v1024
        %v1026 = vpop.f32.mrf.mxu0
        %v1027 = vadd.f32 0.0, %v1026
        %v1028 = vpop.f32.mrf.mxu0
        %v1029 = vadd.f32 0.0, %v1028
        %v1030 = vpop.f32.mrf.mxu0
        %v1031 = vadd.f32 0.0, %v1030
        %1032 = vmatprep.mubr.bf16.mxu0 0
        %1033 = vmatmul.mubr.bf16.gmra.mxu0 %v814
        %v1034 = vpop.f32.mrf.mxu0
        %v1035 = vadd.f32 0.0, %v1034
        %v1036 = vpop.f32.mrf.mxu0
        %v1037 = vadd.f32 0.0, %v1036
        %v1038 = vpop.f32.mrf.mxu0
        %v1039 = vadd.f32 0.0, %v1038
        %v1040 = vpop.f32.mrf.mxu0
        %v1041 = vadd.f32 0.0, %v1040
        %1042 = vmatprep.mubr.bf16.mxu0 0
        %1043 = vmatmul.mubr.bf16.gmra.mxu0 %v817
        %v1044 = vpop.f32.mrf.mxu0
        %v1045 = vadd.f32 0.0, %v1044
        %v1046 = vpop.f32.mrf.mxu0
        %v1047 = vadd.f32 0.0, %v1046
        %v1048 = vpop.f32.mrf.mxu0
        %v1049 = vadd.f32 0.0, %v1048
        %v1050 = vpop.f32.mrf.mxu0
        %v1051 = vadd.f32 0.0, %v1050
        %1052 = vmatprep.mubr.bf16.mxu0 0
        %1053 = vmatmul.mubr.bf16.gmra.mxu0 %v820
        %v1054 = vpop.f32.mrf.mxu0
        %v1055 = vadd.f32 0.0, %v1054
        %v1056 = vpop.f32.mrf.mxu0
        %v1057 = vadd.f32 0.0, %v1056
        %v1058 = vpop.f32.mrf.mxu0
        %v1059 = vadd.f32 0.0, %v1058
        %v1060 = vpop.f32.mrf.mxu0
        %v1061 = vadd.f32 0.0, %v1060
        %1062 = vmatprep.mubr.bf16.mxu0 0
        %1063 = vmatmul.mubr.bf16.gmra.mxu0 %v823
        %v1064 = vpop.f32.mrf.mxu0
        %v1065 = vadd.f32 0.0, %v1064
        %v1066 = vpop.f32.mrf.mxu0
        %v1067 = vadd.f32 0.0, %v1066
        %v1068 = vpop.f32.mrf.mxu0
        %v1069 = vadd.f32 0.0, %v1068
        %v1070 = vpop.f32.mrf.mxu0
        %v1071 = vadd.f32 0.0, %v1070
        %1072 = vmatprep.mubr.bf16.mxu0 0
        %1073 = vmatmul.mubr.bf16.gmra.mxu0 %v826
        %v1074 = vpop.f32.mrf.mxu0
        %v1075 = vadd.f32 0.0, %v1074
        %v1076 = vpop.f32.mrf.mxu0
        %v1077 = vadd.f32 0.0, %v1076
        %v1078 = vpop.f32.mrf.mxu0
        %v1079 = vadd.f32 0.0, %v1078
        %v1080 = vpop.f32.mrf.mxu0
        %v1081 = vadd.f32 0.0, %v1080
        %1082 = vmatprep.mubr.bf16.mxu0 0
        %1083 = vmatmul.mubr.bf16.gmra.mxu0 %v829
        %v1084 = vpop.f32.mrf.mxu0
        %v1085 = vadd.f32 0.0, %v1084
        %v1086 = vpop.f32.mrf.mxu0
        %v1087 = vadd.f32 0.0, %v1086
        %v1088 = vpop.f32.mrf.mxu0
        %v1089 = vadd.f32 0.0, %v1088
        %v1090 = vpop.f32.mrf.mxu0
        %v1091 = vadd.f32 0.0, %v1090
        %1092 = vmatprep.mubr.bf16.mxu0 0
        %1093 = vmatmul.mubr.bf16.gmra.mxu0 %v832
        %v1094 = vpop.f32.mrf.mxu0
        %v1095 = vadd.f32 0.0, %v1094
        %v1096 = vpop.f32.mrf.mxu0
        %v1097 = vadd.f32 0.0, %v1096
        %v1098 = vpop.f32.mrf.mxu0
        %v1099 = vadd.f32 0.0, %v1098
        %v1100 = vpop.f32.mrf.mxu0
        %v1101 = vadd.f32 0.0, %v1100
        %1102 = vmatprep.mubr.bf16.mxu0 0
        %1103 = vmatmul.mubr.bf16.gmra.mxu0 %v835
        %v1104 = vpop.f32.mrf.mxu0
        %v1105 = vadd.f32 0.0, %v1104
        %v1106 = vpop.f32.mrf.mxu0
        %v1107 = vadd.f32 0.0, %v1106
        %v1108 = vpop.f32.mrf.mxu0
        %v1109 = vadd.f32 0.0, %v1108
        %v1110 = vpop.f32.mrf.mxu0
        %v1111 = vadd.f32 0.0, %v1110
        %1112 = vmatprep.mubr.bf16.mxu0 0
        %1113 = vmatmul.mubr.bf16.gmra.mxu0 %v838
        %v1114 = vpop.f32.mrf.mxu0
        %v1115 = vadd.f32 0.0, %v1114
        %v1116 = vpop.f32.mrf.mxu0
        %v1117 = vadd.f32 0.0, %v1116
        %v1118 = vpop.f32.mrf.mxu0
        %v1119 = vadd.f32 0.0, %v1118
        %v1120 = vpop.f32.mrf.mxu0
        %v1121 = vadd.f32 0.0, %v1120
        %1122 = vmatprep.mubr.bf16.mxu0 0
        %1123 = vmatmul.mubr.bf16.gmra.mxu0 %v841
        %v1124 = vpop.f32.mrf.mxu0
        %v1125 = vadd.f32 0.0, %v1124
        %v1126 = vpop.f32.mrf.mxu0
        %v1127 = vadd.f32 0.0, %v1126
        %v1128 = vpop.f32.mrf.mxu0
        %v1129 = vadd.f32 0.0, %v1128
        %v1130 = vpop.f32.mrf.mxu0
        %v1131 = vadd.f32 0.0, %v1130
        %1132 = vmatprep.mubr.bf16.mxu0 0
        %1133 = vmatmul.mubr.bf16.gmra.mxu0 %v844
        %v1134 = vpop.f32.mrf.mxu0
        %v1135 = vadd.f32 0.0, %v1134
        %v1136 = vpop.f32.mrf.mxu0
        %v1137 = vadd.f32 0.0, %v1136
        %v1138 = vpop.f32.mrf.mxu0
        %v1139 = vadd.f32 0.0, %v1138
        %v1140 = vpop.f32.mrf.mxu0
        %v1141 = vadd.f32 0.0, %v1140
        %1142 = vmatprep.mubr.bf16.mxu0 0
        %1143 = vmatmul.mubr.bf16.gmra.mxu0 %v847
        %v1144 = vpop.f32.mrf.mxu0
        %v1145 = vadd.f32 0.0, %v1144
        %v1146 = vpop.f32.mrf.mxu0
        %v1147 = vadd.f32 0.0, %v1146
        %v1148 = vpop.f32.mrf.mxu0
        %v1149 = vadd.f32 0.0, %v1148
        %v1150 = vpop.f32.mrf.mxu0
        %v1151 = vadd.f32 0.0, %v1150
        %1152 = vmatprep.mubr.bf16.mxu0 0
        %1153 = vmatmul.mubr.bf16.gmra.mxu0 %v850
        %v1154 = vpop.f32.mrf.mxu0
        %v1155 = vadd.f32 0.0, %v1154
        %v1156 = vpop.f32.mrf.mxu0
        %v1157 = vadd.f32 0.0, %v1156
        %v1158 = vpop.f32.mrf.mxu0
        %v1159 = vadd.f32 0.0, %v1158
        %v1160 = vpop.f32.mrf.mxu0
        %v1161 = vadd.f32 0.0, %v1160
        %1162 = vmatprep.mubr.bf16.mxu0 0
        %1163 = vmatmul.mubr.bf16.gmra.mxu0 %v853
        %v1164 = vpop.f32.mrf.mxu0
        %v1165 = vadd.f32 0.0, %v1164
        %v1166 = vpop.f32.mrf.mxu0
        %v1167 = vadd.f32 0.0, %v1166
        %v1168 = vpop.f32.mrf.mxu0
        %v1169 = vadd.f32 0.0, %v1168
        %v1170 = vpop.f32.mrf.mxu0
        %v1171 = vadd.f32 0.0, %v1170
        %1172 = vmatprep.mubr.bf16.mxu0 0
        %1173 = vmatmul.mubr.bf16.gmra.mxu0 %v856
        %v1174 = vpop.f32.mrf.mxu0
        %v1175 = vadd.f32 0.0, %v1174
        %v1176 = vpop.f32.mrf.mxu0
        %v1177 = vadd.f32 0.0, %v1176
        %v1178 = vpop.f32.mrf.mxu0
        %v1179 = vadd.f32 0.0, %v1178
        %v1180 = vpop.f32.mrf.mxu0
        %v1181 = vadd.f32 0.0, %v1180
        %1182 = vmatprep.mubr.bf16.mxu0 0
        %1183 = vmatmul.mubr.bf16.gmra.mxu0 %v859
        %v1184 = vpop.f32.mrf.mxu0
        %v1185 = vadd.f32 0.0, %v1184
        %v1186 = vpop.f32.mrf.mxu0
        %v1187 = vadd.f32 0.0, %v1186
        %v1188 = vpop.f32.mrf.mxu0
        %v1189 = vadd.f32 0.0, %v1188
        %v1190 = vpop.f32.mrf.mxu0
        %v1191 = vadd.f32 0.0, %v1190
        %1192 = vmatprep.mubr.bf16.mxu0 0
        %1193 = vmatmul.mubr.bf16.gmra.mxu0 %v862
        %v1194 = vpop.f32.mrf.mxu0
        %v1195 = vadd.f32 0.0, %v1194
        %v1196 = vpop.f32.mrf.mxu0
        %v1197 = vadd.f32 0.0, %v1196
        %v1198 = vpop.f32.mrf.mxu0
        %v1199 = vadd.f32 0.0, %v1198
        %v1200 = vpop.f32.mrf.mxu0
        %v1201 = vadd.f32 0.0, %v1200
        %1202 = vmatprep.mubr.bf16.mxu0 0
        %1203 = vmatmul.mubr.bf16.gmra.mxu0 %v865
        %v1204 = vpop.f32.mrf.mxu0
        %v1205 = vadd.f32 0.0, %v1204
        %v1206 = vpop.f32.mrf.mxu0
        %v1207 = vadd.f32 0.0, %v1206
        %v1208 = vpop.f32.mrf.mxu0
        %v1209 = vadd.f32 0.0, %v1208
        %v1210 = vpop.f32.mrf.mxu0
        %v1211 = vadd.f32 0.0, %v1210
        %1212 = vmatprep.mubr.bf16.mxu0 0
        %1213 = vmatmul.mubr.bf16.gmra.mxu0 %v868
        %v1214 = vpop.f32.mrf.mxu0
        %v1215 = vadd.f32 0.0, %v1214
        %v1216 = vpop.f32.mrf.mxu0
        %v1217 = vadd.f32 0.0, %v1216
        %v1218 = vpop.f32.mrf.mxu0
        %v1219 = vadd.f32 0.0, %v1218
        %v1220 = vpop.f32.mrf.mxu0
        %v1221 = vadd.f32 0.0, %v1220
        %1222 = vmatprep.mubr.bf16.mxu0 0
        %1223 = vmatmul.mubr.bf16.gmra.mxu0 %v871
        %v1224 = vpop.f32.mrf.mxu0
        %v1225 = vadd.f32 0.0, %v1224
        %v1226 = vpop.f32.mrf.mxu0
        %v1227 = vadd.f32 0.0, %v1226
        %v1228 = vpop.f32.mrf.mxu0
        %v1229 = vadd.f32 0.0, %v1228
        %v1230 = vpop.f32.mrf.mxu0
        %v1231 = vadd.f32 0.0, %v1230
        %1232 = vdwg.mxu0
        %v1297 = vunpack.c.l.b16 %v487
        %v1298 = vunpack.c.l.b16 %v488
        %v1299 = vunpack.c.l.b16 %v489
        %v1300 = vunpack.c.l.b16 %v490
        %v1301 = vunpack.c.l.b16 %v491
        %v1302 = vunpack.c.l.b16 %v492
        %v1303 = vunpack.c.l.b16 %v493
        %v1304 = vunpack.c.l.b16 %v494
        %v1305 = vunpack.c.l.b16 %v495
        %v1306 = vunpack.c.l.b16 %v496
        %v1307 = vunpack.c.l.b16 %v497
        %v1308 = vunpack.c.l.b16 %v498
        %v1309 = vunpack.c.l.b16 %v499
        %v1310 = vunpack.c.l.b16 %v500
        %v1311 = vunpack.c.l.b16 %v501
        %v1312 = vunpack.c.l.b16 %v502
        %v1313 = vunpack.c.l.b16 %v503
        %v1314 = vunpack.c.l.b16 %v504
        %v1315 = vunpack.c.l.b16 %v505
        %v1316 = vunpack.c.l.b16 %v506
        %v1317 = vunpack.c.l.b16 %v507
        %v1318 = vunpack.c.l.b16 %v508
        %v1319 = vunpack.c.l.b16 %v509
        %v1320 = vunpack.c.l.b16 %v510
        %v1321 = vunpack.c.l.b16 %v511
        %v1322 = vunpack.c.l.b16 %v512
        %v1323 = vunpack.c.l.b16 %v513
        %v1324 = vunpack.c.l.b16 %v514
        %v1325 = vunpack.c.l.b16 %v515
        %v1326 = vunpack.c.l.b16 %v516
        %v1327 = vunpack.c.l.b16 %v517
        %v1328 = vunpack.c.l.b16 %v518
        %v1329 = vunpack.c.l.b16 %v519
        %v1330 = vunpack.c.l.b16 %v520
        %v1331 = vunpack.c.l.b16 %v521
        %v1332 = vunpack.c.l.b16 %v522
        %v1333 = vunpack.c.l.b16 %v523
        %v1334 = vunpack.c.l.b16 %v524
        %v1335 = vunpack.c.l.b16 %v525
        %v1336 = vunpack.c.l.b16 %v526
        %v1337 = vunpack.c.l.b16 %v527
        %v1338 = vunpack.c.l.b16 %v528
        %v1339 = vunpack.c.l.b16 %v529
        %v1340 = vunpack.c.l.b16 %v530
        %v1341 = vunpack.c.l.b16 %v531
        %v1342 = vunpack.c.l.b16 %v532
        %v1343 = vunpack.c.l.b16 %v533
        %v1344 = vunpack.c.l.b16 %v534
        %v1345 = vunpack.c.l.b16 %v535
        %v1346 = vunpack.c.l.b16 %v536
        %v1347 = vunpack.c.l.b16 %v537
        %v1348 = vunpack.c.l.b16 %v538
        %v1349 = vunpack.c.l.b16 %v539
        %v1350 = vunpack.c.l.b16 %v540
        %v1351 = vunpack.c.l.b16 %v541
        %v1352 = vunpack.c.l.b16 %v542
        %v1353 = vunpack.c.l.b16 %v543
        %v1354 = vunpack.c.l.b16 %v544
        %v1355 = vunpack.c.l.b16 %v545
        %v1356 = vunpack.c.l.b16 %v546
        %v1357 = vunpack.c.l.b16 %v547
        %v1358 = vunpack.c.l.b16 %v548
        %v1359 = vunpack.c.l.b16 %v549
        %v1360 = vunpack.c.l.b16 %v550
        %v1361 = vpack.c.b16 %v1298, %v1297
        %v1362 = vpack.c.b16 %v1300, %v1299
        %v1363 = vpack.c.b16 %v1302, %v1301
        %v1364 = vpack.c.b16 %v1304, %v1303
        %v1365 = vpack.c.b16 %v1306, %v1305
        %v1366 = vpack.c.b16 %v1308, %v1307
        %v1367 = vpack.c.b16 %v1310, %v1309
        %v1368 = vpack.c.b16 %v1312, %v1311
        %v1369 = vpack.c.b16 %v1314, %v1313
        %v1370 = vpack.c.b16 %v1316, %v1315
        %v1371 = vpack.c.b16 %v1318, %v1317
        %v1372 = vpack.c.b16 %v1320, %v1319
        %v1373 = vpack.c.b16 %v1322, %v1321
        %v1374 = vpack.c.b16 %v1324, %v1323
        %v1375 = vpack.c.b16 %v1326, %v1325
        %v1376 = vpack.c.b16 %v1328, %v1327
        %v1377 = vpack.c.b16 %v1330, %v1329
        %v1378 = vpack.c.b16 %v1332, %v1331
        %v1379 = vpack.c.b16 %v1334, %v1333
        %v1380 = vpack.c.b16 %v1336, %v1335
        %v1381 = vpack.c.b16 %v1338, %v1337
        %v1382 = vpack.c.b16 %v1340, %v1339
        %v1383 = vpack.c.b16 %v1342, %v1341
        %v1384 = vpack.c.b16 %v1344, %v1343
        %v1385 = vpack.c.b16 %v1346, %v1345
        %v1386 = vpack.c.b16 %v1348, %v1347
        %v1387 = vpack.c.b16 %v1350, %v1349
        %v1388 = vpack.c.b16 %v1352, %v1351
        %v1389 = vpack.c.b16 %v1354, %v1353
        %v1390 = vpack.c.b16 %v1356, %v1355
        %v1391 = vpack.c.b16 %v1358, %v1357
        %v1392 = vpack.c.b16 %v1360, %v1359
        %v1394 = vsel %vm776, %v1361, 0
        %v1397 = vsel %vm776, %v1362, 0
        %v1400 = vsel %vm776, %v1363, 0
        %v1403 = vsel %vm776, %v1364, 0
        %v1406 = vsel %vm776, %v1365, 0
        %v1409 = vsel %vm776, %v1366, 0
        %v1412 = vsel %vm776, %v1367, 0
        %v1415 = vsel %vm776, %v1368, 0
        %v1418 = vsel %vm776, %v1369, 0
        %v1421 = vsel %vm776, %v1370, 0
        %v1424 = vsel %vm776, %v1371, 0
        %v1427 = vsel %vm776, %v1372, 0
        %v1430 = vsel %vm776, %v1373, 0
        %v1433 = vsel %vm776, %v1374, 0
        %v1436 = vsel %vm776, %v1375, 0
        %v1439 = vsel %vm776, %v1376, 0
        %v1442 = vsel %vm776, %v1377, 0
        %v1445 = vsel %vm776, %v1378, 0
        %v1448 = vsel %vm776, %v1379, 0
        %v1451 = vsel %vm776, %v1380, 0
        %v1454 = vsel %vm776, %v1381, 0
        %v1457 = vsel %vm776, %v1382, 0
        %v1460 = vsel %vm776, %v1383, 0
        %v1463 = vsel %vm776, %v1384, 0
        %v1466 = vsel %vm776, %v1385, 0
        %v1469 = vsel %vm776, %v1386, 0
        %v1472 = vsel %vm776, %v1387, 0
        %v1475 = vsel %vm776, %v1388, 0
        %v1478 = vsel %vm776, %v1389, 0
        %v1481 = vsel %vm776, %v1390, 0
        %v1484 = vsel %vm776, %v1391, 0
        %v1487 = vsel %vm776, %v1392, 0
        %v1490 = vsel %vm873, %v318, 0
        %1492 = vmatprep.subr.bf16.mxu0 0
        %1493 = vmatpush1.bf16.msra.mxu0 0
        %1494 = vmatprep.subr.bf16.mxu0 %v875
        %1495 = vmatpush1.bf16.msra.mxu0 %v1490
        %1496 = vmatprep.subr.bf16.mxu0 %v356
        %1497 = vmatpush1.bf16.msra.mxu0 %v317
        %1498 = vmatprep.subr.bf16.mxu0 %v355
        %1499 = vmatpush1.bf16.msra.mxu0 %v316
        %1500 = vmatprep.subr.bf16.mxu0 %v354
        %1501 = vmatpush1.bf16.msra.mxu0 %v315
        %1502 = vmatprep.subr.bf16.mxu0 %v353
        %1503 = vmatpush1.bf16.msra.mxu0 %v314
        %1504 = vmatprep.subr.bf16.mxu0 %v352
        %1505 = vmatpush1.bf16.msra.mxu0 %v313
        %1506 = vmatprep.subr.bf16.mxu0 %v351
        %1507 = vmatpush1.bf16.msra.mxu0 %v312
        %1508 = vmatprep.subr.bf16.mxu0 0
        %1509 = vmatpush2.bf16.msra.mxu0 0
        %1510 = vmatprep.subr.bf16.mxu0 0
        %1511 = vmatpush2.bf16.msra.mxu0 0
        %1512 = vmatprep.subr.bf16.mxu0 0
        %1513 = vmatpush2.bf16.msra.mxu0 0
        %1514 = vmatprep.subr.bf16.mxu0 0
        %1515 = vmatpush2.bf16.msra.mxu0 0
        %1516 = vmatprep.subr.bf16.mxu0 0
        %1517 = vmatpush2.bf16.msra.mxu0 0
        %1518 = vmatprep.subr.bf16.mxu0 0
        %1519 = vmatpush2.bf16.msra.mxu0 0
        %1520 = vmatprep.subr.bf16.mxu0 0
        %1521 = vmatpush2.bf16.msra.mxu0 0
        %1522 = vmatprep.subr.bf16.mxu0 0
        %1523 = vmatpush2.bf16.msra.mxu0 0
        %1524 = vmatprep.mubr.bf16.mxu0 0
        %1525 = vmatmul.mubr.bf16.gmra.mxu0 %v1394
        %v1526 = vpop.f32.mrf.mxu0
        %v1527 = vadd.f32 %v915, %v1526
        %v1528 = vpop.f32.mrf.mxu0
        %v1529 = vadd.f32 %v917, %v1528
        %v1530 = vpop.f32.mrf.mxu0
        %v1531 = vadd.f32 %v919, %v1530
        %v1532 = vpop.f32.mrf.mxu0
        %v1533 = vadd.f32 %v921, %v1532
        %1534 = vmatprep.mubr.bf16.mxu0 0
        %1535 = vmatmul.mubr.bf16.gmra.mxu0 %v1397
        %v1536 = vpop.f32.mrf.mxu0
        %v1537 = vadd.f32 %v925, %v1536
        %v1538 = vpop.f32.mrf.mxu0
        %v1539 = vadd.f32 %v927, %v1538
        %v1540 = vpop.f32.mrf.mxu0
        %v1541 = vadd.f32 %v929, %v1540
        %v1542 = vpop.f32.mrf.mxu0
        %v1543 = vadd.f32 %v931, %v1542
        %1544 = vmatprep.mubr.bf16.mxu0 0
        %1545 = vmatmul.mubr.bf16.gmra.mxu0 %v1400
        %v1546 = vpop.f32.mrf.mxu0
        %v1547 = vadd.f32 %v935, %v1546
        %v1548 = vpop.f32.mrf.mxu0
        %v1549 = vadd.f32 %v937, %v1548
        %v1550 = vpop.f32.mrf.mxu0
        %v1551 = vadd.f32 %v939, %v1550
        %v1552 = vpop.f32.mrf.mxu0
        %v1553 = vadd.f32 %v941, %v1552
        %1554 = vmatprep.mubr.bf16.mxu0 0
        %1555 = vmatmul.mubr.bf16.gmra.mxu0 %v1403
        %v1556 = vpop.f32.mrf.mxu0
        %v1557 = vadd.f32 %v945, %v1556
        %v1558 = vpop.f32.mrf.mxu0
        %v1559 = vadd.f32 %v947, %v1558
        %v1560 = vpop.f32.mrf.mxu0
        %v1561 = vadd.f32 %v949, %v1560
        %v1562 = vpop.f32.mrf.mxu0
        %v1563 = vadd.f32 %v951, %v1562
        %1564 = vmatprep.mubr.bf16.mxu0 0
        %1565 = vmatmul.mubr.bf16.gmra.mxu0 %v1406
        %v1566 = vpop.f32.mrf.mxu0
        %v1567 = vadd.f32 %v955, %v1566
        %v1568 = vpop.f32.mrf.mxu0
        %v1569 = vadd.f32 %v957, %v1568
        %v1570 = vpop.f32.mrf.mxu0
        %v1571 = vadd.f32 %v959, %v1570
        %v1572 = vpop.f32.mrf.mxu0
        %v1573 = vadd.f32 %v961, %v1572
        %1574 = vmatprep.mubr.bf16.mxu0 0
        %1575 = vmatmul.mubr.bf16.gmra.mxu0 %v1409
        %v1576 = vpop.f32.mrf.mxu0
        %v1577 = vadd.f32 %v965, %v1576
        %v1578 = vpop.f32.mrf.mxu0
        %v1579 = vadd.f32 %v967, %v1578
        %v1580 = vpop.f32.mrf.mxu0
        %v1581 = vadd.f32 %v969, %v1580
        %v1582 = vpop.f32.mrf.mxu0
        %v1583 = vadd.f32 %v971, %v1582
        %1584 = vmatprep.mubr.bf16.mxu0 0
        %1585 = vmatmul.mubr.bf16.gmra.mxu0 %v1412
        %v1586 = vpop.f32.mrf.mxu0
        %v1587 = vadd.f32 %v975, %v1586
        %v1588 = vpop.f32.mrf.mxu0
        %v1589 = vadd.f32 %v977, %v1588
        %v1590 = vpop.f32.mrf.mxu0
        %v1591 = vadd.f32 %v979, %v1590
        %v1592 = vpop.f32.mrf.mxu0
        %v1593 = vadd.f32 %v981, %v1592
        %1594 = vmatprep.mubr.bf16.mxu0 0
        %1595 = vmatmul.mubr.bf16.gmra.mxu0 %v1415
        %v1596 = vpop.f32.mrf.mxu0
        %v1597 = vadd.f32 %v985, %v1596
        %v1598 = vpop.f32.mrf.mxu0
        %v1599 = vadd.f32 %v987, %v1598
        %v1600 = vpop.f32.mrf.mxu0
        %v1601 = vadd.f32 %v989, %v1600
        %v1602 = vpop.f32.mrf.mxu0
        %v1603 = vadd.f32 %v991, %v1602
        %1604 = vmatprep.mubr.bf16.mxu0 0
        %1605 = vmatmul.mubr.bf16.gmra.mxu0 %v1418
        %v1606 = vpop.f32.mrf.mxu0
        %v1607 = vadd.f32 %v995, %v1606
        %v1608 = vpop.f32.mrf.mxu0
        %v1609 = vadd.f32 %v997, %v1608
        %v1610 = vpop.f32.mrf.mxu0
        %v1611 = vadd.f32 %v999, %v1610
        %v1612 = vpop.f32.mrf.mxu0
        %v1613 = vadd.f32 %v1001, %v1612
        %1614 = vmatprep.mubr.bf16.mxu0 0
        %1615 = vmatmul.mubr.bf16.gmra.mxu0 %v1421
        %v1616 = vpop.f32.mrf.mxu0
        %v1617 = vadd.f32 %v1005, %v1616
        %v1618 = vpop.f32.mrf.mxu0
        %v1619 = vadd.f32 %v1007, %v1618
        %v1620 = vpop.f32.mrf.mxu0
        %v1621 = vadd.f32 %v1009, %v1620
        %v1622 = vpop.f32.mrf.mxu0
        %v1623 = vadd.f32 %v1011, %v1622
        %1624 = vmatprep.mubr.bf16.mxu0 0
        %1625 = vmatmul.mubr.bf16.gmra.mxu0 %v1424
        %v1626 = vpop.f32.mrf.mxu0
        %v1627 = vadd.f32 %v1015, %v1626
        %v1628 = vpop.f32.mrf.mxu0
        %v1629 = vadd.f32 %v1017, %v1628
        %v1630 = vpop.f32.mrf.mxu0
        %v1631 = vadd.f32 %v1019, %v1630
        %v1632 = vpop.f32.mrf.mxu0
        %v1633 = vadd.f32 %v1021, %v1632
        %1634 = vmatprep.mubr.bf16.mxu0 0
        %1635 = vmatmul.mubr.bf16.gmra.mxu0 %v1427
        %v1636 = vpop.f32.mrf.mxu0
        %v1637 = vadd.f32 %v1025, %v1636
        %v1638 = vpop.f32.mrf.mxu0
        %v1639 = vadd.f32 %v1027, %v1638
        %v1640 = vpop.f32.mrf.mxu0
        %v1641 = vadd.f32 %v1029, %v1640
        %v1642 = vpop.f32.mrf.mxu0
        %v1643 = vadd.f32 %v1031, %v1642
        %1644 = vmatprep.mubr.bf16.mxu0 0
        %1645 = vmatmul.mubr.bf16.gmra.mxu0 %v1430
        %v1646 = vpop.f32.mrf.mxu0
        %v1647 = vadd.f32 %v1035, %v1646
        %v1648 = vpop.f32.mrf.mxu0
        %v1649 = vadd.f32 %v1037, %v1648
        %v1650 = vpop.f32.mrf.mxu0
        %v1651 = vadd.f32 %v1039, %v1650
        %v1652 = vpop.f32.mrf.mxu0
        %v1653 = vadd.f32 %v1041, %v1652
        %1654 = vmatprep.mubr.bf16.mxu0 0
        %1655 = vmatmul.mubr.bf16.gmra.mxu0 %v1433
        %v1656 = vpop.f32.mrf.mxu0
        %v1657 = vadd.f32 %v1045, %v1656
        %v1658 = vpop.f32.mrf.mxu0
        %v1659 = vadd.f32 %v1047, %v1658
        %v1660 = vpop.f32.mrf.mxu0
        %v1661 = vadd.f32 %v1049, %v1660
        %v1662 = vpop.f32.mrf.mxu0
        %v1663 = vadd.f32 %v1051, %v1662
        %1664 = vmatprep.mubr.bf16.mxu0 0
        %1665 = vmatmul.mubr.bf16.gmra.mxu0 %v1436
        %v1666 = vpop.f32.mrf.mxu0
        %v1667 = vadd.f32 %v1055, %v1666
        %v1668 = vpop.f32.mrf.mxu0
        %v1669 = vadd.f32 %v1057, %v1668
        %v1670 = vpop.f32.mrf.mxu0
        %v1671 = vadd.f32 %v1059, %v1670
        %v1672 = vpop.f32.mrf.mxu0
        %v1673 = vadd.f32 %v1061, %v1672
        %1674 = vmatprep.mubr.bf16.mxu0 0
        %1675 = vmatmul.mubr.bf16.gmra.mxu0 %v1439
        %v1676 = vpop.f32.mrf.mxu0
        %v1677 = vadd.f32 %v1065, %v1676
        %v1678 = vpop.f32.mrf.mxu0
        %v1679 = vadd.f32 %v1067, %v1678
        %v1680 = vpop.f32.mrf.mxu0
        %v1681 = vadd.f32 %v1069, %v1680
        %v1682 = vpop.f32.mrf.mxu0
        %v1683 = vadd.f32 %v1071, %v1682
        %1684 = vmatprep.mubr.bf16.mxu0 0
        %1685 = vmatmul.mubr.bf16.gmra.mxu0 %v1442
        %v1686 = vpop.f32.mrf.mxu0
        %v1687 = vadd.f32 %v1075, %v1686
        %v1688 = vpop.f32.mrf.mxu0
        %v1689 = vadd.f32 %v1077, %v1688
        %v1690 = vpop.f32.mrf.mxu0
        %v1691 = vadd.f32 %v1079, %v1690
        %v1692 = vpop.f32.mrf.mxu0
        %v1693 = vadd.f32 %v1081, %v1692
        %1694 = vmatprep.mubr.bf16.mxu0 0
        %1695 = vmatmul.mubr.bf16.gmra.mxu0 %v1445
        %v1696 = vpop.f32.mrf.mxu0
        %v1697 = vadd.f32 %v1085, %v1696
        %v1698 = vpop.f32.mrf.mxu0
        %v1699 = vadd.f32 %v1087, %v1698
        %v1700 = vpop.f32.mrf.mxu0
        %v1701 = vadd.f32 %v1089, %v1700
        %v1702 = vpop.f32.mrf.mxu0
        %v1703 = vadd.f32 %v1091, %v1702
        %1704 = vmatprep.mubr.bf16.mxu0 0
        %1705 = vmatmul.mubr.bf16.gmra.mxu0 %v1448
        %v1706 = vpop.f32.mrf.mxu0
        %v1707 = vadd.f32 %v1095, %v1706
        %v1708 = vpop.f32.mrf.mxu0
        %v1709 = vadd.f32 %v1097, %v1708
        %v1710 = vpop.f32.mrf.mxu0
        %v1711 = vadd.f32 %v1099, %v1710
        %v1712 = vpop.f32.mrf.mxu0
        %v1713 = vadd.f32 %v1101, %v1712
        %1714 = vmatprep.mubr.bf16.mxu0 0
        %1715 = vmatmul.mubr.bf16.gmra.mxu0 %v1451
        %v1716 = vpop.f32.mrf.mxu0
        %v1717 = vadd.f32 %v1105, %v1716
        %v1718 = vpop.f32.mrf.mxu0
        %v1719 = vadd.f32 %v1107, %v1718
        %v1720 = vpop.f32.mrf.mxu0
        %v1721 = vadd.f32 %v1109, %v1720
        %v1722 = vpop.f32.mrf.mxu0
        %v1723 = vadd.f32 %v1111, %v1722
        %1724 = vmatprep.mubr.bf16.mxu0 0
        %1725 = vmatmul.mubr.bf16.gmra.mxu0 %v1454
        %v1726 = vpop.f32.mrf.mxu0
        %v1727 = vadd.f32 %v1115, %v1726
        %v1728 = vpop.f32.mrf.mxu0
        %v1729 = vadd.f32 %v1117, %v1728
        %v1730 = vpop.f32.mrf.mxu0
        %v1731 = vadd.f32 %v1119, %v1730
        %v1732 = vpop.f32.mrf.mxu0
        %v1733 = vadd.f32 %v1121, %v1732
        %1734 = vmatprep.mubr.bf16.mxu0 0
        %1735 = vmatmul.mubr.bf16.gmra.mxu0 %v1457
        %v1736 = vpop.f32.mrf.mxu0
        %v1737 = vadd.f32 %v1125, %v1736
        %v1738 = vpop.f32.mrf.mxu0
        %v1739 = vadd.f32 %v1127, %v1738
        %v1740 = vpop.f32.mrf.mxu0
        %v1741 = vadd.f32 %v1129, %v1740
        %v1742 = vpop.f32.mrf.mxu0
        %v1743 = vadd.f32 %v1131, %v1742
        %1744 = vmatprep.mubr.bf16.mxu0 0
        %1745 = vmatmul.mubr.bf16.gmra.mxu0 %v1460
        %v1746 = vpop.f32.mrf.mxu0
        %v1747 = vadd.f32 %v1135, %v1746
        %v1748 = vpop.f32.mrf.mxu0
        %v1749 = vadd.f32 %v1137, %v1748
        %v1750 = vpop.f32.mrf.mxu0
        %v1751 = vadd.f32 %v1139, %v1750
        %v1752 = vpop.f32.mrf.mxu0
        %v1753 = vadd.f32 %v1141, %v1752
        %1754 = vmatprep.mubr.bf16.mxu0 0
        %1755 = vmatmul.mubr.bf16.gmra.mxu0 %v1463
        %v1756 = vpop.f32.mrf.mxu0
        %v1757 = vadd.f32 %v1145, %v1756
        %v1758 = vpop.f32.mrf.mxu0
        %v1759 = vadd.f32 %v1147, %v1758
        %v1760 = vpop.f32.mrf.mxu0
        %v1761 = vadd.f32 %v1149, %v1760
        %v1762 = vpop.f32.mrf.mxu0
        %v1763 = vadd.f32 %v1151, %v1762
        %1764 = vmatprep.mubr.bf16.mxu0 0
        %1765 = vmatmul.mubr.bf16.gmra.mxu0 %v1466
        %v1766 = vpop.f32.mrf.mxu0
        %v1767 = vadd.f32 %v1155, %v1766
        %v1768 = vpop.f32.mrf.mxu0
        %v1769 = vadd.f32 %v1157, %v1768
        %v1770 = vpop.f32.mrf.mxu0
        %v1771 = vadd.f32 %v1159, %v1770
        %v1772 = vpop.f32.mrf.mxu0
        %v1773 = vadd.f32 %v1161, %v1772
        %1774 = vmatprep.mubr.bf16.mxu0 0
        %1775 = vmatmul.mubr.bf16.gmra.mxu0 %v1469
        %v1776 = vpop.f32.mrf.mxu0
        %v1777 = vadd.f32 %v1165, %v1776
        %v1778 = vpop.f32.mrf.mxu0
        %v1779 = vadd.f32 %v1167, %v1778
        %v1780 = vpop.f32.mrf.mxu0
        %v1781 = vadd.f32 %v1169, %v1780
        %v1782 = vpop.f32.mrf.mxu0
        %v1783 = vadd.f32 %v1171, %v1782
        %1784 = vmatprep.mubr.bf16.mxu0 0
        %1785 = vmatmul.mubr.bf16.gmra.mxu0 %v1472
        %v1786 = vpop.f32.mrf.mxu0
        %v1787 = vadd.f32 %v1175, %v1786
        %v1788 = vpop.f32.mrf.mxu0
        %v1789 = vadd.f32 %v1177, %v1788
        %v1790 = vpop.f32.mrf.mxu0
        %v1791 = vadd.f32 %v1179, %v1790
        %v1792 = vpop.f32.mrf.mxu0
        %v1793 = vadd.f32 %v1181, %v1792
        %1794 = vmatprep.mubr.bf16.mxu0 0
        %1795 = vmatmul.mubr.bf16.gmra.mxu0 %v1475
        %v1796 = vpop.f32.mrf.mxu0
        %v1797 = vadd.f32 %v1185, %v1796
        %v1798 = vpop.f32.mrf.mxu0
        %v1799 = vadd.f32 %v1187, %v1798
        %v1800 = vpop.f32.mrf.mxu0
        %v1801 = vadd.f32 %v1189, %v1800
        %v1802 = vpop.f32.mrf.mxu0
        %v1803 = vadd.f32 %v1191, %v1802
        %1804 = vmatprep.mubr.bf16.mxu0 0
        %1805 = vmatmul.mubr.bf16.gmra.mxu0 %v1478
        %v1806 = vpop.f32.mrf.mxu0
        %v1807 = vadd.f32 %v1195, %v1806
        %v1808 = vpop.f32.mrf.mxu0
        %v1809 = vadd.f32 %v1197, %v1808
        %v1810 = vpop.f32.mrf.mxu0
        %v1811 = vadd.f32 %v1199, %v1810
        %v1812 = vpop.f32.mrf.mxu0
        %v1813 = vadd.f32 %v1201, %v1812
        %1814 = vmatprep.mubr.bf16.mxu0 0
        %1815 = vmatmul.mubr.bf16.gmra.mxu0 %v1481
        %v1816 = vpop.f32.mrf.mxu0
        %v1817 = vadd.f32 %v1205, %v1816
        %v1818 = vpop.f32.mrf.mxu0
        %v1819 = vadd.f32 %v1207, %v1818
        %v1820 = vpop.f32.mrf.mxu0
        %v1821 = vadd.f32 %v1209, %v1820
        %v1822 = vpop.f32.mrf.mxu0
        %v1823 = vadd.f32 %v1211, %v1822
        %1824 = vmatprep.mubr.bf16.mxu0 0
        %1825 = vmatmul.mubr.bf16.gmra.mxu0 %v1484
        %v1826 = vpop.f32.mrf.mxu0
        %v1827 = vadd.f32 %v1215, %v1826
        %v1828 = vpop.f32.mrf.mxu0
        %v1829 = vadd.f32 %v1217, %v1828
        %v1830 = vpop.f32.mrf.mxu0
        %v1831 = vadd.f32 %v1219, %v1830
        %v1832 = vpop.f32.mrf.mxu0
        %v1833 = vadd.f32 %v1221, %v1832
        %1834 = vmatprep.mubr.bf16.mxu0 0
        %1835 = vmatmul.mubr.bf16.gmra.mxu0 %v1487
        %v1836 = vpop.f32.mrf.mxu0
        %v1837 = vadd.f32 %v1225, %v1836
        %v1838 = vpop.f32.mrf.mxu0
        %v1839 = vadd.f32 %v1227, %v1838
        %v1840 = vpop.f32.mrf.mxu0
        %v1841 = vadd.f32 %v1229, %v1840
        %v1842 = vpop.f32.mrf.mxu0
        %v1843 = vadd.f32 %v1231, %v1842
        %1844 = vdwg.mxu0
        %s1845 = scalar_lea.vmem %s1, 512
        %v1846 = vld [vmem:[%s1845] sm:$0xf]
        %v1847 = vld [vmem:[%s1845 + $0x4] sm:$0xf]
        %v1848 = vld [vmem:[%s1845 + $0x8] sm:$0xf]
        %v1849 = vld [vmem:[%s1845 + $0xc] sm:$0xf]
        %v1850 = vld [vmem:[%s1845 + $0x10] sm:$0xf]
        %v1851 = vld [vmem:[%s1845 + $0x14] sm:$0xf]
        %v1852 = vld [vmem:[%s1845 + $0x18] sm:$0xf]
        %v1853 = vld [vmem:[%s1845 + $0x1c] sm:$0xf]
        %v1854 = vld [vmem:[%s1845 + $0x20] sm:$0xf]
        %v1855 = vld [vmem:[%s1845 + $0x24] sm:$0xf]
        %v1856 = vld [vmem:[%s1845 + $0x28] sm:$0xf]
        %v1857 = vld [vmem:[%s1845 + $0x2c] sm:$0xf]
        %v1858 = vld [vmem:[%s1845 + $0x30] sm:$0xf]
        %v1859 = vld [vmem:[%s1845 + $0x34] sm:$0xf]
        %v1860 = vld [vmem:[%s1845 + $0x38] sm:$0xf]
        %v1861 = vld [vmem:[%s1845 + $0x3c] sm:$0xf]
        %v1862 = vld [vmem:[%s1845 + $0x40] sm:$0xf]
        %v1863 = vld [vmem:[%s1845 + $0x44] sm:$0xf]
        %v1864 = vld [vmem:[%s1845 + $0x48] sm:$0xf]
        %v1865 = vld [vmem:[%s1845 + $0x4c] sm:$0xf]
        %v1866 = vld [vmem:[%s1845 + $0x50] sm:$0xf]
        %v1867 = vld [vmem:[%s1845 + $0x54] sm:$0xf]
        %v1868 = vld [vmem:[%s1845 + $0x58] sm:$0xf]
        %v1869 = vld [vmem:[%s1845 + $0x5c] sm:$0xf]
        %v1870 = vld [vmem:[%s1845 + $0x60] sm:$0xf]
        %v1871 = vld [vmem:[%s1845 + $0x64] sm:$0xf]
        %v1872 = vld [vmem:[%s1845 + $0x68] sm:$0xf]
        %v1873 = vld [vmem:[%s1845 + $0x6c] sm:$0xf]
        %v1874 = vld [vmem:[%s1845 + $0x70] sm:$0xf]
        %v1875 = vld [vmem:[%s1845 + $0x74] sm:$0xf]
        %v1876 = vld [vmem:[%s1845 + $0x78] sm:$0xf]
        %v1877 = vld [vmem:[%s1845 + $0x7c] sm:$0xf]
        %v1878 = vld [vmem:[%s1845 + $0x80] sm:$0xf]
        %v1879 = vld [vmem:[%s1845 + $0x84] sm:$0xf]
        %v1880 = vld [vmem:[%s1845 + $0x88] sm:$0xf]
        %v1881 = vld [vmem:[%s1845 + $0x8c] sm:$0xf]
        %v1882 = vld [vmem:[%s1845 + $0x90] sm:$0xf]
        %v1883 = vld [vmem:[%s1845 + $0x94] sm:$0xf]
        %v1884 = vld [vmem:[%s1845 + $0x98] sm:$0xf]
        %v1885 = vld [vmem:[%s1845 + $0x9c] sm:$0xf]
        %v1886 = vld [vmem:[%s1845 + $0xa0] sm:$0xf]
        %v1887 = vld [vmem:[%s1845 + $0xa4] sm:$0xf]
        %v1888 = vld [vmem:[%s1845 + $0xa8] sm:$0xf]
        %v1889 = vld [vmem:[%s1845 + $0xac] sm:$0xf]
        %v1890 = vld [vmem:[%s1845 + $0xb0] sm:$0xf]
        %v1891 = vld [vmem:[%s1845 + $0xb4] sm:$0xf]
        %v1892 = vld [vmem:[%s1845 + $0xb8] sm:$0xf]
        %v1893 = vld [vmem:[%s1845 + $0xbc] sm:$0xf]
        %v1894 = vld [vmem:[%s1845 + $0xc0] sm:$0xf]
        %v1895 = vld [vmem:[%s1845 + $0xc4] sm:$0xf]
        %v1896 = vld [vmem:[%s1845 + $0xc8] sm:$0xf]
        %v1897 = vld [vmem:[%s1845 + $0xcc] sm:$0xf]
        %v1898 = vld [vmem:[%s1845 + $0xd0] sm:$0xf]
        %v1899 = vld [vmem:[%s1845 + $0xd4] sm:$0xf]
        %v1900 = vld [vmem:[%s1845 + $0xd8] sm:$0xf]
        %v1901 = vld [vmem:[%s1845 + $0xdc] sm:$0xf]
        %v1902 = vld [vmem:[%s1845 + $0xe0] sm:$0xf]
        %v1903 = vld [vmem:[%s1845 + $0xe4] sm:$0xf]
        %v1904 = vld [vmem:[%s1845 + $0xe8] sm:$0xf]
        %v1905 = vld [vmem:[%s1845 + $0xec] sm:$0xf]
        %v1906 = vld [vmem:[%s1845 + $0xf0] sm:$0xf]
        %v1907 = vld [vmem:[%s1845 + $0xf4] sm:$0xf]
        %v1908 = vld [vmem:[%s1845 + $0xf8] sm:$0xf]
        %v1909 = vld [vmem:[%s1845 + $0xfc] sm:$0xf]
        %v1974 = vunpack.c.l.b16 %v1846
        %v1975 = vunpack.c.l.b16 %v1847
        %v1976 = vunpack.c.l.b16 %v1848
        %v1977 = vunpack.c.l.b16 %v1849
        %v1978 = vunpack.c.l.b16 %v1850
        %v1979 = vunpack.c.l.b16 %v1851
        %v1980 = vunpack.c.l.b16 %v1852
        %v1981 = vunpack.c.l.b16 %v1853
        %v1982 = vunpack.c.l.b16 %v1854
        %v1983 = vunpack.c.l.b16 %v1855
        %v1984 = vunpack.c.l.b16 %v1856
        %v1985 = vunpack.c.l.b16 %v1857
        %v1986 = vunpack.c.l.b16 %v1858
        %v1987 = vunpack.c.l.b16 %v1859
        %v1988 = vunpack.c.l.b16 %v1860
        %v1989 = vunpack.c.l.b16 %v1861
        %v1990 = vunpack.c.l.b16 %v1862
        %v1991 = vunpack.c.l.b16 %v1863
        %v1992 = vunpack.c.l.b16 %v1864
        %v1993 = vunpack.c.l.b16 %v1865
        %v1994 = vunpack.c.l.b16 %v1866
        %v1995 = vunpack.c.l.b16 %v1867
        %v1996 = vunpack.c.l.b16 %v1868
        %v1997 = vunpack.c.l.b16 %v1869
        %v1998 = vunpack.c.l.b16 %v1870
        %v1999 = vunpack.c.l.b16 %v1871
        %v2000 = vunpack.c.l.b16 %v1872
        %v2001 = vunpack.c.l.b16 %v1873
        %v2002 = vunpack.c.l.b16 %v1874
        %v2003 = vunpack.c.l.b16 %v1875
        %v2004 = vunpack.c.l.b16 %v1876
        %v2005 = vunpack.c.l.b16 %v1877
        %v2006 = vunpack.c.l.b16 %v1878
        %v2007 = vunpack.c.l.b16 %v1879
        %v2008 = vunpack.c.l.b16 %v1880
        %v2009 = vunpack.c.l.b16 %v1881
        %v2010 = vunpack.c.l.b16 %v1882
        %v2011 = vunpack.c.l.b16 %v1883
        %v2012 = vunpack.c.l.b16 %v1884
        %v2013 = vunpack.c.l.b16 %v1885
        %v2014 = vunpack.c.l.b16 %v1886
        %v2015 = vunpack.c.l.b16 %v1887
        %v2016 = vunpack.c.l.b16 %v1888
        %v2017 = vunpack.c.l.b16 %v1889
        %v2018 = vunpack.c.l.b16 %v1890
        %v2019 = vunpack.c.l.b16 %v1891
        %v2020 = vunpack.c.l.b16 %v1892
        %v2021 = vunpack.c.l.b16 %v1893
        %v2022 = vunpack.c.l.b16 %v1894
        %v2023 = vunpack.c.l.b16 %v1895
        %v2024 = vunpack.c.l.b16 %v1896
        %v2025 = vunpack.c.l.b16 %v1897
        %v2026 = vunpack.c.l.b16 %v1898
        %v2027 = vunpack.c.l.b16 %v1899
        %v2028 = vunpack.c.l.b16 %v1900
        %v2029 = vunpack.c.l.b16 %v1901
        %v2030 = vunpack.c.l.b16 %v1902
        %v2031 = vunpack.c.l.b16 %v1903
        %v2032 = vunpack.c.l.b16 %v1904
        %v2033 = vunpack.c.l.b16 %v1905
        %v2034 = vunpack.c.l.b16 %v1906
        %v2035 = vunpack.c.l.b16 %v1907
        %v2036 = vunpack.c.l.b16 %v1908
        %v2037 = vunpack.c.l.b16 %v1909
        %v2038 = vpack.c.b16 %v1975, %v1974
        %v2039 = vpack.c.b16 %v1977, %v1976
        %v2040 = vpack.c.b16 %v1979, %v1978
        %v2041 = vpack.c.b16 %v1981, %v1980
        %v2042 = vpack.c.b16 %v1983, %v1982
        %v2043 = vpack.c.b16 %v1985, %v1984
        %v2044 = vpack.c.b16 %v1987, %v1986
        %v2045 = vpack.c.b16 %v1989, %v1988
        %v2046 = vpack.c.b16 %v1991, %v1990
        %v2047 = vpack.c.b16 %v1993, %v1992
        %v2048 = vpack.c.b16 %v1995, %v1994
        %v2049 = vpack.c.b16 %v1997, %v1996
        %v2050 = vpack.c.b16 %v1999, %v1998
        %v2051 = vpack.c.b16 %v2001, %v2000
        %v2052 = vpack.c.b16 %v2003, %v2002
        %v2053 = vpack.c.b16 %v2005, %v2004
        %v2054 = vpack.c.b16 %v2007, %v2006
        %v2055 = vpack.c.b16 %v2009, %v2008
        %v2056 = vpack.c.b16 %v2011, %v2010
        %v2057 = vpack.c.b16 %v2013, %v2012
        %v2058 = vpack.c.b16 %v2015, %v2014
        %v2059 = vpack.c.b16 %v2017, %v2016
        %v2060 = vpack.c.b16 %v2019, %v2018
        %v2061 = vpack.c.b16 %v2021, %v2020
        %v2062 = vpack.c.b16 %v2023, %v2022
        %v2063 = vpack.c.b16 %v2025, %v2024
        %v2064 = vpack.c.b16 %v2027, %v2026
        %v2065 = vpack.c.b16 %v2029, %v2028
        %v2066 = vpack.c.b16 %v2031, %v2030
        %v2067 = vpack.c.b16 %v2033, %v2032
        %v2068 = vpack.c.b16 %v2035, %v2034
        %v2069 = vpack.c.b16 %v2037, %v2036
        %v2071 = vsel %vm776, %v2038, 0
        %v2074 = vsel %vm776, %v2039, 0
        %v2077 = vsel %vm776, %v2040, 0
        %v2080 = vsel %vm776, %v2041, 0
        %v2083 = vsel %vm776, %v2042, 0
        %v2086 = vsel %vm776, %v2043, 0
        %v2089 = vsel %vm776, %v2044, 0
        %v2092 = vsel %vm776, %v2045, 0
        %v2095 = vsel %vm776, %v2046, 0
        %v2098 = vsel %vm776, %v2047, 0
        %v2101 = vsel %vm776, %v2048, 0
        %v2104 = vsel %vm776, %v2049, 0
        %v2107 = vsel %vm776, %v2050, 0
        %v2110 = vsel %vm776, %v2051, 0
        %v2113 = vsel %vm776, %v2052, 0
        %v2116 = vsel %vm776, %v2053, 0
        %v2119 = vsel %vm776, %v2054, 0
        %v2122 = vsel %vm776, %v2055, 0
        %v2125 = vsel %vm776, %v2056, 0
        %v2128 = vsel %vm776, %v2057, 0
        %v2131 = vsel %vm776, %v2058, 0
        %v2134 = vsel %vm776, %v2059, 0
        %v2137 = vsel %vm776, %v2060, 0
        %v2140 = vsel %vm776, %v2061, 0
        %v2143 = vsel %vm776, %v2062, 0
        %v2146 = vsel %vm776, %v2063, 0
        %v2149 = vsel %vm776, %v2064, 0
        %v2152 = vsel %vm776, %v2065, 0
        %v2155 = vsel %vm776, %v2066, 0
        %v2158 = vsel %vm776, %v2067, 0
        %v2161 = vsel %vm776, %v2068, 0
        %v2164 = vsel %vm776, %v2069, 0
        %v2167 = vsel %vm873, %v480, 0
        %2169 = vmatprep.subr.bf16.mxu0 0
        %2170 = vmatpush1.bf16.msra.mxu0 0
        %2171 = vmatprep.subr.bf16.mxu0 %v2167
        %2172 = vmatpush1.bf16.msra.mxu0 %v878
        %2173 = vmatprep.subr.bf16.mxu0 %v479
        %2174 = vmatpush1.bf16.msra.mxu0 %v418
        %2175 = vmatprep.subr.bf16.mxu0 %v478
        %2176 = vmatpush1.bf16.msra.mxu0 %v417
        %2177 = vmatprep.subr.bf16.mxu0 %v477
        %2178 = vmatpush1.bf16.msra.mxu0 %v416
        %2179 = vmatprep.subr.bf16.mxu0 %v476
        %2180 = vmatpush1.bf16.msra.mxu0 %v415
        %2181 = vmatprep.subr.bf16.mxu0 %v475
        %2182 = vmatpush1.bf16.msra.mxu0 %v414
        %2183 = vmatprep.subr.bf16.mxu0 %v474
        %2184 = vmatpush1.bf16.msra.mxu0 %v413
        %2185 = vmatprep.subr.bf16.mxu0 0
        %2186 = vmatpush2.bf16.msra.mxu0 0
        %2187 = vmatprep.subr.bf16.mxu0 0
        %2188 = vmatpush2.bf16.msra.mxu0 0
        %2189 = vmatprep.subr.bf16.mxu0 0
        %2190 = vmatpush2.bf16.msra.mxu0 0
        %2191 = vmatprep.subr.bf16.mxu0 0
        %2192 = vmatpush2.bf16.msra.mxu0 0
        %2193 = vmatprep.subr.bf16.mxu0 0
        %2194 = vmatpush2.bf16.msra.mxu0 0
        %2195 = vmatprep.subr.bf16.mxu0 0
        %2196 = vmatpush2.bf16.msra.mxu0 0
        %2197 = vmatprep.subr.bf16.mxu0 0
        %2198 = vmatpush2.bf16.msra.mxu0 0
        %2199 = vmatprep.subr.bf16.mxu0 0
        %2200 = vmatpush2.bf16.msra.mxu0 0
        %2201 = vmatprep.mubr.bf16.mxu0 0
        %2202 = vmatmul.mubr.bf16.gmra.mxu0 %v2071
        %v2203 = vpop.f32.mrf.mxu0
        %v2204 = vadd.f32 0.0, %v2203
        %v2205 = vpop.f32.mrf.mxu0
        %v2206 = vadd.f32 0.0, %v2205
        %v2207 = vpop.f32.mrf.mxu0
        %v2208 = vadd.f32 0.0, %v2207
        %v2209 = vpop.f32.mrf.mxu0
        %v2210 = vadd.f32 0.0, %v2209
        %2211 = vmatprep.mubr.bf16.mxu0 0
        %2212 = vmatmul.mubr.bf16.gmra.mxu0 %v2074
        %v2213 = vpop.f32.mrf.mxu0
        %v2214 = vadd.f32 0.0, %v2213
        %v2215 = vpop.f32.mrf.mxu0
        %v2216 = vadd.f32 0.0, %v2215
        %v2217 = vpop.f32.mrf.mxu0
        %v2218 = vadd.f32 0.0, %v2217
        %v2219 = vpop.f32.mrf.mxu0
        %v2220 = vadd.f32 0.0, %v2219
        %2221 = vmatprep.mubr.bf16.mxu0 0
        %2222 = vmatmul.mubr.bf16.gmra.mxu0 %v2077
        %v2223 = vpop.f32.mrf.mxu0
        %v2224 = vadd.f32 0.0, %v2223
        %v2225 = vpop.f32.mrf.mxu0
        %v2226 = vadd.f32 0.0, %v2225
        %v2227 = vpop.f32.mrf.mxu0
        %v2228 = vadd.f32 0.0, %v2227
        %v2229 = vpop.f32.mrf.mxu0
        %v2230 = vadd.f32 0.0, %v2229
        %2231 = vmatprep.mubr.bf16.mxu0 0
        %2232 = vmatmul.mubr.bf16.gmra.mxu0 %v2080
        %v2233 = vpop.f32.mrf.mxu0
        %v2234 = vadd.f32 0.0, %v2233
        %v2235 = vpop.f32.mrf.mxu0
        %v2236 = vadd.f32 0.0, %v2235
        %v2237 = vpop.f32.mrf.mxu0
        %v2238 = vadd.f32 0.0, %v2237
        %v2239 = vpop.f32.mrf.mxu0
        %v2240 = vadd.f32 0.0, %v2239
        %2241 = vmatprep.mubr.bf16.mxu0 0
        %2242 = vmatmul.mubr.bf16.gmra.mxu0 %v2083
        %v2243 = vpop.f32.mrf.mxu0
        %v2244 = vadd.f32 0.0, %v2243
        %v2245 = vpop.f32.mrf.mxu0
        %v2246 = vadd.f32 0.0, %v2245
        %v2247 = vpop.f32.mrf.mxu0
        %v2248 = vadd.f32 0.0, %v2247
        %v2249 = vpop.f32.mrf.mxu0
        %v2250 = vadd.f32 0.0, %v2249
        %2251 = vmatprep.mubr.bf16.mxu0 0
        %2252 = vmatmul.mubr.bf16.gmra.mxu0 %v2086
        %v2253 = vpop.f32.mrf.mxu0
        %v2254 = vadd.f32 0.0, %v2253
        %v2255 = vpop.f32.mrf.mxu0
        %v2256 = vadd.f32 0.0, %v2255
        %v2257 = vpop.f32.mrf.mxu0
        %v2258 = vadd.f32 0.0, %v2257
        %v2259 = vpop.f32.mrf.mxu0
        %v2260 = vadd.f32 0.0, %v2259
        %2261 = vmatprep.mubr.bf16.mxu0 0
        %2262 = vmatmul.mubr.bf16.gmra.mxu0 %v2089
        %v2263 = vpop.f32.mrf.mxu0
        %v2264 = vadd.f32 0.0, %v2263
        %v2265 = vpop.f32.mrf.mxu0
        %v2266 = vadd.f32 0.0, %v2265
        %v2267 = vpop.f32.mrf.mxu0
        %v2268 = vadd.f32 0.0, %v2267
        %v2269 = vpop.f32.mrf.mxu0
        %v2270 = vadd.f32 0.0, %v2269
        %2271 = vmatprep.mubr.bf16.mxu0 0
        %2272 = vmatmul.mubr.bf16.gmra.mxu0 %v2092
        %v2273 = vpop.f32.mrf.mxu0
        %v2274 = vadd.f32 0.0, %v2273
        %v2275 = vpop.f32.mrf.mxu0
        %v2276 = vadd.f32 0.0, %v2275
        %v2277 = vpop.f32.mrf.mxu0
        %v2278 = vadd.f32 0.0, %v2277
        %v2279 = vpop.f32.mrf.mxu0
        %v2280 = vadd.f32 0.0, %v2279
        %2281 = vmatprep.mubr.bf16.mxu0 0
        %2282 = vmatmul.mubr.bf16.gmra.mxu0 %v2095
        %v2283 = vpop.f32.mrf.mxu0
        %v2284 = vadd.f32 0.0, %v2283
        %v2285 = vpop.f32.mrf.mxu0
        %v2286 = vadd.f32 0.0, %v2285
        %v2287 = vpop.f32.mrf.mxu0
        %v2288 = vadd.f32 0.0, %v2287
        %v2289 = vpop.f32.mrf.mxu0
        %v2290 = vadd.f32 0.0, %v2289
        %2291 = vmatprep.mubr.bf16.mxu0 0
        %2292 = vmatmul.mubr.bf16.gmra.mxu0 %v2098
        %v2293 = vpop.f32.mrf.mxu0
        %v2294 = vadd.f32 0.0, %v2293
        %v2295 = vpop.f32.mrf.mxu0
        %v2296 = vadd.f32 0.0, %v2295
        %v2297 = vpop.f32.mrf.mxu0
        %v2298 = vadd.f32 0.0, %v2297
        %v2299 = vpop.f32.mrf.mxu0
        %v2300 = vadd.f32 0.0, %v2299
        %2301 = vmatprep.mubr.bf16.mxu0 0
        %2302 = vmatmul.mubr.bf16.gmra.mxu0 %v2101
        %v2303 = vpop.f32.mrf.mxu0
        %v2304 = vadd.f32 0.0, %v2303
        %v2305 = vpop.f32.mrf.mxu0
        %v2306 = vadd.f32 0.0, %v2305
        %v2307 = vpop.f32.mrf.mxu0
        %v2308 = vadd.f32 0.0, %v2307
        %v2309 = vpop.f32.mrf.mxu0
        %v2310 = vadd.f32 0.0, %v2309
        %2311 = vmatprep.mubr.bf16.mxu0 0
        %2312 = vmatmul.mubr.bf16.gmra.mxu0 %v2104
        %v2313 = vpop.f32.mrf.mxu0
        %v2314 = vadd.f32 0.0, %v2313
        %v2315 = vpop.f32.mrf.mxu0
        %v2316 = vadd.f32 0.0, %v2315
        %v2317 = vpop.f32.mrf.mxu0
        %v2318 = vadd.f32 0.0, %v2317
        %v2319 = vpop.f32.mrf.mxu0
        %v2320 = vadd.f32 0.0, %v2319
        %2321 = vmatprep.mubr.bf16.mxu0 0
        %2322 = vmatmul.mubr.bf16.gmra.mxu0 %v2107
        %v2323 = vpop.f32.mrf.mxu0
        %v2324 = vadd.f32 0.0, %v2323
        %v2325 = vpop.f32.mrf.mxu0
        %v2326 = vadd.f32 0.0, %v2325
        %v2327 = vpop.f32.mrf.mxu0
        %v2328 = vadd.f32 0.0, %v2327
        %v2329 = vpop.f32.mrf.mxu0
        %v2330 = vadd.f32 0.0, %v2329
        %2331 = vmatprep.mubr.bf16.mxu0 0
        %2332 = vmatmul.mubr.bf16.gmra.mxu0 %v2110
        %v2333 = vpop.f32.mrf.mxu0
        %v2334 = vadd.f32 0.0, %v2333
        %v2335 = vpop.f32.mrf.mxu0
        %v2336 = vadd.f32 0.0, %v2335
        %v2337 = vpop.f32.mrf.mxu0
        %v2338 = vadd.f32 0.0, %v2337
        %v2339 = vpop.f32.mrf.mxu0
        %v2340 = vadd.f32 0.0, %v2339
        %2341 = vmatprep.mubr.bf16.mxu0 0
        %2342 = vmatmul.mubr.bf16.gmra.mxu0 %v2113
        %v2343 = vpop.f32.mrf.mxu0
        %v2344 = vadd.f32 0.0, %v2343
        %v2345 = vpop.f32.mrf.mxu0
        %v2346 = vadd.f32 0.0, %v2345
        %v2347 = vpop.f32.mrf.mxu0
        %v2348 = vadd.f32 0.0, %v2347
        %v2349 = vpop.f32.mrf.mxu0
        %v2350 = vadd.f32 0.0, %v2349
        %2351 = vmatprep.mubr.bf16.mxu0 0
        %2352 = vmatmul.mubr.bf16.gmra.mxu0 %v2116
        %v2353 = vpop.f32.mrf.mxu0
        %v2354 = vadd.f32 0.0, %v2353
        %v2355 = vpop.f32.mrf.mxu0
        %v2356 = vadd.f32 0.0, %v2355
        %v2357 = vpop.f32.mrf.mxu0
        %v2358 = vadd.f32 0.0, %v2357
        %v2359 = vpop.f32.mrf.mxu0
        %v2360 = vadd.f32 0.0, %v2359
        %2361 = vmatprep.mubr.bf16.mxu0 0
        %2362 = vmatmul.mubr.bf16.gmra.mxu0 %v2119
        %v2363 = vpop.f32.mrf.mxu0
        %v2364 = vadd.f32 0.0, %v2363
        %v2365 = vpop.f32.mrf.mxu0
        %v2366 = vadd.f32 0.0, %v2365
        %v2367 = vpop.f32.mrf.mxu0
        %v2368 = vadd.f32 0.0, %v2367
        %v2369 = vpop.f32.mrf.mxu0
        %v2370 = vadd.f32 0.0, %v2369
        %2371 = vmatprep.mubr.bf16.mxu0 0
        %2372 = vmatmul.mubr.bf16.gmra.mxu0 %v2122
        %v2373 = vpop.f32.mrf.mxu0
        %v2374 = vadd.f32 0.0, %v2373
        %v2375 = vpop.f32.mrf.mxu0
        %v2376 = vadd.f32 0.0, %v2375
        %v2377 = vpop.f32.mrf.mxu0
        %v2378 = vadd.f32 0.0, %v2377
        %v2379 = vpop.f32.mrf.mxu0
        %v2380 = vadd.f32 0.0, %v2379
        %2381 = vmatprep.mubr.bf16.mxu0 0
        %2382 = vmatmul.mubr.bf16.gmra.mxu0 %v2125
        %v2383 = vpop.f32.mrf.mxu0
        %v2384 = vadd.f32 0.0, %v2383
        %v2385 = vpop.f32.mrf.mxu0
        %v2386 = vadd.f32 0.0, %v2385
        %v2387 = vpop.f32.mrf.mxu0
        %v2388 = vadd.f32 0.0, %v2387
        %v2389 = vpop.f32.mrf.mxu0
        %v2390 = vadd.f32 0.0, %v2389
        %2391 = vmatprep.mubr.bf16.mxu0 0
        %2392 = vmatmul.mubr.bf16.gmra.mxu0 %v2128
        %v2393 = vpop.f32.mrf.mxu0
        %v2394 = vadd.f32 0.0, %v2393
        %v2395 = vpop.f32.mrf.mxu0
        %v2396 = vadd.f32 0.0, %v2395
        %v2397 = vpop.f32.mrf.mxu0
        %v2398 = vadd.f32 0.0, %v2397
        %v2399 = vpop.f32.mrf.mxu0
        %v2400 = vadd.f32 0.0, %v2399
        %2401 = vmatprep.mubr.bf16.mxu0 0
        %2402 = vmatmul.mubr.bf16.gmra.mxu0 %v2131
        %v2403 = vpop.f32.mrf.mxu0
        %v2404 = vadd.f32 0.0, %v2403
        %v2405 = vpop.f32.mrf.mxu0
        %v2406 = vadd.f32 0.0, %v2405
        %v2407 = vpop.f32.mrf.mxu0
        %v2408 = vadd.f32 0.0, %v2407
        %v2409 = vpop.f32.mrf.mxu0
        %v2410 = vadd.f32 0.0, %v2409
        %2411 = vmatprep.mubr.bf16.mxu0 0
        %2412 = vmatmul.mubr.bf16.gmra.mxu0 %v2134
        %v2413 = vpop.f32.mrf.mxu0
        %v2414 = vadd.f32 0.0, %v2413
        %v2415 = vpop.f32.mrf.mxu0
        %v2416 = vadd.f32 0.0, %v2415
        %v2417 = vpop.f32.mrf.mxu0
        %v2418 = vadd.f32 0.0, %v2417
        %v2419 = vpop.f32.mrf.mxu0
        %v2420 = vadd.f32 0.0, %v2419
        %2421 = vmatprep.mubr.bf16.mxu0 0
        %2422 = vmatmul.mubr.bf16.gmra.mxu0 %v2137
        %v2423 = vpop.f32.mrf.mxu0
        %v2424 = vadd.f32 0.0, %v2423
        %v2425 = vpop.f32.mrf.mxu0
        %v2426 = vadd.f32 0.0, %v2425
        %v2427 = vpop.f32.mrf.mxu0
        %v2428 = vadd.f32 0.0, %v2427
        %v2429 = vpop.f32.mrf.mxu0
        %v2430 = vadd.f32 0.0, %v2429
        %2431 = vmatprep.mubr.bf16.mxu0 0
        %2432 = vmatmul.mubr.bf16.gmra.mxu0 %v2140
        %v2433 = vpop.f32.mrf.mxu0
        %v2434 = vadd.f32 0.0, %v2433
        %v2435 = vpop.f32.mrf.mxu0
        %v2436 = vadd.f32 0.0, %v2435
        %v2437 = vpop.f32.mrf.mxu0
        %v2438 = vadd.f32 0.0, %v2437
        %v2439 = vpop.f32.mrf.mxu0
        %v2440 = vadd.f32 0.0, %v2439
        %2441 = vmatprep.mubr.bf16.mxu0 0
        %2442 = vmatmul.mubr.bf16.gmra.mxu0 %v2143
        %v2443 = vpop.f32.mrf.mxu0
        %v2444 = vadd.f32 0.0, %v2443
        %v2445 = vpop.f32.mrf.mxu0
        %v2446 = vadd.f32 0.0, %v2445
        %v2447 = vpop.f32.mrf.mxu0
        %v2448 = vadd.f32 0.0, %v2447
        %v2449 = vpop.f32.mrf.mxu0
        %v2450 = vadd.f32 0.0, %v2449
        %2451 = vmatprep.mubr.bf16.mxu0 0
        %2452 = vmatmul.mubr.bf16.gmra.mxu0 %v2146
        %v2453 = vpop.f32.mrf.mxu0
        %v2454 = vadd.f32 0.0, %v2453
        %v2455 = vpop.f32.mrf.mxu0
        %v2456 = vadd.f32 0.0, %v2455
        %v2457 = vpop.f32.mrf.mxu0
        %v2458 = vadd.f32 0.0, %v2457
        %v2459 = vpop.f32.mrf.mxu0
        %v2460 = vadd.f32 0.0, %v2459
        %2461 = vmatprep.mubr.bf16.mxu0 0
        %2462 = vmatmul.mubr.bf16.gmra.mxu0 %v2149
        %v2463 = vpop.f32.mrf.mxu0
        %v2464 = vadd.f32 0.0, %v2463
        %v2465 = vpop.f32.mrf.mxu0
        %v2466 = vadd.f32 0.0, %v2465
        %v2467 = vpop.f32.mrf.mxu0
        %v2468 = vadd.f32 0.0, %v2467
        %v2469 = vpop.f32.mrf.mxu0
        %v2470 = vadd.f32 0.0, %v2469
        %2471 = vmatprep.mubr.bf16.mxu0 0
        %2472 = vmatmul.mubr.bf16.gmra.mxu0 %v2152
        %v2473 = vpop.f32.mrf.mxu0
        %v2474 = vadd.f32 0.0, %v2473
        %v2475 = vpop.f32.mrf.mxu0
        %v2476 = vadd.f32 0.0, %v2475
        %v2477 = vpop.f32.mrf.mxu0
        %v2478 = vadd.f32 0.0, %v2477
        %v2479 = vpop.f32.mrf.mxu0
        %v2480 = vadd.f32 0.0, %v2479
        %2481 = vmatprep.mubr.bf16.mxu0 0
        %2482 = vmatmul.mubr.bf16.gmra.mxu0 %v2155
        %v2483 = vpop.f32.mrf.mxu0
        %v2484 = vadd.f32 0.0, %v2483
        %v2485 = vpop.f32.mrf.mxu0
        %v2486 = vadd.f32 0.0, %v2485
        %v2487 = vpop.f32.mrf.mxu0
        %v2488 = vadd.f32 0.0, %v2487
        %v2489 = vpop.f32.mrf.mxu0
        %v2490 = vadd.f32 0.0, %v2489
        %2491 = vmatprep.mubr.bf16.mxu0 0
        %2492 = vmatmul.mubr.bf16.gmra.mxu0 %v2158
        %v2493 = vpop.f32.mrf.mxu0
        %v2494 = vadd.f32 0.0, %v2493
        %v2495 = vpop.f32.mrf.mxu0
        %v2496 = vadd.f32 0.0, %v2495
        %v2497 = vpop.f32.mrf.mxu0
        %v2498 = vadd.f32 0.0, %v2497
        %v2499 = vpop.f32.mrf.mxu0
        %v2500 = vadd.f32 0.0, %v2499
        %2501 = vmatprep.mubr.bf16.mxu0 0
        %2502 = vmatmul.mubr.bf16.gmra.mxu0 %v2161
        %v2503 = vpop.f32.mrf.mxu0
        %v2504 = vadd.f32 0.0, %v2503
        %v2505 = vpop.f32.mrf.mxu0
        %v2506 = vadd.f32 0.0, %v2505
        %v2507 = vpop.f32.mrf.mxu0
        %v2508 = vadd.f32 0.0, %v2507
        %v2509 = vpop.f32.mrf.mxu0
        %v2510 = vadd.f32 0.0, %v2509
        %2511 = vmatprep.mubr.bf16.mxu0 0
        %2512 = vmatmul.mubr.bf16.gmra.mxu0 %v2164
        %v2513 = vpop.f32.mrf.mxu0
        %v2514 = vadd.f32 0.0, %v2513
        %v2515 = vpop.f32.mrf.mxu0
        %v2516 = vadd.f32 0.0, %v2515
        %v2517 = vpop.f32.mrf.mxu0
        %v2518 = vadd.f32 0.0, %v2517
        %v2519 = vpop.f32.mrf.mxu0
        %v2520 = vadd.f32 0.0, %v2519
        %2521 = vdwg.mxu0
        %v2522 = vadd.f32 %v1527, %v2204
        %v2523 = vadd.f32 %v1529, %v2206
        %v2524 = vadd.f32 %v1531, %v2208
        %v2525 = vadd.f32 %v1533, %v2210
        %v2526 = vadd.f32 %v1537, %v2214
        %v2527 = vadd.f32 %v1539, %v2216
        %v2528 = vadd.f32 %v1541, %v2218
        %v2529 = vadd.f32 %v1543, %v2220
        %v2530 = vadd.f32 %v1547, %v2224
        %v2531 = vadd.f32 %v1549, %v2226
        %v2532 = vadd.f32 %v1551, %v2228
        %v2533 = vadd.f32 %v1553, %v2230
        %v2534 = vadd.f32 %v1557, %v2234
        %v2535 = vadd.f32 %v1559, %v2236
        %v2536 = vadd.f32 %v1561, %v2238
        %v2537 = vadd.f32 %v1563, %v2240
        %v2538 = vadd.f32 %v1567, %v2244
        %v2539 = vadd.f32 %v1569, %v2246
        %v2540 = vadd.f32 %v1571, %v2248
        %v2541 = vadd.f32 %v1573, %v2250
        %v2542 = vadd.f32 %v1577, %v2254
        %v2543 = vadd.f32 %v1579, %v2256
        %v2544 = vadd.f32 %v1581, %v2258
        %v2545 = vadd.f32 %v1583, %v2260
        %v2546 = vadd.f32 %v1587, %v2264
        %v2547 = vadd.f32 %v1589, %v2266
        %v2548 = vadd.f32 %v1591, %v2268
        %v2549 = vadd.f32 %v1593, %v2270
        %v2550 = vadd.f32 %v1597, %v2274
        %v2551 = vadd.f32 %v1599, %v2276
        %v2552 = vadd.f32 %v1601, %v2278
        %v2553 = vadd.f32 %v1603, %v2280
        %v2554 = vadd.f32 %v1607, %v2284
        %v2555 = vadd.f32 %v1609, %v2286
        %v2556 = vadd.f32 %v1611, %v2288
        %v2557 = vadd.f32 %v1613, %v2290
        %v2558 = vadd.f32 %v1617, %v2294
        %v2559 = vadd.f32 %v1619, %v2296
        %v2560 = vadd.f32 %v1621, %v2298
        %v2561 = vadd.f32 %v1623, %v2300
        %v2562 = vadd.f32 %v1627, %v2304
        %v2563 = vadd.f32 %v1629, %v2306
        %v2564 = vadd.f32 %v1631, %v2308
        %v2565 = vadd.f32 %v1633, %v2310
        %v2566 = vadd.f32 %v1637, %v2314
        %v2567 = vadd.f32 %v1639, %v2316
        %v2568 = vadd.f32 %v1641, %v2318
        %v2569 = vadd.f32 %v1643, %v2320
        %v2570 = vadd.f32 %v1647, %v2324
        %v2571 = vadd.f32 %v1649, %v2326
        %v2572 = vadd.f32 %v1651, %v2328
        %v2573 = vadd.f32 %v1653, %v2330
        %v2574 = vadd.f32 %v1657, %v2334
        %v2575 = vadd.f32 %v1659, %v2336
        %v2576 = vadd.f32 %v1661, %v2338
        %v2577 = vadd.f32 %v1663, %v2340
        %v2578 = vadd.f32 %v1667, %v2344
        %v2579 = vadd.f32 %v1669, %v2346
        %v2580 = vadd.f32 %v1671, %v2348
        %v2581 = vadd.f32 %v1673, %v2350
        %v2582 = vadd.f32 %v1677, %v2354
        %v2583 = vadd.f32 %v1679, %v2356
        %v2584 = vadd.f32 %v1681, %v2358
        %v2585 = vadd.f32 %v1683, %v2360
        %v2586 = vadd.f32 %v1687, %v2364
        %v2587 = vadd.f32 %v1689, %v2366
        %v2588 = vadd.f32 %v1691, %v2368
        %v2589 = vadd.f32 %v1693, %v2370
        %v2590 = vadd.f32 %v1697, %v2374
        %v2591 = vadd.f32 %v1699, %v2376
        %v2592 = vadd.f32 %v1701, %v2378
        %v2593 = vadd.f32 %v1703, %v2380
        %v2594 = vadd.f32 %v1707, %v2384
        %v2595 = vadd.f32 %v1709, %v2386
        %v2596 = vadd.f32 %v1711, %v2388
        %v2597 = vadd.f32 %v1713, %v2390
        %v2598 = vadd.f32 %v1717, %v2394
        %v2599 = vadd.f32 %v1719, %v2396
        %v2600 = vadd.f32 %v1721, %v2398
        %v2601 = vadd.f32 %v1723, %v2400
        %v2602 = vadd.f32 %v1727, %v2404
        %v2603 = vadd.f32 %v1729, %v2406
        %v2604 = vadd.f32 %v1731, %v2408
        %v2605 = vadd.f32 %v1733, %v2410
        %v2606 = vadd.f32 %v1737, %v2414
        %v2607 = vadd.f32 %v1739, %v2416
        %v2608 = vadd.f32 %v1741, %v2418
        %v2609 = vadd.f32 %v1743, %v2420
        %v2610 = vadd.f32 %v1747, %v2424
        %v2611 = vadd.f32 %v1749, %v2426
        %v2612 = vadd.f32 %v1751, %v2428
        %v2613 = vadd.f32 %v1753, %v2430
        %v2614 = vadd.f32 %v1757, %v2434
        %v2615 = vadd.f32 %v1759, %v2436
        %v2616 = vadd.f32 %v1761, %v2438
        %v2617 = vadd.f32 %v1763, %v2440
        %v2618 = vadd.f32 %v1767, %v2444
        %v2619 = vadd.f32 %v1769, %v2446
        %v2620 = vadd.f32 %v1771, %v2448
        %v2621 = vadd.f32 %v1773, %v2450
        %v2622 = vadd.f32 %v1777, %v2454
        %v2623 = vadd.f32 %v1779, %v2456
        %v2624 = vadd.f32 %v1781, %v2458
        %v2625 = vadd.f32 %v1783, %v2460
        %v2626 = vadd.f32 %v1787, %v2464
        %v2627 = vadd.f32 %v1789, %v2466
        %v2628 = vadd.f32 %v1791, %v2468
        %v2629 = vadd.f32 %v1793, %v2470
        %v2630 = vadd.f32 %v1797, %v2474
        %v2631 = vadd.f32 %v1799, %v2476
        %v2632 = vadd.f32 %v1801, %v2478
        %v2633 = vadd.f32 %v1803, %v2480
        %v2634 = vadd.f32 %v1807, %v2484
        %v2635 = vadd.f32 %v1809, %v2486
        %v2636 = vadd.f32 %v1811, %v2488
        %v2637 = vadd.f32 %v1813, %v2490
        %v2638 = vadd.f32 %v1817, %v2494
        %v2639 = vadd.f32 %v1819, %v2496
        %v2640 = vadd.f32 %v1821, %v2498
        %v2641 = vadd.f32 %v1823, %v2500
        %v2642 = vadd.f32 %v1827, %v2504
        %v2643 = vadd.f32 %v1829, %v2506
        %v2644 = vadd.f32 %v1831, %v2508
        %v2645 = vadd.f32 %v1833, %v2510
        %v2646 = vadd.f32 %v1837, %v2514
        %v2647 = vadd.f32 %v1839, %v2516
        %v2648 = vadd.f32 %v1841, %v2518
        %v2649 = vadd.f32 %v1843, %v2520
        %2651 = vset.pattern.permute.xlu0 0
        %2652 = vperm.xlu0 %2651, %v222
        %v2653 = vpop.permute.xlu0 %2652
        %2656 = vset.pattern.permute.xlu0 0
        %2657 = vperm.xlu0 %2656, %v223
        %v2658 = vpop.permute.xlu0 %2657
        %2661 = vset.pattern.permute.xlu0 0
        %2662 = vperm.xlu0 %2661, %v224
        %v2663 = vpop.permute.xlu0 %2662
        %2666 = vset.pattern.permute.xlu0 0
        %2667 = vperm.xlu0 %2666, %v225
        %v2668 = vpop.permute.xlu0 %2667
        %2671 = vset.pattern.permute.xlu0 0
        %2672 = vperm.xlu0 %2671, %v226
        %v2673 = vpop.permute.xlu0 %2672
        %2676 = vset.pattern.permute.xlu0 0
        %2677 = vperm.xlu0 %2676, %v227
        %v2678 = vpop.permute.xlu0 %2677
        %2681 = vset.pattern.permute.xlu0 0
        %2682 = vperm.xlu0 %2681, %v228
        %v2683 = vpop.permute.xlu0 %2682
        %2686 = vset.pattern.permute.xlu0 0
        %2687 = vperm.xlu0 %2686, %v229
        %v2688 = vpop.permute.xlu0 %2687
        %2691 = vset.pattern.permute.xlu0 0
        %2692 = vperm.xlu0 %2691, %v230
        %v2693 = vpop.permute.xlu0 %2692
        %2696 = vset.pattern.permute.xlu0 0
        %2697 = vperm.xlu0 %2696, %v231
        %v2698 = vpop.permute.xlu0 %2697
        %2701 = vset.pattern.permute.xlu0 0
        %2702 = vperm.xlu0 %2701, %v232
        %v2703 = vpop.permute.xlu0 %2702
        %2706 = vset.pattern.permute.xlu0 0
        %2707 = vperm.xlu0 %2706, %v233
        %v2708 = vpop.permute.xlu0 %2707
        %2711 = vset.pattern.permute.xlu0 0
        %2712 = vperm.xlu0 %2711, %v234
        %v2713 = vpop.permute.xlu0 %2712
        %2716 = vset.pattern.permute.xlu0 0
        %2717 = vperm.xlu0 %2716, %v235
        %v2718 = vpop.permute.xlu0 %2717
        %2721 = vset.pattern.permute.xlu0 0
        %2722 = vperm.xlu0 %2721, %v236
        %v2723 = vpop.permute.xlu0 %2722
        %2726 = vset.pattern.permute.xlu0 0
        %2727 = vperm.xlu0 %2726, %v237
        %v2728 = vpop.permute.xlu0 %2727
        %2731 = vset.pattern.permute.xlu0 0
        %2732 = vperm.xlu0 %2731, %v238
        %v2733 = vpop.permute.xlu0 %2732
        %2736 = vset.pattern.permute.xlu0 0
        %2737 = vperm.xlu0 %2736, %v239
        %v2738 = vpop.permute.xlu0 %2737
        %2741 = vset.pattern.permute.xlu0 0
        %2742 = vperm.xlu0 %2741, %v240
        %v2743 = vpop.permute.xlu0 %2742
        %2746 = vset.pattern.permute.xlu0 0
        %2747 = vperm.xlu0 %2746, %v241
        %v2748 = vpop.permute.xlu0 %2747
        %2751 = vset.pattern.permute.xlu0 0
        %2752 = vperm.xlu0 %2751, %v242
        %v2753 = vpop.permute.xlu0 %2752
        %2756 = vset.pattern.permute.xlu0 0
        %2757 = vperm.xlu0 %2756, %v243
        %v2758 = vpop.permute.xlu0 %2757
        %2761 = vset.pattern.permute.xlu0 0
        %2762 = vperm.xlu0 %2761, %v244
        %v2763 = vpop.permute.xlu0 %2762
        %2766 = vset.pattern.permute.xlu0 0
        %2767 = vperm.xlu0 %2766, %v245
        %v2768 = vpop.permute.xlu0 %2767
        %2771 = vset.pattern.permute.xlu0 0
        %2772 = vperm.xlu0 %2771, %v246
        %v2773 = vpop.permute.xlu0 %2772
        %2776 = vset.pattern.permute.xlu0 0
        %2777 = vperm.xlu0 %2776, %v247
        %v2778 = vpop.permute.xlu0 %2777
        %2781 = vset.pattern.permute.xlu0 0
        %2782 = vperm.xlu0 %2781, %v248
        %v2783 = vpop.permute.xlu0 %2782
        %2786 = vset.pattern.permute.xlu0 0
        %2787 = vperm.xlu0 %2786, %v249
        %v2788 = vpop.permute.xlu0 %2787
        %2791 = vset.pattern.permute.xlu0 0
        %2792 = vperm.xlu0 %2791, %v250
        %v2793 = vpop.permute.xlu0 %2792
        %2796 = vset.pattern.permute.xlu0 0
        %2797 = vperm.xlu0 %2796, %v251
        %v2798 = vpop.permute.xlu0 %2797
        %2801 = vset.pattern.permute.xlu0 0
        %2802 = vperm.xlu0 %2801, %v252
        %v2803 = vpop.permute.xlu0 %2802
        %2806 = vset.pattern.permute.xlu0 0
        %2807 = vperm.xlu0 %2806, %v253
        %v2808 = vpop.permute.xlu0 %2807
        %2811 = vset.pattern.permute.xlu0 0
        %2812 = vperm.xlu0 %2811, %v254
        %v2813 = vpop.permute.xlu0 %2812
        %2816 = vset.pattern.permute.xlu0 0
        %2817 = vperm.xlu0 %2816, %v255
        %v2818 = vpop.permute.xlu0 %2817
        %2821 = vset.pattern.permute.xlu0 0
        %2822 = vperm.xlu0 %2821, %v256
        %v2823 = vpop.permute.xlu0 %2822
        %2826 = vset.pattern.permute.xlu0 0
        %2827 = vperm.xlu0 %2826, %v257
        %v2828 = vpop.permute.xlu0 %2827
        %2831 = vset.pattern.permute.xlu0 0
        %2832 = vperm.xlu0 %2831, %v258
        %v2833 = vpop.permute.xlu0 %2832
        %2836 = vset.pattern.permute.xlu0 0
        %2837 = vperm.xlu0 %2836, %v259
        %v2838 = vpop.permute.xlu0 %2837
        %2841 = vset.pattern.permute.xlu0 0
        %2842 = vperm.xlu0 %2841, %v260
        %v2843 = vpop.permute.xlu0 %2842
        %2846 = vset.pattern.permute.xlu0 0
        %2847 = vperm.xlu0 %2846, %v261
        %v2848 = vpop.permute.xlu0 %2847
        %2851 = vset.pattern.permute.xlu0 0
        %2852 = vperm.xlu0 %2851, %v262
        %v2853 = vpop.permute.xlu0 %2852
        %2856 = vset.pattern.permute.xlu0 0
        %2857 = vperm.xlu0 %2856, %v263
        %v2858 = vpop.permute.xlu0 %2857
        %2861 = vset.pattern.permute.xlu0 0
        %2862 = vperm.xlu0 %2861, %v264
        %v2863 = vpop.permute.xlu0 %2862
        %2866 = vset.pattern.permute.xlu0 0
        %2867 = vperm.xlu0 %2866, %v265
        %v2868 = vpop.permute.xlu0 %2867
        %2871 = vset.pattern.permute.xlu0 0
        %2872 = vperm.xlu0 %2871, %v266
        %v2873 = vpop.permute.xlu0 %2872
        %2876 = vset.pattern.permute.xlu0 0
        %2877 = vperm.xlu0 %2876, %v267
        %v2878 = vpop.permute.xlu0 %2877
        %2881 = vset.pattern.permute.xlu0 0
        %2882 = vperm.xlu0 %2881, %v268
        %v2883 = vpop.permute.xlu0 %2882
        %2886 = vset.pattern.permute.xlu0 0
        %2887 = vperm.xlu0 %2886, %v269
        %v2888 = vpop.permute.xlu0 %2887
        %2891 = vset.pattern.permute.xlu0 0
        %2892 = vperm.xlu0 %2891, %v270
        %v2893 = vpop.permute.xlu0 %2892
        %2896 = vset.pattern.permute.xlu0 0
        %2897 = vperm.xlu0 %2896, %v271
        %v2898 = vpop.permute.xlu0 %2897
        %2901 = vset.pattern.permute.xlu0 0
        %2902 = vperm.xlu0 %2901, %v272
        %v2903 = vpop.permute.xlu0 %2902
        %2906 = vset.pattern.permute.xlu0 0
        %2907 = vperm.xlu0 %2906, %v273
        %v2908 = vpop.permute.xlu0 %2907
        %2911 = vset.pattern.permute.xlu0 0
        %2912 = vperm.xlu0 %2911, %v274
        %v2913 = vpop.permute.xlu0 %2912
        %2916 = vset.pattern.permute.xlu0 0
        %2917 = vperm.xlu0 %2916, %v275
        %v2918 = vpop.permute.xlu0 %2917
        %2921 = vset.pattern.permute.xlu0 0
        %2922 = vperm.xlu0 %2921, %v276
        %v2923 = vpop.permute.xlu0 %2922
        %2926 = vset.pattern.permute.xlu0 0
        %2927 = vperm.xlu0 %2926, %v277
        %v2928 = vpop.permute.xlu0 %2927
        %2931 = vset.pattern.permute.xlu0 0
        %2932 = vperm.xlu0 %2931, %v278
        %v2933 = vpop.permute.xlu0 %2932
        %2936 = vset.pattern.permute.xlu0 0
        %2937 = vperm.xlu0 %2936, %v279
        %v2938 = vpop.permute.xlu0 %2937
        %2941 = vset.pattern.permute.xlu0 0
        %2942 = vperm.xlu0 %2941, %v280
        %v2943 = vpop.permute.xlu0 %2942
        %2946 = vset.pattern.permute.xlu0 0
        %2947 = vperm.xlu0 %2946, %v281
        %v2948 = vpop.permute.xlu0 %2947
        %2951 = vset.pattern.permute.xlu0 0
        %2952 = vperm.xlu0 %2951, %v282
        %v2953 = vpop.permute.xlu0 %2952
        %2956 = vset.pattern.permute.xlu0 0
        %2957 = vperm.xlu0 %2956, %v283
        %v2958 = vpop.permute.xlu0 %2957
        %2961 = vset.pattern.permute.xlu0 0
        %2962 = vperm.xlu0 %2961, %v284
        %v2963 = vpop.permute.xlu0 %2962
        %2966 = vset.pattern.permute.xlu0 0
        %2967 = vperm.xlu0 %2966, %v285
        %v2968 = vpop.permute.xlu0 %2967
        %v2970 = vadd.f32 %v2522, %v2653
        %v2971 = vadd.f32 %v2523, %v2653
        %v2972 = vadd.f32 %v2524, %v2658
        %v2973 = vadd.f32 %v2525, %v2658
        %v2974 = vadd.f32 %v2526, %v2663
        %v2975 = vadd.f32 %v2527, %v2663
        %v2976 = vadd.f32 %v2528, %v2668
        %v2977 = vadd.f32 %v2529, %v2668
        %v2978 = vadd.f32 %v2530, %v2673
        %v2979 = vadd.f32 %v2531, %v2673
        %v2980 = vadd.f32 %v2532, %v2678
        %v2981 = vadd.f32 %v2533, %v2678
        %v2982 = vadd.f32 %v2534, %v2683
        %v2983 = vadd.f32 %v2535, %v2683
        %v2984 = vadd.f32 %v2536, %v2688
        %v2985 = vadd.f32 %v2537, %v2688
        %v2986 = vadd.f32 %v2538, %v2693
        %v2987 = vadd.f32 %v2539, %v2693
        %v2988 = vadd.f32 %v2540, %v2698
        %v2989 = vadd.f32 %v2541, %v2698
        %v2990 = vadd.f32 %v2542, %v2703
        %v2991 = vadd.f32 %v2543, %v2703
        %v2992 = vadd.f32 %v2544, %v2708
        %v2993 = vadd.f32 %v2545, %v2708
        %v2994 = vadd.f32 %v2546, %v2713
        %v2995 = vadd.f32 %v2547, %v2713
        %v2996 = vadd.f32 %v2548, %v2718
        %v2997 = vadd.f32 %v2549, %v2718
        %v2998 = vadd.f32 %v2550, %v2723
        %v2999 = vadd.f32 %v2551, %v2723
        %v3000 = vadd.f32 %v2552, %v2728
        %v3001 = vadd.f32 %v2553, %v2728
        %v3002 = vadd.f32 %v2554, %v2733
        %v3003 = vadd.f32 %v2555, %v2733
        %v3004 = vadd.f32 %v2556, %v2738
        %v3005 = vadd.f32 %v2557, %v2738
        %v3006 = vadd.f32 %v2558, %v2743
        %v3007 = vadd.f32 %v2559, %v2743
        %v3008 = vadd.f32 %v2560, %v2748
        %v3009 = vadd.f32 %v2561, %v2748
        %v3010 = vadd.f32 %v2562, %v2753
        %v3011 = vadd.f32 %v2563, %v2753
        %v3012 = vadd.f32 %v2564, %v2758
        %v3013 = vadd.f32 %v2565, %v2758
        %v3014 = vadd.f32 %v2566, %v2763
        %v3015 = vadd.f32 %v2567, %v2763
        %v3016 = vadd.f32 %v2568, %v2768
        %v3017 = vadd.f32 %v2569, %v2768
        %v3018 = vadd.f32 %v2570, %v2773
        %v3019 = vadd.f32 %v2571, %v2773
        %v3020 = vadd.f32 %v2572, %v2778
        %v3021 = vadd.f32 %v2573, %v2778
        %v3022 = vadd.f32 %v2574, %v2783
        %v3023 = vadd.f32 %v2575, %v2783
        %v3024 = vadd.f32 %v2576, %v2788
        %v3025 = vadd.f32 %v2577, %v2788
        %v3026 = vadd.f32 %v2578, %v2793
        %v3027 = vadd.f32 %v2579, %v2793
        %v3028 = vadd.f32 %v2580, %v2798
        %v3029 = vadd.f32 %v2581, %v2798
        %v3030 = vadd.f32 %v2582, %v2803
        %v3031 = vadd.f32 %v2583, %v2803
        %v3032 = vadd.f32 %v2584, %v2808
        %v3033 = vadd.f32 %v2585, %v2808
        %v3034 = vadd.f32 %v2586, %v2813
        %v3035 = vadd.f32 %v2587, %v2813
        %v3036 = vadd.f32 %v2588, %v2818
        %v3037 = vadd.f32 %v2589, %v2818
        %v3038 = vadd.f32 %v2590, %v2823
        %v3039 = vadd.f32 %v2591, %v2823
        %v3040 = vadd.f32 %v2592, %v2828
        %v3041 = vadd.f32 %v2593, %v2828
        %v3042 = vadd.f32 %v2594, %v2833
        %v3043 = vadd.f32 %v2595, %v2833
        %v3044 = vadd.f32 %v2596, %v2838
        %v3045 = vadd.f32 %v2597, %v2838
        %v3046 = vadd.f32 %v2598, %v2843
        %v3047 = vadd.f32 %v2599, %v2843
        %v3048 = vadd.f32 %v2600, %v2848
        %v3049 = vadd.f32 %v2601, %v2848
        %v3050 = vadd.f32 %v2602, %v2853
        %v3051 = vadd.f32 %v2603, %v2853
        %v3052 = vadd.f32 %v2604, %v2858
        %v3053 = vadd.f32 %v2605, %v2858
        %v3054 = vadd.f32 %v2606, %v2863
        %v3055 = vadd.f32 %v2607, %v2863
        %v3056 = vadd.f32 %v2608, %v2868
        %v3057 = vadd.f32 %v2609, %v2868
        %v3058 = vadd.f32 %v2610, %v2873
        %v3059 = vadd.f32 %v2611, %v2873
        %v3060 = vadd.f32 %v2612, %v2878
        %v3061 = vadd.f32 %v2613, %v2878
        %v3062 = vadd.f32 %v2614, %v2883
        %v3063 = vadd.f32 %v2615, %v2883
        %v3064 = vadd.f32 %v2616, %v2888
        %v3065 = vadd.f32 %v2617, %v2888
        %v3066 = vadd.f32 %v2618, %v2893
        %v3067 = vadd.f32 %v2619, %v2893
        %v3068 = vadd.f32 %v2620, %v2898
        %v3069 = vadd.f32 %v2621, %v2898
        %v3070 = vadd.f32 %v2622, %v2903
        %v3071 = vadd.f32 %v2623, %v2903
        %v3072 = vadd.f32 %v2624, %v2908
        %v3073 = vadd.f32 %v2625, %v2908
        %v3074 = vadd.f32 %v2626, %v2913
        %v3075 = vadd.f32 %v2627, %v2913
        %v3076 = vadd.f32 %v2628, %v2918
        %v3077 = vadd.f32 %v2629, %v2918
        %v3078 = vadd.f32 %v2630, %v2923
        %v3079 = vadd.f32 %v2631, %v2923
        %v3080 = vadd.f32 %v2632, %v2928
        %v3081 = vadd.f32 %v2633, %v2928
        %v3082 = vadd.f32 %v2634, %v2933
        %v3083 = vadd.f32 %v2635, %v2933
        %v3084 = vadd.f32 %v2636, %v2938
        %v3085 = vadd.f32 %v2637, %v2938
        %v3086 = vadd.f32 %v2638, %v2943
        %v3087 = vadd.f32 %v2639, %v2943
        %v3088 = vadd.f32 %v2640, %v2948
        %v3089 = vadd.f32 %v2641, %v2948
        %v3090 = vadd.f32 %v2642, %v2953
        %v3091 = vadd.f32 %v2643, %v2953
        %v3092 = vadd.f32 %v2644, %v2958
        %v3093 = vadd.f32 %v2645, %v2958
        %v3094 = vadd.f32 %v2646, %v2963
        %v3095 = vadd.f32 %v2647, %v2963
        %v3096 = vadd.f32 %v2648, %v2968
        %v3097 = vadd.f32 %v2649, %v2968
        %v3098 = vmax.f32 %v2970, 0.0
        %v3099 = vmax.f32 %v2971, 0.0
        %v3100 = vmax.f32 %v2972, 0.0
        %v3101 = vmax.f32 %v2973, 0.0
        %v3102 = vmax.f32 %v2974, 0.0
        %v3103 = vmax.f32 %v2975, 0.0
        %v3104 = vmax.f32 %v2976, 0.0
        %v3105 = vmax.f32 %v2977, 0.0
        %v3106 = vmax.f32 %v2978, 0.0
        %v3107 = vmax.f32 %v2979, 0.0
        %v3108 = vmax.f32 %v2980, 0.0
        %v3109 = vmax.f32 %v2981, 0.0
        %v3110 = vmax.f32 %v2982, 0.0
        %v3111 = vmax.f32 %v2983, 0.0
        %v3112 = vmax.f32 %v2984, 0.0
        %v3113 = vmax.f32 %v2985, 0.0
        %v3114 = vmax.f32 %v2986, 0.0
        %v3115 = vmax.f32 %v2987, 0.0
        %v3116 = vmax.f32 %v2988, 0.0
        %v3117 = vmax.f32 %v2989, 0.0
        %v3118 = vmax.f32 %v2990, 0.0
        %v3119 = vmax.f32 %v2991, 0.0
        %v3120 = vmax.f32 %v2992, 0.0
        %v3121 = vmax.f32 %v2993, 0.0
        %v3122 = vmax.f32 %v2994, 0.0
        %v3123 = vmax.f32 %v2995, 0.0
        %v3124 = vmax.f32 %v2996, 0.0
        %v3125 = vmax.f32 %v2997, 0.0
        %v3126 = vmax.f32 %v2998, 0.0
        %v3127 = vmax.f32 %v2999, 0.0
        %v3128 = vmax.f32 %v3000, 0.0
        %v3129 = vmax.f32 %v3001, 0.0
        %v3130 = vmax.f32 %v3002, 0.0
        %v3131 = vmax.f32 %v3003, 0.0
        %v3132 = vmax.f32 %v3004, 0.0
        %v3133 = vmax.f32 %v3005, 0.0
        %v3134 = vmax.f32 %v3006, 0.0
        %v3135 = vmax.f32 %v3007, 0.0
        %v3136 = vmax.f32 %v3008, 0.0
        %v3137 = vmax.f32 %v3009, 0.0
        %v3138 = vmax.f32 %v3010, 0.0
        %v3139 = vmax.f32 %v3011, 0.0
        %v3140 = vmax.f32 %v3012, 0.0
        %v3141 = vmax.f32 %v3013, 0.0
        %v3142 = vmax.f32 %v3014, 0.0
        %v3143 = vmax.f32 %v3015, 0.0
        %v3144 = vmax.f32 %v3016, 0.0
        %v3145 = vmax.f32 %v3017, 0.0
        %v3146 = vmax.f32 %v3018, 0.0
        %v3147 = vmax.f32 %v3019, 0.0
        %v3148 = vmax.f32 %v3020, 0.0
        %v3149 = vmax.f32 %v3021, 0.0
        %v3150 = vmax.f32 %v3022, 0.0
        %v3151 = vmax.f32 %v3023, 0.0
        %v3152 = vmax.f32 %v3024, 0.0
        %v3153 = vmax.f32 %v3025, 0.0
        %v3154 = vmax.f32 %v3026, 0.0
        %v3155 = vmax.f32 %v3027, 0.0
        %v3156 = vmax.f32 %v3028, 0.0
        %v3157 = vmax.f32 %v3029, 0.0
        %v3158 = vmax.f32 %v3030, 0.0
        %v3159 = vmax.f32 %v3031, 0.0
        %v3160 = vmax.f32 %v3032, 0.0
        %v3161 = vmax.f32 %v3033, 0.0
        %v3162 = vmax.f32 %v3034, 0.0
        %v3163 = vmax.f32 %v3035, 0.0
        %v3164 = vmax.f32 %v3036, 0.0
        %v3165 = vmax.f32 %v3037, 0.0
        %v3166 = vmax.f32 %v3038, 0.0
        %v3167 = vmax.f32 %v3039, 0.0
        %v3168 = vmax.f32 %v3040, 0.0
        %v3169 = vmax.f32 %v3041, 0.0
        %v3170 = vmax.f32 %v3042, 0.0
        %v3171 = vmax.f32 %v3043, 0.0
        %v3172 = vmax.f32 %v3044, 0.0
        %v3173 = vmax.f32 %v3045, 0.0
        %v3174 = vmax.f32 %v3046, 0.0
        %v3175 = vmax.f32 %v3047, 0.0
        %v3176 = vmax.f32 %v3048, 0.0
        %v3177 = vmax.f32 %v3049, 0.0
        %v3178 = vmax.f32 %v3050, 0.0
        %v3179 = vmax.f32 %v3051, 0.0
        %v3180 = vmax.f32 %v3052, 0.0
        %v3181 = vmax.f32 %v3053, 0.0
        %v3182 = vmax.f32 %v3054, 0.0
        %v3183 = vmax.f32 %v3055, 0.0
        %v3184 = vmax.f32 %v3056, 0.0
        %v3185 = vmax.f32 %v3057, 0.0
        %v3186 = vmax.f32 %v3058, 0.0
        %v3187 = vmax.f32 %v3059, 0.0
        %v3188 = vmax.f32 %v3060, 0.0
        %v3189 = vmax.f32 %v3061, 0.0
        %v3190 = vmax.f32 %v3062, 0.0
        %v3191 = vmax.f32 %v3063, 0.0
        %v3192 = vmax.f32 %v3064, 0.0
        %v3193 = vmax.f32 %v3065, 0.0
        %v3194 = vmax.f32 %v3066, 0.0
        %v3195 = vmax.f32 %v3067, 0.0
        %v3196 = vmax.f32 %v3068, 0.0
        %v3197 = vmax.f32 %v3069, 0.0
        %v3198 = vmax.f32 %v3070, 0.0
        %v3199 = vmax.f32 %v3071, 0.0
        %v3200 = vmax.f32 %v3072, 0.0
        %v3201 = vmax.f32 %v3073, 0.0
        %v3202 = vmax.f32 %v3074, 0.0
        %v3203 = vmax.f32 %v3075, 0.0
        %v3204 = vmax.f32 %v3076, 0.0
        %v3205 = vmax.f32 %v3077, 0.0
        %v3206 = vmax.f32 %v3078, 0.0
        %v3207 = vmax.f32 %v3079, 0.0
        %v3208 = vmax.f32 %v3080, 0.0
        %v3209 = vmax.f32 %v3081, 0.0
        %v3210 = vmax.f32 %v3082, 0.0
        %v3211 = vmax.f32 %v3083, 0.0
        %v3212 = vmax.f32 %v3084, 0.0
        %v3213 = vmax.f32 %v3085, 0.0
        %v3214 = vmax.f32 %v3086, 0.0
        %v3215 = vmax.f32 %v3087, 0.0
        %v3216 = vmax.f32 %v3088, 0.0
        %v3217 = vmax.f32 %v3089, 0.0
        %v3218 = vmax.f32 %v3090, 0.0
        %v3219 = vmax.f32 %v3091, 0.0
        %v3220 = vmax.f32 %v3092, 0.0
        %v3221 = vmax.f32 %v3093, 0.0
        %v3222 = vmax.f32 %v3094, 0.0
        %v3223 = vmax.f32 %v3095, 0.0
        %v3224 = vmax.f32 %v3096, 0.0
        %v3225 = vmax.f32 %v3097, 0.0
        %v3226 = vmax.f32 %v3098, %v3099
        %v3227 = vmax.f32 %v3100, %v3101
        %v3228 = vmax.f32 %v3102, %v3103
        %v3229 = vmax.f32 %v3104, %v3105
        %v3230 = vmax.f32 %v3106, %v3107
        %v3231 = vmax.f32 %v3108, %v3109
        %v3232 = vmax.f32 %v3110, %v3111
        %v3233 = vmax.f32 %v3112, %v3113
        %v3234 = vmax.f32 %v3114, %v3115
        %v3235 = vmax.f32 %v3116, %v3117
        %v3236 = vmax.f32 %v3118, %v3119
        %v3237 = vmax.f32 %v3120, %v3121
        %v3238 = vmax.f32 %v3122, %v3123
        %v3239 = vmax.f32 %v3124, %v3125
        %v3240 = vmax.f32 %v3126, %v3127
        %v3241 = vmax.f32 %v3128, %v3129
        %v3242 = vmax.f32 %v3130, %v3131
        %v3243 = vmax.f32 %v3132, %v3133
        %v3244 = vmax.f32 %v3134, %v3135
        %v3245 = vmax.f32 %v3136, %v3137
        %v3246 = vmax.f32 %v3138, %v3139
        %v3247 = vmax.f32 %v3140, %v3141
        %v3248 = vmax.f32 %v3142, %v3143
        %v3249 = vmax.f32 %v3144, %v3145
        %v3250 = vmax.f32 %v3146, %v3147
        %v3251 = vmax.f32 %v3148, %v3149
        %v3252 = vmax.f32 %v3150, %v3151
        %v3253 = vmax.f32 %v3152, %v3153
        %v3254 = vmax.f32 %v3154, %v3155
        %v3255 = vmax.f32 %v3156, %v3157
        %v3256 = vmax.f32 %v3158, %v3159
        %v3257 = vmax.f32 %v3160, %v3161
        %v3258 = vmax.f32 %v3162, %v3163
        %v3259 = vmax.f32 %v3164, %v3165
        %v3260 = vmax.f32 %v3166, %v3167
        %v3261 = vmax.f32 %v3168, %v3169
        %v3262 = vmax.f32 %v3170, %v3171
        %v3263 = vmax.f32 %v3172, %v3173
        %v3264 = vmax.f32 %v3174, %v3175
        %v3265 = vmax.f32 %v3176, %v3177
        %v3266 = vmax.f32 %v3178, %v3179
        %v3267 = vmax.f32 %v3180, %v3181
        %v3268 = vmax.f32 %v3182, %v3183
        %v3269 = vmax.f32 %v3184, %v3185
        %v3270 = vmax.f32 %v3186, %v3187
        %v3271 = vmax.f32 %v3188, %v3189
        %v3272 = vmax.f32 %v3190, %v3191
        %v3273 = vmax.f32 %v3192, %v3193
        %v3274 = vmax.f32 %v3194, %v3195
        %v3275 = vmax.f32 %v3196, %v3197
        %v3276 = vmax.f32 %v3198, %v3199
        %v3277 = vmax.f32 %v3200, %v3201
        %v3278 = vmax.f32 %v3202, %v3203
        %v3279 = vmax.f32 %v3204, %v3205
        %v3280 = vmax.f32 %v3206, %v3207
        %v3281 = vmax.f32 %v3208, %v3209
        %v3282 = vmax.f32 %v3210, %v3211
        %v3283 = vmax.f32 %v3212, %v3213
        %v3284 = vmax.f32 %v3214, %v3215
        %v3285 = vmax.f32 %v3216, %v3217
        %v3286 = vmax.f32 %v3218, %v3219
        %v3287 = vmax.f32 %v3220, %v3221
        %v3288 = vmax.f32 %v3222, %v3223
        %v3289 = vmax.f32 %v3224, %v3225
        %v3290 = vmax.f32 %v3226, %v3258
        %v3291 = vmax.f32 %v3227, %v3259
        %v3292 = vmax.f32 %v3228, %v3260
        %v3293 = vmax.f32 %v3229, %v3261
        %v3294 = vmax.f32 %v3230, %v3262
        %v3295 = vmax.f32 %v3231, %v3263
        %v3296 = vmax.f32 %v3232, %v3264
        %v3297 = vmax.f32 %v3233, %v3265
        %v3298 = vmax.f32 %v3234, %v3266
        %v3299 = vmax.f32 %v3235, %v3267
        %v3300 = vmax.f32 %v3236, %v3268
        %v3301 = vmax.f32 %v3237, %v3269
        %v3302 = vmax.f32 %v3238, %v3270
        %v3303 = vmax.f32 %v3239, %v3271
        %v3304 = vmax.f32 %v3240, %v3272
        %v3305 = vmax.f32 %v3241, %v3273
        %v3306 = vmax.f32 %v3242, %v3274
        %v3307 = vmax.f32 %v3243, %v3275
        %v3308 = vmax.f32 %v3244, %v3276
        %v3309 = vmax.f32 %v3245, %v3277
        %v3310 = vmax.f32 %v3246, %v3278
        %v3311 = vmax.f32 %v3247, %v3279
        %v3312 = vmax.f32 %v3248, %v3280
        %v3313 = vmax.f32 %v3249, %v3281
        %v3314 = vmax.f32 %v3250, %v3282
        %v3315 = vmax.f32 %v3251, %v3283
        %v3316 = vmax.f32 %v3252, %v3284
        %v3317 = vmax.f32 %v3253, %v3285
        %v3318 = vmax.f32 %v3254, %v3286
        %v3319 = vmax.f32 %v3255, %v3287
        %v3320 = vmax.f32 %v3256, %v3288
        %v3321 = vmax.f32 %v3257, %v3289
        %v3322 = vpack.c.bf16 %v3291, %v3290
        %v3323 = vpack.c.bf16 %v3293, %v3292
        %v3324 = vpack.c.bf16 %v3295, %v3294
        %v3325 = vpack.c.bf16 %v3297, %v3296
        %v3326 = vpack.c.bf16 %v3299, %v3298
        %v3327 = vpack.c.bf16 %v3301, %v3300
        %v3328 = vpack.c.bf16 %v3303, %v3302
        %v3329 = vpack.c.bf16 %v3305, %v3304
        %v3330 = vpack.c.bf16 %v3307, %v3306
        %v3331 = vpack.c.bf16 %v3309, %v3308
        %v3332 = vpack.c.bf16 %v3311, %v3310
        %v3333 = vpack.c.bf16 %v3313, %v3312
        %v3334 = vpack.c.bf16 %v3315, %v3314
        %v3335 = vpack.c.bf16 %v3317, %v3316
        %v3336 = vpack.c.bf16 %v3319, %v3318
        %v3337 = vpack.c.bf16 %v3321, %v3320
        %v3354 = vunpack.c.l.b16 %v3322
        %v3355 = vunpack.c.h.b16 %v3322
        %v3356 = vunpack.c.l.b16 %v3323
        %v3357 = vunpack.c.h.b16 %v3323
        %v3358 = vunpack.c.l.b16 %v3324
        %v3359 = vunpack.c.h.b16 %v3324
        %v3360 = vunpack.c.l.b16 %v3325
        %v3361 = vunpack.c.h.b16 %v3325
        %v3362 = vunpack.c.l.b16 %v3326
        %v3363 = vunpack.c.h.b16 %v3326
        %v3364 = vunpack.c.l.b16 %v3327
        %v3365 = vunpack.c.h.b16 %v3327
        %v3366 = vunpack.c.l.b16 %v3328
        %v3367 = vunpack.c.h.b16 %v3328
        %v3368 = vunpack.c.l.b16 %v3329
        %v3369 = vunpack.c.h.b16 %v3329
        %v3370 = vunpack.c.l.b16 %v3330
        %v3371 = vunpack.c.h.b16 %v3330
        %v3372 = vunpack.c.l.b16 %v3331
        %v3373 = vunpack.c.h.b16 %v3331
        %v3374 = vunpack.c.l.b16 %v3332
        %v3375 = vunpack.c.h.b16 %v3332
        %v3376 = vunpack.c.l.b16 %v3333
        %v3377 = vunpack.c.h.b16 %v3333
        %v3378 = vunpack.c.l.b16 %v3334
        %v3379 = vunpack.c.h.b16 %v3334
        %v3380 = vunpack.c.l.b16 %v3335
        %v3381 = vunpack.c.h.b16 %v3335
        %v3382 = vunpack.c.l.b16 %v3336
        %v3383 = vunpack.c.h.b16 %v3336
        %v3384 = vunpack.c.l.b16 %v3337
        %v3385 = vunpack.c.h.b16 %v3337
        %v3386 = vpack.c.b16 %v3354, %v3354
        %v3387 = vpack.c.b16 %v3355, %v3355
        %v3388 = vpack.c.b16 %v3356, %v3356
        %v3389 = vpack.c.b16 %v3357, %v3357
        %v3390 = vpack.c.b16 %v3358, %v3358
        %v3391 = vpack.c.b16 %v3359, %v3359
        %v3392 = vpack.c.b16 %v3360, %v3360
        %v3393 = vpack.c.b16 %v3361, %v3361
        %v3394 = vpack.c.b16 %v3362, %v3362
        %v3395 = vpack.c.b16 %v3363, %v3363
        %v3396 = vpack.c.b16 %v3364, %v3364
        %v3397 = vpack.c.b16 %v3365, %v3365
        %v3398 = vpack.c.b16 %v3366, %v3366
        %v3399 = vpack.c.b16 %v3367, %v3367
        %v3400 = vpack.c.b16 %v3368, %v3368
        %v3401 = vpack.c.b16 %v3369, %v3369
        %v3402 = vpack.c.b16 %v3370, %v3370
        %v3403 = vpack.c.b16 %v3371, %v3371
        %v3404 = vpack.c.b16 %v3372, %v3372
        %v3405 = vpack.c.b16 %v3373, %v3373
        %v3406 = vpack.c.b16 %v3374, %v3374
        %v3407 = vpack.c.b16 %v3375, %v3375
        %v3408 = vpack.c.b16 %v3376, %v3376
        %v3409 = vpack.c.b16 %v3377, %v3377
        %v3410 = vpack.c.b16 %v3378, %v3378
        %v3411 = vpack.c.b16 %v3379, %v3379
        %v3412 = vpack.c.b16 %v3380, %v3380
        %v3413 = vpack.c.b16 %v3381, %v3381
        %v3414 = vpack.c.b16 %v3382, %v3382
        %v3415 = vpack.c.b16 %v3383, %v3383
        %v3416 = vpack.c.b16 %v3384, %v3384
        %v3417 = vpack.c.b16 %v3385, %v3385
        %3450 = vst [vmem:[%s183] sm:$0xf] %v3386
        %3451 = vst [vmem:[%s183 + $0x4] sm:$0xf] %v3387
        %3452 = vst [vmem:[%s183 + $0x8] sm:$0xf] %v3388
        %3453 = vst [vmem:[%s183 + $0xc] sm:$0xf] %v3389
        %3454 = vst [vmem:[%s183 + $0x10] sm:$0xf] %v3390
        %3455 = vst [vmem:[%s183 + $0x14] sm:$0xf] %v3391
        %3456 = vst [vmem:[%s183 + $0x18] sm:$0xf] %v3392
        %3457 = vst [vmem:[%s183 + $0x1c] sm:$0xf] %v3393
        %3458 = vst [vmem:[%s183 + $0x20] sm:$0xf] %v3394
        %3459 = vst [vmem:[%s183 + $0x24] sm:$0xf] %v3395
        %3460 = vst [vmem:[%s183 + $0x28] sm:$0xf] %v3396
        %3461 = vst [vmem:[%s183 + $0x2c] sm:$0xf] %v3397
        %3462 = vst [vmem:[%s183 + $0x30] sm:$0xf] %v3398
        %3463 = vst [vmem:[%s183 + $0x34] sm:$0xf] %v3399
        %3464 = vst [vmem:[%s183 + $0x38] sm:$0xf] %v3400
        %3465 = vst [vmem:[%s183 + $0x3c] sm:$0xf] %v3401
        %3466 = vst [vmem:[%s183 + $0x40] sm:$0xf] %v3402
        %3467 = vst [vmem:[%s183 + $0x44] sm:$0xf] %v3403
        %3468 = vst [vmem:[%s183 + $0x48] sm:$0xf] %v3404
        %3469 = vst [vmem:[%s183 + $0x4c] sm:$0xf] %v3405
        %3470 = vst [vmem:[%s183 + $0x50] sm:$0xf] %v3406
        %3471 = vst [vmem:[%s183 + $0x54] sm:$0xf] %v3407
        %3472 = vst [vmem:[%s183 + $0x58] sm:$0xf] %v3408
        %3473 = vst [vmem:[%s183 + $0x5c] sm:$0xf] %v3409
        %3474 = vst [vmem:[%s183 + $0x60] sm:$0xf] %v3410
        %3475 = vst [vmem:[%s183 + $0x64] sm:$0xf] %v3411
        %3476 = vst [vmem:[%s183 + $0x68] sm:$0xf] %v3412
        %3477 = vst [vmem:[%s183 + $0x6c] sm:$0xf] %v3413
        %3478 = vst [vmem:[%s183 + $0x70] sm:$0xf] %v3414
        %3479 = vst [vmem:[%s183 + $0x74] sm:$0xf] %v3415
        %3480 = vst [vmem:[%s183 + $0x78] sm:$0xf] %v3416
        %3481 = vst [vmem:[%s183 + $0x7c] sm:$0xf] %v3417
        %s3482 = sand.u32 %s106, 1
        %s3483 = sand.u32 %s106, 1
        %s3484 = smul.addr %s3483, 128
        %s3485 = scalar_lea.vmem [#allocation2], %s3484
        // Predicated region
        $region33: #{baseline_cnn_forward.2} parent=31 // pred_check
          %p3486 = pneg %p116
        $region34: #{baseline_cnn_forward.2} parent=31 // pred_check_branch
          %3488 = sbr.rel (%p3486) target = $region36
        $region35: #{baseline_cnn_forward.2} parent=31 // pred_region
          %s3489 = smul.u32 2, %s19
          %s3490 = smul.addr %s18, 256
          %s3491 = sadd.s32 %s3489, %s3490
          %s3492 = smul.addr %s3491, 4
          %s3493 = scalar_lea.vmem %s3, %s3492
          // Predicated region
          $region37: #{baseline_cnn_forward.2} parent=35 // pred_check
            _
          $region38: #{baseline_cnn_forward.2} parent=35 // pred_check_branch
            %3495 = sbr.rel (0) target = $region40
          $region39: #{baseline_cnn_forward.2} parent=35 // pred_region
            // Predicated region
            $region41: #{baseline_cnn_forward.2} parent=39 // pred_check
              _
            $region42: #{baseline_cnn_forward.2} parent=39 // pred_check_branch
              %3497 = sbr.rel target = $region44
            $region43: #{baseline_cnn_forward.2} parent=39 // pred_region
              // Predicated region
              $region56: #{baseline_cnn_forward.2} parent=43 // pred_check
                _
              $region57: #{baseline_cnn_forward.2} parent=43 // pred_check_branch
                %3575 = sbr.rel (0) target = $region59
              $region58: #{baseline_cnn_forward.2} parent=43 // pred_region
                loop: start=0, step=1, limit=1
                $region60: #{baseline_cnn_forward.2} parent=58 // loop_pre_header
                  _
                $region61: #{baseline_cnn_forward.2} parent=58 // loop_header
                  %s3577 = sphi 0, %s3581
                  %p3578 = scmp.ge.s32.totalorder %s3577, 1
                  %s3582 = sphi %s3485, %s3485
                  %s3583 = sphi %s3493, %s3493
                $region62: #{baseline_cnn_forward.2} parent=58 // loop_header_branch
                  %3580 = sbr.rel (%p3578) target = $region66
                $region63: #{baseline_cnn_forward.2} parent=58 // loop_body
                  _
                $region64: #{baseline_cnn_forward.2} parent=58 // loop_footer
                  %s3581 = sadd.s32 1, %s3577
                $region65: #{baseline_cnn_forward.2} parent=58 // loop_footer_branch
                  %3576 = sbr.rel target = $region61
                $region66: #{baseline_cnn_forward.2} parent=58 // loop_exit
                  _
                %s3585 = ssub.s32 16, 1
                loop: start=0, step=1, limit=1
                $region67: #{baseline_cnn_forward.2} parent=58 // loop_pre_header
                  _
                $region68: #{baseline_cnn_forward.2} parent=58 // loop_header
                  %s3587 = sphi 0, %s3591
                  %p3588 = scmp.ge.s32.totalorder %s3587, 1
                  %s3592 = sphi %s3485, %s3485
                  %s3593 = sphi %s3493, %s3493
                $region69: #{baseline_cnn_forward.2} parent=58 // loop_header_branch
                  %3590 = sbr.rel (%p3588) target = $region73
                $region70: #{baseline_cnn_forward.2} parent=58 // loop_body
                  %v3594 = vld [vmem:[%s3592] sm:%s3585]
                  %3595 = vst [vmem:[%s3593] sm:%s3585] %v3594
                  %v3596 = vld [vmem:[%s3592 + $0x4] sm:%s3585]
                  %3597 = vst [vmem:[%s3593 + $0x4] sm:%s3585] %v3596
                  %v3598 = vld [vmem:[%s3592 + $0x8] sm:%s3585]
                  %3599 = vst [vmem:[%s3593 + $0x40] sm:%s3585] %v3598
                  %v3600 = vld [vmem:[%s3592 + $0xc] sm:%s3585]
                  %3601 = vst [vmem:[%s3593 + $0x44] sm:%s3585] %v3600
                  %v3602 = vld [vmem:[%s3592 + $0x10] sm:%s3585]
                  %3603 = vst [vmem:[%s3593 + $0x80] sm:%s3585] %v3602
                  %v3604 = vld [vmem:[%s3592 + $0x14] sm:%s3585]
                  %3605 = vst [vmem:[%s3593 + $0x84] sm:%s3585] %v3604
                  %v3606 = vld [vmem:[%s3592 + $0x18] sm:%s3585]
                  %3607 = vst [vmem:[%s3593 + $0xc0] sm:%s3585] %v3606
                  %v3608 = vld [vmem:[%s3592 + $0x1c] sm:%s3585]
                  %3609 = vst [vmem:[%s3593 + $0xc4] sm:%s3585] %v3608
                  %v3610 = vld [vmem:[%s3592 + $0x20] sm:%s3585]
                  %3611 = vst [vmem:[%s3593 + $0x100] sm:%s3585] %v3610
                  %v3612 = vld [vmem:[%s3592 + $0x24] sm:%s3585]
                  %3613 = vst [vmem:[%s3593 + $0x104] sm:%s3585] %v3612
                  %v3614 = vld [vmem:[%s3592 + $0x28] sm:%s3585]
                  %3615 = vst [vmem:[%s3593 + $0x140] sm:%s3585] %v3614
                  %v3616 = vld [vmem:[%s3592 + $0x2c] sm:%s3585]
                  %3617 = vst [vmem:[%s3593 + $0x144] sm:%s3585] %v3616
                  %v3618 = vld [vmem:[%s3592 + $0x30] sm:%s3585]
                  %3619 = vst [vmem:[%s3593 + $0x180] sm:%s3585] %v3618
                  %v3620 = vld [vmem:[%s3592 + $0x34] sm:%s3585]
                  %3621 = vst [vmem:[%s3593 + $0x184] sm:%s3585] %v3620
                  %v3622 = vld [vmem:[%s3592 + $0x38] sm:%s3585]
                  %3623 = vst [vmem:[%s3593 + $0x1c0] sm:%s3585] %v3622
                  %v3624 = vld [vmem:[%s3592 + $0x3c] sm:%s3585]
                  %3625 = vst [vmem:[%s3593 + $0x1c4] sm:%s3585] %v3624
                  %v3626 = vld [vmem:[%s3592 + $0x40] sm:%s3585]
                  %3627 = vst [vmem:[%s3593 + $0x200] sm:%s3585] %v3626
                  %v3628 = vld [vmem:[%s3592 + $0x44] sm:%s3585]
                  %3629 = vst [vmem:[%s3593 + $0x204] sm:%s3585] %v3628
                  %v3630 = vld [vmem:[%s3592 + $0x48] sm:%s3585]
                  %3631 = vst [vmem:[%s3593 + $0x240] sm:%s3585] %v3630
                  %v3632 = vld [vmem:[%s3592 + $0x4c] sm:%s3585]
                  %3633 = vst [vmem:[%s3593 + $0x244] sm:%s3585] %v3632
                  %v3634 = vld [vmem:[%s3592 + $0x50] sm:%s3585]
                  %3635 = vst [vmem:[%s3593 + $0x280] sm:%s3585] %v3634
                  %v3636 = vld [vmem:[%s3592 + $0x54] sm:%s3585]
                  %3637 = vst [vmem:[%s3593 + $0x284] sm:%s3585] %v3636
                  %v3638 = vld [vmem:[%s3592 + $0x58] sm:%s3585]
                  %3639 = vst [vmem:[%s3593 + $0x2c0] sm:%s3585] %v3638
                  %v3640 = vld [vmem:[%s3592 + $0x5c] sm:%s3585]
                  %3641 = vst [vmem:[%s3593 + $0x2c4] sm:%s3585] %v3640
                  %v3642 = vld [vmem:[%s3592 + $0x60] sm:%s3585]
                  %3643 = vst [vmem:[%s3593 + $0x300] sm:%s3585] %v3642
                  %v3644 = vld [vmem:[%s3592 + $0x64] sm:%s3585]
                  %3645 = vst [vmem:[%s3593 + $0x304] sm:%s3585] %v3644
                  %v3646 = vld [vmem:[%s3592 + $0x68] sm:%s3585]
                  %3647 = vst [vmem:[%s3593 + $0x340] sm:%s3585] %v3646
                  %v3648 = vld [vmem:[%s3592 + $0x6c] sm:%s3585]
                  %3649 = vst [vmem:[%s3593 + $0x344] sm:%s3585] %v3648
                  %v3650 = vld [vmem:[%s3592 + $0x70] sm:%s3585]
                  %3651 = vst [vmem:[%s3593 + $0x380] sm:%s3585] %v3650
                  %v3652 = vld [vmem:[%s3592 + $0x74] sm:%s3585]
                  %3653 = vst [vmem:[%s3593 + $0x384] sm:%s3585] %v3652
                  %v3654 = vld [vmem:[%s3592 + $0x78] sm:%s3585]
                  %3655 = vst [vmem:[%s3593 + $0x3c0] sm:%s3585] %v3654
                  %v3656 = vld [vmem:[%s3592 + $0x7c] sm:%s3585]
                  %3657 = vst [vmem:[%s3593 + $0x3c4] sm:%s3585] %v3656
                $region71: #{baseline_cnn_forward.2} parent=58 // loop_footer
                  %s3591 = sadd.s32 1, %s3587
                $region72: #{baseline_cnn_forward.2} parent=58 // loop_footer_branch
                  %3586 = sbr.rel target = $region68
                $region73: #{baseline_cnn_forward.2} parent=58 // loop_exit
                  _
              $region59: #{baseline_cnn_forward.2} parent=43 // pred_fallthru
                _
            $region44: #{baseline_cnn_forward.2} parent=39 // pred_fallthru
              _
            // Predicated region
            $region45: #{baseline_cnn_forward.2} parent=39 // pred_check
              _
            $region46: #{baseline_cnn_forward.2} parent=39 // pred_check_branch
              %3499 = sbr.rel (0) target = $region48
            $region47: #{baseline_cnn_forward.2} parent=39 // pred_region
              %s3501 = ssub.s32 16, 1
              loop: start=0, step=1, limit=1
              $region49: #{baseline_cnn_forward.2} parent=47 // loop_pre_header
                _
              $region50: #{baseline_cnn_forward.2} parent=47 // loop_header
                %s3503 = sphi 0, %s3507
                %p3504 = scmp.ge.s32.totalorder %s3503, 1
                %s3508 = sphi %s3485, %s3485
                %s3509 = sphi %s3493, %s3493
              $region51: #{baseline_cnn_forward.2} parent=47 // loop_header_branch
                %3506 = sbr.rel (%p3504) target = $region55
              $region52: #{baseline_cnn_forward.2} parent=47 // loop_body
                %v3510 = vld [vmem:[%s3508] sm:%s3501]
                %3511 = vst [vmem:[%s3509] sm:%s3501] %v3510
                %v3512 = vld [vmem:[%s3508 + $0x4] sm:%s3501]
                %3513 = vst [vmem:[%s3509 + $0x4] sm:%s3501] %v3512
                %v3514 = vld [vmem:[%s3508 + $0x8] sm:%s3501]
                %3515 = vst [vmem:[%s3509 + $0x40] sm:%s3501] %v3514
                %v3516 = vld [vmem:[%s3508 + $0xc] sm:%s3501]
                %3517 = vst [vmem:[%s3509 + $0x44] sm:%s3501] %v3516
                %v3518 = vld [vmem:[%s3508 + $0x10] sm:%s3501]
                %3519 = vst [vmem:[%s3509 + $0x80] sm:%s3501] %v3518
                %v3520 = vld [vmem:[%s3508 + $0x14] sm:%s3501]
                %3521 = vst [vmem:[%s3509 + $0x84] sm:%s3501] %v3520
                %v3522 = vld [vmem:[%s3508 + $0x18] sm:%s3501]
                %3523 = vst [vmem:[%s3509 + $0xc0] sm:%s3501] %v3522
                %v3524 = vld [vmem:[%s3508 + $0x1c] sm:%s3501]
                %3525 = vst [vmem:[%s3509 + $0xc4] sm:%s3501] %v3524
                %v3526 = vld [vmem:[%s3508 + $0x20] sm:%s3501]
                %3527 = vst [vmem:[%s3509 + $0x100] sm:%s3501] %v3526
                %v3528 = vld [vmem:[%s3508 + $0x24] sm:%s3501]
                %3529 = vst [vmem:[%s3509 + $0x104] sm:%s3501] %v3528
                %v3530 = vld [vmem:[%s3508 + $0x28] sm:%s3501]
                %3531 = vst [vmem:[%s3509 + $0x140] sm:%s3501] %v3530
                %v3532 = vld [vmem:[%s3508 + $0x2c] sm:%s3501]
                %3533 = vst [vmem:[%s3509 + $0x144] sm:%s3501] %v3532
                %v3534 = vld [vmem:[%s3508 + $0x30] sm:%s3501]
                %3535 = vst [vmem:[%s3509 + $0x180] sm:%s3501] %v3534
                %v3536 = vld [vmem:[%s3508 + $0x34] sm:%s3501]
                %3537 = vst [vmem:[%s3509 + $0x184] sm:%s3501] %v3536
                %v3538 = vld [vmem:[%s3508 + $0x38] sm:%s3501]
                %3539 = vst [vmem:[%s3509 + $0x1c0] sm:%s3501] %v3538
                %v3540 = vld [vmem:[%s3508 + $0x3c] sm:%s3501]
                %3541 = vst [vmem:[%s3509 + $0x1c4] sm:%s3501] %v3540
                %v3542 = vld [vmem:[%s3508 + $0x40] sm:%s3501]
                %3543 = vst [vmem:[%s3509 + $0x200] sm:%s3501] %v3542
                %v3544 = vld [vmem:[%s3508 + $0x44] sm:%s3501]
                %3545 = vst [vmem:[%s3509 + $0x204] sm:%s3501] %v3544
                %v3546 = vld [vmem:[%s3508 + $0x48] sm:%s3501]
                %3547 = vst [vmem:[%s3509 + $0x240] sm:%s3501] %v3546
                %v3548 = vld [vmem:[%s3508 + $0x4c] sm:%s3501]
                %3549 = vst [vmem:[%s3509 + $0x244] sm:%s3501] %v3548
                %v3550 = vld [vmem:[%s3508 + $0x50] sm:%s3501]
                %3551 = vst [vmem:[%s3509 + $0x280] sm:%s3501] %v3550
                %v3552 = vld [vmem:[%s3508 + $0x54] sm:%s3501]
                %3553 = vst [vmem:[%s3509 + $0x284] sm:%s3501] %v3552
                %v3554 = vld [vmem:[%s3508 + $0x58] sm:%s3501]
                %3555 = vst [vmem:[%s3509 + $0x2c0] sm:%s3501] %v3554
                %v3556 = vld [vmem:[%s3508 + $0x5c] sm:%s3501]
                %3557 = vst [vmem:[%s3509 + $0x2c4] sm:%s3501] %v3556
                %v3558 = vld [vmem:[%s3508 + $0x60] sm:%s3501]
                %3559 = vst [vmem:[%s3509 + $0x300] sm:%s3501] %v3558
                %v3560 = vld [vmem:[%s3508 + $0x64] sm:%s3501]
                %3561 = vst [vmem:[%s3509 + $0x304] sm:%s3501] %v3560
                %v3562 = vld [vmem:[%s3508 + $0x68] sm:%s3501]
                %3563 = vst [vmem:[%s3509 + $0x340] sm:%s3501] %v3562
                %v3564 = vld [vmem:[%s3508 + $0x6c] sm:%s3501]
                %3565 = vst [vmem:[%s3509 + $0x344] sm:%s3501] %v3564
                %v3566 = vld [vmem:[%s3508 + $0x70] sm:%s3501]
                %3567 = vst [vmem:[%s3509 + $0x380] sm:%s3501] %v3566
                %v3568 = vld [vmem:[%s3508 + $0x74] sm:%s3501]
                %3569 = vst [vmem:[%s3509 + $0x384] sm:%s3501] %v3568
                %v3570 = vld [vmem:[%s3508 + $0x78] sm:%s3501]
                %3571 = vst [vmem:[%s3509 + $0x3c0] sm:%s3501] %v3570
                %v3572 = vld [vmem:[%s3508 + $0x7c] sm:%s3501]
                %3573 = vst [vmem:[%s3509 + $0x3c4] sm:%s3501] %v3572
              $region53: #{baseline_cnn_forward.2} parent=47 // loop_footer
                %s3507 = sadd.s32 1, %s3503
              $region54: #{baseline_cnn_forward.2} parent=47 // loop_footer_branch
                %3502 = sbr.rel target = $region50
              $region55: #{baseline_cnn_forward.2} parent=47 // loop_exit
                _
            $region48: #{baseline_cnn_forward.2} parent=39 // pred_fallthru
              _
          $region40: #{baseline_cnn_forward.2} parent=35 // pred_fallthru
            _
          %3658 = vnop
        $region36: #{baseline_cnn_forward.2} parent=31 // pred_fallthru
          _
      $region32: #{baseline_cnn_forward.2} parent=5 // pred_fallthru
        _
      %p3659 = scmp.le.s32.totalorder 2, %s9
      // Predicated region
      $region74: #{baseline_cnn_forward.2} parent=5 // pred_check
        %p3660 = pneg %p3659
      $region75: #{baseline_cnn_forward.2} parent=5 // pred_check_branch
        %3662 = sbr.rel (%p3660) target = $region77
      $region76: #{baseline_cnn_forward.2} parent=5 // pred_region
        %s3663 = ssub.s32 %s9, 2
        // Predicated region
        $region78: #{baseline_cnn_forward.2} parent=76 // pred_check
          %p3664 = pneg %p122
        $region79: #{baseline_cnn_forward.2} parent=76 // pred_check_branch
          %3666 = sbr.rel (%p3664) target = $region81
        $region80: #{baseline_cnn_forward.2} parent=76 // pred_region
          %s3667 = sand.u32 %s107, 1
          %s3668 = sand.u32 %s107, 1
          %s3669 = smul.addr %s3668, 128
          %s3670 = scalar_lea.vmem [#allocation2], %s3669
        $region81: #{baseline_cnn_forward.2} parent=76 // pred_fallthru
          _
      $region77: #{baseline_cnn_forward.2} parent=5 // pred_fallthru
        _
    $region6: #{baseline_cnn_forward.2} parent=1 // loop_footer
      %s13 = sadd.s32 1, %s9
    $region7: #{baseline_cnn_forward.2} parent=1 // loop_footer_branch
      %8 = sbr.rel target = $region3
    $region8: #{baseline_cnn_forward.2} parent=1 // loop_exit
      _

// kernel: baseline_cnn_forward.3
$region0: #{baseline_cnn_forward.3}
  #allocation0 [shape = 'u32[]', space=smem, size = 0x4, offset = 0x4, fixed_abs, tag = 'smem constant byte address 0x4 - core index']
  #allocation1 [shape = 'u32[144,128]{1,0:T(1,128)}', space=vmem, size = 0x12000, scoped, tag = 'internal scratch']
  #allocation2 [shape = 'f32[256,64]{1,0:T(8,128)}', space=vmem, size = 0x20000, scoped, tag = 'scratch operand']
  #allocation3 [shape = 'f32[1,1]{1,0:T(1,128)S(1)}', space=vmem, size = 0x200, scoped, tag = 'scoped memory for baseline_cnn_forward.3']
  %s0 = inlined_call_operand.vmem [shape: bf16[2,8,2,288,65], index: 0, kind: input, shape index: {}]
  %s1 = inlined_call_operand.vmem [shape: bf16[3,512,288], index: 1, kind: input, shape index: {}]
  %s2 = inlined_call_operand.vmem [shape: f32[512,1], index: 2, kind: input, shape index: {}]
  %s3 = inlined_call_operand.vmem [shape: f32[8,256,64], index: 3, kind: input, shape index: {}]
  %s4 = inlined_call_operand.<no memory space> [shape: f32[1,1], index: 4, kind: input, shape index: {}]
  %s5 = inlined_call_operand.vmem [shape: f32[2,1,128], index: 5, kind: output, shape index: {}]
  %s6 = sld [smem:[#allocation0]]
  $region61: #{baseline_cnn_forward.3} parent=0
    _
  %s8 = ssub.s32 1, %s6
  %s9 = scalar_select 0, %s8, %s6
  %v10 = vstv %s4
  %11 = vst [vmem:[#allocation3] sm:$0x1] %v10
  loop: start=0, step=1, limit=18
  $region2: #{baseline_cnn_forward.3} parent=0 // loop_pre_header
    _
  $region3: #{baseline_cnn_forward.3} parent=0 // loop_header
    %s13 = sphi 0, %s17
    %p14 = scmp.ge.s32.totalorder %s13, 18
    %s20 = sphi 0, %s32
    %s21 = sphi 0, %s28
    %s22 = sphi 0, %s20
    %s23 = sphi 0, %s21
    %s24 = sphi 0, %s22
    %s25 = sphi 0, %s23
    %s37 = sphi 0, %s39
    %s40 = sphi 0, %s37
    %s41 = sphi 0, %s40
    %s57 = sphi 0, %s41
    %s61 = sphi 0, %s61
    %s63 = sphi 0, %s61
    %s64 = sphi 0, %s63
    %s78 = sphi 0, %s64
    %s82 = sphi 0, %s82
    %s84 = sphi 0, %s82
    %s85 = sphi 0, %s84
    %s99 = sphi 0, %s85
    %s105 = sphi 0, %s107
    %s108 = sphi 0, %s105
    %s109 = sphi 0, %s108
    %s125 = sphi 0, %s109
    %s129 = sphi 0, %s129
    %s131 = sphi 0, %s129
    %s132 = sphi 0, %s131
    %s146 = sphi 0, %s132
    %s152 = sphi 0, %s154
    %s155 = sphi 0, %s152
    %s156 = sphi 0, %s155
    %s172 = sphi 0, %s156
  $region4: #{baseline_cnn_forward.3} parent=0 // loop_header_branch
    %16 = sbr.rel (%p14) target = $region8
  $region5: #{baseline_cnn_forward.3} parent=0 // loop_body
    %s18 = ssub.s32 %s13, 1
    %s19 = ssub.s32 %s13, 2
    %s26 = sadd.s32 1, %s21
    %p27 = scmp.ge.s32.totalorder %s26, 8
    %s28 = scalar_select %p27, 0, %s26
    %s29 = sadd.s32 1, %s20
    %s30 = scalar_select %p27, %s29, %s20
    %p31 = scmp.ge.s32.totalorder %s30, 2
    %s32 = scalar_select %p31, 0, %s30
    %s33 = ssub.s32 %s20, %s32
    %s34 = ssub.s32 %s21, %s28
    %s35 = sor.u32 %s33, %s34
    %p36 = scmp.eq.s32.totalorder %s35, 0
    %s38 = sadd.s32 %s37, 1
    %s39 = scalar_select %p36, %s37, %s38
    %p42 = pneg %p36
    %p43 = scmp.eq.s32.totalorder %s13, 15
    %p44 = por %p42, %p43
    %p45 = scmp.ne.s32.totalorder %s37, %s40
    %p46 = scmp.eq.s32.totalorder %s13, 0
    %p47 = por %p45, %p46
    %p48 = scmp.ne.s32.totalorder %s37, %s40
    %p49 = scmp.eq.s32.totalorder %s18, 15
    %p50 = por %p48, %p49
    %p51 = scmp.ne.s32.totalorder %s40, %s41
    %p52 = scmp.eq.s32.totalorder %s18, 0
    %p53 = por %p51, %p52
    %p54 = scmp.ne.s32.totalorder %s40, %s41
    %p55 = scmp.eq.s32.totalorder %s19, 15
    %p56 = por %p54, %p55
    %p58 = scmp.ne.s32.totalorder %s41, %s57
    %p59 = scmp.eq.s32.totalorder %s19, 0
    %p60 = por %p58, %p59
    %s62 = sadd.s32 %s61, 1
    %p65 = scmp.eq.s32.totalorder %s13, 15
    %p66 = scmp.ne.s32.totalorder %s61, %s63
    %p67 = scmp.eq.s32.totalorder %s13, 0
    %p68 = por %p66, %p67
    %p69 = scmp.ne.s32.totalorder %s61, %s63
    %p70 = scmp.eq.s32.totalorder %s18, 15
    %p71 = por %p69, %p70
    %p72 = scmp.ne.s32.totalorder %s63, %s64
    %p73 = scmp.eq.s32.totalorder %s18, 0
    %p74 = por %p72, %p73
    %p75 = scmp.ne.s32.totalorder %s63, %s64
    %p76 = scmp.eq.s32.totalorder %s19, 15
    %p77 = por %p75, %p76
    %p79 = scmp.ne.s32.totalorder %s64, %s78
    %p80 = scmp.eq.s32.totalorder %s19, 0
    %p81 = por %p79, %p80
    %s83 = sadd.s32 %s82, 1
    %p86 = scmp.eq.s32.totalorder %s13, 15
    %p87 = scmp.ne.s32.totalorder %s82, %s84
    %p88 = scmp.eq.s32.totalorder %s13, 0
    %p89 = por %p87, %p88
    %p90 = scmp.ne.s32.totalorder %s82, %s84
    %p91 = scmp.eq.s32.totalorder %s18, 15
    %p92 = por %p90, %p91
    %p93 = scmp.ne.s32.totalorder %s84, %s85
    %p94 = scmp.eq.s32.totalorder %s18, 0
    %p95 = por %p93, %p94
    %p96 = scmp.ne.s32.totalorder %s84, %s85
    %p97 = scmp.eq.s32.totalorder %s19, 15
    %p98 = por %p96, %p97
    %p100 = scmp.ne.s32.totalorder %s85, %s99
    %p101 = scmp.eq.s32.totalorder %s19, 0
    %p102 = por %p100, %p101
    %s103 = ssub.s32 %s21, %s28
    %p104 = scmp.eq.s32.totalorder %s103, 0
    %s106 = sadd.s32 %s105, 1
    %s107 = scalar_select %p104, %s105, %s106
    %p110 = pneg %p104
    %p111 = scmp.eq.s32.totalorder %s13, 15
    %p112 = por %p110, %p111
    %p113 = scmp.ne.s32.totalorder %s105, %s108
    %p114 = scmp.eq.s32.totalorder %s13, 0
    %p115 = por %p113, %p114
    %p116 = scmp.ne.s32.totalorder %s105, %s108
    %p117 = scmp.eq.s32.totalorder %s18, 15
    %p118 = por %p116, %p117
    %p119 = scmp.ne.s32.totalorder %s108, %s109
    %p120 = scmp.eq.s32.totalorder %s18, 0
    %p121 = por %p119, %p120
    %p122 = scmp.ne.s32.totalorder %s108, %s109
    %p123 = scmp.eq.s32.totalorder %s19, 15
    %p124 = por %p122, %p123
    %p126 = scmp.ne.s32.totalorder %s109, %s125
    %p127 = scmp.eq.s32.totalorder %s19, 0
    %p128 = por %p126, %p127
    %s130 = sadd.s32 %s129, 1
    %p133 = scmp.eq.s32.totalorder %s13, 15
    %p134 = scmp.ne.s32.totalorder %s129, %s131
    %p135 = scmp.eq.s32.totalorder %s13, 0
    %p136 = por %p134, %p135
    %p137 = scmp.ne.s32.totalorder %s129, %s131
    %p138 = scmp.eq.s32.totalorder %s18, 15
    %p139 = por %p137, %p138
    %p140 = scmp.ne.s32.totalorder %s131, %s132
    %p141 = scmp.eq.s32.totalorder %s18, 0
    %p142 = por %p140, %p141
    %p143 = scmp.ne.s32.totalorder %s131, %s132
    %p144 = scmp.eq.s32.totalorder %s19, 15
    %p145 = por %p143, %p144
    %p147 = scmp.ne.s32.totalorder %s132, %s146
    %p148 = scmp.eq.s32.totalorder %s19, 0
    %p149 = por %p147, %p148
    %s150 = ssub.s32 %s20, %s32
    %p151 = scmp.eq.s32.totalorder %s150, 0
    %s153 = sadd.s32 %s152, 1
    %s154 = scalar_select %p151, %s152, %s153
    %p157 = pneg %p151
    %p158 = scmp.eq.s32.totalorder %s13, 15
    %p159 = por %p157, %p158
    %p160 = scmp.ne.s32.totalorder %s152, %s155
    %p161 = scmp.eq.s32.totalorder %s13, 0
    %p162 = por %p160, %p161
    %p163 = scmp.ne.s32.totalorder %s152, %s155
    %p164 = scmp.eq.s32.totalorder %s18, 15
    %p165 = por %p163, %p164
    %p166 = scmp.ne.s32.totalorder %s155, %s156
    %p167 = scmp.eq.s32.totalorder %s18, 0
    %p168 = por %p166, %p167
    %p169 = scmp.ne.s32.totalorder %s155, %s156
    %p170 = scmp.eq.s32.totalorder %s19, 15
    %p171 = por %p169, %p170
    %p173 = scmp.ne.s32.totalorder %s156, %s172
    %p174 = scmp.eq.s32.totalorder %s19, 0
    %p175 = por %p173, %p174
    %p176 = scmp.le.s32.totalorder 1, %s13
    %p177 = scmp.lt.s32.totalorder %s13, 17
    %p178 = pnand %p176, %p177
    %p179 = pneg %p178
    // Predicated region
    $region9: #{baseline_cnn_forward.3} parent=5 // pred_check
      _
    $region10: #{baseline_cnn_forward.3} parent=5 // pred_check_branch
      %181 = sbr.rel (%p178) target = $region12
    $region11: #{baseline_cnn_forward.3} parent=5 // pred_region
      %s182 = ssub.s32 %s13, 1
      // Predicated region
      $region13: #{baseline_cnn_forward.3} parent=11 // pred_check
        %p183 = pneg %p74
      $region14: #{baseline_cnn_forward.3} parent=11 // pred_check_branch
        %185 = sbr.rel (%p183) target = $region16
      $region15: #{baseline_cnn_forward.3} parent=11 // pred_region
        _
      $region16: #{baseline_cnn_forward.3} parent=11 // pred_fallthru
        _
      // Predicated region
      $region17: #{baseline_cnn_forward.3} parent=11 // pred_check
        %p186 = pneg %p95
      $region18: #{baseline_cnn_forward.3} parent=11 // pred_check_branch
        %188 = sbr.rel (%p186) target = $region20
      $region19: #{baseline_cnn_forward.3} parent=11 // pred_region
        _
      $region20: #{baseline_cnn_forward.3} parent=11 // pred_fallthru
        _
      // Predicated region
      $region21: #{baseline_cnn_forward.3} parent=11 // pred_check
        %p189 = pneg %p142
      $region22: #{baseline_cnn_forward.3} parent=11 // pred_check_branch
        %191 = sbr.rel (%p189) target = $region24
      $region23: #{baseline_cnn_forward.3} parent=11 // pred_region
        _
      $region24: #{baseline_cnn_forward.3} parent=11 // pred_fallthru
        _
    $region12: #{baseline_cnn_forward.3} parent=5 // pred_fallthru
      _
    %p192 = scmp.lt.s32.totalorder %s13, 16
    // Predicated region
    $region25: #{baseline_cnn_forward.3} parent=5 // pred_check
      %p193 = pneg %p192
    $region26: #{baseline_cnn_forward.3} parent=5 // pred_check_branch
      %195 = sbr.rel (%p193) target = $region28
    $region27: #{baseline_cnn_forward.3} parent=5 // pred_region
      // Predicated region
      $region29: #{baseline_cnn_forward.3} parent=27 // pred_check
        %p196 = pneg %p47
      $region30: #{baseline_cnn_forward.3} parent=27 // pred_check_branch
        %198 = sbr.rel (%p196) target = $region32
      $region31: #{baseline_cnn_forward.3} parent=27 // pred_region
        %p199 = scmp.lt.s32.totalorder %s20, 1
        %s200 = scalar_select %p199, %s20, 1
        %p201 = scmp.lt.s32.totalorder %s21, 7
        %s202 = scalar_select %p201, %s21, 7
        %s203 = smul.addr %s202, 72
        %s204 = smul.addr %s200, 576
        %s205 = sadd.s32 %s203, %s204
        %s206 = smul.addr %s205, 4
        %s207 = scalar_lea.vmem %s0, %s206
      $region32: #{baseline_cnn_forward.3} parent=27 // pred_fallthru
        _
      // Predicated region
      $region33: #{baseline_cnn_forward.3} parent=27 // pred_check
        %p208 = pneg %p115
      $region34: #{baseline_cnn_forward.3} parent=27 // pred_check_branch
        %210 = sbr.rel (%p208) target = $region36
      $region35: #{baseline_cnn_forward.3} parent=27 // pred_region
        %p211 = scmp.lt.s32.totalorder %s21, 7
        %s212 = scalar_select %p211, %s21, 7
        %s213 = smul.addr %s212, 32
        %s214 = smul.addr %s213, 8
        %s215 = scalar_lea.vmem %s3, %s214
      $region36: #{baseline_cnn_forward.3} parent=27 // pred_fallthru
        _
    $region28: #{baseline_cnn_forward.3} parent=5 // pred_fallthru
      _
    %p216 = scmp.le.s32.totalorder 1, %s13
    %p217 = scmp.lt.s32.totalorder %s13, 17
    %p218 = pnand %p216, %p217
    %p219 = pneg %p218
    // Predicated region
    $region37: #{baseline_cnn_forward.3} parent=5 // pred_check
      _
    $region38: #{baseline_cnn_forward.3} parent=5 // pred_check_branch
      %221 = sbr.rel (%p218) target = $region40
    $region39: #{baseline_cnn_forward.3} parent=5 // pred_region
      %s222 = ssub.s32 %s13, 1
      %p223 = scmp.lt.s32.totalorder %s22, 1
      %s224 = scalar_select %p223, %s22, 1
      %p225 = scmp.lt.s32.totalorder %s23, 7
      %s226 = scalar_select %p225, %s23, 7
      %s227 = smul.addr %s226, 72
      %s228 = smul.addr %s224, 576
      %s229 = sadd.s32 %s227, %s228
      %s230 = smul.addr %s229, 4
      %s231 = scalar_lea.vmem %s0, %s230
      %p232 = pneg %p53
      %p233 = pneg %p50
      %p234 = pneg %p74
      %p235 = pneg %p71
      %p236 = pneg %p95
      %p237 = pneg %p92
      %p238 = scmp.lt.s32.totalorder %s23, 7
      %s239 = scalar_select %p238, %s23, 7
      %s240 = smul.addr %s239, 32
      %s241 = smul.addr %s240, 8
      %s242 = scalar_lea.vmem %s3, %s241
      %p243 = pneg %p121
      %p244 = pneg %p118
      %p245 = pneg %p142
      %p246 = pneg %p139
      %p247 = pneg %p168
      %p248 = pneg %p165
      %p249 = scmp.lt.s32.totalorder %s22, 1
      %s250 = scalar_select %p249, %s22, 1
      %s251 = scalar_lea.vmem %s5, %s250
      %p252 = scmp.lt.s32.totalorder %s22, 1
      %s253 = scalar_select %p252, %s22, 1
      %p254 = scmp.lt.s32.totalorder %s23, 7
      %s255 = scalar_select %p254, %s23, 7
      %s256 = smul.addr %s255, 72
      %s257 = smul.addr %s253, 576
      %s258 = sadd.s32 %s256, %s257
      %s259 = smul.addr %s258, 4
      %s260 = scalar_lea.vmem %s0, %s259
      %p261 = scmp.lt.s32.totalorder %s23, 7
      %s262 = scalar_select %p261, %s23, 7
      %s263 = smul.addr %s262, 32
      %s264 = smul.addr %s263, 8
      %s265 = scalar_lea.vmem %s3, %s264
      %p266 = scmp.lt.s32.totalorder %s22, 1
      %s267 = scalar_select %p266, %s22, 1
      %s268 = scalar_lea.vmem %s5, %s267
      %v270 = vld [vmem:[%s260] sm:$0xf]
      %v271 = vld [vmem:[%s260 + $0x4] sm:$0xf]
      %v272 = vld [vmem:[%s260 + $0x8] sm:$0xf]
      %v273 = vld [vmem:[%s260 + $0xc] sm:$0xf]
      %v274 = vld [vmem:[%s260 + $0x10] sm:$0xf]
      %v275 = vld [vmem:[%s260 + $0x14] sm:$0xf]
      %v276 = vld [vmem:[%s260 + $0x18] sm:$0xf]
      %v277 = vld [vmem:[%s260 + $0x1c] sm:$0xf]
      %v278 = vld [vmem:[%s260 + $0x20] sm:$0xf]
      %v279 = vld [vmem:[%s260 + $0x24] sm:$0xf]
      %v280 = vld [vmem:[%s260 + $0x28] sm:$0xf]
      %v281 = vld [vmem:[%s260 + $0x2c] sm:$0xf]
      %v282 = vld [vmem:[%s260 + $0x30] sm:$0xf]
      %v283 = vld [vmem:[%s260 + $0x34] sm:$0xf]
      %v284 = vld [vmem:[%s260 + $0x38] sm:$0xf]
      %v285 = vld [vmem:[%s260 + $0x3c] sm:$0xf]
      %v286 = vld [vmem:[%s260 + $0x40] sm:$0xf]
      %v287 = vld [vmem:[%s260 + $0x44] sm:$0xf]
      %v288 = vld [vmem:[%s260 + $0x48] sm:$0xf]
      %v289 = vld [vmem:[%s260 + $0x4c] sm:$0xf]
      %v290 = vld [vmem:[%s260 + $0x50] sm:$0xf]
      %v291 = vld [vmem:[%s260 + $0x54] sm:$0xf]
      %v292 = vld [vmem:[%s260 + $0x58] sm:$0xf]
      %v293 = vld [vmem:[%s260 + $0x5c] sm:$0xf]
      %v294 = vld [vmem:[%s260 + $0x60] sm:$0xf]
      %v295 = vld [vmem:[%s260 + $0x64] sm:$0xf]
      %v296 = vld [vmem:[%s260 + $0x68] sm:$0xf]
      %v297 = vld [vmem:[%s260 + $0x6c] sm:$0xf]
      %v298 = vld [vmem:[%s260 + $0x70] sm:$0xf]
      %v299 = vld [vmem:[%s260 + $0x74] sm:$0xf]
      %v300 = vld [vmem:[%s260 + $0x78] sm:$0xf]
      %v301 = vld [vmem:[%s260 + $0x7c] sm:$0xf]
      %v302 = vld [vmem:[%s260 + $0x80] sm:$0xf]
      %v303 = vld [vmem:[%s260 + $0x84] sm:$0xf]
      %v304 = vld [vmem:[%s260 + $0x88] sm:$0xf]
      %v305 = vld [vmem:[%s260 + $0x8c] sm:$0xf]
      %s306 = scalar_lea.vmem %s260, 144
      %v307 = vld [vmem:[%s306] sm:$0xf]
      %v308 = vld [vmem:[%s306 + $0x4] sm:$0xf]
      %v309 = vld [vmem:[%s306 + $0x8] sm:$0xf]
      %v310 = vld [vmem:[%s306 + $0xc] sm:$0xf]
      %v311 = vld [vmem:[%s306 + $0x10] sm:$0xf]
      %v312 = vld [vmem:[%s306 + $0x14] sm:$0xf]
      %v313 = vld [vmem:[%s306 + $0x18] sm:$0xf]
      %v314 = vld [vmem:[%s306 + $0x1c] sm:$0xf]
      %v315 = vld [vmem:[%s306 + $0x20] sm:$0xf]
      %v316 = vld [vmem:[%s306 + $0x24] sm:$0xf]
      %v317 = vld [vmem:[%s306 + $0x28] sm:$0xf]
      %v318 = vld [vmem:[%s306 + $0x2c] sm:$0xf]
      %v319 = vld [vmem:[%s306 + $0x30] sm:$0xf]
      %v320 = vld [vmem:[%s306 + $0x34] sm:$0xf]
      %v321 = vld [vmem:[%s306 + $0x38] sm:$0xf]
      %v322 = vld [vmem:[%s306 + $0x3c] sm:$0xf]
      %v323 = vld [vmem:[%s306 + $0x40] sm:$0xf]
      %v324 = vld [vmem:[%s306 + $0x44] sm:$0xf]
      %v325 = vld [vmem:[%s306 + $0x48] sm:$0xf]
      %v326 = vld [vmem:[%s306 + $0x4c] sm:$0xf]
      %v327 = vld [vmem:[%s306 + $0x50] sm:$0xf]
      %v328 = vld [vmem:[%s306 + $0x54] sm:$0xf]
      %v329 = vld [vmem:[%s306 + $0x58] sm:$0xf]
      %v330 = vld [vmem:[%s306 + $0x5c] sm:$0xf]
      %v331 = vld [vmem:[%s306 + $0x60] sm:$0xf]
      %v332 = vld [vmem:[%s306 + $0x64] sm:$0xf]
      %v333 = vld [vmem:[%s306 + $0x68] sm:$0xf]
      %v334 = vld [vmem:[%s306 + $0x6c] sm:$0xf]
      %v335 = vld [vmem:[%s306 + $0x70] sm:$0xf]
      %v336 = vld [vmem:[%s306 + $0x74] sm:$0xf]
      %v337 = vld [vmem:[%s306 + $0x78] sm:$0xf]
      %v338 = vld [vmem:[%s306 + $0x7c] sm:$0xf]
      %v339 = vld [vmem:[%s306 + $0x80] sm:$0xf]
      %v340 = vld [vmem:[%s306 + $0x84] sm:$0xf]
      %v341 = vld [vmem:[%s306 + $0x88] sm:$0xf]
      %v342 = vld [vmem:[%s306 + $0x8c] sm:$0xf]
      %v343 = vld [vmem:[%s2] sm:$0xff]
      %v344 = vld [vmem:[%s2 + $0x8] sm:$0xff]
      %v345 = vld [vmem:[%s2 + $0x10] sm:$0xff]
      %v346 = vld [vmem:[%s2 + $0x18] sm:$0xff]
      %v347 = vld [vmem:[%s2 + $0x20] sm:$0xff]
      %v348 = vld [vmem:[%s2 + $0x28] sm:$0xff]
      %v349 = vld [vmem:[%s2 + $0x30] sm:$0xff]
      %v350 = vld [vmem:[%s2 + $0x38] sm:$0xff]
      %v351 = vld [vmem:[%s2 + $0x40] sm:$0xff]
      %v352 = vld [vmem:[%s2 + $0x48] sm:$0xff]
      %v353 = vld [vmem:[%s2 + $0x50] sm:$0xff]
      %v354 = vld [vmem:[%s2 + $0x58] sm:$0xff]
      %v355 = vld [vmem:[%s2 + $0x60] sm:$0xff]
      %v356 = vld [vmem:[%s2 + $0x68] sm:$0xff]
      %v357 = vld [vmem:[%s2 + $0x70] sm:$0xff]
      %v358 = vld [vmem:[%s2 + $0x78] sm:$0xff]
      %v359 = vld [vmem:[%s2 + $0x80] sm:$0xff]
      %v360 = vld [vmem:[%s2 + $0x88] sm:$0xff]
      %v361 = vld [vmem:[%s2 + $0x90] sm:$0xff]
      %v362 = vld [vmem:[%s2 + $0x98] sm:$0xff]
      %v363 = vld [vmem:[%s2 + $0xa0] sm:$0xff]
      %v364 = vld [vmem:[%s2 + $0xa8] sm:$0xff]
      %v365 = vld [vmem:[%s2 + $0xb0] sm:$0xff]
      %v366 = vld [vmem:[%s2 + $0xb8] sm:$0xff]
      %v367 = vld [vmem:[%s2 + $0xc0] sm:$0xff]
      %v368 = vld [vmem:[%s2 + $0xc8] sm:$0xff]
      %v369 = vld [vmem:[%s2 + $0xd0] sm:$0xff]
      %v370 = vld [vmem:[%s2 + $0xd8] sm:$0xff]
      %v371 = vld [vmem:[%s2 + $0xe0] sm:$0xff]
      %v372 = vld [vmem:[%s2 + $0xe8] sm:$0xff]
      %v373 = vld [vmem:[%s2 + $0xf0] sm:$0xff]
      %v374 = vld [vmem:[%s2 + $0xf8] sm:$0xff]
      %v375 = vld [vmem:[%s2 + $0x100] sm:$0xff]
      %v376 = vld [vmem:[%s2 + $0x108] sm:$0xff]
      %v377 = vld [vmem:[%s2 + $0x110] sm:$0xff]
      %v378 = vld [vmem:[%s2 + $0x118] sm:$0xff]
      %v379 = vld [vmem:[%s2 + $0x120] sm:$0xff]
      %v380 = vld [vmem:[%s2 + $0x128] sm:$0xff]
      %v381 = vld [vmem:[%s2 + $0x130] sm:$0xff]
      %v382 = vld [vmem:[%s2 + $0x138] sm:$0xff]
      %v383 = vld [vmem:[%s2 + $0x140] sm:$0xff]
      %v384 = vld [vmem:[%s2 + $0x148] sm:$0xff]
      %v385 = vld [vmem:[%s2 + $0x150] sm:$0xff]
      %v386 = vld [vmem:[%s2 + $0x158] sm:$0xff]
      %v387 = vld [vmem:[%s2 + $0x160] sm:$0xff]
      %v388 = vld [vmem:[%s2 + $0x168] sm:$0xff]
      %v389 = vld [vmem:[%s2 + $0x170] sm:$0xff]
      %v390 = vld [vmem:[%s2 + $0x178] sm:$0xff]
      %v391 = vld [vmem:[%s2 + $0x180] sm:$0xff]
      %v392 = vld [vmem:[%s2 + $0x188] sm:$0xff]
      %v393 = vld [vmem:[%s2 + $0x190] sm:$0xff]
      %v394 = vld [vmem:[%s2 + $0x198] sm:$0xff]
      %v395 = vld [vmem:[%s2 + $0x1a0] sm:$0xff]
      %v396 = vld [vmem:[%s2 + $0x1a8] sm:$0xff]
      %v397 = vld [vmem:[%s2 + $0x1b0] sm:$0xff]
      %v398 = vld [vmem:[%s2 + $0x1b8] sm:$0xff]
      %v399 = vld [vmem:[%s2 + $0x1c0] sm:$0xff]
      %v400 = vld [vmem:[%s2 + $0x1c8] sm:$0xff]
      %v401 = vld [vmem:[%s2 + $0x1d0] sm:$0xff]
      %v402 = vld [vmem:[%s2 + $0x1d8] sm:$0xff]
      %v403 = vld [vmem:[%s2 + $0x1e0] sm:$0xff]
      %v404 = vld [vmem:[%s2 + $0x1e8] sm:$0xff]
      %v405 = vld [vmem:[%s2 + $0x1f0] sm:$0xff]
      %v406 = vld [vmem:[%s2 + $0x1f8] sm:$0xff]
      %v443 = vunpack.c.l.b16 %v270
      %v444 = vunpack.c.l.b16 %v271
      %v445 = vunpack.c.l.b16 %v272
      %v446 = vunpack.c.l.b16 %v273
      %v447 = vunpack.c.l.b16 %v274
      %v448 = vunpack.c.l.b16 %v275
      %v449 = vunpack.c.l.b16 %v276
      %v450 = vunpack.c.l.b16 %v277
      %v451 = vunpack.c.l.b16 %v278
      %v452 = vunpack.c.l.b16 %v279
      %v453 = vunpack.c.l.b16 %v280
      %v454 = vunpack.c.l.b16 %v281
      %v455 = vunpack.c.l.b16 %v282
      %v456 = vunpack.c.l.b16 %v283
      %v457 = vunpack.c.l.b16 %v284
      %v458 = vunpack.c.l.b16 %v285
      %v459 = vunpack.c.l.b16 %v286
      %v460 = vunpack.c.l.b16 %v287
      %v461 = vunpack.c.l.b16 %v288
      %v462 = vunpack.c.l.b16 %v289
      %v463 = vunpack.c.l.b16 %v290
      %v464 = vunpack.c.l.b16 %v291
      %v465 = vunpack.c.l.b16 %v292
      %v466 = vunpack.c.l.b16 %v293
      %v467 = vunpack.c.l.b16 %v294
      %v468 = vunpack.c.l.b16 %v295
      %v469 = vunpack.c.l.b16 %v296
      %v470 = vunpack.c.l.b16 %v297
      %v471 = vunpack.c.l.b16 %v298
      %v472 = vunpack.c.l.b16 %v299
      %v473 = vunpack.c.l.b16 %v300
      %v474 = vunpack.c.l.b16 %v301
      %v475 = vunpack.c.l.b16 %v302
      %v476 = vunpack.c.l.b16 %v303
      %v477 = vunpack.c.l.b16 %v304
      %v478 = vunpack.c.l.b16 %v305
      %v479 = vpack.c.b16 %v444, %v443
      %v480 = vpack.c.b16 %v446, %v445
      %v481 = vpack.c.b16 %v448, %v447
      %v482 = vpack.c.b16 %v450, %v449
      %v483 = vpack.c.b16 %v452, %v451
      %v484 = vpack.c.b16 %v454, %v453
      %v485 = vpack.c.b16 %v456, %v455
      %v486 = vpack.c.b16 %v458, %v457
      %v487 = vpack.c.b16 %v460, %v459
      %v488 = vpack.c.b16 %v462, %v461
      %v489 = vpack.c.b16 %v464, %v463
      %v490 = vpack.c.b16 %v466, %v465
      %v491 = vpack.c.b16 %v468, %v467
      %v492 = vpack.c.b16 %v470, %v469
      %v493 = vpack.c.b16 %v472, %v471
      %v494 = vpack.c.b16 %v474, %v473
      %v495 = vpack.c.b16 %v476, %v475
      %v496 = vpack.c.b16 %v478, %v477
      %v533 = vunpack.c.l.b16 %v307
      %v534 = vunpack.c.l.b16 %v308
      %v535 = vunpack.c.l.b16 %v309
      %v536 = vunpack.c.l.b16 %v310
      %v537 = vunpack.c.l.b16 %v311
      %v538 = vunpack.c.l.b16 %v312
      %v539 = vunpack.c.l.b16 %v313
      %v540 = vunpack.c.l.b16 %v314
      %v541 = vunpack.c.l.b16 %v315
      %v542 = vunpack.c.l.b16 %v316
      %v543 = vunpack.c.l.b16 %v317
      %v544 = vunpack.c.l.b16 %v318
      %v545 = vunpack.c.l.b16 %v319
      %v546 = vunpack.c.l.b16 %v320
      %v547 = vunpack.c.l.b16 %v321
      %v548 = vunpack.c.l.b16 %v322
      %v549 = vunpack.c.l.b16 %v323
      %v550 = vunpack.c.l.b16 %v324
      %v551 = vunpack.c.l.b16 %v325
      %v552 = vunpack.c.l.b16 %v326
      %v553 = vunpack.c.l.b16 %v327
      %v554 = vunpack.c.l.b16 %v328
      %v555 = vunpack.c.l.b16 %v329
      %v556 = vunpack.c.l.b16 %v330
      %v557 = vunpack.c.l.b16 %v331
      %v558 = vunpack.c.l.b16 %v332
      %v559 = vunpack.c.l.b16 %v333
      %v560 = vunpack.c.l.b16 %v334
      %v561 = vunpack.c.l.b16 %v335
      %v562 = vunpack.c.l.b16 %v336
      %v563 = vunpack.c.l.b16 %v337
      %v564 = vunpack.c.l.b16 %v338
      %v565 = vunpack.c.l.b16 %v339
      %v566 = vunpack.c.l.b16 %v340
      %v567 = vunpack.c.l.b16 %v341
      %v568 = vunpack.c.l.b16 %v342
      %v569 = vpack.c.b16 %v534, %v533
      %v570 = vpack.c.b16 %v536, %v535
      %v571 = vpack.c.b16 %v538, %v537
      %v572 = vpack.c.b16 %v540, %v539
      %v573 = vpack.c.b16 %v542, %v541
      %v574 = vpack.c.b16 %v544, %v543
      %v575 = vpack.c.b16 %v546, %v545
      %v576 = vpack.c.b16 %v548, %v547
      %v577 = vpack.c.b16 %v550, %v549
      %v578 = vpack.c.b16 %v552, %v551
      %v579 = vpack.c.b16 %v554, %v553
      %v580 = vpack.c.b16 %v556, %v555
      %v581 = vpack.c.b16 %v558, %v557
      %v582 = vpack.c.b16 %v560, %v559
      %v583 = vpack.c.b16 %v562, %v561
      %v584 = vpack.c.b16 %v564, %v563
      %v585 = vpack.c.b16 %v566, %v565
      %v586 = vpack.c.b16 %v568, %v567
      %587 = vrot.lane.b32.xlu0 %v569, 64
      %v588 = vpop.permute.xlu0 %587
      %589 = vrot.lane.b32.xlu0 %v570, 64
      %v590 = vpop.permute.xlu0 %589
      %591 = vrot.lane.b32.xlu0 %v571, 64
      %v592 = vpop.permute.xlu0 %591
      %593 = vrot.lane.b32.xlu0 %v572, 64
      %v594 = vpop.permute.xlu0 %593
      %595 = vrot.lane.b32.xlu0 %v573, 64
      %v596 = vpop.permute.xlu0 %595
      %597 = vrot.lane.b32.xlu0 %v574, 64
      %v598 = vpop.permute.xlu0 %597
      %599 = vrot.lane.b32.xlu0 %v575, 64
      %v600 = vpop.permute.xlu0 %599
      %601 = vrot.lane.b32.xlu0 %v576, 64
      %v602 = vpop.permute.xlu0 %601
      %603 = vrot.lane.b32.xlu0 %v577, 64
      %v604 = vpop.permute.xlu0 %603
      %605 = vrot.lane.b32.xlu0 %v578, 64
      %v606 = vpop.permute.xlu0 %605
      %607 = vrot.lane.b32.xlu0 %v579, 64
      %v608 = vpop.permute.xlu0 %607
      %609 = vrot.lane.b32.xlu0 %v580, 64
      %v610 = vpop.permute.xlu0 %609
      %611 = vrot.lane.b32.xlu0 %v581, 64
      %v612 = vpop.permute.xlu0 %611
      %613 = vrot.lane.b32.xlu0 %v582, 64
      %v614 = vpop.permute.xlu0 %613
      %615 = vrot.lane.b32.xlu0 %v583, 64
      %v616 = vpop.permute.xlu0 %615
      %617 = vrot.lane.b32.xlu0 %v584, 64
      %v618 = vpop.permute.xlu0 %617
      %619 = vrot.lane.b32.xlu0 %v585, 64
      %v620 = vpop.permute.xlu0 %619
      %621 = vrot.lane.b32.xlu0 %v586, 64
      %v622 = vpop.permute.xlu0 %621
      %vm623 = vcmask 523264
      %v626 = vsel %vm623, %v479, %v588
      %v630 = vsel %vm623, %v480, %v590
      %v634 = vsel %vm623, %v481, %v592
      %v638 = vsel %vm623, %v482, %v594
      %v642 = vsel %vm623, %v483, %v596
      %v646 = vsel %vm623, %v484, %v598
      %v650 = vsel %vm623, %v485, %v600
      %v654 = vsel %vm623, %v486, %v602
      %v658 = vsel %vm623, %v487, %v604
      %v662 = vsel %vm623, %v488, %v606
      %v666 = vsel %vm623, %v489, %v608
      %v670 = vsel %vm623, %v490, %v610
      %v674 = vsel %vm623, %v491, %v612
      %v678 = vsel %vm623, %v492, %v614
      %v682 = vsel %vm623, %v493, %v616
      %v686 = vsel %vm623, %v494, %v618
      %v690 = vsel %vm623, %v495, %v620
      %v694 = vsel %vm623, %v496, %v622
      %696 = vrot.lane.b32.xlu0 %v479, 63
      %v697 = vpop.permute.xlu0 %696
      %698 = vrot.lane.b32.xlu0 %v480, 63
      %v699 = vpop.permute.xlu0 %698
      %700 = vrot.lane.b32.xlu0 %v481, 63
      %v701 = vpop.permute.xlu0 %700
      %702 = vrot.lane.b32.xlu0 %v482, 63
      %v703 = vpop.permute.xlu0 %702
      %704 = vrot.lane.b32.xlu0 %v483, 63
      %v705 = vpop.permute.xlu0 %704
      %706 = vrot.lane.b32.xlu0 %v484, 63
      %v707 = vpop.permute.xlu0 %706
      %708 = vrot.lane.b32.xlu0 %v485, 63
      %v709 = vpop.permute.xlu0 %708
      %710 = vrot.lane.b32.xlu0 %v486, 63
      %v711 = vpop.permute.xlu0 %710
      %712 = vrot.lane.b32.xlu0 %v487, 63
      %v713 = vpop.permute.xlu0 %712
      %714 = vrot.lane.b32.xlu0 %v488, 63
      %v715 = vpop.permute.xlu0 %714
      %716 = vrot.lane.b32.xlu0 %v489, 63
      %v717 = vpop.permute.xlu0 %716
      %718 = vrot.lane.b32.xlu0 %v490, 63
      %v719 = vpop.permute.xlu0 %718
      %720 = vrot.lane.b32.xlu0 %v491, 63
      %v721 = vpop.permute.xlu0 %720
      %722 = vrot.lane.b32.xlu0 %v492, 63
      %v723 = vpop.permute.xlu0 %722
      %724 = vrot.lane.b32.xlu0 %v493, 63
      %v725 = vpop.permute.xlu0 %724
      %726 = vrot.lane.b32.xlu0 %v494, 63
      %v727 = vpop.permute.xlu0 %726
      %728 = vrot.lane.b32.xlu0 %v495, 63
      %v729 = vpop.permute.xlu0 %728
      %730 = vrot.lane.b32.xlu0 %v496, 63
      %v731 = vpop.permute.xlu0 %730
      %v734 = vsel %vm623, %v569, %v697
      %v738 = vsel %vm623, %v570, %v699
      %v742 = vsel %vm623, %v571, %v701
      %v746 = vsel %vm623, %v572, %v703
      %v750 = vsel %vm623, %v573, %v705
      %v754 = vsel %vm623, %v574, %v707
      %v758 = vsel %vm623, %v575, %v709
      %v762 = vsel %vm623, %v576, %v711
      %v766 = vsel %vm623, %v577, %v713
      %v770 = vsel %vm623, %v578, %v715
      %v774 = vsel %vm623, %v579, %v717
      %v778 = vsel %vm623, %v580, %v719
      %v782 = vsel %vm623, %v581, %v721
      %v786 = vsel %vm623, %v582, %v723
      %v790 = vsel %vm623, %v583, %v725
      %v794 = vsel %vm623, %v584, %v727
      %v798 = vsel %vm623, %v585, %v729
      %v802 = vsel %vm623, %v586, %v731
      %804 = vrot.lane.b32.xlu0 %v479, 127
      %v805 = vpop.permute.xlu0 %804
      %806 = vrot.lane.b32.xlu0 %v480, 127
      %v807 = vpop.permute.xlu0 %806
      %808 = vrot.lane.b32.xlu0 %v481, 127
      %v809 = vpop.permute.xlu0 %808
      %810 = vrot.lane.b32.xlu0 %v482, 127
      %v811 = vpop.permute.xlu0 %810
      %812 = vrot.lane.b32.xlu0 %v483, 127
      %v813 = vpop.permute.xlu0 %812
      %814 = vrot.lane.b32.xlu0 %v484, 127
      %v815 = vpop.permute.xlu0 %814
      %816 = vrot.lane.b32.xlu0 %v485, 127
      %v817 = vpop.permute.xlu0 %816
      %818 = vrot.lane.b32.xlu0 %v486, 127
      %v819 = vpop.permute.xlu0 %818
      %820 = vrot.lane.b32.xlu0 %v487, 127
      %v821 = vpop.permute.xlu0 %820
      %822 = vrot.lane.b32.xlu0 %v488, 127
      %v823 = vpop.permute.xlu0 %822
      %824 = vrot.lane.b32.xlu0 %v489, 127
      %v825 = vpop.permute.xlu0 %824
      %826 = vrot.lane.b32.xlu0 %v490, 127
      %v827 = vpop.permute.xlu0 %826
      %828 = vrot.lane.b32.xlu0 %v491, 127
      %v829 = vpop.permute.xlu0 %828
      %830 = vrot.lane.b32.xlu0 %v492, 127
      %v831 = vpop.permute.xlu0 %830
      %832 = vrot.lane.b32.xlu0 %v493, 127
      %v833 = vpop.permute.xlu0 %832
      %834 = vrot.lane.b32.xlu0 %v494, 127
      %v835 = vpop.permute.xlu0 %834
      %836 = vrot.lane.b32.xlu0 %v495, 127
      %v837 = vpop.permute.xlu0 %836
      %838 = vrot.lane.b32.xlu0 %v496, 127
      %v839 = vpop.permute.xlu0 %838
      %840 = vrot.lane.b32.xlu0 %v569, 63
      %v841 = vpop.permute.xlu0 %840
      %842 = vrot.lane.b32.xlu0 %v570, 63
      %v843 = vpop.permute.xlu0 %842
      %844 = vrot.lane.b32.xlu0 %v571, 63
      %v845 = vpop.permute.xlu0 %844
      %846 = vrot.lane.b32.xlu0 %v572, 63
      %v847 = vpop.permute.xlu0 %846
      %848 = vrot.lane.b32.xlu0 %v573, 63
      %v849 = vpop.permute.xlu0 %848
      %850 = vrot.lane.b32.xlu0 %v574, 63
      %v851 = vpop.permute.xlu0 %850
      %852 = vrot.lane.b32.xlu0 %v575, 63
      %v853 = vpop.permute.xlu0 %852
      %854 = vrot.lane.b32.xlu0 %v576, 63
      %v855 = vpop.permute.xlu0 %854
      %856 = vrot.lane.b32.xlu0 %v577, 63
      %v857 = vpop.permute.xlu0 %856
      %858 = vrot.lane.b32.xlu0 %v578, 63
      %v859 = vpop.permute.xlu0 %858
      %860 = vrot.lane.b32.xlu0 %v579, 63
      %v861 = vpop.permute.xlu0 %860
      %862 = vrot.lane.b32.xlu0 %v580, 63
      %v863 = vpop.permute.xlu0 %862
      %864 = vrot.lane.b32.xlu0 %v581, 63
      %v865 = vpop.permute.xlu0 %864
      %866 = vrot.lane.b32.xlu0 %v582, 63
      %v867 = vpop.permute.xlu0 %866
      %868 = vrot.lane.b32.xlu0 %v583, 63
      %v869 = vpop.permute.xlu0 %868
      %870 = vrot.lane.b32.xlu0 %v584, 63
      %v871 = vpop.permute.xlu0 %870
      %872 = vrot.lane.b32.xlu0 %v585, 63
      %v873 = vpop.permute.xlu0 %872
      %874 = vrot.lane.b32.xlu0 %v586, 63
      %v875 = vpop.permute.xlu0 %874
      %v878 = vsel %vm623, %v805, %v841
      %v882 = vsel %vm623, %v807, %v843
      %v886 = vsel %vm623, %v809, %v845
      %v890 = vsel %vm623, %v811, %v847
      %v894 = vsel %vm623, %v813, %v849
      %v898 = vsel %vm623, %v815, %v851
      %v902 = vsel %vm623, %v817, %v853
      %v906 = vsel %vm623, %v819, %v855
      %v910 = vsel %vm623, %v821, %v857
      %v914 = vsel %vm623, %v823, %v859
      %v918 = vsel %vm623, %v825, %v861
      %v922 = vsel %vm623, %v827, %v863
      %v926 = vsel %vm623, %v829, %v865
      %v930 = vsel %vm623, %v831, %v867
      %v934 = vsel %vm623, %v833, %v869
      %v938 = vsel %vm623, %v835, %v871
      %v942 = vsel %vm623, %v837, %v873
      %v946 = vsel %vm623, %v839, %v875
      %v948 = vld [vmem:[%s1] sm:$0xff]
      %v949 = vld [vmem:[%s1 + $0x8] sm:$0xf]
      %v950 = vld [vmem:[%s1 + $0xc] sm:$0xff]
      %v951 = vld [vmem:[%s1 + $0x14] sm:$0xf]
      %v952 = vld [vmem:[%s1 + $0x18] sm:$0xff]
      %v953 = vld [vmem:[%s1 + $0x20] sm:$0xf]
      %v954 = vld [vmem:[%s1 + $0x24] sm:$0xff]
      %v955 = vld [vmem:[%s1 + $0x2c] sm:$0xf]
      %v956 = vld [vmem:[%s1 + $0x30] sm:$0xff]
      %v957 = vld [vmem:[%s1 + $0x38] sm:$0xf]
      %v958 = vld [vmem:[%s1 + $0x3c] sm:$0xff]
      %v959 = vld [vmem:[%s1 + $0x44] sm:$0xf]
      %v960 = vld [vmem:[%s1 + $0x48] sm:$0xff]
      %v961 = vld [vmem:[%s1 + $0x50] sm:$0xf]
      %v962 = vld [vmem:[%s1 + $0x54] sm:$0xff]
      %v963 = vld [vmem:[%s1 + $0x5c] sm:$0xf]
      %v964 = vld [vmem:[%s1 + $0x60] sm:$0xff]
      %v965 = vld [vmem:[%s1 + $0x68] sm:$0xf]
      %v966 = vld [vmem:[%s1 + $0x6c] sm:$0xff]
      %v967 = vld [vmem:[%s1 + $0x74] sm:$0xf]
      %v968 = vld [vmem:[%s1 + $0x78] sm:$0xff]
      %v969 = vld [vmem:[%s1 + $0x80] sm:$0xf]
      %v970 = vld [vmem:[%s1 + $0x84] sm:$0xff]
      %v971 = vld [vmem:[%s1 + $0x8c] sm:$0xf]
      %v972 = vld [vmem:[%s1 + $0x90] sm:$0xff]
      %v973 = vld [vmem:[%s1 + $0x98] sm:$0xf]
      %v974 = vld [vmem:[%s1 + $0x9c] sm:$0xff]
      %v975 = vld [vmem:[%s1 + $0xa4] sm:$0xf]
      %v976 = vld [vmem:[%s1 + $0xa8] sm:$0xff]
      %v977 = vld [vmem:[%s1 + $0xb0] sm:$0xf]
      %v978 = vld [vmem:[%s1 + $0xb4] sm:$0xff]
      %v979 = vld [vmem:[%s1 + $0xbc] sm:$0xf]
      %v980 = vld [vmem:[%s1 + $0xc0] sm:$0xff]
      %v981 = vld [vmem:[%s1 + $0xc8] sm:$0xf]
      %v982 = vld [vmem:[%s1 + $0xcc] sm:$0xff]
      %v983 = vld [vmem:[%s1 + $0xd4] sm:$0xf]
      %v984 = vld [vmem:[%s1 + $0xd8] sm:$0xff]
      %v985 = vld [vmem:[%s1 + $0xe0] sm:$0xf]
      %v986 = vld [vmem:[%s1 + $0xe4] sm:$0xff]
      %v987 = vld [vmem:[%s1 + $0xec] sm:$0xf]
      %v988 = vld [vmem:[%s1 + $0xf0] sm:$0xff]
      %v989 = vld [vmem:[%s1 + $0xf8] sm:$0xf]
      %v990 = vld [vmem:[%s1 + $0xfc] sm:$0xff]
      %v991 = vld [vmem:[%s1 + $0x104] sm:$0xf]
      %v992 = vld [vmem:[%s1 + $0x108] sm:$0xff]
      %v993 = vld [vmem:[%s1 + $0x110] sm:$0xf]
      %v994 = vld [vmem:[%s1 + $0x114] sm:$0xff]
      %v995 = vld [vmem:[%s1 + $0x11c] sm:$0xf]
      %v996 = vld [vmem:[%s1 + $0x120] sm:$0xff]
      %v997 = vld [vmem:[%s1 + $0x128] sm:$0xf]
      %v998 = vld [vmem:[%s1 + $0x12c] sm:$0xff]
      %v999 = vld [vmem:[%s1 + $0x134] sm:$0xf]
      %v1000 = vld [vmem:[%s1 + $0x138] sm:$0xff]
      %v1001 = vld [vmem:[%s1 + $0x140] sm:$0xf]
      %v1002 = vld [vmem:[%s1 + $0x144] sm:$0xff]
      %v1003 = vld [vmem:[%s1 + $0x14c] sm:$0xf]
      %v1004 = vld [vmem:[%s1 + $0x150] sm:$0xff]
      %v1005 = vld [vmem:[%s1 + $0x158] sm:$0xf]
      %v1006 = vld [vmem:[%s1 + $0x15c] sm:$0xff]
      %v1007 = vld [vmem:[%s1 + $0x164] sm:$0xf]
      %v1008 = vld [vmem:[%s1 + $0x168] sm:$0xff]
      %v1009 = vld [vmem:[%s1 + $0x170] sm:$0xf]
      %v1010 = vld [vmem:[%s1 + $0x174] sm:$0xff]
      %v1011 = vld [vmem:[%s1 + $0x17c] sm:$0xf]
      %v1012 = vld [vmem:[%s1 + $0x180] sm:$0xff]
      %v1013 = vld [vmem:[%s1 + $0x188] sm:$0xf]
      %v1014 = vld [vmem:[%s1 + $0x18c] sm:$0xff]
      %v1015 = vld [vmem:[%s1 + $0x194] sm:$0xf]
      %v1016 = vld [vmem:[%s1 + $0x198] sm:$0xff]
      %v1017 = vld [vmem:[%s1 + $0x1a0] sm:$0xf]
      %v1018 = vld [vmem:[%s1 + $0x1a4] sm:$0xff]
      %v1019 = vld [vmem:[%s1 + $0x1ac] sm:$0xf]
      %v1020 = vld [vmem:[%s1 + $0x1b0] sm:$0xff]
      %v1021 = vld [vmem:[%s1 + $0x1b8] sm:$0xf]
      %v1022 = vld [vmem:[%s1 + $0x1bc] sm:$0xff]
      %v1023 = vld [vmem:[%s1 + $0x1c4] sm:$0xf]
      %v1024 = vld [vmem:[%s1 + $0x1c8] sm:$0xff]
      %v1025 = vld [vmem:[%s1 + $0x1d0] sm:$0xf]
      %v1026 = vld [vmem:[%s1 + $0x1d4] sm:$0xff]
      %v1027 = vld [vmem:[%s1 + $0x1dc] sm:$0xf]
      %v1028 = vld [vmem:[%s1 + $0x1e0] sm:$0xff]
      %v1029 = vld [vmem:[%s1 + $0x1e8] sm:$0xf]
      %v1030 = vld [vmem:[%s1 + $0x1ec] sm:$0xff]
      %v1031 = vld [vmem:[%s1 + $0x1f4] sm:$0xf]
      %v1032 = vld [vmem:[%s1 + $0x1f8] sm:$0xff]
      %v1033 = vld [vmem:[%s1 + $0x200] sm:$0xf]
      %v1034 = vld [vmem:[%s1 + $0x204] sm:$0xff]
      %v1035 = vld [vmem:[%s1 + $0x20c] sm:$0xf]
      %v1036 = vld [vmem:[%s1 + $0x210] sm:$0xff]
      %v1037 = vld [vmem:[%s1 + $0x218] sm:$0xf]
      %v1038 = vld [vmem:[%s1 + $0x21c] sm:$0xff]
      %v1039 = vld [vmem:[%s1 + $0x224] sm:$0xf]
      %v1040 = vld [vmem:[%s1 + $0x228] sm:$0xff]
      %v1041 = vld [vmem:[%s1 + $0x230] sm:$0xf]
      %v1042 = vld [vmem:[%s1 + $0x234] sm:$0xff]
      %v1043 = vld [vmem:[%s1 + $0x23c] sm:$0xf]
      %v1044 = vld [vmem:[%s1 + $0x240] sm:$0xff]
      %v1045 = vld [vmem:[%s1 + $0x248] sm:$0xf]
      %v1046 = vld [vmem:[%s1 + $0x24c] sm:$0xff]
      %v1047 = vld [vmem:[%s1 + $0x254] sm:$0xf]
      %v1048 = vld [vmem:[%s1 + $0x258] sm:$0xff]
      %v1049 = vld [vmem:[%s1 + $0x260] sm:$0xf]
      %v1050 = vld [vmem:[%s1 + $0x264] sm:$0xff]
      %v1051 = vld [vmem:[%s1 + $0x26c] sm:$0xf]
      %v1052 = vld [vmem:[%s1 + $0x270] sm:$0xff]
      %v1053 = vld [vmem:[%s1 + $0x278] sm:$0xf]
      %v1054 = vld [vmem:[%s1 + $0x27c] sm:$0xff]
      %v1055 = vld [vmem:[%s1 + $0x284] sm:$0xf]
      %v1056 = vld [vmem:[%s1 + $0x288] sm:$0xff]
      %v1057 = vld [vmem:[%s1 + $0x290] sm:$0xf]
      %v1058 = vld [vmem:[%s1 + $0x294] sm:$0xff]
      %v1059 = vld [vmem:[%s1 + $0x29c] sm:$0xf]
      %v1060 = vld [vmem:[%s1 + $0x2a0] sm:$0xff]
      %v1061 = vld [vmem:[%s1 + $0x2a8] sm:$0xf]
      %v1062 = vld [vmem:[%s1 + $0x2ac] sm:$0xff]
      %v1063 = vld [vmem:[%s1 + $0x2b4] sm:$0xf]
      %v1064 = vld [vmem:[%s1 + $0x2b8] sm:$0xff]
      %v1065 = vld [vmem:[%s1 + $0x2c0] sm:$0xf]
      %v1066 = vld [vmem:[%s1 + $0x2c4] sm:$0xff]
      %v1067 = vld [vmem:[%s1 + $0x2cc] sm:$0xf]
      %v1068 = vld [vmem:[%s1 + $0x2d0] sm:$0xff]
      %v1069 = vld [vmem:[%s1 + $0x2d8] sm:$0xf]
      %v1070 = vld [vmem:[%s1 + $0x2dc] sm:$0xff]
      %v1071 = vld [vmem:[%s1 + $0x2e4] sm:$0xf]
      %v1072 = vld [vmem:[%s1 + $0x2e8] sm:$0xff]
      %v1073 = vld [vmem:[%s1 + $0x2f0] sm:$0xf]
      %v1074 = vld [vmem:[%s1 + $0x2f4] sm:$0xff]
      %v1075 = vld [vmem:[%s1 + $0x2fc] sm:$0xf]
      %s1076 = scalar_lea.vmem %s1, 768
      %v1077 = vld [vmem:[%s1076] sm:$0xff]
      %v1078 = vld [vmem:[%s1076 + $0x8] sm:$0xf]
      %v1079 = vld [vmem:[%s1076 + $0xc] sm:$0xff]
      %v1080 = vld [vmem:[%s1076 + $0x14] sm:$0xf]
      %v1081 = vld [vmem:[%s1076 + $0x18] sm:$0xff]
      %v1082 = vld [vmem:[%s1076 + $0x20] sm:$0xf]
      %v1083 = vld [vmem:[%s1076 + $0x24] sm:$0xff]
      %v1084 = vld [vmem:[%s1076 + $0x2c] sm:$0xf]
      %v1085 = vld [vmem:[%s1076 + $0x30] sm:$0xff]
      %v1086 = vld [vmem:[%s1076 + $0x38] sm:$0xf]
      %v1087 = vld [vmem:[%s1076 + $0x3c] sm:$0xff]
      %v1088 = vld [vmem:[%s1076 + $0x44] sm:$0xf]
      %v1089 = vld [vmem:[%s1076 + $0x48] sm:$0xff]
      %v1090 = vld [vmem:[%s1076 + $0x50] sm:$0xf]
      %v1091 = vld [vmem:[%s1076 + $0x54] sm:$0xff]
      %v1092 = vld [vmem:[%s1076 + $0x5c] sm:$0xf]
      %v1093 = vld [vmem:[%s1076 + $0x60] sm:$0xff]
      %v1094 = vld [vmem:[%s1076 + $0x68] sm:$0xf]
      %v1095 = vld [vmem:[%s1076 + $0x6c] sm:$0xff]
      %v1096 = vld [vmem:[%s1076 + $0x74] sm:$0xf]
      %v1097 = vld [vmem:[%s1076 + $0x78] sm:$0xff]
      %v1098 = vld [vmem:[%s1076 + $0x80] sm:$0xf]
      %v1099 = vld [vmem:[%s1076 + $0x84] sm:$0xff]
      %v1100 = vld [vmem:[%s1076 + $0x8c] sm:$0xf]
      %v1101 = vld [vmem:[%s1076 + $0x90] sm:$0xff]
      %v1102 = vld [vmem:[%s1076 + $0x98] sm:$0xf]
      %v1103 = vld [vmem:[%s1076 + $0x9c] sm:$0xff]
      %v1104 = vld [vmem:[%s1076 + $0xa4] sm:$0xf]
      %v1105 = vld [vmem:[%s1076 + $0xa8] sm:$0xff]
      %v1106 = vld [vmem:[%s1076 + $0xb0] sm:$0xf]
      %v1107 = vld [vmem:[%s1076 + $0xb4] sm:$0xff]
      %v1108 = vld [vmem:[%s1076 + $0xbc] sm:$0xf]
      %v1109 = vld [vmem:[%s1076 + $0xc0] sm:$0xff]
      %v1110 = vld [vmem:[%s1076 + $0xc8] sm:$0xf]
      %v1111 = vld [vmem:[%s1076 + $0xcc] sm:$0xff]
      %v1112 = vld [vmem:[%s1076 + $0xd4] sm:$0xf]
      %v1113 = vld [vmem:[%s1076 + $0xd8] sm:$0xff]
      %v1114 = vld [vmem:[%s1076 + $0xe0] sm:$0xf]
      %v1115 = vld [vmem:[%s1076 + $0xe4] sm:$0xff]
      %v1116 = vld [vmem:[%s1076 + $0xec] sm:$0xf]
      %v1117 = vld [vmem:[%s1076 + $0xf0] sm:$0xff]
      %v1118 = vld [vmem:[%s1076 + $0xf8] sm:$0xf]
      %v1119 = vld [vmem:[%s1076 + $0xfc] sm:$0xff]
      %v1120 = vld [vmem:[%s1076 + $0x104] sm:$0xf]
      %v1121 = vld [vmem:[%s1076 + $0x108] sm:$0xff]
      %v1122 = vld [vmem:[%s1076 + $0x110] sm:$0xf]
      %v1123 = vld [vmem:[%s1076 + $0x114] sm:$0xff]
      %v1124 = vld [vmem:[%s1076 + $0x11c] sm:$0xf]
      %v1125 = vld [vmem:[%s1076 + $0x120] sm:$0xff]
      %v1126 = vld [vmem:[%s1076 + $0x128] sm:$0xf]
      %v1127 = vld [vmem:[%s1076 + $0x12c] sm:$0xff]
      %v1128 = vld [vmem:[%s1076 + $0x134] sm:$0xf]
      %v1129 = vld [vmem:[%s1076 + $0x138] sm:$0xff]
      %v1130 = vld [vmem:[%s1076 + $0x140] sm:$0xf]
      %v1131 = vld [vmem:[%s1076 + $0x144] sm:$0xff]
      %v1132 = vld [vmem:[%s1076 + $0x14c] sm:$0xf]
      %v1133 = vld [vmem:[%s1076 + $0x150] sm:$0xff]
      %v1134 = vld [vmem:[%s1076 + $0x158] sm:$0xf]
      %v1135 = vld [vmem:[%s1076 + $0x15c] sm:$0xff]
      %v1136 = vld [vmem:[%s1076 + $0x164] sm:$0xf]
      %v1137 = vld [vmem:[%s1076 + $0x168] sm:$0xff]
      %v1138 = vld [vmem:[%s1076 + $0x170] sm:$0xf]
      %v1139 = vld [vmem:[%s1076 + $0x174] sm:$0xff]
      %v1140 = vld [vmem:[%s1076 + $0x17c] sm:$0xf]
      %v1141 = vld [vmem:[%s1076 + $0x180] sm:$0xff]
      %v1142 = vld [vmem:[%s1076 + $0x188] sm:$0xf]
      %v1143 = vld [vmem:[%s1076 + $0x18c] sm:$0xff]
      %v1144 = vld [vmem:[%s1076 + $0x194] sm:$0xf]
      %v1145 = vld [vmem:[%s1076 + $0x198] sm:$0xff]
      %v1146 = vld [vmem:[%s1076 + $0x1a0] sm:$0xf]
      %v1147 = vld [vmem:[%s1076 + $0x1a4] sm:$0xff]
      %v1148 = vld [vmem:[%s1076 + $0x1ac] sm:$0xf]
      %v1149 = vld [vmem:[%s1076 + $0x1b0] sm:$0xff]
      %v1150 = vld [vmem:[%s1076 + $0x1b8] sm:$0xf]
      %v1151 = vld [vmem:[%s1076 + $0x1bc] sm:$0xff]
      %v1152 = vld [vmem:[%s1076 + $0x1c4] sm:$0xf]
      %v1153 = vld [vmem:[%s1076 + $0x1c8] sm:$0xff]
      %v1154 = vld [vmem:[%s1076 + $0x1d0] sm:$0xf]
      %v1155 = vld [vmem:[%s1076 + $0x1d4] sm:$0xff]
      %v1156 = vld [vmem:[%s1076 + $0x1dc] sm:$0xf]
      %v1157 = vld [vmem:[%s1076 + $0x1e0] sm:$0xff]
      %v1158 = vld [vmem:[%s1076 + $0x1e8] sm:$0xf]
      %v1159 = vld [vmem:[%s1076 + $0x1ec] sm:$0xff]
      %v1160 = vld [vmem:[%s1076 + $0x1f4] sm:$0xf]
      %v1161 = vld [vmem:[%s1076 + $0x1f8] sm:$0xff]
      %v1162 = vld [vmem:[%s1076 + $0x200] sm:$0xf]
      %v1163 = vld [vmem:[%s1076 + $0x204] sm:$0xff]
      %v1164 = vld [vmem:[%s1076 + $0x20c] sm:$0xf]
      %v1165 = vld [vmem:[%s1076 + $0x210] sm:$0xff]
      %v1166 = vld [vmem:[%s1076 + $0x218] sm:$0xf]
      %v1167 = vld [vmem:[%s1076 + $0x21c] sm:$0xff]
      %v1168 = vld [vmem:[%s1076 + $0x224] sm:$0xf]
      %v1169 = vld [vmem:[%s1076 + $0x228] sm:$0xff]
      %v1170 = vld [vmem:[%s1076 + $0x230] sm:$0xf]
      %v1171 = vld [vmem:[%s1076 + $0x234] sm:$0xff]
      %v1172 = vld [vmem:[%s1076 + $0x23c] sm:$0xf]
      %v1173 = vld [vmem:[%s1076 + $0x240] sm:$0xff]
      %v1174 = vld [vmem:[%s1076 + $0x248] sm:$0xf]
      %v1175 = vld [vmem:[%s1076 + $0x24c] sm:$0xff]
      %v1176 = vld [vmem:[%s1076 + $0x254] sm:$0xf]
      %v1177 = vld [vmem:[%s1076 + $0x258] sm:$0xff]
      %v1178 = vld [vmem:[%s1076 + $0x260] sm:$0xf]
      %v1179 = vld [vmem:[%s1076 + $0x264] sm:$0xff]
      %v1180 = vld [vmem:[%s1076 + $0x26c] sm:$0xf]
      %v1181 = vld [vmem:[%s1076 + $0x270] sm:$0xff]
      %v1182 = vld [vmem:[%s1076 + $0x278] sm:$0xf]
      %v1183 = vld [vmem:[%s1076 + $0x27c] sm:$0xff]
      %v1184 = vld [vmem:[%s1076 + $0x284] sm:$0xf]
      %v1185 = vld [vmem:[%s1076 + $0x288] sm:$0xff]
      %v1186 = vld [vmem:[%s1076 + $0x290] sm:$0xf]
      %v1187 = vld [vmem:[%s1076 + $0x294] sm:$0xff]
      %v1188 = vld [vmem:[%s1076 + $0x29c] sm:$0xf]
      %v1189 = vld [vmem:[%s1076 + $0x2a0] sm:$0xff]
      %v1190 = vld [vmem:[%s1076 + $0x2a8] sm:$0xf]
      %v1191 = vld [vmem:[%s1076 + $0x2ac] sm:$0xff]
      %v1192 = vld [vmem:[%s1076 + $0x2b4] sm:$0xf]
      %v1193 = vld [vmem:[%s1076 + $0x2b8] sm:$0xff]
      %v1194 = vld [vmem:[%s1076 + $0x2c0] sm:$0xf]
      %v1195 = vld [vmem:[%s1076 + $0x2c4] sm:$0xff]
      %v1196 = vld [vmem:[%s1076 + $0x2cc] sm:$0xf]
      %v1197 = vld [vmem:[%s1076 + $0x2d0] sm:$0xff]
      %v1198 = vld [vmem:[%s1076 + $0x2d8] sm:$0xf]
      %v1199 = vld [vmem:[%s1076 + $0x2dc] sm:$0xff]
      %v1200 = vld [vmem:[%s1076 + $0x2e4] sm:$0xf]
      %v1201 = vld [vmem:[%s1076 + $0x2e8] sm:$0xff]
      %v1202 = vld [vmem:[%s1076 + $0x2f0] sm:$0xf]
      %v1203 = vld [vmem:[%s1076 + $0x2f4] sm:$0xff]
      %v1204 = vld [vmem:[%s1076 + $0x2fc] sm:$0xf]
      %v1333 = vunpack.c.l.b16 %v1077
      %v1334 = vunpack.c.h.b16 %v1077
      %v1335 = vunpack.c.l.b16 %v1078
      %v1336 = vunpack.c.l.b16 %v1079
      %v1337 = vunpack.c.h.b16 %v1079
      %v1338 = vunpack.c.l.b16 %v1080
      %v1339 = vunpack.c.l.b16 %v1081
      %v1340 = vunpack.c.h.b16 %v1081
      %v1341 = vunpack.c.l.b16 %v1082
      %v1342 = vunpack.c.l.b16 %v1083
      %v1343 = vunpack.c.h.b16 %v1083
      %v1344 = vunpack.c.l.b16 %v1084
      %v1345 = vunpack.c.l.b16 %v1085
      %v1346 = vunpack.c.h.b16 %v1085
      %v1347 = vunpack.c.l.b16 %v1086
      %v1348 = vunpack.c.l.b16 %v1087
      %v1349 = vunpack.c.h.b16 %v1087
      %v1350 = vunpack.c.l.b16 %v1088
      %v1351 = vunpack.c.l.b16 %v1089
      %v1352 = vunpack.c.h.b16 %v1089
      %v1353 = vunpack.c.l.b16 %v1090
      %v1354 = vunpack.c.l.b16 %v1091
      %v1355 = vunpack.c.h.b16 %v1091
      %v1356 = vunpack.c.l.b16 %v1092
      %v1357 = vunpack.c.l.b16 %v1093
      %v1358 = vunpack.c.h.b16 %v1093
      %v1359 = vunpack.c.l.b16 %v1094
      %v1360 = vunpack.c.l.b16 %v1095
      %v1361 = vunpack.c.h.b16 %v1095
      %v1362 = vunpack.c.l.b16 %v1096
      %v1363 = vunpack.c.l.b16 %v1097
      %v1364 = vunpack.c.h.b16 %v1097
      %v1365 = vunpack.c.l.b16 %v1098
      %v1366 = vunpack.c.l.b16 %v1099
      %v1367 = vunpack.c.h.b16 %v1099
      %v1368 = vunpack.c.l.b16 %v1100
      %v1369 = vunpack.c.l.b16 %v1101
      %v1370 = vunpack.c.h.b16 %v1101
      %v1371 = vunpack.c.l.b16 %v1102
      %v1372 = vunpack.c.l.b16 %v1103
      %v1373 = vunpack.c.h.b16 %v1103
      %v1374 = vunpack.c.l.b16 %v1104
      %v1375 = vunpack.c.l.b16 %v1105
      %v1376 = vunpack.c.h.b16 %v1105
      %v1377 = vunpack.c.l.b16 %v1106
      %v1378 = vunpack.c.l.b16 %v1107
      %v1379 = vunpack.c.h.b16 %v1107
      %v1380 = vunpack.c.l.b16 %v1108
      %v1381 = vunpack.c.l.b16 %v1109
      %v1382 = vunpack.c.h.b16 %v1109
      %v1383 = vunpack.c.l.b16 %v1110
      %v1384 = vunpack.c.l.b16 %v1111
      %v1385 = vunpack.c.h.b16 %v1111
      %v1386 = vunpack.c.l.b16 %v1112
      %v1387 = vunpack.c.l.b16 %v1113
      %v1388 = vunpack.c.h.b16 %v1113
      %v1389 = vunpack.c.l.b16 %v1114
      %v1390 = vunpack.c.l.b16 %v1115
      %v1391 = vunpack.c.h.b16 %v1115
      %v1392 = vunpack.c.l.b16 %v1116
      %v1393 = vunpack.c.l.b16 %v1117
      %v1394 = vunpack.c.h.b16 %v1117
      %v1395 = vunpack.c.l.b16 %v1118
      %v1396 = vunpack.c.l.b16 %v1119
      %v1397 = vunpack.c.h.b16 %v1119
      %v1398 = vunpack.c.l.b16 %v1120
      %v1399 = vunpack.c.l.b16 %v1121
      %v1400 = vunpack.c.h.b16 %v1121
      %v1401 = vunpack.c.l.b16 %v1122
      %v1402 = vunpack.c.l.b16 %v1123
      %v1403 = vunpack.c.h.b16 %v1123
      %v1404 = vunpack.c.l.b16 %v1124
      %v1405 = vunpack.c.l.b16 %v1125
      %v1406 = vunpack.c.h.b16 %v1125
      %v1407 = vunpack.c.l.b16 %v1126
      %v1408 = vunpack.c.l.b16 %v1127
      %v1409 = vunpack.c.h.b16 %v1127
      %v1410 = vunpack.c.l.b16 %v1128
      %v1411 = vunpack.c.l.b16 %v1129
      %v1412 = vunpack.c.h.b16 %v1129
      %v1413 = vunpack.c.l.b16 %v1130
      %v1414 = vunpack.c.l.b16 %v1131
      %v1415 = vunpack.c.h.b16 %v1131
      %v1416 = vunpack.c.l.b16 %v1132
      %v1417 = vunpack.c.l.b16 %v1133
      %v1418 = vunpack.c.h.b16 %v1133
      %v1419 = vunpack.c.l.b16 %v1134
      %v1420 = vunpack.c.l.b16 %v1135
      %v1421 = vunpack.c.h.b16 %v1135
      %v1422 = vunpack.c.l.b16 %v1136
      %v1423 = vunpack.c.l.b16 %v1137
      %v1424 = vunpack.c.h.b16 %v1137
      %v1425 = vunpack.c.l.b16 %v1138
      %v1426 = vunpack.c.l.b16 %v1139
      %v1427 = vunpack.c.h.b16 %v1139
      %v1428 = vunpack.c.l.b16 %v1140
      %v1429 = vunpack.c.l.b16 %v1141
      %v1430 = vunpack.c.h.b16 %v1141
      %v1431 = vunpack.c.l.b16 %v1142
      %v1432 = vunpack.c.l.b16 %v1143
      %v1433 = vunpack.c.h.b16 %v1143
      %v1434 = vunpack.c.l.b16 %v1144
      %v1435 = vunpack.c.l.b16 %v1145
      %v1436 = vunpack.c.h.b16 %v1145
      %v1437 = vunpack.c.l.b16 %v1146
      %v1438 = vunpack.c.l.b16 %v1147
      %v1439 = vunpack.c.h.b16 %v1147
      %v1440 = vunpack.c.l.b16 %v1148
      %v1441 = vunpack.c.l.b16 %v1149
      %v1442 = vunpack.c.h.b16 %v1149
      %v1443 = vunpack.c.l.b16 %v1150
      %v1444 = vunpack.c.l.b16 %v1151
      %v1445 = vunpack.c.h.b16 %v1151
      %v1446 = vunpack.c.l.b16 %v1152
      %v1447 = vunpack.c.l.b16 %v1153
      %v1448 = vunpack.c.h.b16 %v1153
      %v1449 = vunpack.c.l.b16 %v1154
      %v1450 = vunpack.c.l.b16 %v1155
      %v1451 = vunpack.c.h.b16 %v1155
      %v1452 = vunpack.c.l.b16 %v1156
      %v1453 = vunpack.c.l.b16 %v1157
      %v1454 = vunpack.c.h.b16 %v1157
      %v1455 = vunpack.c.l.b16 %v1158
      %v1456 = vunpack.c.l.b16 %v1159
      %v1457 = vunpack.c.h.b16 %v1159
      %v1458 = vunpack.c.l.b16 %v1160
      %v1459 = vunpack.c.l.b16 %v1161
      %v1460 = vunpack.c.h.b16 %v1161
      %v1461 = vunpack.c.l.b16 %v1162
      %v1462 = vunpack.c.l.b16 %v1163
      %v1463 = vunpack.c.h.b16 %v1163
      %v1464 = vunpack.c.l.b16 %v1164
      %v1465 = vunpack.c.l.b16 %v1165
      %v1466 = vunpack.c.h.b16 %v1165
      %v1467 = vunpack.c.l.b16 %v1166
      %v1468 = vunpack.c.l.b16 %v1167
      %v1469 = vunpack.c.h.b16 %v1167
      %v1470 = vunpack.c.l.b16 %v1168
      %v1471 = vunpack.c.l.b16 %v1169
      %v1472 = vunpack.c.h.b16 %v1169
      %v1473 = vunpack.c.l.b16 %v1170
      %v1474 = vunpack.c.l.b16 %v1171
      %v1475 = vunpack.c.h.b16 %v1171
      %v1476 = vunpack.c.l.b16 %v1172
      %v1477 = vunpack.c.l.b16 %v1173
      %v1478 = vunpack.c.h.b16 %v1173
      %v1479 = vunpack.c.l.b16 %v1174
      %v1480 = vunpack.c.l.b16 %v1175
      %v1481 = vunpack.c.h.b16 %v1175
      %v1482 = vunpack.c.l.b16 %v1176
      %v1483 = vunpack.c.l.b16 %v1177
      %v1484 = vunpack.c.h.b16 %v1177
      %v1485 = vunpack.c.l.b16 %v1178
      %v1486 = vunpack.c.l.b16 %v1179
      %v1487 = vunpack.c.h.b16 %v1179
      %v1488 = vunpack.c.l.b16 %v1180
      %v1489 = vunpack.c.l.b16 %v1181
      %v1490 = vunpack.c.h.b16 %v1181
      %v1491 = vunpack.c.l.b16 %v1182
      %v1492 = vunpack.c.l.b16 %v1183
      %v1493 = vunpack.c.h.b16 %v1183
      %v1494 = vunpack.c.l.b16 %v1184
      %v1495 = vunpack.c.l.b16 %v1185
      %v1496 = vunpack.c.h.b16 %v1185
      %v1497 = vunpack.c.l.b16 %v1186
      %v1498 = vunpack.c.l.b16 %v1187
      %v1499 = vunpack.c.h.b16 %v1187
      %v1500 = vunpack.c.l.b16 %v1188
      %v1501 = vunpack.c.l.b16 %v1189
      %v1502 = vunpack.c.h.b16 %v1189
      %v1503 = vunpack.c.l.b16 %v1190
      %v1504 = vunpack.c.l.b16 %v1191
      %v1505 = vunpack.c.h.b16 %v1191
      %v1506 = vunpack.c.l.b16 %v1192
      %v1507 = vunpack.c.l.b16 %v1193
      %v1508 = vunpack.c.h.b16 %v1193
      %v1509 = vunpack.c.l.b16 %v1194
      %v1510 = vunpack.c.l.b16 %v1195
      %v1511 = vunpack.c.h.b16 %v1195
      %v1512 = vunpack.c.l.b16 %v1196
      %v1513 = vunpack.c.l.b16 %v1197
      %v1514 = vunpack.c.h.b16 %v1197
      %v1515 = vunpack.c.l.b16 %v1198
      %v1516 = vunpack.c.l.b16 %v1199
      %v1517 = vunpack.c.h.b16 %v1199
      %v1518 = vunpack.c.l.b16 %v1200
      %v1519 = vunpack.c.l.b16 %v1201
      %v1520 = vunpack.c.h.b16 %v1201
      %v1521 = vunpack.c.l.b16 %v1202
      %v1522 = vunpack.c.l.b16 %v1203
      %v1523 = vunpack.c.h.b16 %v1203
      %v1524 = vunpack.c.l.b16 %v1204
      %v1525 = vpack.c.b16 %v1336, %v1333
      %v1526 = vpack.c.b16 %v1337, %v1334
      %v1527 = vpack.c.b16 %v1338, %v1335
      %v1528 = vpack.c.b16 %v1342, %v1339
      %v1529 = vpack.c.b16 %v1343, %v1340
      %v1530 = vpack.c.b16 %v1344, %v1341
      %v1531 = vpack.c.b16 %v1348, %v1345
      %v1532 = vpack.c.b16 %v1349, %v1346
      %v1533 = vpack.c.b16 %v1350, %v1347
      %v1534 = vpack.c.b16 %v1354, %v1351
      %v1535 = vpack.c.b16 %v1355, %v1352
      %v1536 = vpack.c.b16 %v1356, %v1353
      %v1537 = vpack.c.b16 %v1360, %v1357
      %v1538 = vpack.c.b16 %v1361, %v1358
      %v1539 = vpack.c.b16 %v1362, %v1359
      %v1540 = vpack.c.b16 %v1366, %v1363
      %v1541 = vpack.c.b16 %v1367, %v1364
      %v1542 = vpack.c.b16 %v1368, %v1365
      %v1543 = vpack.c.b16 %v1372, %v1369
      %v1544 = vpack.c.b16 %v1373, %v1370
      %v1545 = vpack.c.b16 %v1374, %v1371
      %v1546 = vpack.c.b16 %v1378, %v1375
      %v1547 = vpack.c.b16 %v1379, %v1376
      %v1548 = vpack.c.b16 %v1380, %v1377
      %v1549 = vpack.c.b16 %v1384, %v1381
      %v1550 = vpack.c.b16 %v1385, %v1382
      %v1551 = vpack.c.b16 %v1386, %v1383
      %v1552 = vpack.c.b16 %v1390, %v1387
      %v1553 = vpack.c.b16 %v1391, %v1388
      %v1554 = vpack.c.b16 %v1392, %v1389
      %v1555 = vpack.c.b16 %v1396, %v1393
      %v1556 = vpack.c.b16 %v1397, %v1394
      %v1557 = vpack.c.b16 %v1398, %v1395
      %v1558 = vpack.c.b16 %v1402, %v1399
      %v1559 = vpack.c.b16 %v1403, %v1400
      %v1560 = vpack.c.b16 %v1404, %v1401
      %v1561 = vpack.c.b16 %v1408, %v1405
      %v1562 = vpack.c.b16 %v1409, %v1406
      %v1563 = vpack.c.b16 %v1410, %v1407
      %v1564 = vpack.c.b16 %v1414, %v1411
      %v1565 = vpack.c.b16 %v1415, %v1412
      %v1566 = vpack.c.b16 %v1416, %v1413
      %v1567 = vpack.c.b16 %v1420, %v1417
      %v1568 = vpack.c.b16 %v1421, %v1418
      %v1569 = vpack.c.b16 %v1422, %v1419
      %v1570 = vpack.c.b16 %v1426, %v1423
      %v1571 = vpack.c.b16 %v1427, %v1424
      %v1572 = vpack.c.b16 %v1428, %v1425
      %v1573 = vpack.c.b16 %v1432, %v1429
      %v1574 = vpack.c.b16 %v1433, %v1430
      %v1575 = vpack.c.b16 %v1434, %v1431
      %v1576 = vpack.c.b16 %v1438, %v1435
      %v1577 = vpack.c.b16 %v1439, %v1436
      %v1578 = vpack.c.b16 %v1440, %v1437
      %v1579 = vpack.c.b16 %v1444, %v1441
      %v1580 = vpack.c.b16 %v1445, %v1442
      %v1581 = vpack.c.b16 %v1446, %v1443
      %v1582 = vpack.c.b16 %v1450, %v1447
      %v1583 = vpack.c.b16 %v1451, %v1448
      %v1584 = vpack.c.b16 %v1452, %v1449
      %v1585 = vpack.c.b16 %v1456, %v1453
      %v1586 = vpack.c.b16 %v1457, %v1454
      %v1587 = vpack.c.b16 %v1458, %v1455
      %v1588 = vpack.c.b16 %v1462, %v1459
      %v1589 = vpack.c.b16 %v1463, %v1460
      %v1590 = vpack.c.b16 %v1464, %v1461
      %v1591 = vpack.c.b16 %v1468, %v1465
      %v1592 = vpack.c.b16 %v1469, %v1466
      %v1593 = vpack.c.b16 %v1470, %v1467
      %v1594 = vpack.c.b16 %v1474, %v1471
      %v1595 = vpack.c.b16 %v1475, %v1472
      %v1596 = vpack.c.b16 %v1476, %v1473
      %v1597 = vpack.c.b16 %v1480, %v1477
      %v1598 = vpack.c.b16 %v1481, %v1478
      %v1599 = vpack.c.b16 %v1482, %v1479
      %v1600 = vpack.c.b16 %v1486, %v1483
      %v1601 = vpack.c.b16 %v1487, %v1484
      %v1602 = vpack.c.b16 %v1488, %v1485
      %v1603 = vpack.c.b16 %v1492, %v1489
      %v1604 = vpack.c.b16 %v1493, %v1490
      %v1605 = vpack.c.b16 %v1494, %v1491
      %v1606 = vpack.c.b16 %v1498, %v1495
      %v1607 = vpack.c.b16 %v1499, %v1496
      %v1608 = vpack.c.b16 %v1500, %v1497
      %v1609 = vpack.c.b16 %v1504, %v1501
      %v1610 = vpack.c.b16 %v1505, %v1502
      %v1611 = vpack.c.b16 %v1506, %v1503
      %v1612 = vpack.c.b16 %v1510, %v1507
      %v1613 = vpack.c.b16 %v1511, %v1508
      %v1614 = vpack.c.b16 %v1512, %v1509
      %v1615 = vpack.c.b16 %v1516, %v1513
      %v1616 = vpack.c.b16 %v1517, %v1514
      %v1617 = vpack.c.b16 %v1518, %v1515
      %v1618 = vpack.c.b16 %v1522, %v1519
      %v1619 = vpack.c.b16 %v1523, %v1520
      %v1620 = vpack.c.b16 %v1524, %v1521
      %vm1685 = vcmask 261120
      %v1687 = vsel %vm1685, %v1527, 0
      %v1690 = vsel %vm1685, %v1530, 0
      %v1693 = vsel %vm1685, %v1533, 0
      %v1696 = vsel %vm1685, %v1536, 0
      %v1699 = vsel %vm1685, %v1539, 0
      %v1702 = vsel %vm1685, %v1542, 0
      %v1705 = vsel %vm1685, %v1545, 0
      %v1708 = vsel %vm1685, %v1548, 0
      %v1711 = vsel %vm1685, %v1551, 0
      %v1714 = vsel %vm1685, %v1554, 0
      %v1717 = vsel %vm1685, %v1557, 0
      %v1720 = vsel %vm1685, %v1560, 0
      %v1723 = vsel %vm1685, %v1563, 0
      %v1726 = vsel %vm1685, %v1566, 0
      %v1729 = vsel %vm1685, %v1569, 0
      %v1732 = vsel %vm1685, %v1572, 0
      %v1735 = vsel %vm1685, %v1575, 0
      %v1738 = vsel %vm1685, %v1578, 0
      %v1741 = vsel %vm1685, %v1581, 0
      %v1744 = vsel %vm1685, %v1584, 0
      %v1747 = vsel %vm1685, %v1587, 0
      %v1750 = vsel %vm1685, %v1590, 0
      %v1753 = vsel %vm1685, %v1593, 0
      %v1756 = vsel %vm1685, %v1596, 0
      %v1759 = vsel %vm1685, %v1599, 0
      %v1762 = vsel %vm1685, %v1602, 0
      %v1765 = vsel %vm1685, %v1605, 0
      %v1768 = vsel %vm1685, %v1608, 0
      %v1771 = vsel %vm1685, %v1611, 0
      %v1774 = vsel %vm1685, %v1614, 0
      %v1777 = vsel %vm1685, %v1617, 0
      %v1780 = vsel %vm1685, %v1620, 0
      %1782 = vmatprep.subr.bf16.mxu0 0
      %1783 = vmatpush1.bf16.msra.mxu0 %v762
      %1784 = vmatprep.subr.bf16.mxu0 0
      %1785 = vmatpush1.bf16.msra.mxu0 %v758
      %1786 = vmatprep.subr.bf16.mxu0 0
      %1787 = vmatpush1.bf16.msra.mxu0 %v754
      %1788 = vmatprep.subr.bf16.mxu0 0
      %1789 = vmatpush1.bf16.msra.mxu0 %v750
      %1790 = vmatprep.subr.bf16.mxu0 0
      %1791 = vmatpush1.bf16.msra.mxu0 %v746
      %1792 = vmatprep.subr.bf16.mxu0 0
      %1793 = vmatpush1.bf16.msra.mxu0 %v742
      %1794 = vmatprep.subr.bf16.mxu0 0
      %1795 = vmatpush1.bf16.msra.mxu0 %v738
      %1796 = vmatprep.subr.bf16.mxu0 0
      %1797 = vmatpush1.bf16.msra.mxu0 %v734
      %1798 = vmatprep.subr.bf16.mxu0 0
      %1799 = vmatpush2.bf16.msra.mxu0 %v794
      %1800 = vmatprep.subr.bf16.mxu0 0
      %1801 = vmatpush2.bf16.msra.mxu0 %v790
      %1802 = vmatprep.subr.bf16.mxu0 0
      %1803 = vmatpush2.bf16.msra.mxu0 %v786
      %1804 = vmatprep.subr.bf16.mxu0 0
      %1805 = vmatpush2.bf16.msra.mxu0 %v782
      %1806 = vmatprep.subr.bf16.mxu0 0
      %1807 = vmatpush2.bf16.msra.mxu0 %v778
      %1808 = vmatprep.subr.bf16.mxu0 0
      %1809 = vmatpush2.bf16.msra.mxu0 %v774
      %1810 = vmatprep.subr.bf16.mxu0 0
      %1811 = vmatpush2.bf16.msra.mxu0 %v770
      %1812 = vmatprep.subr.bf16.mxu0 0
      %1813 = vmatpush2.bf16.msra.mxu0 %v766
      %1814 = vmatprep.mubr.bf16.mxu0 %v1526
      %1815 = vmatmul.mubr.bf16.gmra.mxu0 %v1525
      %v1816 = vpop.f32.mrf.mxu0
      %v1817 = vadd.f32 0.0, %v1816
      %v1818 = vpop.f32.mrf.mxu0
      %v1819 = vpop.f32.mrf.mxu0
      %v1820 = vadd.f32 0.0, %v1819
      %v1821 = vpop.f32.mrf.mxu0
      %1822 = vmatprep.mubr.bf16.mxu0 %v1529
      %1823 = vmatmul.mubr.bf16.gmra.mxu0 %v1528
      %v1824 = vpop.f32.mrf.mxu0
      %v1825 = vadd.f32 0.0, %v1824
      %v1826 = vpop.f32.mrf.mxu0
      %v1827 = vpop.f32.mrf.mxu0
      %v1828 = vadd.f32 0.0, %v1827
      %v1829 = vpop.f32.mrf.mxu0
      %1830 = vmatprep.mubr.bf16.mxu0 %v1532
      %1831 = vmatmul.mubr.bf16.gmra.mxu0 %v1531
      %v1832 = vpop.f32.mrf.mxu0
      %v1833 = vadd.f32 0.0, %v1832
      %v1834 = vpop.f32.mrf.mxu0
      %v1835 = vpop.f32.mrf.mxu0
      %v1836 = vadd.f32 0.0, %v1835
      %v1837 = vpop.f32.mrf.mxu0
      %1838 = vmatprep.mubr.bf16.mxu0 %v1535
      %1839 = vmatmul.mubr.bf16.gmra.mxu0 %v1534
      %v1840 = vpop.f32.mrf.mxu0
      %v1841 = vadd.f32 0.0, %v1840
      %v1842 = vpop.f32.mrf.mxu0
      %v1843 = vpop.f32.mrf.mxu0
      %v1844 = vadd.f32 0.0, %v1843
      %v1845 = vpop.f32.mrf.mxu0
      %1846 = vmatprep.mubr.bf16.mxu0 %v1538
      %1847 = vmatmul.mubr.bf16.gmra.mxu0 %v1537
      %v1848 = vpop.f32.mrf.mxu0
      %v1849 = vadd.f32 0.0, %v1848
      %v1850 = vpop.f32.mrf.mxu0
      %v1851 = vpop.f32.mrf.mxu0
      %v1852 = vadd.f32 0.0, %v1851
      %v1853 = vpop.f32.mrf.mxu0
      %1854 = vmatprep.mubr.bf16.mxu0 %v1541
      %1855 = vmatmul.mubr.bf16.gmra.mxu0 %v1540
      %v1856 = vpop.f32.mrf.mxu0
      %v1857 = vadd.f32 0.0, %v1856
      %v1858 = vpop.f32.mrf.mxu0
      %v1859 = vpop.f32.mrf.mxu0
      %v1860 = vadd.f32 0.0, %v1859
      %v1861 = vpop.f32.mrf.mxu0
      %1862 = vmatprep.mubr.bf16.mxu0 %v1544
      %1863 = vmatmul.mubr.bf16.gmra.mxu0 %v1543
      %v1864 = vpop.f32.mrf.mxu0
      %v1865 = vadd.f32 0.0, %v1864
      %v1866 = vpop.f32.mrf.mxu0
      %v1867 = vpop.f32.mrf.mxu0
      %v1868 = vadd.f32 0.0, %v1867
      %v1869 = vpop.f32.mrf.mxu0
      %1870 = vmatprep.mubr.bf16.mxu0 %v1547
      %1871 = vmatmul.mubr.bf16.gmra.mxu0 %v1546
      %v1872 = vpop.f32.mrf.mxu0
      %v1873 = vadd.f32 0.0, %v1872
      %v1874 = vpop.f32.mrf.mxu0
      %v1875 = vpop.f32.mrf.mxu0
      %v1876 = vadd.f32 0.0, %v1875
      %v1877 = vpop.f32.mrf.mxu0
      %1878 = vmatprep.mubr.bf16.mxu0 %v1550
      %1879 = vmatmul.mubr.bf16.gmra.mxu0 %v1549
      %v1880 = vpop.f32.mrf.mxu0
      %v1881 = vadd.f32 0.0, %v1880
      %v1882 = vpop.f32.mrf.mxu0
      %v1883 = vpop.f32.mrf.mxu0
      %v1884 = vadd.f32 0.0, %v1883
      %v1885 = vpop.f32.mrf.mxu0
      %1886 = vmatprep.mubr.bf16.mxu0 %v1553
      %1887 = vmatmul.mubr.bf16.gmra.mxu0 %v1552
      %v1888 = vpop.f32.mrf.mxu0
      %v1889 = vadd.f32 0.0, %v1888
      %v1890 = vpop.f32.mrf.mxu0
      %v1891 = vpop.f32.mrf.mxu0
      %v1892 = vadd.f32 0.0, %v1891
      %v1893 = vpop.f32.mrf.mxu0
      %1894 = vmatprep.mubr.bf16.mxu0 %v1556
      %1895 = vmatmul.mubr.bf16.gmra.mxu0 %v1555
      %v1896 = vpop.f32.mrf.mxu0
      %v1897 = vadd.f32 0.0, %v1896
      %v1898 = vpop.f32.mrf.mxu0
      %v1899 = vpop.f32.mrf.mxu0
      %v1900 = vadd.f32 0.0, %v1899
      %v1901 = vpop.f32.mrf.mxu0
      %1902 = vmatprep.mubr.bf16.mxu0 %v1559
      %1903 = vmatmul.mubr.bf16.gmra.mxu0 %v1558
      %v1904 = vpop.f32.mrf.mxu0
      %v1905 = vadd.f32 0.0, %v1904
      %v1906 = vpop.f32.mrf.mxu0
      %v1907 = vpop.f32.mrf.mxu0
      %v1908 = vadd.f32 0.0, %v1907
      %v1909 = vpop.f32.mrf.mxu0
      %1910 = vmatprep.mubr.bf16.mxu0 %v1562
      %1911 = vmatmul.mubr.bf16.gmra.mxu0 %v1561
      %v1912 = vpop.f32.mrf.mxu0
      %v1913 = vadd.f32 0.0, %v1912
      %v1914 = vpop.f32.mrf.mxu0
      %v1915 = vpop.f32.mrf.mxu0
      %v1916 = vadd.f32 0.0, %v1915
      %v1917 = vpop.f32.mrf.mxu0
      %1918 = vmatprep.mubr.bf16.mxu0 %v1565
      %1919 = vmatmul.mubr.bf16.gmra.mxu0 %v1564
      %v1920 = vpop.f32.mrf.mxu0
      %v1921 = vadd.f32 0.0, %v1920
      %v1922 = vpop.f32.mrf.mxu0
      %v1923 = vpop.f32.mrf.mxu0
      %v1924 = vadd.f32 0.0, %v1923
      %v1925 = vpop.f32.mrf.mxu0
      %1926 = vmatprep.mubr.bf16.mxu0 %v1568
      %1927 = vmatmul.mubr.bf16.gmra.mxu0 %v1567
      %v1928 = vpop.f32.mrf.mxu0
      %v1929 = vadd.f32 0.0, %v1928
      %v1930 = vpop.f32.mrf.mxu0
      %v1931 = vpop.f32.mrf.mxu0
      %v1932 = vadd.f32 0.0, %v1931
      %v1933 = vpop.f32.mrf.mxu0
      %1934 = vmatprep.mubr.bf16.mxu0 %v1571
      %1935 = vmatmul.mubr.bf16.gmra.mxu0 %v1570
      %v1936 = vpop.f32.mrf.mxu0
      %v1937 = vadd.f32 0.0, %v1936
      %v1938 = vpop.f32.mrf.mxu0
      %v1939 = vpop.f32.mrf.mxu0
      %v1940 = vadd.f32 0.0, %v1939
      %v1941 = vpop.f32.mrf.mxu0
      %1942 = vmatprep.mubr.bf16.mxu0 %v1574
      %1943 = vmatmul.mubr.bf16.gmra.mxu0 %v1573
      %v1944 = vpop.f32.mrf.mxu0
      %v1945 = vadd.f32 0.0, %v1944
      %v1946 = vpop.f32.mrf.mxu0
      %v1947 = vpop.f32.mrf.mxu0
      %v1948 = vadd.f32 0.0, %v1947
      %v1949 = vpop.f32.mrf.mxu0
      %1950 = vmatprep.mubr.bf16.mxu0 %v1577
      %1951 = vmatmul.mubr.bf16.gmra.mxu0 %v1576
      %v1952 = vpop.f32.mrf.mxu0
      %v1953 = vadd.f32 0.0, %v1952
      %v1954 = vpop.f32.mrf.mxu0
      %v1955 = vpop.f32.mrf.mxu0
      %v1956 = vadd.f32 0.0, %v1955
      %v1957 = vpop.f32.mrf.mxu0
      %1958 = vmatprep.mubr.bf16.mxu0 %v1580
      %1959 = vmatmul.mubr.bf16.gmra.mxu0 %v1579
      %v1960 = vpop.f32.mrf.mxu0
      %v1961 = vadd.f32 0.0, %v1960
      %v1962 = vpop.f32.mrf.mxu0
      %v1963 = vpop.f32.mrf.mxu0
      %v1964 = vadd.f32 0.0, %v1963
      %v1965 = vpop.f32.mrf.mxu0
      %1966 = vmatprep.mubr.bf16.mxu0 %v1583
      %1967 = vmatmul.mubr.bf16.gmra.mxu0 %v1582
      %v1968 = vpop.f32.mrf.mxu0
      %v1969 = vadd.f32 0.0, %v1968
      %v1970 = vpop.f32.mrf.mxu0
      %v1971 = vpop.f32.mrf.mxu0
      %v1972 = vadd.f32 0.0, %v1971
      %v1973 = vpop.f32.mrf.mxu0
      %1974 = vmatprep.mubr.bf16.mxu0 %v1586
      %1975 = vmatmul.mubr.bf16.gmra.mxu0 %v1585
      %v1976 = vpop.f32.mrf.mxu0
      %v1977 = vadd.f32 0.0, %v1976
      %v1978 = vpop.f32.mrf.mxu0
      %v1979 = vpop.f32.mrf.mxu0
      %v1980 = vadd.f32 0.0, %v1979
      %v1981 = vpop.f32.mrf.mxu0
      %1982 = vmatprep.mubr.bf16.mxu0 %v1589
      %1983 = vmatmul.mubr.bf16.gmra.mxu0 %v1588
      %v1984 = vpop.f32.mrf.mxu0
      %v1985 = vadd.f32 0.0, %v1984
      %v1986 = vpop.f32.mrf.mxu0
      %v1987 = vpop.f32.mrf.mxu0
      %v1988 = vadd.f32 0.0, %v1987
      %v1989 = vpop.f32.mrf.mxu0
      %1990 = vmatprep.mubr.bf16.mxu0 %v1592
      %1991 = vmatmul.mubr.bf16.gmra.mxu0 %v1591
      %v1992 = vpop.f32.mrf.mxu0
      %v1993 = vadd.f32 0.0, %v1992
      %v1994 = vpop.f32.mrf.mxu0
      %v1995 = vpop.f32.mrf.mxu0
      %v1996 = vadd.f32 0.0, %v1995
      %v1997 = vpop.f32.mrf.mxu0
      %1998 = vmatprep.mubr.bf16.mxu0 %v1595
      %1999 = vmatmul.mubr.bf16.gmra.mxu0 %v1594
      %v2000 = vpop.f32.mrf.mxu0
      %v2001 = vadd.f32 0.0, %v2000
      %v2002 = vpop.f32.mrf.mxu0
      %v2003 = vpop.f32.mrf.mxu0
      %v2004 = vadd.f32 0.0, %v2003
      %v2005 = vpop.f32.mrf.mxu0
      %2006 = vmatprep.mubr.bf16.mxu0 %v1598
      %2007 = vmatmul.mubr.bf16.gmra.mxu0 %v1597
      %v2008 = vpop.f32.mrf.mxu0
      %v2009 = vadd.f32 0.0, %v2008
      %v2010 = vpop.f32.mrf.mxu0
      %v2011 = vpop.f32.mrf.mxu0
      %v2012 = vadd.f32 0.0, %v2011
      %v2013 = vpop.f32.mrf.mxu0
      %2014 = vmatprep.mubr.bf16.mxu0 %v1601
      %2015 = vmatmul.mubr.bf16.gmra.mxu0 %v1600
      %v2016 = vpop.f32.mrf.mxu0
      %v2017 = vadd.f32 0.0, %v2016
      %v2018 = vpop.f32.mrf.mxu0
      %v2019 = vpop.f32.mrf.mxu0
      %v2020 = vadd.f32 0.0, %v2019
      %v2021 = vpop.f32.mrf.mxu0
      %2022 = vmatprep.mubr.bf16.mxu0 %v1604
      %2023 = vmatmul.mubr.bf16.gmra.mxu0 %v1603
      %v2024 = vpop.f32.mrf.mxu0
      %v2025 = vadd.f32 0.0, %v2024
      %v2026 = vpop.f32.mrf.mxu0
      %v2027 = vpop.f32.mrf.mxu0
      %v2028 = vadd.f32 0.0, %v2027
      %v2029 = vpop.f32.mrf.mxu0
      %2030 = vmatprep.mubr.bf16.mxu0 %v1607
      %2031 = vmatmul.mubr.bf16.gmra.mxu0 %v1606
      %v2032 = vpop.f32.mrf.mxu0
      %v2033 = vadd.f32 0.0, %v2032
      %v2034 = vpop.f32.mrf.mxu0
      %v2035 = vpop.f32.mrf.mxu0
      %v2036 = vadd.f32 0.0, %v2035
      %v2037 = vpop.f32.mrf.mxu0
      %2038 = vmatprep.mubr.bf16.mxu0 %v1610
      %2039 = vmatmul.mubr.bf16.gmra.mxu0 %v1609
      %v2040 = vpop.f32.mrf.mxu0
      %v2041 = vadd.f32 0.0, %v2040
      %v2042 = vpop.f32.mrf.mxu0
      %v2043 = vpop.f32.mrf.mxu0
      %v2044 = vadd.f32 0.0, %v2043
      %v2045 = vpop.f32.mrf.mxu0
      %2046 = vmatprep.mubr.bf16.mxu0 %v1613
      %2047 = vmatmul.mubr.bf16.gmra.mxu0 %v1612
      %v2048 = vpop.f32.mrf.mxu0
      %v2049 = vadd.f32 0.0, %v2048
      %v2050 = vpop.f32.mrf.mxu0
      %v2051 = vpop.f32.mrf.mxu0
      %v2052 = vadd.f32 0.0, %v2051
      %v2053 = vpop.f32.mrf.mxu0
      %2054 = vmatprep.mubr.bf16.mxu0 %v1616
      %2055 = vmatmul.mubr.bf16.gmra.mxu0 %v1615
      %v2056 = vpop.f32.mrf.mxu0
      %v2057 = vadd.f32 0.0, %v2056
      %v2058 = vpop.f32.mrf.mxu0
      %v2059 = vpop.f32.mrf.mxu0
      %v2060 = vadd.f32 0.0, %v2059
      %v2061 = vpop.f32.mrf.mxu0
      %2062 = vmatprep.mubr.bf16.mxu0 %v1619
      %2063 = vmatmul.mubr.bf16.gmra.mxu0 %v1618
      %v2064 = vpop.f32.mrf.mxu0
      %v2065 = vadd.f32 0.0, %v2064
      %v2066 = vpop.f32.mrf.mxu0
      %v2067 = vpop.f32.mrf.mxu0
      %v2068 = vadd.f32 0.0, %v2067
      %v2069 = vpop.f32.mrf.mxu0
      %2070 = vdwg.mxu0
      %2071 = vmatprep.subr.bf16.mxu0 0
      %2072 = vmatpush1.bf16.msra.mxu0 0
      %2073 = vmatprep.subr.bf16.mxu0 0
      %2074 = vmatpush1.bf16.msra.mxu0 0
      %2075 = vmatprep.subr.bf16.mxu0 0
      %2076 = vmatpush1.bf16.msra.mxu0 0
      %2077 = vmatprep.subr.bf16.mxu0 0
      %2078 = vmatpush1.bf16.msra.mxu0 0
      %2079 = vmatprep.subr.bf16.mxu0 0
      %2080 = vmatpush1.bf16.msra.mxu0 0
      %2081 = vmatprep.subr.bf16.mxu0 0
      %2082 = vmatpush1.bf16.msra.mxu0 0
      %2083 = vmatprep.subr.bf16.mxu0 0
      %2084 = vmatpush1.bf16.msra.mxu0 %v802
      %2085 = vmatprep.subr.bf16.mxu0 0
      %2086 = vmatpush1.bf16.msra.mxu0 %v798
      %2087 = vmatprep.subr.bf16.mxu0 0
      %2088 = vmatpush2.bf16.msra.mxu0 0
      %2089 = vmatprep.subr.bf16.mxu0 0
      %2090 = vmatpush2.bf16.msra.mxu0 0
      %2091 = vmatprep.subr.bf16.mxu0 0
      %2092 = vmatpush2.bf16.msra.mxu0 0
      %2093 = vmatprep.subr.bf16.mxu0 0
      %2094 = vmatpush2.bf16.msra.mxu0 0
      %2095 = vmatprep.subr.bf16.mxu0 0
      %2096 = vmatpush2.bf16.msra.mxu0 0
      %2097 = vmatprep.subr.bf16.mxu0 0
      %2098 = vmatpush2.bf16.msra.mxu0 0
      %2099 = vmatprep.subr.bf16.mxu0 0
      %2100 = vmatpush2.bf16.msra.mxu0 0
      %2101 = vmatprep.subr.bf16.mxu0 0
      %2102 = vmatpush2.bf16.msra.mxu0 0
      %2103 = vmatprep.mubr.bf16.mxu0 0
      %2104 = vmatmul.mubr.bf16.gmra.mxu0 %v1687
      %v2105 = vpop.f32.mrf.mxu0
      %v2106 = vadd.f32 %v1817, %v2105
      %v2107 = vpop.f32.mrf.mxu0
      %v2108 = vpop.f32.mrf.mxu0
      %v2109 = vadd.f32 %v1820, %v2108
      %v2110 = vpop.f32.mrf.mxu0
      %2111 = vmatprep.mubr.bf16.mxu0 0
      %2112 = vmatmul.mubr.bf16.gmra.mxu0 %v1690
      %v2113 = vpop.f32.mrf.mxu0
      %v2114 = vadd.f32 %v1825, %v2113
      %v2115 = vpop.f32.mrf.mxu0
      %v2116 = vpop.f32.mrf.mxu0
      %v2117 = vadd.f32 %v1828, %v2116
      %v2118 = vpop.f32.mrf.mxu0
      %2119 = vmatprep.mubr.bf16.mxu0 0
      %2120 = vmatmul.mubr.bf16.gmra.mxu0 %v1693
      %v2121 = vpop.f32.mrf.mxu0
      %v2122 = vadd.f32 %v1833, %v2121
      %v2123 = vpop.f32.mrf.mxu0
      %v2124 = vpop.f32.mrf.mxu0
      %v2125 = vadd.f32 %v1836, %v2124
      %v2126 = vpop.f32.mrf.mxu0
      %2127 = vmatprep.mubr.bf16.mxu0 0
      %2128 = vmatmul.mubr.bf16.gmra.mxu0 %v1696
      %v2129 = vpop.f32.mrf.mxu0
      %v2130 = vadd.f32 %v1841, %v2129
      %v2131 = vpop.f32.mrf.mxu0
      %v2132 = vpop.f32.mrf.mxu0
      %v2133 = vadd.f32 %v1844, %v2132
      %v2134 = vpop.f32.mrf.mxu0
      %2135 = vmatprep.mubr.bf16.mxu0 0
      %2136 = vmatmul.mubr.bf16.gmra.mxu0 %v1699
      %v2137 = vpop.f32.mrf.mxu0
      %v2138 = vadd.f32 %v1849, %v2137
      %v2139 = vpop.f32.mrf.mxu0
      %v2140 = vpop.f32.mrf.mxu0
      %v2141 = vadd.f32 %v1852, %v2140
      %v2142 = vpop.f32.mrf.mxu0
      %2143 = vmatprep.mubr.bf16.mxu0 0
      %2144 = vmatmul.mubr.bf16.gmra.mxu0 %v1702
      %v2145 = vpop.f32.mrf.mxu0
      %v2146 = vadd.f32 %v1857, %v2145
      %v2147 = vpop.f32.mrf.mxu0
      %v2148 = vpop.f32.mrf.mxu0
      %v2149 = vadd.f32 %v1860, %v2148
      %v2150 = vpop.f32.mrf.mxu0
      %2151 = vmatprep.mubr.bf16.mxu0 0
      %2152 = vmatmul.mubr.bf16.gmra.mxu0 %v1705
      %v2153 = vpop.f32.mrf.mxu0
      %v2154 = vadd.f32 %v1865, %v2153
      %v2155 = vpop.f32.mrf.mxu0
      %v2156 = vpop.f32.mrf.mxu0
      %v2157 = vadd.f32 %v1868, %v2156
      %v2158 = vpop.f32.mrf.mxu0
      %2159 = vmatprep.mubr.bf16.mxu0 0
      %2160 = vmatmul.mubr.bf16.gmra.mxu0 %v1708
      %v2161 = vpop.f32.mrf.mxu0
      %v2162 = vadd.f32 %v1873, %v2161
      %v2163 = vpop.f32.mrf.mxu0
      %v2164 = vpop.f32.mrf.mxu0
      %v2165 = vadd.f32 %v1876, %v2164
      %v2166 = vpop.f32.mrf.mxu0
      %2167 = vmatprep.mubr.bf16.mxu0 0
      %2168 = vmatmul.mubr.bf16.gmra.mxu0 %v1711
      %v2169 = vpop.f32.mrf.mxu0
      %v2170 = vadd.f32 %v1881, %v2169
      %v2171 = vpop.f32.mrf.mxu0
      %v2172 = vpop.f32.mrf.mxu0
      %v2173 = vadd.f32 %v1884, %v2172
      %v2174 = vpop.f32.mrf.mxu0
      %2175 = vmatprep.mubr.bf16.mxu0 0
      %2176 = vmatmul.mubr.bf16.gmra.mxu0 %v1714
      %v2177 = vpop.f32.mrf.mxu0
      %v2178 = vadd.f32 %v1889, %v2177
      %v2179 = vpop.f32.mrf.mxu0
      %v2180 = vpop.f32.mrf.mxu0
      %v2181 = vadd.f32 %v1892, %v2180
      %v2182 = vpop.f32.mrf.mxu0
      %2183 = vmatprep.mubr.bf16.mxu0 0
      %2184 = vmatmul.mubr.bf16.gmra.mxu0 %v1717
      %v2185 = vpop.f32.mrf.mxu0
      %v2186 = vadd.f32 %v1897, %v2185
      %v2187 = vpop.f32.mrf.mxu0
      %v2188 = vpop.f32.mrf.mxu0
      %v2189 = vadd.f32 %v1900, %v2188
      %v2190 = vpop.f32.mrf.mxu0
      %2191 = vmatprep.mubr.bf16.mxu0 0
      %2192 = vmatmul.mubr.bf16.gmra.mxu0 %v1720
      %v2193 = vpop.f32.mrf.mxu0
      %v2194 = vadd.f32 %v1905, %v2193
      %v2195 = vpop.f32.mrf.mxu0
      %v2196 = vpop.f32.mrf.mxu0
      %v2197 = vadd.f32 %v1908, %v2196
      %v2198 = vpop.f32.mrf.mxu0
      %2199 = vmatprep.mubr.bf16.mxu0 0
      %2200 = vmatmul.mubr.bf16.gmra.mxu0 %v1723
      %v2201 = vpop.f32.mrf.mxu0
      %v2202 = vadd.f32 %v1913, %v2201
      %v2203 = vpop.f32.mrf.mxu0
      %v2204 = vpop.f32.mrf.mxu0
      %v2205 = vadd.f32 %v1916, %v2204
      %v2206 = vpop.f32.mrf.mxu0
      %2207 = vmatprep.mubr.bf16.mxu0 0
      %2208 = vmatmul.mubr.bf16.gmra.mxu0 %v1726
      %v2209 = vpop.f32.mrf.mxu0
      %v2210 = vadd.f32 %v1921, %v2209
      %v2211 = vpop.f32.mrf.mxu0
      %v2212 = vpop.f32.mrf.mxu0
      %v2213 = vadd.f32 %v1924, %v2212
      %v2214 = vpop.f32.mrf.mxu0
      %2215 = vmatprep.mubr.bf16.mxu0 0
      %2216 = vmatmul.mubr.bf16.gmra.mxu0 %v1729
      %v2217 = vpop.f32.mrf.mxu0
      %v2218 = vadd.f32 %v1929, %v2217
      %v2219 = vpop.f32.mrf.mxu0
      %v2220 = vpop.f32.mrf.mxu0
      %v2221 = vadd.f32 %v1932, %v2220
      %v2222 = vpop.f32.mrf.mxu0
      %2223 = vmatprep.mubr.bf16.mxu0 0
      %2224 = vmatmul.mubr.bf16.gmra.mxu0 %v1732
      %v2225 = vpop.f32.mrf.mxu0
      %v2226 = vadd.f32 %v1937, %v2225
      %v2227 = vpop.f32.mrf.mxu0
      %v2228 = vpop.f32.mrf.mxu0
      %v2229 = vadd.f32 %v1940, %v2228
      %v2230 = vpop.f32.mrf.mxu0
      %2231 = vmatprep.mubr.bf16.mxu0 0
      %2232 = vmatmul.mubr.bf16.gmra.mxu0 %v1735
      %v2233 = vpop.f32.mrf.mxu0
      %v2234 = vadd.f32 %v1945, %v2233
      %v2235 = vpop.f32.mrf.mxu0
      %v2236 = vpop.f32.mrf.mxu0
      %v2237 = vadd.f32 %v1948, %v2236
      %v2238 = vpop.f32.mrf.mxu0
      %2239 = vmatprep.mubr.bf16.mxu0 0
      %2240 = vmatmul.mubr.bf16.gmra.mxu0 %v1738
      %v2241 = vpop.f32.mrf.mxu0
      %v2242 = vadd.f32 %v1953, %v2241
      %v2243 = vpop.f32.mrf.mxu0
      %v2244 = vpop.f32.mrf.mxu0
      %v2245 = vadd.f32 %v1956, %v2244
      %v2246 = vpop.f32.mrf.mxu0
      %2247 = vmatprep.mubr.bf16.mxu0 0
      %2248 = vmatmul.mubr.bf16.gmra.mxu0 %v1741
      %v2249 = vpop.f32.mrf.mxu0
      %v2250 = vadd.f32 %v1961, %v2249
      %v2251 = vpop.f32.mrf.mxu0
      %v2252 = vpop.f32.mrf.mxu0
      %v2253 = vadd.f32 %v1964, %v2252
      %v2254 = vpop.f32.mrf.mxu0
      %2255 = vmatprep.mubr.bf16.mxu0 0
      %2256 = vmatmul.mubr.bf16.gmra.mxu0 %v1744
      %v2257 = vpop.f32.mrf.mxu0
      %v2258 = vadd.f32 %v1969, %v2257
      %v2259 = vpop.f32.mrf.mxu0
      %v2260 = vpop.f32.mrf.mxu0
      %v2261 = vadd.f32 %v1972, %v2260
      %v2262 = vpop.f32.mrf.mxu0
      %2263 = vmatprep.mubr.bf16.mxu0 0
      %2264 = vmatmul.mubr.bf16.gmra.mxu0 %v1747
      %v2265 = vpop.f32.mrf.mxu0
      %v2266 = vadd.f32 %v1977, %v2265
      %v2267 = vpop.f32.mrf.mxu0
      %v2268 = vpop.f32.mrf.mxu0
      %v2269 = vadd.f32 %v1980, %v2268
      %v2270 = vpop.f32.mrf.mxu0
      %2271 = vmatprep.mubr.bf16.mxu0 0
      %2272 = vmatmul.mubr.bf16.gmra.mxu0 %v1750
      %v2273 = vpop.f32.mrf.mxu0
      %v2274 = vadd.f32 %v1985, %v2273
      %v2275 = vpop.f32.mrf.mxu0
      %v2276 = vpop.f32.mrf.mxu0
      %v2277 = vadd.f32 %v1988, %v2276
      %v2278 = vpop.f32.mrf.mxu0
      %2279 = vmatprep.mubr.bf16.mxu0 0
      %2280 = vmatmul.mubr.bf16.gmra.mxu0 %v1753
      %v2281 = vpop.f32.mrf.mxu0
      %v2282 = vadd.f32 %v1993, %v2281
      %v2283 = vpop.f32.mrf.mxu0
      %v2284 = vpop.f32.mrf.mxu0
      %v2285 = vadd.f32 %v1996, %v2284
      %v2286 = vpop.f32.mrf.mxu0
      %2287 = vmatprep.mubr.bf16.mxu0 0
      %2288 = vmatmul.mubr.bf16.gmra.mxu0 %v1756
      %v2289 = vpop.f32.mrf.mxu0
      %v2290 = vadd.f32 %v2001, %v2289
      %v2291 = vpop.f32.mrf.mxu0
      %v2292 = vpop.f32.mrf.mxu0
      %v2293 = vadd.f32 %v2004, %v2292
      %v2294 = vpop.f32.mrf.mxu0
      %2295 = vmatprep.mubr.bf16.mxu0 0
      %2296 = vmatmul.mubr.bf16.gmra.mxu0 %v1759
      %v2297 = vpop.f32.mrf.mxu0
      %v2298 = vadd.f32 %v2009, %v2297
      %v2299 = vpop.f32.mrf.mxu0
      %v2300 = vpop.f32.mrf.mxu0
      %v2301 = vadd.f32 %v2012, %v2300
      %v2302 = vpop.f32.mrf.mxu0
      %2303 = vmatprep.mubr.bf16.mxu0 0
      %2304 = vmatmul.mubr.bf16.gmra.mxu0 %v1762
      %v2305 = vpop.f32.mrf.mxu0
      %v2306 = vadd.f32 %v2017, %v2305
      %v2307 = vpop.f32.mrf.mxu0
      %v2308 = vpop.f32.mrf.mxu0
      %v2309 = vadd.f32 %v2020, %v2308
      %v2310 = vpop.f32.mrf.mxu0
      %2311 = vmatprep.mubr.bf16.mxu0 0
      %2312 = vmatmul.mubr.bf16.gmra.mxu0 %v1765
      %v2313 = vpop.f32.mrf.mxu0
      %v2314 = vadd.f32 %v2025, %v2313
      %v2315 = vpop.f32.mrf.mxu0
      %v2316 = vpop.f32.mrf.mxu0
      %v2317 = vadd.f32 %v2028, %v2316
      %v2318 = vpop.f32.mrf.mxu0
      %2319 = vmatprep.mubr.bf16.mxu0 0
      %2320 = vmatmul.mubr.bf16.gmra.mxu0 %v1768
      %v2321 = vpop.f32.mrf.mxu0
      %v2322 = vadd.f32 %v2033, %v2321
      %v2323 = vpop.f32.mrf.mxu0
      %v2324 = vpop.f32.mrf.mxu0
      %v2325 = vadd.f32 %v2036, %v2324
      %v2326 = vpop.f32.mrf.mxu0
      %2327 = vmatprep.mubr.bf16.mxu0 0
      %2328 = vmatmul.mubr.bf16.gmra.mxu0 %v1771
      %v2329 = vpop.f32.mrf.mxu0
      %v2330 = vadd.f32 %v2041, %v2329
      %v2331 = vpop.f32.mrf.mxu0
      %v2332 = vpop.f32.mrf.mxu0
      %v2333 = vadd.f32 %v2044, %v2332
      %v2334 = vpop.f32.mrf.mxu0
      %2335 = vmatprep.mubr.bf16.mxu0 0
      %2336 = vmatmul.mubr.bf16.gmra.mxu0 %v1774
      %v2337 = vpop.f32.mrf.mxu0
      %v2338 = vadd.f32 %v2049, %v2337
      %v2339 = vpop.f32.mrf.mxu0
      %v2340 = vpop.f32.mrf.mxu0
      %v2341 = vadd.f32 %v2052, %v2340
      %v2342 = vpop.f32.mrf.mxu0
      %2343 = vmatprep.mubr.bf16.mxu0 0
      %2344 = vmatmul.mubr.bf16.gmra.mxu0 %v1777
      %v2345 = vpop.f32.mrf.mxu0
      %v2346 = vadd.f32 %v2057, %v2345
      %v2347 = vpop.f32.mrf.mxu0
      %v2348 = vpop.f32.mrf.mxu0
      %v2349 = vadd.f32 %v2060, %v2348
      %v2350 = vpop.f32.mrf.mxu0
      %2351 = vmatprep.mubr.bf16.mxu0 0
      %2352 = vmatmul.mubr.bf16.gmra.mxu0 %v1780
      %v2353 = vpop.f32.mrf.mxu0
      %v2354 = vadd.f32 %v2065, %v2353
      %v2355 = vpop.f32.mrf.mxu0
      %v2356 = vpop.f32.mrf.mxu0
      %v2357 = vadd.f32 %v2068, %v2356
      %v2358 = vpop.f32.mrf.mxu0
      %2359 = vdwg.mxu0
      %v2488 = vunpack.c.l.b16 %v948
      %v2489 = vunpack.c.h.b16 %v948
      %v2490 = vunpack.c.l.b16 %v949
      %v2491 = vunpack.c.l.b16 %v950
      %v2492 = vunpack.c.h.b16 %v950
      %v2493 = vunpack.c.l.b16 %v951
      %v2494 = vunpack.c.l.b16 %v952
      %v2495 = vunpack.c.h.b16 %v952
      %v2496 = vunpack.c.l.b16 %v953
      %v2497 = vunpack.c.l.b16 %v954
      %v2498 = vunpack.c.h.b16 %v954
      %v2499 = vunpack.c.l.b16 %v955
      %v2500 = vunpack.c.l.b16 %v956
      %v2501 = vunpack.c.h.b16 %v956
      %v2502 = vunpack.c.l.b16 %v957
      %v2503 = vunpack.c.l.b16 %v958
      %v2504 = vunpack.c.h.b16 %v958
      %v2505 = vunpack.c.l.b16 %v959
      %v2506 = vunpack.c.l.b16 %v960
      %v2507 = vunpack.c.h.b16 %v960
      %v2508 = vunpack.c.l.b16 %v961
      %v2509 = vunpack.c.l.b16 %v962
      %v2510 = vunpack.c.h.b16 %v962
      %v2511 = vunpack.c.l.b16 %v963
      %v2512 = vunpack.c.l.b16 %v964
      %v2513 = vunpack.c.h.b16 %v964
      %v2514 = vunpack.c.l.b16 %v965
      %v2515 = vunpack.c.l.b16 %v966
      %v2516 = vunpack.c.h.b16 %v966
      %v2517 = vunpack.c.l.b16 %v967
      %v2518 = vunpack.c.l.b16 %v968
      %v2519 = vunpack.c.h.b16 %v968
      %v2520 = vunpack.c.l.b16 %v969
      %v2521 = vunpack.c.l.b16 %v970
      %v2522 = vunpack.c.h.b16 %v970
      %v2523 = vunpack.c.l.b16 %v971
      %v2524 = vunpack.c.l.b16 %v972
      %v2525 = vunpack.c.h.b16 %v972
      %v2526 = vunpack.c.l.b16 %v973
      %v2527 = vunpack.c.l.b16 %v974
      %v2528 = vunpack.c.h.b16 %v974
      %v2529 = vunpack.c.l.b16 %v975
      %v2530 = vunpack.c.l.b16 %v976
      %v2531 = vunpack.c.h.b16 %v976
      %v2532 = vunpack.c.l.b16 %v977
      %v2533 = vunpack.c.l.b16 %v978
      %v2534 = vunpack.c.h.b16 %v978
      %v2535 = vunpack.c.l.b16 %v979
      %v2536 = vunpack.c.l.b16 %v980
      %v2537 = vunpack.c.h.b16 %v980
      %v2538 = vunpack.c.l.b16 %v981
      %v2539 = vunpack.c.l.b16 %v982
      %v2540 = vunpack.c.h.b16 %v982
      %v2541 = vunpack.c.l.b16 %v983
      %v2542 = vunpack.c.l.b16 %v984
      %v2543 = vunpack.c.h.b16 %v984
      %v2544 = vunpack.c.l.b16 %v985
      %v2545 = vunpack.c.l.b16 %v986
      %v2546 = vunpack.c.h.b16 %v986
      %v2547 = vunpack.c.l.b16 %v987
      %v2548 = vunpack.c.l.b16 %v988
      %v2549 = vunpack.c.h.b16 %v988
      %v2550 = vunpack.c.l.b16 %v989
      %v2551 = vunpack.c.l.b16 %v990
      %v2552 = vunpack.c.h.b16 %v990
      %v2553 = vunpack.c.l.b16 %v991
      %v2554 = vunpack.c.l.b16 %v992
      %v2555 = vunpack.c.h.b16 %v992
      %v2556 = vunpack.c.l.b16 %v993
      %v2557 = vunpack.c.l.b16 %v994
      %v2558 = vunpack.c.h.b16 %v994
      %v2559 = vunpack.c.l.b16 %v995
      %v2560 = vunpack.c.l.b16 %v996
      %v2561 = vunpack.c.h.b16 %v996
      %v2562 = vunpack.c.l.b16 %v997
      %v2563 = vunpack.c.l.b16 %v998
      %v2564 = vunpack.c.h.b16 %v998
      %v2565 = vunpack.c.l.b16 %v999
      %v2566 = vunpack.c.l.b16 %v1000
      %v2567 = vunpack.c.h.b16 %v1000
      %v2568 = vunpack.c.l.b16 %v1001
      %v2569 = vunpack.c.l.b16 %v1002
      %v2570 = vunpack.c.h.b16 %v1002
      %v2571 = vunpack.c.l.b16 %v1003
      %v2572 = vunpack.c.l.b16 %v1004
      %v2573 = vunpack.c.h.b16 %v1004
      %v2574 = vunpack.c.l.b16 %v1005
      %v2575 = vunpack.c.l.b16 %v1006
      %v2576 = vunpack.c.h.b16 %v1006
      %v2577 = vunpack.c.l.b16 %v1007
      %v2578 = vunpack.c.l.b16 %v1008
      %v2579 = vunpack.c.h.b16 %v1008
      %v2580 = vunpack.c.l.b16 %v1009
      %v2581 = vunpack.c.l.b16 %v1010
      %v2582 = vunpack.c.h.b16 %v1010
      %v2583 = vunpack.c.l.b16 %v1011
      %v2584 = vunpack.c.l.b16 %v1012
      %v2585 = vunpack.c.h.b16 %v1012
      %v2586 = vunpack.c.l.b16 %v1013
      %v2587 = vunpack.c.l.b16 %v1014
      %v2588 = vunpack.c.h.b16 %v1014
      %v2589 = vunpack.c.l.b16 %v1015
      %v2590 = vunpack.c.l.b16 %v1016
      %v2591 = vunpack.c.h.b16 %v1016
      %v2592 = vunpack.c.l.b16 %v1017
      %v2593 = vunpack.c.l.b16 %v1018
      %v2594 = vunpack.c.h.b16 %v1018
      %v2595 = vunpack.c.l.b16 %v1019
      %v2596 = vunpack.c.l.b16 %v1020
      %v2597 = vunpack.c.h.b16 %v1020
      %v2598 = vunpack.c.l.b16 %v1021
      %v2599 = vunpack.c.l.b16 %v1022
      %v2600 = vunpack.c.h.b16 %v1022
      %v2601 = vunpack.c.l.b16 %v1023
      %v2602 = vunpack.c.l.b16 %v1024
      %v2603 = vunpack.c.h.b16 %v1024
      %v2604 = vunpack.c.l.b16 %v1025
      %v2605 = vunpack.c.l.b16 %v1026
      %v2606 = vunpack.c.h.b16 %v1026
      %v2607 = vunpack.c.l.b16 %v1027
      %v2608 = vunpack.c.l.b16 %v1028
      %v2609 = vunpack.c.h.b16 %v1028
      %v2610 = vunpack.c.l.b16 %v1029
      %v2611 = vunpack.c.l.b16 %v1030
      %v2612 = vunpack.c.h.b16 %v1030
      %v2613 = vunpack.c.l.b16 %v1031
      %v2614 = vunpack.c.l.b16 %v1032
      %v2615 = vunpack.c.h.b16 %v1032
      %v2616 = vunpack.c.l.b16 %v1033
      %v2617 = vunpack.c.l.b16 %v1034
      %v2618 = vunpack.c.h.b16 %v1034
      %v2619 = vunpack.c.l.b16 %v1035
      %v2620 = vunpack.c.l.b16 %v1036
      %v2621 = vunpack.c.h.b16 %v1036
      %v2622 = vunpack.c.l.b16 %v1037
      %v2623 = vunpack.c.l.b16 %v1038
      %v2624 = vunpack.c.h.b16 %v1038
      %v2625 = vunpack.c.l.b16 %v1039
      %v2626 = vunpack.c.l.b16 %v1040
      %v2627 = vunpack.c.h.b16 %v1040
      %v2628 = vunpack.c.l.b16 %v1041
      %v2629 = vunpack.c.l.b16 %v1042
      %v2630 = vunpack.c.h.b16 %v1042
      %v2631 = vunpack.c.l.b16 %v1043
      %v2632 = vunpack.c.l.b16 %v1044
      %v2633 = vunpack.c.h.b16 %v1044
      %v2634 = vunpack.c.l.b16 %v1045
      %v2635 = vunpack.c.l.b16 %v1046
      %v2636 = vunpack.c.h.b16 %v1046
      %v2637 = vunpack.c.l.b16 %v1047
      %v2638 = vunpack.c.l.b16 %v1048
      %v2639 = vunpack.c.h.b16 %v1048
      %v2640 = vunpack.c.l.b16 %v1049
      %v2641 = vunpack.c.l.b16 %v1050
      %v2642 = vunpack.c.h.b16 %v1050
      %v2643 = vunpack.c.l.b16 %v1051
      %v2644 = vunpack.c.l.b16 %v1052
      %v2645 = vunpack.c.h.b16 %v1052
      %v2646 = vunpack.c.l.b16 %v1053
      %v2647 = vunpack.c.l.b16 %v1054
      %v2648 = vunpack.c.h.b16 %v1054
      %v2649 = vunpack.c.l.b16 %v1055
      %v2650 = vunpack.c.l.b16 %v1056
      %v2651 = vunpack.c.h.b16 %v1056
      %v2652 = vunpack.c.l.b16 %v1057
      %v2653 = vunpack.c.l.b16 %v1058
      %v2654 = vunpack.c.h.b16 %v1058
      %v2655 = vunpack.c.l.b16 %v1059
      %v2656 = vunpack.c.l.b16 %v1060
      %v2657 = vunpack.c.h.b16 %v1060
      %v2658 = vunpack.c.l.b16 %v1061
      %v2659 = vunpack.c.l.b16 %v1062
      %v2660 = vunpack.c.h.b16 %v1062
      %v2661 = vunpack.c.l.b16 %v1063
      %v2662 = vunpack.c.l.b16 %v1064
      %v2663 = vunpack.c.h.b16 %v1064
      %v2664 = vunpack.c.l.b16 %v1065
      %v2665 = vunpack.c.l.b16 %v1066
      %v2666 = vunpack.c.h.b16 %v1066
      %v2667 = vunpack.c.l.b16 %v1067
      %v2668 = vunpack.c.l.b16 %v1068
      %v2669 = vunpack.c.h.b16 %v1068
      %v2670 = vunpack.c.l.b16 %v1069
      %v2671 = vunpack.c.l.b16 %v1070
      %v2672 = vunpack.c.h.b16 %v1070
      %v2673 = vunpack.c.l.b16 %v1071
      %v2674 = vunpack.c.l.b16 %v1072
      %v2675 = vunpack.c.h.b16 %v1072
      %v2676 = vunpack.c.l.b16 %v1073
      %v2677 = vunpack.c.l.b16 %v1074
      %v2678 = vunpack.c.h.b16 %v1074
      %v2679 = vunpack.c.l.b16 %v1075
      %v2680 = vpack.c.b16 %v2491, %v2488
      %v2681 = vpack.c.b16 %v2492, %v2489
      %v2682 = vpack.c.b16 %v2493, %v2490
      %v2683 = vpack.c.b16 %v2497, %v2494
      %v2684 = vpack.c.b16 %v2498, %v2495
      %v2685 = vpack.c.b16 %v2499, %v2496
      %v2686 = vpack.c.b16 %v2503, %v2500
      %v2687 = vpack.c.b16 %v2504, %v2501
      %v2688 = vpack.c.b16 %v2505, %v2502
      %v2689 = vpack.c.b16 %v2509, %v2506
      %v2690 = vpack.c.b16 %v2510, %v2507
      %v2691 = vpack.c.b16 %v2511, %v2508
      %v2692 = vpack.c.b16 %v2515, %v2512
      %v2693 = vpack.c.b16 %v2516, %v2513
      %v2694 = vpack.c.b16 %v2517, %v2514
      %v2695 = vpack.c.b16 %v2521, %v2518
      %v2696 = vpack.c.b16 %v2522, %v2519
      %v2697 = vpack.c.b16 %v2523, %v2520
      %v2698 = vpack.c.b16 %v2527, %v2524
      %v2699 = vpack.c.b16 %v2528, %v2525
      %v2700 = vpack.c.b16 %v2529, %v2526
      %v2701 = vpack.c.b16 %v2533, %v2530
      %v2702 = vpack.c.b16 %v2534, %v2531
      %v2703 = vpack.c.b16 %v2535, %v2532
      %v2704 = vpack.c.b16 %v2539, %v2536
      %v2705 = vpack.c.b16 %v2540, %v2537
      %v2706 = vpack.c.b16 %v2541, %v2538
      %v2707 = vpack.c.b16 %v2545, %v2542
      %v2708 = vpack.c.b16 %v2546, %v2543
      %v2709 = vpack.c.b16 %v2547, %v2544
      %v2710 = vpack.c.b16 %v2551, %v2548
      %v2711 = vpack.c.b16 %v2552, %v2549
      %v2712 = vpack.c.b16 %v2553, %v2550
      %v2713 = vpack.c.b16 %v2557, %v2554
      %v2714 = vpack.c.b16 %v2558, %v2555
      %v2715 = vpack.c.b16 %v2559, %v2556
      %v2716 = vpack.c.b16 %v2563, %v2560
      %v2717 = vpack.c.b16 %v2564, %v2561
      %v2718 = vpack.c.b16 %v2565, %v2562
      %v2719 = vpack.c.b16 %v2569, %v2566
      %v2720 = vpack.c.b16 %v2570, %v2567
      %v2721 = vpack.c.b16 %v2571, %v2568
      %v2722 = vpack.c.b16 %v2575, %v2572
      %v2723 = vpack.c.b16 %v2576, %v2573
      %v2724 = vpack.c.b16 %v2577, %v2574
      %v2725 = vpack.c.b16 %v2581, %v2578
      %v2726 = vpack.c.b16 %v2582, %v2579
      %v2727 = vpack.c.b16 %v2583, %v2580
      %v2728 = vpack.c.b16 %v2587, %v2584
      %v2729 = vpack.c.b16 %v2588, %v2585
      %v2730 = vpack.c.b16 %v2589, %v2586
      %v2731 = vpack.c.b16 %v2593, %v2590
      %v2732 = vpack.c.b16 %v2594, %v2591
      %v2733 = vpack.c.b16 %v2595, %v2592
      %v2734 = vpack.c.b16 %v2599, %v2596
      %v2735 = vpack.c.b16 %v2600, %v2597
      %v2736 = vpack.c.b16 %v2601, %v2598
      %v2737 = vpack.c.b16 %v2605, %v2602
      %v2738 = vpack.c.b16 %v2606, %v2603
      %v2739 = vpack.c.b16 %v2607, %v2604
      %v2740 = vpack.c.b16 %v2611, %v2608
      %v2741 = vpack.c.b16 %v2612, %v2609
      %v2742 = vpack.c.b16 %v2613, %v2610
      %v2743 = vpack.c.b16 %v2617, %v2614
      %v2744 = vpack.c.b16 %v2618, %v2615
      %v2745 = vpack.c.b16 %v2619, %v2616
      %v2746 = vpack.c.b16 %v2623, %v2620
      %v2747 = vpack.c.b16 %v2624, %v2621
      %v2748 = vpack.c.b16 %v2625, %v2622
      %v2749 = vpack.c.b16 %v2629, %v2626
      %v2750 = vpack.c.b16 %v2630, %v2627
      %v2751 = vpack.c.b16 %v2631, %v2628
      %v2752 = vpack.c.b16 %v2635, %v2632
      %v2753 = vpack.c.b16 %v2636, %v2633
      %v2754 = vpack.c.b16 %v2637, %v2634
      %v2755 = vpack.c.b16 %v2641, %v2638
      %v2756 = vpack.c.b16 %v2642, %v2639
      %v2757 = vpack.c.b16 %v2643, %v2640
      %v2758 = vpack.c.b16 %v2647, %v2644
      %v2759 = vpack.c.b16 %v2648, %v2645
      %v2760 = vpack.c.b16 %v2649, %v2646
      %v2761 = vpack.c.b16 %v2653, %v2650
      %v2762 = vpack.c.b16 %v2654, %v2651
      %v2763 = vpack.c.b16 %v2655, %v2652
      %v2764 = vpack.c.b16 %v2659, %v2656
      %v2765 = vpack.c.b16 %v2660, %v2657
      %v2766 = vpack.c.b16 %v2661, %v2658
      %v2767 = vpack.c.b16 %v2665, %v2662
      %v2768 = vpack.c.b16 %v2666, %v2663
      %v2769 = vpack.c.b16 %v2667, %v2664
      %v2770 = vpack.c.b16 %v2671, %v2668
      %v2771 = vpack.c.b16 %v2672, %v2669
      %v2772 = vpack.c.b16 %v2673, %v2670
      %v2773 = vpack.c.b16 %v2677, %v2674
      %v2774 = vpack.c.b16 %v2678, %v2675
      %v2775 = vpack.c.b16 %v2679, %v2676
      %v2841 = vsel %vm1685, %v2682, 0
      %v2844 = vsel %vm1685, %v2685, 0
      %v2847 = vsel %vm1685, %v2688, 0
      %v2850 = vsel %vm1685, %v2691, 0
      %v2853 = vsel %vm1685, %v2694, 0
      %v2856 = vsel %vm1685, %v2697, 0
      %v2859 = vsel %vm1685, %v2700, 0
      %v2862 = vsel %vm1685, %v2703, 0
      %v2865 = vsel %vm1685, %v2706, 0
      %v2868 = vsel %vm1685, %v2709, 0
      %v2871 = vsel %vm1685, %v2712, 0
      %v2874 = vsel %vm1685, %v2715, 0
      %v2877 = vsel %vm1685, %v2718, 0
      %v2880 = vsel %vm1685, %v2721, 0
      %v2883 = vsel %vm1685, %v2724, 0
      %v2886 = vsel %vm1685, %v2727, 0
      %v2889 = vsel %vm1685, %v2730, 0
      %v2892 = vsel %vm1685, %v2733, 0
      %v2895 = vsel %vm1685, %v2736, 0
      %v2898 = vsel %vm1685, %v2739, 0
      %v2901 = vsel %vm1685, %v2742, 0
      %v2904 = vsel %vm1685, %v2745, 0
      %v2907 = vsel %vm1685, %v2748, 0
      %v2910 = vsel %vm1685, %v2751, 0
      %v2913 = vsel %vm1685, %v2754, 0
      %v2916 = vsel %vm1685, %v2757, 0
      %v2919 = vsel %vm1685, %v2760, 0
      %v2922 = vsel %vm1685, %v2763, 0
      %v2925 = vsel %vm1685, %v2766, 0
      %v2928 = vsel %vm1685, %v2769, 0
      %v2931 = vsel %vm1685, %v2772, 0
      %v2934 = vsel %vm1685, %v2775, 0
      %2936 = vmatprep.subr.bf16.mxu0 0
      %2937 = vmatpush1.bf16.msra.mxu0 %v654
      %2938 = vmatprep.subr.bf16.mxu0 0
      %2939 = vmatpush1.bf16.msra.mxu0 %v650
      %2940 = vmatprep.subr.bf16.mxu0 0
      %2941 = vmatpush1.bf16.msra.mxu0 %v646
      %2942 = vmatprep.subr.bf16.mxu0 0
      %2943 = vmatpush1.bf16.msra.mxu0 %v642
      %2944 = vmatprep.subr.bf16.mxu0 0
      %2945 = vmatpush1.bf16.msra.mxu0 %v638
      %2946 = vmatprep.subr.bf16.mxu0 0
      %2947 = vmatpush1.bf16.msra.mxu0 %v634
      %2948 = vmatprep.subr.bf16.mxu0 0
      %2949 = vmatpush1.bf16.msra.mxu0 %v630
      %2950 = vmatprep.subr.bf16.mxu0 0
      %2951 = vmatpush1.bf16.msra.mxu0 %v626
      %2952 = vmatprep.subr.bf16.mxu0 0
      %2953 = vmatpush2.bf16.msra.mxu0 %v686
      %2954 = vmatprep.subr.bf16.mxu0 0
      %2955 = vmatpush2.bf16.msra.mxu0 %v682
      %2956 = vmatprep.subr.bf16.mxu0 0
      %2957 = vmatpush2.bf16.msra.mxu0 %v678
      %2958 = vmatprep.subr.bf16.mxu0 0
      %2959 = vmatpush2.bf16.msra.mxu0 %v674
      %2960 = vmatprep.subr.bf16.mxu0 0
      %2961 = vmatpush2.bf16.msra.mxu0 %v670
      %2962 = vmatprep.subr.bf16.mxu0 0
      %2963 = vmatpush2.bf16.msra.mxu0 %v666
      %2964 = vmatprep.subr.bf16.mxu0 0
      %2965 = vmatpush2.bf16.msra.mxu0 %v662
      %2966 = vmatprep.subr.bf16.mxu0 0
      %2967 = vmatpush2.bf16.msra.mxu0 %v658
      %2968 = vmatprep.mubr.bf16.mxu0 %v2681
      %2969 = vmatmul.mubr.bf16.gmra.mxu0 %v2680
      %v2970 = vpop.f32.mrf.mxu0
      %v2971 = vadd.f32 %v2106, %v2970
      %v2972 = vpop.f32.mrf.mxu0
      %v2973 = vpop.f32.mrf.mxu0
      %v2974 = vadd.f32 %v2109, %v2973
      %v2975 = vpop.f32.mrf.mxu0
      %2976 = vmatprep.mubr.bf16.mxu0 %v2684
      %2977 = vmatmul.mubr.bf16.gmra.mxu0 %v2683
      %v2978 = vpop.f32.mrf.mxu0
      %v2979 = vadd.f32 %v2114, %v2978
      %v2980 = vpop.f32.mrf.mxu0
      %v2981 = vpop.f32.mrf.mxu0
      %v2982 = vadd.f32 %v2117, %v2981
      %v2983 = vpop.f32.mrf.mxu0
      %2984 = vmatprep.mubr.bf16.mxu0 %v2687
      %2985 = vmatmul.mubr.bf16.gmra.mxu0 %v2686
      %v2986 = vpop.f32.mrf.mxu0
      %v2987 = vadd.f32 %v2122, %v2986
      %v2988 = vpop.f32.mrf.mxu0
      %v2989 = vpop.f32.mrf.mxu0
      %v2990 = vadd.f32 %v2125, %v2989
      %v2991 = vpop.f32.mrf.mxu0
      %2992 = vmatprep.mubr.bf16.mxu0 %v2690
      %2993 = vmatmul.mubr.bf16.gmra.mxu0 %v2689
      %v2994 = vpop.f32.mrf.mxu0
      %v2995 = vadd.f32 %v2130, %v2994
      %v2996 = vpop.f32.mrf.mxu0
      %v2997 = vpop.f32.mrf.mxu0
      %v2998 = vadd.f32 %v2133, %v2997
      %v2999 = vpop.f32.mrf.mxu0
      %3000 = vmatprep.mubr.bf16.mxu0 %v2693
      %3001 = vmatmul.mubr.bf16.gmra.mxu0 %v2692
      %v3002 = vpop.f32.mrf.mxu0
      %v3003 = vadd.f32 %v2138, %v3002
      %v3004 = vpop.f32.mrf.mxu0
      %v3005 = vpop.f32.mrf.mxu0
      %v3006 = vadd.f32 %v2141, %v3005
      %v3007 = vpop.f32.mrf.mxu0
      %3008 = vmatprep.mubr.bf16.mxu0 %v2696
      %3009 = vmatmul.mubr.bf16.gmra.mxu0 %v2695
      %v3010 = vpop.f32.mrf.mxu0
      %v3011 = vadd.f32 %v2146, %v3010
      %v3012 = vpop.f32.mrf.mxu0
      %v3013 = vpop.f32.mrf.mxu0
      %v3014 = vadd.f32 %v2149, %v3013
      %v3015 = vpop.f32.mrf.mxu0
      %3016 = vmatprep.mubr.bf16.mxu0 %v2699
      %3017 = vmatmul.mubr.bf16.gmra.mxu0 %v2698
      %v3018 = vpop.f32.mrf.mxu0
      %v3019 = vadd.f32 %v2154, %v3018
      %v3020 = vpop.f32.mrf.mxu0
      %v3021 = vpop.f32.mrf.mxu0
      %v3022 = vadd.f32 %v2157, %v3021
      %v3023 = vpop.f32.mrf.mxu0
      %3024 = vmatprep.mubr.bf16.mxu0 %v2702
      %3025 = vmatmul.mubr.bf16.gmra.mxu0 %v2701
      %v3026 = vpop.f32.mrf.mxu0
      %v3027 = vadd.f32 %v2162, %v3026
      %v3028 = vpop.f32.mrf.mxu0
      %v3029 = vpop.f32.mrf.mxu0
      %v3030 = vadd.f32 %v2165, %v3029
      %v3031 = vpop.f32.mrf.mxu0
      %3032 = vmatprep.mubr.bf16.mxu0 %v2705
      %3033 = vmatmul.mubr.bf16.gmra.mxu0 %v2704
      %v3034 = vpop.f32.mrf.mxu0
      %v3035 = vadd.f32 %v2170, %v3034
      %v3036 = vpop.f32.mrf.mxu0
      %v3037 = vpop.f32.mrf.mxu0
      %v3038 = vadd.f32 %v2173, %v3037
      %v3039 = vpop.f32.mrf.mxu0
      %3040 = vmatprep.mubr.bf16.mxu0 %v2708
      %3041 = vmatmul.mubr.bf16.gmra.mxu0 %v2707
      %v3042 = vpop.f32.mrf.mxu0
      %v3043 = vadd.f32 %v2178, %v3042
      %v3044 = vpop.f32.mrf.mxu0
      %v3045 = vpop.f32.mrf.mxu0
      %v3046 = vadd.f32 %v2181, %v3045
      %v3047 = vpop.f32.mrf.mxu0
      %3048 = vmatprep.mubr.bf16.mxu0 %v2711
      %3049 = vmatmul.mubr.bf16.gmra.mxu0 %v2710
      %v3050 = vpop.f32.mrf.mxu0
      %v3051 = vadd.f32 %v2186, %v3050
      %v3052 = vpop.f32.mrf.mxu0
      %v3053 = vpop.f32.mrf.mxu0
      %v3054 = vadd.f32 %v2189, %v3053
      %v3055 = vpop.f32.mrf.mxu0
      %3056 = vmatprep.mubr.bf16.mxu0 %v2714
      %3057 = vmatmul.mubr.bf16.gmra.mxu0 %v2713
      %v3058 = vpop.f32.mrf.mxu0
      %v3059 = vadd.f32 %v2194, %v3058
      %v3060 = vpop.f32.mrf.mxu0
      %v3061 = vpop.f32.mrf.mxu0
      %v3062 = vadd.f32 %v2197, %v3061
      %v3063 = vpop.f32.mrf.mxu0
      %3064 = vmatprep.mubr.bf16.mxu0 %v2717
      %3065 = vmatmul.mubr.bf16.gmra.mxu0 %v2716
      %v3066 = vpop.f32.mrf.mxu0
      %v3067 = vadd.f32 %v2202, %v3066
      %v3068 = vpop.f32.mrf.mxu0
      %v3069 = vpop.f32.mrf.mxu0
      %v3070 = vadd.f32 %v2205, %v3069
      %v3071 = vpop.f32.mrf.mxu0
      %3072 = vmatprep.mubr.bf16.mxu0 %v2720
      %3073 = vmatmul.mubr.bf16.gmra.mxu0 %v2719
      %v3074 = vpop.f32.mrf.mxu0
      %v3075 = vadd.f32 %v2210, %v3074
      %v3076 = vpop.f32.mrf.mxu0
      %v3077 = vpop.f32.mrf.mxu0
      %v3078 = vadd.f32 %v2213, %v3077
      %v3079 = vpop.f32.mrf.mxu0
      %3080 = vmatprep.mubr.bf16.mxu0 %v2723
      %3081 = vmatmul.mubr.bf16.gmra.mxu0 %v2722
      %v3082 = vpop.f32.mrf.mxu0
      %v3083 = vadd.f32 %v2218, %v3082
      %v3084 = vpop.f32.mrf.mxu0
      %v3085 = vpop.f32.mrf.mxu0
      %v3086 = vadd.f32 %v2221, %v3085
      %v3087 = vpop.f32.mrf.mxu0
      %3088 = vmatprep.mubr.bf16.mxu0 %v2726
      %3089 = vmatmul.mubr.bf16.gmra.mxu0 %v2725
      %v3090 = vpop.f32.mrf.mxu0
      %v3091 = vadd.f32 %v2226, %v3090
      %v3092 = vpop.f32.mrf.mxu0
      %v3093 = vpop.f32.mrf.mxu0
      %v3094 = vadd.f32 %v2229, %v3093
      %v3095 = vpop.f32.mrf.mxu0
      %3096 = vmatprep.mubr.bf16.mxu0 %v2729
      %3097 = vmatmul.mubr.bf16.gmra.mxu0 %v2728
      %v3098 = vpop.f32.mrf.mxu0
      %v3099 = vadd.f32 %v2234, %v3098
      %v3100 = vpop.f32.mrf.mxu0
      %v3101 = vpop.f32.mrf.mxu0
      %v3102 = vadd.f32 %v2237, %v3101
      %v3103 = vpop.f32.mrf.mxu0
      %3104 = vmatprep.mubr.bf16.mxu0 %v2732
      %3105 = vmatmul.mubr.bf16.gmra.mxu0 %v2731
      %v3106 = vpop.f32.mrf.mxu0
      %v3107 = vadd.f32 %v2242, %v3106
      %v3108 = vpop.f32.mrf.mxu0
      %v3109 = vpop.f32.mrf.mxu0
      %v3110 = vadd.f32 %v2245, %v3109
      %v3111 = vpop.f32.mrf.mxu0
      %3112 = vmatprep.mubr.bf16.mxu0 %v2735
      %3113 = vmatmul.mubr.bf16.gmra.mxu0 %v2734
      %v3114 = vpop.f32.mrf.mxu0
      %v3115 = vadd.f32 %v2250, %v3114
      %v3116 = vpop.f32.mrf.mxu0
      %v3117 = vpop.f32.mrf.mxu0
      %v3118 = vadd.f32 %v2253, %v3117
      %v3119 = vpop.f32.mrf.mxu0
      %3120 = vmatprep.mubr.bf16.mxu0 %v2738
      %3121 = vmatmul.mubr.bf16.gmra.mxu0 %v2737
      %v3122 = vpop.f32.mrf.mxu0
      %v3123 = vadd.f32 %v2258, %v3122
      %v3124 = vpop.f32.mrf.mxu0
      %v3125 = vpop.f32.mrf.mxu0
      %v3126 = vadd.f32 %v2261, %v3125
      %v3127 = vpop.f32.mrf.mxu0
      %3128 = vmatprep.mubr.bf16.mxu0 %v2741
      %3129 = vmatmul.mubr.bf16.gmra.mxu0 %v2740
      %v3130 = vpop.f32.mrf.mxu0
      %v3131 = vadd.f32 %v2266, %v3130
      %v3132 = vpop.f32.mrf.mxu0
      %v3133 = vpop.f32.mrf.mxu0
      %v3134 = vadd.f32 %v2269, %v3133
      %v3135 = vpop.f32.mrf.mxu0
      %3136 = vmatprep.mubr.bf16.mxu0 %v2744
      %3137 = vmatmul.mubr.bf16.gmra.mxu0 %v2743
      %v3138 = vpop.f32.mrf.mxu0
      %v3139 = vadd.f32 %v2274, %v3138
      %v3140 = vpop.f32.mrf.mxu0
      %v3141 = vpop.f32.mrf.mxu0
      %v3142 = vadd.f32 %v2277, %v3141
      %v3143 = vpop.f32.mrf.mxu0
      %3144 = vmatprep.mubr.bf16.mxu0 %v2747
      %3145 = vmatmul.mubr.bf16.gmra.mxu0 %v2746
      %v3146 = vpop.f32.mrf.mxu0
      %v3147 = vadd.f32 %v2282, %v3146
      %v3148 = vpop.f32.mrf.mxu0
      %v3149 = vpop.f32.mrf.mxu0
      %v3150 = vadd.f32 %v2285, %v3149
      %v3151 = vpop.f32.mrf.mxu0
      %3152 = vmatprep.mubr.bf16.mxu0 %v2750
      %3153 = vmatmul.mubr.bf16.gmra.mxu0 %v2749
      %v3154 = vpop.f32.mrf.mxu0
      %v3155 = vadd.f32 %v2290, %v3154
      %v3156 = vpop.f32.mrf.mxu0
      %v3157 = vpop.f32.mrf.mxu0
      %v3158 = vadd.f32 %v2293, %v3157
      %v3159 = vpop.f32.mrf.mxu0
      %3160 = vmatprep.mubr.bf16.mxu0 %v2753
      %3161 = vmatmul.mubr.bf16.gmra.mxu0 %v2752
      %v3162 = vpop.f32.mrf.mxu0
      %v3163 = vadd.f32 %v2298, %v3162
      %v3164 = vpop.f32.mrf.mxu0
      %v3165 = vpop.f32.mrf.mxu0
      %v3166 = vadd.f32 %v2301, %v3165
      %v3167 = vpop.f32.mrf.mxu0
      %3168 = vmatprep.mubr.bf16.mxu0 %v2756
      %3169 = vmatmul.mubr.bf16.gmra.mxu0 %v2755
      %v3170 = vpop.f32.mrf.mxu0
      %v3171 = vadd.f32 %v2306, %v3170
      %v3172 = vpop.f32.mrf.mxu0
      %v3173 = vpop.f32.mrf.mxu0
      %v3174 = vadd.f32 %v2309, %v3173
      %v3175 = vpop.f32.mrf.mxu0
      %3176 = vmatprep.mubr.bf16.mxu0 %v2759
      %3177 = vmatmul.mubr.bf16.gmra.mxu0 %v2758
      %v3178 = vpop.f32.mrf.mxu0
      %v3179 = vadd.f32 %v2314, %v3178
      %v3180 = vpop.f32.mrf.mxu0
      %v3181 = vpop.f32.mrf.mxu0
      %v3182 = vadd.f32 %v2317, %v3181
      %v3183 = vpop.f32.mrf.mxu0
      %3184 = vmatprep.mubr.bf16.mxu0 %v2762
      %3185 = vmatmul.mubr.bf16.gmra.mxu0 %v2761
      %v3186 = vpop.f32.mrf.mxu0
      %v3187 = vadd.f32 %v2322, %v3186
      %v3188 = vpop.f32.mrf.mxu0
      %v3189 = vpop.f32.mrf.mxu0
      %v3190 = vadd.f32 %v2325, %v3189
      %v3191 = vpop.f32.mrf.mxu0
      %3192 = vmatprep.mubr.bf16.mxu0 %v2765
      %3193 = vmatmul.mubr.bf16.gmra.mxu0 %v2764
      %v3194 = vpop.f32.mrf.mxu0
      %v3195 = vadd.f32 %v2330, %v3194
      %v3196 = vpop.f32.mrf.mxu0
      %v3197 = vpop.f32.mrf.mxu0
      %v3198 = vadd.f32 %v2333, %v3197
      %v3199 = vpop.f32.mrf.mxu0
      %3200 = vmatprep.mubr.bf16.mxu0 %v2768
      %3201 = vmatmul.mubr.bf16.gmra.mxu0 %v2767
      %v3202 = vpop.f32.mrf.mxu0
      %v3203 = vadd.f32 %v2338, %v3202
      %v3204 = vpop.f32.mrf.mxu0
      %v3205 = vpop.f32.mrf.mxu0
      %v3206 = vadd.f32 %v2341, %v3205
      %v3207 = vpop.f32.mrf.mxu0
      %3208 = vmatprep.mubr.bf16.mxu0 %v2771
      %3209 = vmatmul.mubr.bf16.gmra.mxu0 %v2770
      %v3210 = vpop.f32.mrf.mxu0
      %v3211 = vadd.f32 %v2346, %v3210
      %v3212 = vpop.f32.mrf.mxu0
      %v3213 = vpop.f32.mrf.mxu0
      %v3214 = vadd.f32 %v2349, %v3213
      %v3215 = vpop.f32.mrf.mxu0
      %3216 = vmatprep.mubr.bf16.mxu0 %v2774
      %3217 = vmatmul.mubr.bf16.gmra.mxu0 %v2773
      %v3218 = vpop.f32.mrf.mxu0
      %v3219 = vadd.f32 %v2354, %v3218
      %v3220 = vpop.f32.mrf.mxu0
      %v3221 = vpop.f32.mrf.mxu0
      %v3222 = vadd.f32 %v2357, %v3221
      %v3223 = vpop.f32.mrf.mxu0
      %3224 = vdwg.mxu0
      %3225 = vmatprep.subr.bf16.mxu0 0
      %3226 = vmatpush1.bf16.msra.mxu0 0
      %3227 = vmatprep.subr.bf16.mxu0 0
      %3228 = vmatpush1.bf16.msra.mxu0 0
      %3229 = vmatprep.subr.bf16.mxu0 0
      %3230 = vmatpush1.bf16.msra.mxu0 0
      %3231 = vmatprep.subr.bf16.mxu0 0
      %3232 = vmatpush1.bf16.msra.mxu0 0
      %3233 = vmatprep.subr.bf16.mxu0 0
      %3234 = vmatpush1.bf16.msra.mxu0 0
      %3235 = vmatprep.subr.bf16.mxu0 0
      %3236 = vmatpush1.bf16.msra.mxu0 0
      %3237 = vmatprep.subr.bf16.mxu0 0
      %3238 = vmatpush1.bf16.msra.mxu0 %v694
      %3239 = vmatprep.subr.bf16.mxu0 0
      %3240 = vmatpush1.bf16.msra.mxu0 %v690
      %3241 = vmatprep.subr.bf16.mxu0 0
      %3242 = vmatpush2.bf16.msra.mxu0 0
      %3243 = vmatprep.subr.bf16.mxu0 0
      %3244 = vmatpush2.bf16.msra.mxu0 0
      %3245 = vmatprep.subr.bf16.mxu0 0
      %3246 = vmatpush2.bf16.msra.mxu0 0
      %3247 = vmatprep.subr.bf16.mxu0 0
      %3248 = vmatpush2.bf16.msra.mxu0 0
      %3249 = vmatprep.subr.bf16.mxu0 0
      %3250 = vmatpush2.bf16.msra.mxu0 0
      %3251 = vmatprep.subr.bf16.mxu0 0
      %3252 = vmatpush2.bf16.msra.mxu0 0
      %3253 = vmatprep.subr.bf16.mxu0 0
      %3254 = vmatpush2.bf16.msra.mxu0 0
      %3255 = vmatprep.subr.bf16.mxu0 0
      %3256 = vmatpush2.bf16.msra.mxu0 0
      %3257 = vmatprep.mubr.bf16.mxu0 0
      %3258 = vmatmul.mubr.bf16.gmra.mxu0 %v2841
      %v3259 = vpop.f32.mrf.mxu0
      %v3260 = vadd.f32 %v2971, %v3259
      %v3261 = vpop.f32.mrf.mxu0
      %v3262 = vpop.f32.mrf.mxu0
      %v3263 = vadd.f32 %v2974, %v3262
      %v3264 = vpop.f32.mrf.mxu0
      %3265 = vmatprep.mubr.bf16.mxu0 0
      %3266 = vmatmul.mubr.bf16.gmra.mxu0 %v2844
      %v3267 = vpop.f32.mrf.mxu0
      %v3268 = vadd.f32 %v2979, %v3267
      %v3269 = vpop.f32.mrf.mxu0
      %v3270 = vpop.f32.mrf.mxu0
      %v3271 = vadd.f32 %v2982, %v3270
      %v3272 = vpop.f32.mrf.mxu0
      %3273 = vmatprep.mubr.bf16.mxu0 0
      %3274 = vmatmul.mubr.bf16.gmra.mxu0 %v2847
      %v3275 = vpop.f32.mrf.mxu0
      %v3276 = vadd.f32 %v2987, %v3275
      %v3277 = vpop.f32.mrf.mxu0
      %v3278 = vpop.f32.mrf.mxu0
      %v3279 = vadd.f32 %v2990, %v3278
      %v3280 = vpop.f32.mrf.mxu0
      %3281 = vmatprep.mubr.bf16.mxu0 0
      %3282 = vmatmul.mubr.bf16.gmra.mxu0 %v2850
      %v3283 = vpop.f32.mrf.mxu0
      %v3284 = vadd.f32 %v2995, %v3283
      %v3285 = vpop.f32.mrf.mxu0
      %v3286 = vpop.f32.mrf.mxu0
      %v3287 = vadd.f32 %v2998, %v3286
      %v3288 = vpop.f32.mrf.mxu0
      %3289 = vmatprep.mubr.bf16.mxu0 0
      %3290 = vmatmul.mubr.bf16.gmra.mxu0 %v2853
      %v3291 = vpop.f32.mrf.mxu0
      %v3292 = vadd.f32 %v3003, %v3291
      %v3293 = vpop.f32.mrf.mxu0
      %v3294 = vpop.f32.mrf.mxu0
      %v3295 = vadd.f32 %v3006, %v3294
      %v3296 = vpop.f32.mrf.mxu0
      %3297 = vmatprep.mubr.bf16.mxu0 0
      %3298 = vmatmul.mubr.bf16.gmra.mxu0 %v2856
      %v3299 = vpop.f32.mrf.mxu0
      %v3300 = vadd.f32 %v3011, %v3299
      %v3301 = vpop.f32.mrf.mxu0
      %v3302 = vpop.f32.mrf.mxu0
      %v3303 = vadd.f32 %v3014, %v3302
      %v3304 = vpop.f32.mrf.mxu0
      %3305 = vmatprep.mubr.bf16.mxu0 0
      %3306 = vmatmul.mubr.bf16.gmra.mxu0 %v2859
      %v3307 = vpop.f32.mrf.mxu0
      %v3308 = vadd.f32 %v3019, %v3307
      %v3309 = vpop.f32.mrf.mxu0
      %v3310 = vpop.f32.mrf.mxu0
      %v3311 = vadd.f32 %v3022, %v3310
      %v3312 = vpop.f32.mrf.mxu0
      %3313 = vmatprep.mubr.bf16.mxu0 0
      %3314 = vmatmul.mubr.bf16.gmra.mxu0 %v2862
      %v3315 = vpop.f32.mrf.mxu0
      %v3316 = vadd.f32 %v3027, %v3315
      %v3317 = vpop.f32.mrf.mxu0
      %v3318 = vpop.f32.mrf.mxu0
      %v3319 = vadd.f32 %v3030, %v3318
      %v3320 = vpop.f32.mrf.mxu0
      %3321 = vmatprep.mubr.bf16.mxu0 0
      %3322 = vmatmul.mubr.bf16.gmra.mxu0 %v2865
      %v3323 = vpop.f32.mrf.mxu0
      %v3324 = vadd.f32 %v3035, %v3323
      %v3325 = vpop.f32.mrf.mxu0
      %v3326 = vpop.f32.mrf.mxu0
      %v3327 = vadd.f32 %v3038, %v3326
      %v3328 = vpop.f32.mrf.mxu0
      %3329 = vmatprep.mubr.bf16.mxu0 0
      %3330 = vmatmul.mubr.bf16.gmra.mxu0 %v2868
      %v3331 = vpop.f32.mrf.mxu0
      %v3332 = vadd.f32 %v3043, %v3331
      %v3333 = vpop.f32.mrf.mxu0
      %v3334 = vpop.f32.mrf.mxu0
      %v3335 = vadd.f32 %v3046, %v3334
      %v3336 = vpop.f32.mrf.mxu0
      %3337 = vmatprep.mubr.bf16.mxu0 0
      %3338 = vmatmul.mubr.bf16.gmra.mxu0 %v2871
      %v3339 = vpop.f32.mrf.mxu0
      %v3340 = vadd.f32 %v3051, %v3339
      %v3341 = vpop.f32.mrf.mxu0
      %v3342 = vpop.f32.mrf.mxu0
      %v3343 = vadd.f32 %v3054, %v3342
      %v3344 = vpop.f32.mrf.mxu0
      %3345 = vmatprep.mubr.bf16.mxu0 0
      %3346 = vmatmul.mubr.bf16.gmra.mxu0 %v2874
      %v3347 = vpop.f32.mrf.mxu0
      %v3348 = vadd.f32 %v3059, %v3347
      %v3349 = vpop.f32.mrf.mxu0
      %v3350 = vpop.f32.mrf.mxu0
      %v3351 = vadd.f32 %v3062, %v3350
      %v3352 = vpop.f32.mrf.mxu0
      %3353 = vmatprep.mubr.bf16.mxu0 0
      %3354 = vmatmul.mubr.bf16.gmra.mxu0 %v2877
      %v3355 = vpop.f32.mrf.mxu0
      %v3356 = vadd.f32 %v3067, %v3355
      %v3357 = vpop.f32.mrf.mxu0
      %v3358 = vpop.f32.mrf.mxu0
      %v3359 = vadd.f32 %v3070, %v3358
      %v3360 = vpop.f32.mrf.mxu0
      %3361 = vmatprep.mubr.bf16.mxu0 0
      %3362 = vmatmul.mubr.bf16.gmra.mxu0 %v2880
      %v3363 = vpop.f32.mrf.mxu0
      %v3364 = vadd.f32 %v3075, %v3363
      %v3365 = vpop.f32.mrf.mxu0
      %v3366 = vpop.f32.mrf.mxu0
      %v3367 = vadd.f32 %v3078, %v3366
      %v3368 = vpop.f32.mrf.mxu0
      %3369 = vmatprep.mubr.bf16.mxu0 0
      %3370 = vmatmul.mubr.bf16.gmra.mxu0 %v2883
      %v3371 = vpop.f32.mrf.mxu0
      %v3372 = vadd.f32 %v3083, %v3371
      %v3373 = vpop.f32.mrf.mxu0
      %v3374 = vpop.f32.mrf.mxu0
      %v3375 = vadd.f32 %v3086, %v3374
      %v3376 = vpop.f32.mrf.mxu0
      %3377 = vmatprep.mubr.bf16.mxu0 0
      %3378 = vmatmul.mubr.bf16.gmra.mxu0 %v2886
      %v3379 = vpop.f32.mrf.mxu0
      %v3380 = vadd.f32 %v3091, %v3379
      %v3381 = vpop.f32.mrf.mxu0
      %v3382 = vpop.f32.mrf.mxu0
      %v3383 = vadd.f32 %v3094, %v3382
      %v3384 = vpop.f32.mrf.mxu0
      %3385 = vmatprep.mubr.bf16.mxu0 0
      %3386 = vmatmul.mubr.bf16.gmra.mxu0 %v2889
      %v3387 = vpop.f32.mrf.mxu0
      %v3388 = vadd.f32 %v3099, %v3387
      %v3389 = vpop.f32.mrf.mxu0
      %v3390 = vpop.f32.mrf.mxu0
      %v3391 = vadd.f32 %v3102, %v3390
      %v3392 = vpop.f32.mrf.mxu0
      %3393 = vmatprep.mubr.bf16.mxu0 0
      %3394 = vmatmul.mubr.bf16.gmra.mxu0 %v2892
      %v3395 = vpop.f32.mrf.mxu0
      %v3396 = vadd.f32 %v3107, %v3395
      %v3397 = vpop.f32.mrf.mxu0
      %v3398 = vpop.f32.mrf.mxu0
      %v3399 = vadd.f32 %v3110, %v3398
      %v3400 = vpop.f32.mrf.mxu0
      %3401 = vmatprep.mubr.bf16.mxu0 0
      %3402 = vmatmul.mubr.bf16.gmra.mxu0 %v2895
      %v3403 = vpop.f32.mrf.mxu0
      %v3404 = vadd.f32 %v3115, %v3403
      %v3405 = vpop.f32.mrf.mxu0
      %v3406 = vpop.f32.mrf.mxu0
      %v3407 = vadd.f32 %v3118, %v3406
      %v3408 = vpop.f32.mrf.mxu0
      %3409 = vmatprep.mubr.bf16.mxu0 0
      %3410 = vmatmul.mubr.bf16.gmra.mxu0 %v2898
      %v3411 = vpop.f32.mrf.mxu0
      %v3412 = vadd.f32 %v3123, %v3411
      %v3413 = vpop.f32.mrf.mxu0
      %v3414 = vpop.f32.mrf.mxu0
      %v3415 = vadd.f32 %v3126, %v3414
      %v3416 = vpop.f32.mrf.mxu0
      %3417 = vmatprep.mubr.bf16.mxu0 0
      %3418 = vmatmul.mubr.bf16.gmra.mxu0 %v2901
      %v3419 = vpop.f32.mrf.mxu0
      %v3420 = vadd.f32 %v3131, %v3419
      %v3421 = vpop.f32.mrf.mxu0
      %v3422 = vpop.f32.mrf.mxu0
      %v3423 = vadd.f32 %v3134, %v3422
      %v3424 = vpop.f32.mrf.mxu0
      %3425 = vmatprep.mubr.bf16.mxu0 0
      %3426 = vmatmul.mubr.bf16.gmra.mxu0 %v2904
      %v3427 = vpop.f32.mrf.mxu0
      %v3428 = vadd.f32 %v3139, %v3427
      %v3429 = vpop.f32.mrf.mxu0
      %v3430 = vpop.f32.mrf.mxu0
      %v3431 = vadd.f32 %v3142, %v3430
      %v3432 = vpop.f32.mrf.mxu0
      %3433 = vmatprep.mubr.bf16.mxu0 0
      %3434 = vmatmul.mubr.bf16.gmra.mxu0 %v2907
      %v3435 = vpop.f32.mrf.mxu0
      %v3436 = vadd.f32 %v3147, %v3435
      %v3437 = vpop.f32.mrf.mxu0
      %v3438 = vpop.f32.mrf.mxu0
      %v3439 = vadd.f32 %v3150, %v3438
      %v3440 = vpop.f32.mrf.mxu0
      %3441 = vmatprep.mubr.bf16.mxu0 0
      %3442 = vmatmul.mubr.bf16.gmra.mxu0 %v2910
      %v3443 = vpop.f32.mrf.mxu0
      %v3444 = vadd.f32 %v3155, %v3443
      %v3445 = vpop.f32.mrf.mxu0
      %v3446 = vpop.f32.mrf.mxu0
      %v3447 = vadd.f32 %v3158, %v3446
      %v3448 = vpop.f32.mrf.mxu0
      %3449 = vmatprep.mubr.bf16.mxu0 0
      %3450 = vmatmul.mubr.bf16.gmra.mxu0 %v2913
      %v3451 = vpop.f32.mrf.mxu0
      %v3452 = vadd.f32 %v3163, %v3451
      %v3453 = vpop.f32.mrf.mxu0
      %v3454 = vpop.f32.mrf.mxu0
      %v3455 = vadd.f32 %v3166, %v3454
      %v3456 = vpop.f32.mrf.mxu0
      %3457 = vmatprep.mubr.bf16.mxu0 0
      %3458 = vmatmul.mubr.bf16.gmra.mxu0 %v2916
      %v3459 = vpop.f32.mrf.mxu0
      %v3460 = vadd.f32 %v3171, %v3459
      %v3461 = vpop.f32.mrf.mxu0
      %v3462 = vpop.f32.mrf.mxu0
      %v3463 = vadd.f32 %v3174, %v3462
      %v3464 = vpop.f32.mrf.mxu0
      %3465 = vmatprep.mubr.bf16.mxu0 0
      %3466 = vmatmul.mubr.bf16.gmra.mxu0 %v2919
      %v3467 = vpop.f32.mrf.mxu0
      %v3468 = vadd.f32 %v3179, %v3467
      %v3469 = vpop.f32.mrf.mxu0
      %v3470 = vpop.f32.mrf.mxu0
      %v3471 = vadd.f32 %v3182, %v3470
      %v3472 = vpop.f32.mrf.mxu0
      %3473 = vmatprep.mubr.bf16.mxu0 0
      %3474 = vmatmul.mubr.bf16.gmra.mxu0 %v2922
      %v3475 = vpop.f32.mrf.mxu0
      %v3476 = vadd.f32 %v3187, %v3475
      %v3477 = vpop.f32.mrf.mxu0
      %v3478 = vpop.f32.mrf.mxu0
      %v3479 = vadd.f32 %v3190, %v3478
      %v3480 = vpop.f32.mrf.mxu0
      %3481 = vmatprep.mubr.bf16.mxu0 0
      %3482 = vmatmul.mubr.bf16.gmra.mxu0 %v2925
      %v3483 = vpop.f32.mrf.mxu0
      %v3484 = vadd.f32 %v3195, %v3483
      %v3485 = vpop.f32.mrf.mxu0
      %v3486 = vpop.f32.mrf.mxu0
      %v3487 = vadd.f32 %v3198, %v3486
      %v3488 = vpop.f32.mrf.mxu0
      %3489 = vmatprep.mubr.bf16.mxu0 0
      %3490 = vmatmul.mubr.bf16.gmra.mxu0 %v2928
      %v3491 = vpop.f32.mrf.mxu0
      %v3492 = vadd.f32 %v3203, %v3491
      %v3493 = vpop.f32.mrf.mxu0
      %v3494 = vpop.f32.mrf.mxu0
      %v3495 = vadd.f32 %v3206, %v3494
      %v3496 = vpop.f32.mrf.mxu0
      %3497 = vmatprep.mubr.bf16.mxu0 0
      %3498 = vmatmul.mubr.bf16.gmra.mxu0 %v2931
      %v3499 = vpop.f32.mrf.mxu0
      %v3500 = vadd.f32 %v3211, %v3499
      %v3501 = vpop.f32.mrf.mxu0
      %v3502 = vpop.f32.mrf.mxu0
      %v3503 = vadd.f32 %v3214, %v3502
      %v3504 = vpop.f32.mrf.mxu0
      %3505 = vmatprep.mubr.bf16.mxu0 0
      %3506 = vmatmul.mubr.bf16.gmra.mxu0 %v2934
      %v3507 = vpop.f32.mrf.mxu0
      %v3508 = vadd.f32 %v3219, %v3507
      %v3509 = vpop.f32.mrf.mxu0
      %v3510 = vpop.f32.mrf.mxu0
      %v3511 = vadd.f32 %v3222, %v3510
      %v3512 = vpop.f32.mrf.mxu0
      %3513 = vdwg.mxu0
      %s3514 = scalar_lea.vmem %s1, 1536
      %v3515 = vld [vmem:[%s3514] sm:$0xff]
      %v3516 = vld [vmem:[%s3514 + $0x8] sm:$0xf]
      %v3517 = vld [vmem:[%s3514 + $0xc] sm:$0xff]
      %v3518 = vld [vmem:[%s3514 + $0x14] sm:$0xf]
      %v3519 = vld [vmem:[%s3514 + $0x18] sm:$0xff]
      %v3520 = vld [vmem:[%s3514 + $0x20] sm:$0xf]
      %v3521 = vld [vmem:[%s3514 + $0x24] sm:$0xff]
      %v3522 = vld [vmem:[%s3514 + $0x2c] sm:$0xf]
      %v3523 = vld [vmem:[%s3514 + $0x30] sm:$0xff]
      %v3524 = vld [vmem:[%s3514 + $0x38] sm:$0xf]
      %v3525 = vld [vmem:[%s3514 + $0x3c] sm:$0xff]
      %v3526 = vld [vmem:[%s3514 + $0x44] sm:$0xf]
      %v3527 = vld [vmem:[%s3514 + $0x48] sm:$0xff]
      %v3528 = vld [vmem:[%s3514 + $0x50] sm:$0xf]
      %v3529 = vld [vmem:[%s3514 + $0x54] sm:$0xff]
      %v3530 = vld [vmem:[%s3514 + $0x5c] sm:$0xf]
      %v3531 = vld [vmem:[%s3514 + $0x60] sm:$0xff]
      %v3532 = vld [vmem:[%s3514 + $0x68] sm:$0xf]
      %v3533 = vld [vmem:[%s3514 + $0x6c] sm:$0xff]
      %v3534 = vld [vmem:[%s3514 + $0x74] sm:$0xf]
      %v3535 = vld [vmem:[%s3514 + $0x78] sm:$0xff]
      %v3536 = vld [vmem:[%s3514 + $0x80] sm:$0xf]
      %v3537 = vld [vmem:[%s3514 + $0x84] sm:$0xff]
      %v3538 = vld [vmem:[%s3514 + $0x8c] sm:$0xf]
      %v3539 = vld [vmem:[%s3514 + $0x90] sm:$0xff]
      %v3540 = vld [vmem:[%s3514 + $0x98] sm:$0xf]
      %v3541 = vld [vmem:[%s3514 + $0x9c] sm:$0xff]
      %v3542 = vld [vmem:[%s3514 + $0xa4] sm:$0xf]
      %v3543 = vld [vmem:[%s3514 + $0xa8] sm:$0xff]
      %v3544 = vld [vmem:[%s3514 + $0xb0] sm:$0xf]
      %v3545 = vld [vmem:[%s3514 + $0xb4] sm:$0xff]
      %v3546 = vld [vmem:[%s3514 + $0xbc] sm:$0xf]
      %v3547 = vld [vmem:[%s3514 + $0xc0] sm:$0xff]
      %v3548 = vld [vmem:[%s3514 + $0xc8] sm:$0xf]
      %v3549 = vld [vmem:[%s3514 + $0xcc] sm:$0xff]
      %v3550 = vld [vmem:[%s3514 + $0xd4] sm:$0xf]
      %v3551 = vld [vmem:[%s3514 + $0xd8] sm:$0xff]
      %v3552 = vld [vmem:[%s3514 + $0xe0] sm:$0xf]
      %v3553 = vld [vmem:[%s3514 + $0xe4] sm:$0xff]
      %v3554 = vld [vmem:[%s3514 + $0xec] sm:$0xf]
      %v3555 = vld [vmem:[%s3514 + $0xf0] sm:$0xff]
      %v3556 = vld [vmem:[%s3514 + $0xf8] sm:$0xf]
      %v3557 = vld [vmem:[%s3514 + $0xfc] sm:$0xff]
      %v3558 = vld [vmem:[%s3514 + $0x104] sm:$0xf]
      %v3559 = vld [vmem:[%s3514 + $0x108] sm:$0xff]
      %v3560 = vld [vmem:[%s3514 + $0x110] sm:$0xf]
      %v3561 = vld [vmem:[%s3514 + $0x114] sm:$0xff]
      %v3562 = vld [vmem:[%s3514 + $0x11c] sm:$0xf]
      %v3563 = vld [vmem:[%s3514 + $0x120] sm:$0xff]
      %v3564 = vld [vmem:[%s3514 + $0x128] sm:$0xf]
      %v3565 = vld [vmem:[%s3514 + $0x12c] sm:$0xff]
      %v3566 = vld [vmem:[%s3514 + $0x134] sm:$0xf]
      %v3567 = vld [vmem:[%s3514 + $0x138] sm:$0xff]
      %v3568 = vld [vmem:[%s3514 + $0x140] sm:$0xf]
      %v3569 = vld [vmem:[%s3514 + $0x144] sm:$0xff]
      %v3570 = vld [vmem:[%s3514 + $0x14c] sm:$0xf]
      %v3571 = vld [vmem:[%s3514 + $0x150] sm:$0xff]
      %v3572 = vld [vmem:[%s3514 + $0x158] sm:$0xf]
      %v3573 = vld [vmem:[%s3514 + $0x15c] sm:$0xff]
      %v3574 = vld [vmem:[%s3514 + $0x164] sm:$0xf]
      %v3575 = vld [vmem:[%s3514 + $0x168] sm:$0xff]
      %v3576 = vld [vmem:[%s3514 + $0x170] sm:$0xf]
      %v3577 = vld [vmem:[%s3514 + $0x174] sm:$0xff]
      %v3578 = vld [vmem:[%s3514 + $0x17c] sm:$0xf]
      %v3579 = vld [vmem:[%s3514 + $0x180] sm:$0xff]
      %v3580 = vld [vmem:[%s3514 + $0x188] sm:$0xf]
      %v3581 = vld [vmem:[%s3514 + $0x18c] sm:$0xff]
      %v3582 = vld [vmem:[%s3514 + $0x194] sm:$0xf]
      %v3583 = vld [vmem:[%s3514 + $0x198] sm:$0xff]
      %v3584 = vld [vmem:[%s3514 + $0x1a0] sm:$0xf]
      %v3585 = vld [vmem:[%s3514 + $0x1a4] sm:$0xff]
      %v3586 = vld [vmem:[%s3514 + $0x1ac] sm:$0xf]
      %v3587 = vld [vmem:[%s3514 + $0x1b0] sm:$0xff]
      %v3588 = vld [vmem:[%s3514 + $0x1b8] sm:$0xf]
      %v3589 = vld [vmem:[%s3514 + $0x1bc] sm:$0xff]
      %v3590 = vld [vmem:[%s3514 + $0x1c4] sm:$0xf]
      %v3591 = vld [vmem:[%s3514 + $0x1c8] sm:$0xff]
      %v3592 = vld [vmem:[%s3514 + $0x1d0] sm:$0xf]
      %v3593 = vld [vmem:[%s3514 + $0x1d4] sm:$0xff]
      %v3594 = vld [vmem:[%s3514 + $0x1dc] sm:$0xf]
      %v3595 = vld [vmem:[%s3514 + $0x1e0] sm:$0xff]
      %v3596 = vld [vmem:[%s3514 + $0x1e8] sm:$0xf]
      %v3597 = vld [vmem:[%s3514 + $0x1ec] sm:$0xff]
      %v3598 = vld [vmem:[%s3514 + $0x1f4] sm:$0xf]
      %v3599 = vld [vmem:[%s3514 + $0x1f8] sm:$0xff]
      %v3600 = vld [vmem:[%s3514 + $0x200] sm:$0xf]
      %v3601 = vld [vmem:[%s3514 + $0x204] sm:$0xff]
      %v3602 = vld [vmem:[%s3514 + $0x20c] sm:$0xf]
      %v3603 = vld [vmem:[%s3514 + $0x210] sm:$0xff]
      %v3604 = vld [vmem:[%s3514 + $0x218] sm:$0xf]
      %v3605 = vld [vmem:[%s3514 + $0x21c] sm:$0xff]
      %v3606 = vld [vmem:[%s3514 + $0x224] sm:$0xf]
      %v3607 = vld [vmem:[%s3514 + $0x228] sm:$0xff]
      %v3608 = vld [vmem:[%s3514 + $0x230] sm:$0xf]
      %v3609 = vld [vmem:[%s3514 + $0x234] sm:$0xff]
      %v3610 = vld [vmem:[%s3514 + $0x23c] sm:$0xf]
      %v3611 = vld [vmem:[%s3514 + $0x240] sm:$0xff]
      %v3612 = vld [vmem:[%s3514 + $0x248] sm:$0xf]
      %v3613 = vld [vmem:[%s3514 + $0x24c] sm:$0xff]
      %v3614 = vld [vmem:[%s3514 + $0x254] sm:$0xf]
      %v3615 = vld [vmem:[%s3514 + $0x258] sm:$0xff]
      %v3616 = vld [vmem:[%s3514 + $0x260] sm:$0xf]
      %v3617 = vld [vmem:[%s3514 + $0x264] sm:$0xff]
      %v3618 = vld [vmem:[%s3514 + $0x26c] sm:$0xf]
      %v3619 = vld [vmem:[%s3514 + $0x270] sm:$0xff]
      %v3620 = vld [vmem:[%s3514 + $0x278] sm:$0xf]
      %v3621 = vld [vmem:[%s3514 + $0x27c] sm:$0xff]
      %v3622 = vld [vmem:[%s3514 + $0x284] sm:$0xf]
      %v3623 = vld [vmem:[%s3514 + $0x288] sm:$0xff]
      %v3624 = vld [vmem:[%s3514 + $0x290] sm:$0xf]
      %v3625 = vld [vmem:[%s3514 + $0x294] sm:$0xff]
      %v3626 = vld [vmem:[%s3514 + $0x29c] sm:$0xf]
      %v3627 = vld [vmem:[%s3514 + $0x2a0] sm:$0xff]
      %v3628 = vld [vmem:[%s3514 + $0x2a8] sm:$0xf]
      %v3629 = vld [vmem:[%s3514 + $0x2ac] sm:$0xff]
      %v3630 = vld [vmem:[%s3514 + $0x2b4] sm:$0xf]
      %v3631 = vld [vmem:[%s3514 + $0x2b8] sm:$0xff]
      %v3632 = vld [vmem:[%s3514 + $0x2c0] sm:$0xf]
      %v3633 = vld [vmem:[%s3514 + $0x2c4] sm:$0xff]
      %v3634 = vld [vmem:[%s3514 + $0x2cc] sm:$0xf]
      %v3635 = vld [vmem:[%s3514 + $0x2d0] sm:$0xff]
      %v3636 = vld [vmem:[%s3514 + $0x2d8] sm:$0xf]
      %v3637 = vld [vmem:[%s3514 + $0x2dc] sm:$0xff]
      %v3638 = vld [vmem:[%s3514 + $0x2e4] sm:$0xf]
      %v3639 = vld [vmem:[%s3514 + $0x2e8] sm:$0xff]
      %v3640 = vld [vmem:[%s3514 + $0x2f0] sm:$0xf]
      %v3641 = vld [vmem:[%s3514 + $0x2f4] sm:$0xff]
      %v3642 = vld [vmem:[%s3514 + $0x2fc] sm:$0xf]
      %v3771 = vunpack.c.l.b16 %v3515
      %v3772 = vunpack.c.h.b16 %v3515
      %v3773 = vunpack.c.l.b16 %v3516
      %v3774 = vunpack.c.l.b16 %v3517
      %v3775 = vunpack.c.h.b16 %v3517
      %v3776 = vunpack.c.l.b16 %v3518
      %v3777 = vunpack.c.l.b16 %v3519
      %v3778 = vunpack.c.h.b16 %v3519
      %v3779 = vunpack.c.l.b16 %v3520
      %v3780 = vunpack.c.l.b16 %v3521
      %v3781 = vunpack.c.h.b16 %v3521
      %v3782 = vunpack.c.l.b16 %v3522
      %v3783 = vunpack.c.l.b16 %v3523
      %v3784 = vunpack.c.h.b16 %v3523
      %v3785 = vunpack.c.l.b16 %v3524
      %v3786 = vunpack.c.l.b16 %v3525
      %v3787 = vunpack.c.h.b16 %v3525
      %v3788 = vunpack.c.l.b16 %v3526
      %v3789 = vunpack.c.l.b16 %v3527
      %v3790 = vunpack.c.h.b16 %v3527
      %v3791 = vunpack.c.l.b16 %v3528
      %v3792 = vunpack.c.l.b16 %v3529
      %v3793 = vunpack.c.h.b16 %v3529
      %v3794 = vunpack.c.l.b16 %v3530
      %v3795 = vunpack.c.l.b16 %v3531
      %v3796 = vunpack.c.h.b16 %v3531
      %v3797 = vunpack.c.l.b16 %v3532
      %v3798 = vunpack.c.l.b16 %v3533
      %v3799 = vunpack.c.h.b16 %v3533
      %v3800 = vunpack.c.l.b16 %v3534
      %v3801 = vunpack.c.l.b16 %v3535
      %v3802 = vunpack.c.h.b16 %v3535
      %v3803 = vunpack.c.l.b16 %v3536
      %v3804 = vunpack.c.l.b16 %v3537
      %v3805 = vunpack.c.h.b16 %v3537
      %v3806 = vunpack.c.l.b16 %v3538
      %v3807 = vunpack.c.l.b16 %v3539
      %v3808 = vunpack.c.h.b16 %v3539
      %v3809 = vunpack.c.l.b16 %v3540
      %v3810 = vunpack.c.l.b16 %v3541
      %v3811 = vunpack.c.h.b16 %v3541
      %v3812 = vunpack.c.l.b16 %v3542
      %v3813 = vunpack.c.l.b16 %v3543
      %v3814 = vunpack.c.h.b16 %v3543
      %v3815 = vunpack.c.l.b16 %v3544
      %v3816 = vunpack.c.l.b16 %v3545
      %v3817 = vunpack.c.h.b16 %v3545
      %v3818 = vunpack.c.l.b16 %v3546
      %v3819 = vunpack.c.l.b16 %v3547
      %v3820 = vunpack.c.h.b16 %v3547
      %v3821 = vunpack.c.l.b16 %v3548
      %v3822 = vunpack.c.l.b16 %v3549
      %v3823 = vunpack.c.h.b16 %v3549
      %v3824 = vunpack.c.l.b16 %v3550
      %v3825 = vunpack.c.l.b16 %v3551
      %v3826 = vunpack.c.h.b16 %v3551
      %v3827 = vunpack.c.l.b16 %v3552
      %v3828 = vunpack.c.l.b16 %v3553
      %v3829 = vunpack.c.h.b16 %v3553
      %v3830 = vunpack.c.l.b16 %v3554
      %v3831 = vunpack.c.l.b16 %v3555
      %v3832 = vunpack.c.h.b16 %v3555
      %v3833 = vunpack.c.l.b16 %v3556
      %v3834 = vunpack.c.l.b16 %v3557
      %v3835 = vunpack.c.h.b16 %v3557
      %v3836 = vunpack.c.l.b16 %v3558
      %v3837 = vunpack.c.l.b16 %v3559
      %v3838 = vunpack.c.h.b16 %v3559
      %v3839 = vunpack.c.l.b16 %v3560
      %v3840 = vunpack.c.l.b16 %v3561
      %v3841 = vunpack.c.h.b16 %v3561
      %v3842 = vunpack.c.l.b16 %v3562
      %v3843 = vunpack.c.l.b16 %v3563
      %v3844 = vunpack.c.h.b16 %v3563
      %v3845 = vunpack.c.l.b16 %v3564
      %v3846 = vunpack.c.l.b16 %v3565
      %v3847 = vunpack.c.h.b16 %v3565
      %v3848 = vunpack.c.l.b16 %v3566
      %v3849 = vunpack.c.l.b16 %v3567
      %v3850 = vunpack.c.h.b16 %v3567
      %v3851 = vunpack.c.l.b16 %v3568
      %v3852 = vunpack.c.l.b16 %v3569
      %v3853 = vunpack.c.h.b16 %v3569
      %v3854 = vunpack.c.l.b16 %v3570
      %v3855 = vunpack.c.l.b16 %v3571
      %v3856 = vunpack.c.h.b16 %v3571
      %v3857 = vunpack.c.l.b16 %v3572
      %v3858 = vunpack.c.l.b16 %v3573
      %v3859 = vunpack.c.h.b16 %v3573
      %v3860 = vunpack.c.l.b16 %v3574
      %v3861 = vunpack.c.l.b16 %v3575
      %v3862 = vunpack.c.h.b16 %v3575
      %v3863 = vunpack.c.l.b16 %v3576
      %v3864 = vunpack.c.l.b16 %v3577
      %v3865 = vunpack.c.h.b16 %v3577
      %v3866 = vunpack.c.l.b16 %v3578
      %v3867 = vunpack.c.l.b16 %v3579
      %v3868 = vunpack.c.h.b16 %v3579
      %v3869 = vunpack.c.l.b16 %v3580
      %v3870 = vunpack.c.l.b16 %v3581
      %v3871 = vunpack.c.h.b16 %v3581
      %v3872 = vunpack.c.l.b16 %v3582
      %v3873 = vunpack.c.l.b16 %v3583
      %v3874 = vunpack.c.h.b16 %v3583
      %v3875 = vunpack.c.l.b16 %v3584
      %v3876 = vunpack.c.l.b16 %v3585
      %v3877 = vunpack.c.h.b16 %v3585
      %v3878 = vunpack.c.l.b16 %v3586
      %v3879 = vunpack.c.l.b16 %v3587
      %v3880 = vunpack.c.h.b16 %v3587
      %v3881 = vunpack.c.l.b16 %v3588
      %v3882 = vunpack.c.l.b16 %v3589
      %v3883 = vunpack.c.h.b16 %v3589
      %v3884 = vunpack.c.l.b16 %v3590
      %v3885 = vunpack.c.l.b16 %v3591
      %v3886 = vunpack.c.h.b16 %v3591
      %v3887 = vunpack.c.l.b16 %v3592
      %v3888 = vunpack.c.l.b16 %v3593
      %v3889 = vunpack.c.h.b16 %v3593
      %v3890 = vunpack.c.l.b16 %v3594
      %v3891 = vunpack.c.l.b16 %v3595
      %v3892 = vunpack.c.h.b16 %v3595
      %v3893 = vunpack.c.l.b16 %v3596
      %v3894 = vunpack.c.l.b16 %v3597
      %v3895 = vunpack.c.h.b16 %v3597
      %v3896 = vunpack.c.l.b16 %v3598
      %v3897 = vunpack.c.l.b16 %v3599
      %v3898 = vunpack.c.h.b16 %v3599
      %v3899 = vunpack.c.l.b16 %v3600
      %v3900 = vunpack.c.l.b16 %v3601
      %v3901 = vunpack.c.h.b16 %v3601
      %v3902 = vunpack.c.l.b16 %v3602
      %v3903 = vunpack.c.l.b16 %v3603
      %v3904 = vunpack.c.h.b16 %v3603
      %v3905 = vunpack.c.l.b16 %v3604
      %v3906 = vunpack.c.l.b16 %v3605
      %v3907 = vunpack.c.h.b16 %v3605
      %v3908 = vunpack.c.l.b16 %v3606
      %v3909 = vunpack.c.l.b16 %v3607
      %v3910 = vunpack.c.h.b16 %v3607
      %v3911 = vunpack.c.l.b16 %v3608
      %v3912 = vunpack.c.l.b16 %v3609
      %v3913 = vunpack.c.h.b16 %v3609
      %v3914 = vunpack.c.l.b16 %v3610
      %v3915 = vunpack.c.l.b16 %v3611
      %v3916 = vunpack.c.h.b16 %v3611
      %v3917 = vunpack.c.l.b16 %v3612
      %v3918 = vunpack.c.l.b16 %v3613
      %v3919 = vunpack.c.h.b16 %v3613
      %v3920 = vunpack.c.l.b16 %v3614
      %v3921 = vunpack.c.l.b16 %v3615
      %v3922 = vunpack.c.h.b16 %v3615
      %v3923 = vunpack.c.l.b16 %v3616
      %v3924 = vunpack.c.l.b16 %v3617
      %v3925 = vunpack.c.h.b16 %v3617
      %v3926 = vunpack.c.l.b16 %v3618
      %v3927 = vunpack.c.l.b16 %v3619
      %v3928 = vunpack.c.h.b16 %v3619
      %v3929 = vunpack.c.l.b16 %v3620
      %v3930 = vunpack.c.l.b16 %v3621
      %v3931 = vunpack.c.h.b16 %v3621
      %v3932 = vunpack.c.l.b16 %v3622
      %v3933 = vunpack.c.l.b16 %v3623
      %v3934 = vunpack.c.h.b16 %v3623
      %v3935 = vunpack.c.l.b16 %v3624
      %v3936 = vunpack.c.l.b16 %v3625
      %v3937 = vunpack.c.h.b16 %v3625
      %v3938 = vunpack.c.l.b16 %v3626
      %v3939 = vunpack.c.l.b16 %v3627
      %v3940 = vunpack.c.h.b16 %v3627
      %v3941 = vunpack.c.l.b16 %v3628
      %v3942 = vunpack.c.l.b16 %v3629
      %v3943 = vunpack.c.h.b16 %v3629
      %v3944 = vunpack.c.l.b16 %v3630
      %v3945 = vunpack.c.l.b16 %v3631
      %v3946 = vunpack.c.h.b16 %v3631
      %v3947 = vunpack.c.l.b16 %v3632
      %v3948 = vunpack.c.l.b16 %v3633
      %v3949 = vunpack.c.h.b16 %v3633
      %v3950 = vunpack.c.l.b16 %v3634
      %v3951 = vunpack.c.l.b16 %v3635
      %v3952 = vunpack.c.h.b16 %v3635
      %v3953 = vunpack.c.l.b16 %v3636
      %v3954 = vunpack.c.l.b16 %v3637
      %v3955 = vunpack.c.h.b16 %v3637
      %v3956 = vunpack.c.l.b16 %v3638
      %v3957 = vunpack.c.l.b16 %v3639
      %v3958 = vunpack.c.h.b16 %v3639
      %v3959 = vunpack.c.l.b16 %v3640
      %v3960 = vunpack.c.l.b16 %v3641
      %v3961 = vunpack.c.h.b16 %v3641
      %v3962 = vunpack.c.l.b16 %v3642
      %v3963 = vpack.c.b16 %v3774, %v3771
      %v3964 = vpack.c.b16 %v3775, %v3772
      %v3965 = vpack.c.b16 %v3776, %v3773
      %v3966 = vpack.c.b16 %v3780, %v3777
      %v3967 = vpack.c.b16 %v3781, %v3778
      %v3968 = vpack.c.b16 %v3782, %v3779
      %v3969 = vpack.c.b16 %v3786, %v3783
      %v3970 = vpack.c.b16 %v3787, %v3784
      %v3971 = vpack.c.b16 %v3788, %v3785
      %v3972 = vpack.c.b16 %v3792, %v3789
      %v3973 = vpack.c.b16 %v3793, %v3790
      %v3974 = vpack.c.b16 %v3794, %v3791
      %v3975 = vpack.c.b16 %v3798, %v3795
      %v3976 = vpack.c.b16 %v3799, %v3796
      %v3977 = vpack.c.b16 %v3800, %v3797
      %v3978 = vpack.c.b16 %v3804, %v3801
      %v3979 = vpack.c.b16 %v3805, %v3802
      %v3980 = vpack.c.b16 %v3806, %v3803
      %v3981 = vpack.c.b16 %v3810, %v3807
      %v3982 = vpack.c.b16 %v3811, %v3808
      %v3983 = vpack.c.b16 %v3812, %v3809
      %v3984 = vpack.c.b16 %v3816, %v3813
      %v3985 = vpack.c.b16 %v3817, %v3814
      %v3986 = vpack.c.b16 %v3818, %v3815
      %v3987 = vpack.c.b16 %v3822, %v3819
      %v3988 = vpack.c.b16 %v3823, %v3820
      %v3989 = vpack.c.b16 %v3824, %v3821
      %v3990 = vpack.c.b16 %v3828, %v3825
      %v3991 = vpack.c.b16 %v3829, %v3826
      %v3992 = vpack.c.b16 %v3830, %v3827
      %v3993 = vpack.c.b16 %v3834, %v3831
      %v3994 = vpack.c.b16 %v3835, %v3832
      %v3995 = vpack.c.b16 %v3836, %v3833
      %v3996 = vpack.c.b16 %v3840, %v3837
      %v3997 = vpack.c.b16 %v3841, %v3838
      %v3998 = vpack.c.b16 %v3842, %v3839
      %v3999 = vpack.c.b16 %v3846, %v3843
      %v4000 = vpack.c.b16 %v3847, %v3844
      %v4001 = vpack.c.b16 %v3848, %v3845
      %v4002 = vpack.c.b16 %v3852, %v3849
      %v4003 = vpack.c.b16 %v3853, %v3850
      %v4004 = vpack.c.b16 %v3854, %v3851
      %v4005 = vpack.c.b16 %v3858, %v3855
      %v4006 = vpack.c.b16 %v3859, %v3856
      %v4007 = vpack.c.b16 %v3860, %v3857
      %v4008 = vpack.c.b16 %v3864, %v3861
      %v4009 = vpack.c.b16 %v3865, %v3862
      %v4010 = vpack.c.b16 %v3866, %v3863
      %v4011 = vpack.c.b16 %v3870, %v3867
      %v4012 = vpack.c.b16 %v3871, %v3868
      %v4013 = vpack.c.b16 %v3872, %v3869
      %v4014 = vpack.c.b16 %v3876, %v3873
      %v4015 = vpack.c.b16 %v3877, %v3874
      %v4016 = vpack.c.b16 %v3878, %v3875
      %v4017 = vpack.c.b16 %v3882, %v3879
      %v4018 = vpack.c.b16 %v3883, %v3880
      %v4019 = vpack.c.b16 %v3884, %v3881
      %v4020 = vpack.c.b16 %v3888, %v3885
      %v4021 = vpack.c.b16 %v3889, %v3886
      %v4022 = vpack.c.b16 %v3890, %v3887
      %v4023 = vpack.c.b16 %v3894, %v3891
      %v4024 = vpack.c.b16 %v3895, %v3892
      %v4025 = vpack.c.b16 %v3896, %v3893
      %v4026 = vpack.c.b16 %v3900, %v3897
      %v4027 = vpack.c.b16 %v3901, %v3898
      %v4028 = vpack.c.b16 %v3902, %v3899
      %v4029 = vpack.c.b16 %v3906, %v3903
      %v4030 = vpack.c.b16 %v3907, %v3904
      %v4031 = vpack.c.b16 %v3908, %v3905
      %v4032 = vpack.c.b16 %v3912, %v3909
      %v4033 = vpack.c.b16 %v3913, %v3910
      %v4034 = vpack.c.b16 %v3914, %v3911
      %v4035 = vpack.c.b16 %v3918, %v3915
      %v4036 = vpack.c.b16 %v3919, %v3916
      %v4037 = vpack.c.b16 %v3920, %v3917
      %v4038 = vpack.c.b16 %v3924, %v3921
      %v4039 = vpack.c.b16 %v3925, %v3922
      %v4040 = vpack.c.b16 %v3926, %v3923
      %v4041 = vpack.c.b16 %v3930, %v3927
      %v4042 = vpack.c.b16 %v3931, %v3928
      %v4043 = vpack.c.b16 %v3932, %v3929
      %v4044 = vpack.c.b16 %v3936, %v3933
      %v4045 = vpack.c.b16 %v3937, %v3934
      %v4046 = vpack.c.b16 %v3938, %v3935
      %v4047 = vpack.c.b16 %v3942, %v3939
      %v4048 = vpack.c.b16 %v3943, %v3940
      %v4049 = vpack.c.b16 %v3944, %v3941
      %v4050 = vpack.c.b16 %v3948, %v3945
      %v4051 = vpack.c.b16 %v3949, %v3946
      %v4052 = vpack.c.b16 %v3950, %v3947
      %v4053 = vpack.c.b16 %v3954, %v3951
      %v4054 = vpack.c.b16 %v3955, %v3952
      %v4055 = vpack.c.b16 %v3956, %v3953
      %v4056 = vpack.c.b16 %v3960, %v3957
      %v4057 = vpack.c.b16 %v3961, %v3958
      %v4058 = vpack.c.b16 %v3962, %v3959
      %v4124 = vsel %vm1685, %v3965, 0
      %v4127 = vsel %vm1685, %v3968, 0
      %v4130 = vsel %vm1685, %v3971, 0
      %v4133 = vsel %vm1685, %v3974, 0
      %v4136 = vsel %vm1685, %v3977, 0
      %v4139 = vsel %vm1685, %v3980, 0
      %v4142 = vsel %vm1685, %v3983, 0
      %v4145 = vsel %vm1685, %v3986, 0
      %v4148 = vsel %vm1685, %v3989, 0
      %v4151 = vsel %vm1685, %v3992, 0
      %v4154 = vsel %vm1685, %v3995, 0
      %v4157 = vsel %vm1685, %v3998, 0
      %v4160 = vsel %vm1685, %v4001, 0
      %v4163 = vsel %vm1685, %v4004, 0
      %v4166 = vsel %vm1685, %v4007, 0
      %v4169 = vsel %vm1685, %v4010, 0
      %v4172 = vsel %vm1685, %v4013, 0
      %v4175 = vsel %vm1685, %v4016, 0
      %v4178 = vsel %vm1685, %v4019, 0
      %v4181 = vsel %vm1685, %v4022, 0
      %v4184 = vsel %vm1685, %v4025, 0
      %v4187 = vsel %vm1685, %v4028, 0
      %v4190 = vsel %vm1685, %v4031, 0
      %v4193 = vsel %vm1685, %v4034, 0
      %v4196 = vsel %vm1685, %v4037, 0
      %v4199 = vsel %vm1685, %v4040, 0
      %v4202 = vsel %vm1685, %v4043, 0
      %v4205 = vsel %vm1685, %v4046, 0
      %v4208 = vsel %vm1685, %v4049, 0
      %v4211 = vsel %vm1685, %v4052, 0
      %v4214 = vsel %vm1685, %v4055, 0
      %v4217 = vsel %vm1685, %v4058, 0
      %4219 = vmatprep.subr.bf16.mxu0 0
      %4220 = vmatpush1.bf16.msra.mxu0 %v906
      %4221 = vmatprep.subr.bf16.mxu0 0
      %4222 = vmatpush1.bf16.msra.mxu0 %v902
      %4223 = vmatprep.subr.bf16.mxu0 0
      %4224 = vmatpush1.bf16.msra.mxu0 %v898
      %4225 = vmatprep.subr.bf16.mxu0 0
      %4226 = vmatpush1.bf16.msra.mxu0 %v894
      %4227 = vmatprep.subr.bf16.mxu0 0
      %4228 = vmatpush1.bf16.msra.mxu0 %v890
      %4229 = vmatprep.subr.bf16.mxu0 0
      %4230 = vmatpush1.bf16.msra.mxu0 %v886
      %4231 = vmatprep.subr.bf16.mxu0 0
      %4232 = vmatpush1.bf16.msra.mxu0 %v882
      %4233 = vmatprep.subr.bf16.mxu0 0
      %4234 = vmatpush1.bf16.msra.mxu0 %v878
      %4235 = vmatprep.subr.bf16.mxu0 0
      %4236 = vmatpush2.bf16.msra.mxu0 %v938
      %4237 = vmatprep.subr.bf16.mxu0 0
      %4238 = vmatpush2.bf16.msra.mxu0 %v934
      %4239 = vmatprep.subr.bf16.mxu0 0
      %4240 = vmatpush2.bf16.msra.mxu0 %v930
      %4241 = vmatprep.subr.bf16.mxu0 0
      %4242 = vmatpush2.bf16.msra.mxu0 %v926
      %4243 = vmatprep.subr.bf16.mxu0 0
      %4244 = vmatpush2.bf16.msra.mxu0 %v922
      %4245 = vmatprep.subr.bf16.mxu0 0
      %4246 = vmatpush2.bf16.msra.mxu0 %v918
      %4247 = vmatprep.subr.bf16.mxu0 0
      %4248 = vmatpush2.bf16.msra.mxu0 %v914
      %4249 = vmatprep.subr.bf16.mxu0 0
      %4250 = vmatpush2.bf16.msra.mxu0 %v910
      %4251 = vmatprep.mubr.bf16.mxu0 %v3964
      %4252 = vmatmul.mubr.bf16.gmra.mxu0 %v3963
      %v4253 = vpop.f32.mrf.mxu0
      %v4254 = vadd.f32 0.0, %v4253
      %v4255 = vpop.f32.mrf.mxu0
      %v4256 = vpop.f32.mrf.mxu0
      %v4257 = vadd.f32 0.0, %v4256
      %v4258 = vpop.f32.mrf.mxu0
      %4259 = vmatprep.mubr.bf16.mxu0 %v3967
      %4260 = vmatmul.mubr.bf16.gmra.mxu0 %v3966
      %v4261 = vpop.f32.mrf.mxu0
      %v4262 = vadd.f32 0.0, %v4261
      %v4263 = vpop.f32.mrf.mxu0
      %v4264 = vpop.f32.mrf.mxu0
      %v4265 = vadd.f32 0.0, %v4264
      %v4266 = vpop.f32.mrf.mxu0
      %4267 = vmatprep.mubr.bf16.mxu0 %v3970
      %4268 = vmatmul.mubr.bf16.gmra.mxu0 %v3969
      %v4269 = vpop.f32.mrf.mxu0
      %v4270 = vadd.f32 0.0, %v4269
      %v4271 = vpop.f32.mrf.mxu0
      %v4272 = vpop.f32.mrf.mxu0
      %v4273 = vadd.f32 0.0, %v4272
      %v4274 = vpop.f32.mrf.mxu0
      %4275 = vmatprep.mubr.bf16.mxu0 %v3973
      %4276 = vmatmul.mubr.bf16.gmra.mxu0 %v3972
      %v4277 = vpop.f32.mrf.mxu0
      %v4278 = vadd.f32 0.0, %v4277
      %v4279 = vpop.f32.mrf.mxu0
      %v4280 = vpop.f32.mrf.mxu0
      %v4281 = vadd.f32 0.0, %v4280
      %v4282 = vpop.f32.mrf.mxu0
      %4283 = vmatprep.mubr.bf16.mxu0 %v3976
      %4284 = vmatmul.mubr.bf16.gmra.mxu0 %v3975
      %v4285 = vpop.f32.mrf.mxu0
      %v4286 = vadd.f32 0.0, %v4285
      %v4287 = vpop.f32.mrf.mxu0
      %v4288 = vpop.f32.mrf.mxu0
      %v4289 = vadd.f32 0.0, %v4288
      %v4290 = vpop.f32.mrf.mxu0
      %4291 = vmatprep.mubr.bf16.mxu0 %v3979
      %4292 = vmatmul.mubr.bf16.gmra.mxu0 %v3978
      %v4293 = vpop.f32.mrf.mxu0
      %v4294 = vadd.f32 0.0, %v4293
      %v4295 = vpop.f32.mrf.mxu0
      %v4296 = vpop.f32.mrf.mxu0
      %v4297 = vadd.f32 0.0, %v4296
      %v4298 = vpop.f32.mrf.mxu0
      %4299 = vmatprep.mubr.bf16.mxu0 %v3982
      %4300 = vmatmul.mubr.bf16.gmra.mxu0 %v3981
      %v4301 = vpop.f32.mrf.mxu0
      %v4302 = vadd.f32 0.0, %v4301
      %v4303 = vpop.f32.mrf.mxu0
      %v4304 = vpop.f32.mrf.mxu0
      %v4305 = vadd.f32 0.0, %v4304
      %v4306 = vpop.f32.mrf.mxu0
      %4307 = vmatprep.mubr.bf16.mxu0 %v3985
      %4308 = vmatmul.mubr.bf16.gmra.mxu0 %v3984
      %v4309 = vpop.f32.mrf.mxu0
      %v4310 = vadd.f32 0.0, %v4309
      %v4311 = vpop.f32.mrf.mxu0
      %v4312 = vpop.f32.mrf.mxu0
      %v4313 = vadd.f32 0.0, %v4312
      %v4314 = vpop.f32.mrf.mxu0
      %4315 = vmatprep.mubr.bf16.mxu0 %v3988
      %4316 = vmatmul.mubr.bf16.gmra.mxu0 %v3987
      %v4317 = vpop.f32.mrf.mxu0
      %v4318 = vadd.f32 0.0, %v4317
      %v4319 = vpop.f32.mrf.mxu0
      %v4320 = vpop.f32.mrf.mxu0
      %v4321 = vadd.f32 0.0, %v4320
      %v4322 = vpop.f32.mrf.mxu0
      %4323 = vmatprep.mubr.bf16.mxu0 %v3991
      %4324 = vmatmul.mubr.bf16.gmra.mxu0 %v3990
      %v4325 = vpop.f32.mrf.mxu0
      %v4326 = vadd.f32 0.0, %v4325
      %v4327 = vpop.f32.mrf.mxu0
      %v4328 = vpop.f32.mrf.mxu0
      %v4329 = vadd.f32 0.0, %v4328
      %v4330 = vpop.f32.mrf.mxu0
      %4331 = vmatprep.mubr.bf16.mxu0 %v3994
      %4332 = vmatmul.mubr.bf16.gmra.mxu0 %v3993
      %v4333 = vpop.f32.mrf.mxu0
      %v4334 = vadd.f32 0.0, %v4333
      %v4335 = vpop.f32.mrf.mxu0
      %v4336 = vpop.f32.mrf.mxu0
      %v4337 = vadd.f32 0.0, %v4336
      %v4338 = vpop.f32.mrf.mxu0
      %4339 = vmatprep.mubr.bf16.mxu0 %v3997
      %4340 = vmatmul.mubr.bf16.gmra.mxu0 %v3996
      %v4341 = vpop.f32.mrf.mxu0
      %v4342 = vadd.f32 0.0, %v4341
      %v4343 = vpop.f32.mrf.mxu0
      %v4344 = vpop.f32.mrf.mxu0
      %v4345 = vadd.f32 0.0, %v4344
      %v4346 = vpop.f32.mrf.mxu0
      %4347 = vmatprep.mubr.bf16.mxu0 %v4000
      %4348 = vmatmul.mubr.bf16.gmra.mxu0 %v3999
      %v4349 = vpop.f32.mrf.mxu0
      %v4350 = vadd.f32 0.0, %v4349
      %v4351 = vpop.f32.mrf.mxu0
      %v4352 = vpop.f32.mrf.mxu0
      %v4353 = vadd.f32 0.0, %v4352
      %v4354 = vpop.f32.mrf.mxu0
      %4355 = vmatprep.mubr.bf16.mxu0 %v4003
      %4356 = vmatmul.mubr.bf16.gmra.mxu0 %v4002
      %v4357 = vpop.f32.mrf.mxu0
      %v4358 = vadd.f32 0.0, %v4357
      %v4359 = vpop.f32.mrf.mxu0
      %v4360 = vpop.f32.mrf.mxu0
      %v4361 = vadd.f32 0.0, %v4360
      %v4362 = vpop.f32.mrf.mxu0
      %4363 = vmatprep.mubr.bf16.mxu0 %v4006
      %4364 = vmatmul.mubr.bf16.gmra.mxu0 %v4005
      %v4365 = vpop.f32.mrf.mxu0
      %v4366 = vadd.f32 0.0, %v4365
      %v4367 = vpop.f32.mrf.mxu0
      %v4368 = vpop.f32.mrf.mxu0
      %v4369 = vadd.f32 0.0, %v4368
      %v4370 = vpop.f32.mrf.mxu0
      %4371 = vmatprep.mubr.bf16.mxu0 %v4009
      %4372 = vmatmul.mubr.bf16.gmra.mxu0 %v4008
      %v4373 = vpop.f32.mrf.mxu0
      %v4374 = vadd.f32 0.0, %v4373
      %v4375 = vpop.f32.mrf.mxu0
      %v4376 = vpop.f32.mrf.mxu0
      %v4377 = vadd.f32 0.0, %v4376
      %v4378 = vpop.f32.mrf.mxu0
      %4379 = vmatprep.mubr.bf16.mxu0 %v4012
      %4380 = vmatmul.mubr.bf16.gmra.mxu0 %v4011
      %v4381 = vpop.f32.mrf.mxu0
      %v4382 = vadd.f32 0.0, %v4381
      %v4383 = vpop.f32.mrf.mxu0
      %v4384 = vpop.f32.mrf.mxu0
      %v4385 = vadd.f32 0.0, %v4384
      %v4386 = vpop.f32.mrf.mxu0
      %4387 = vmatprep.mubr.bf16.mxu0 %v4015
      %4388 = vmatmul.mubr.bf16.gmra.mxu0 %v4014
      %v4389 = vpop.f32.mrf.mxu0
      %v4390 = vadd.f32 0.0, %v4389
      %v4391 = vpop.f32.mrf.mxu0
      %v4392 = vpop.f32.mrf.mxu0
      %v4393 = vadd.f32 0.0, %v4392
      %v4394 = vpop.f32.mrf.mxu0
      %4395 = vmatprep.mubr.bf16.mxu0 %v4018
      %4396 = vmatmul.mubr.bf16.gmra.mxu0 %v4017
      %v4397 = vpop.f32.mrf.mxu0
      %v4398 = vadd.f32 0.0, %v4397
      %v4399 = vpop.f32.mrf.mxu0
      %v4400 = vpop.f32.mrf.mxu0
      %v4401 = vadd.f32 0.0, %v4400
      %v4402 = vpop.f32.mrf.mxu0
      %4403 = vmatprep.mubr.bf16.mxu0 %v4021
      %4404 = vmatmul.mubr.bf16.gmra.mxu0 %v4020
      %v4405 = vpop.f32.mrf.mxu0
      %v4406 = vadd.f32 0.0, %v4405
      %v4407 = vpop.f32.mrf.mxu0
      %v4408 = vpop.f32.mrf.mxu0
      %v4409 = vadd.f32 0.0, %v4408
      %v4410 = vpop.f32.mrf.mxu0
      %4411 = vmatprep.mubr.bf16.mxu0 %v4024
      %4412 = vmatmul.mubr.bf16.gmra.mxu0 %v4023
      %v4413 = vpop.f32.mrf.mxu0
      %v4414 = vadd.f32 0.0, %v4413
      %v4415 = vpop.f32.mrf.mxu0
      %v4416 = vpop.f32.mrf.mxu0
      %v4417 = vadd.f32 0.0, %v4416
      %v4418 = vpop.f32.mrf.mxu0
      %4419 = vmatprep.mubr.bf16.mxu0 %v4027
      %4420 = vmatmul.mubr.bf16.gmra.mxu0 %v4026
      %v4421 = vpop.f32.mrf.mxu0
      %v4422 = vadd.f32 0.0, %v4421
      %v4423 = vpop.f32.mrf.mxu0
      %v4424 = vpop.f32.mrf.mxu0
      %v4425 = vadd.f32 0.0, %v4424
      %v4426 = vpop.f32.mrf.mxu0
      %4427 = vmatprep.mubr.bf16.mxu0 %v4030
      %4428 = vmatmul.mubr.bf16.gmra.mxu0 %v4029
      %v4429 = vpop.f32.mrf.mxu0
      %v4430 = vadd.f32 0.0, %v4429
      %v4431 = vpop.f32.mrf.mxu0
      %v4432 = vpop.f32.mrf.mxu0
      %v4433 = vadd.f32 0.0, %v4432
      %v4434 = vpop.f32.mrf.mxu0
      %4435 = vmatprep.mubr.bf16.mxu0 %v4033
      %4436 = vmatmul.mubr.bf16.gmra.mxu0 %v4032
      %v4437 = vpop.f32.mrf.mxu0
      %v4438 = vadd.f32 0.0, %v4437
      %v4439 = vpop.f32.mrf.mxu0
      %v4440 = vpop.f32.mrf.mxu0
      %v4441 = vadd.f32 0.0, %v4440
      %v4442 = vpop.f32.mrf.mxu0
      %4443 = vmatprep.mubr.bf16.mxu0 %v4036
      %4444 = vmatmul.mubr.bf16.gmra.mxu0 %v4035
      %v4445 = vpop.f32.mrf.mxu0
      %v4446 = vadd.f32 0.0, %v4445
      %v4447 = vpop.f32.mrf.mxu0
      %v4448 = vpop.f32.mrf.mxu0
      %v4449 = vadd.f32 0.0, %v4448
      %v4450 = vpop.f32.mrf.mxu0
      %4451 = vmatprep.mubr.bf16.mxu0 %v4039
      %4452 = vmatmul.mubr.bf16.gmra.mxu0 %v4038
      %v4453 = vpop.f32.mrf.mxu0
      %v4454 = vadd.f32 0.0, %v4453
      %v4455 = vpop.f32.mrf.mxu0
      %v4456 = vpop.f32.mrf.mxu0
      %v4457 = vadd.f32 0.0, %v4456
      %v4458 = vpop.f32.mrf.mxu0
      %4459 = vmatprep.mubr.bf16.mxu0 %v4042
      %4460 = vmatmul.mubr.bf16.gmra.mxu0 %v4041
      %v4461 = vpop.f32.mrf.mxu0
      %v4462 = vadd.f32 0.0, %v4461
      %v4463 = vpop.f32.mrf.mxu0
      %v4464 = vpop.f32.mrf.mxu0
      %v4465 = vadd.f32 0.0, %v4464
      %v4466 = vpop.f32.mrf.mxu0
      %4467 = vmatprep.mubr.bf16.mxu0 %v4045
      %4468 = vmatmul.mubr.bf16.gmra.mxu0 %v4044
      %v4469 = vpop.f32.mrf.mxu0
      %v4470 = vadd.f32 0.0, %v4469
      %v4471 = vpop.f32.mrf.mxu0
      %v4472 = vpop.f32.mrf.mxu0
      %v4473 = vadd.f32 0.0, %v4472
      %v4474 = vpop.f32.mrf.mxu0
      %4475 = vmatprep.mubr.bf16.mxu0 %v4048
      %4476 = vmatmul.mubr.bf16.gmra.mxu0 %v4047
      %v4477 = vpop.f32.mrf.mxu0
      %v4478 = vadd.f32 0.0, %v4477
      %v4479 = vpop.f32.mrf.mxu0
      %v4480 = vpop.f32.mrf.mxu0
      %v4481 = vadd.f32 0.0, %v4480
      %v4482 = vpop.f32.mrf.mxu0
      %4483 = vmatprep.mubr.bf16.mxu0 %v4051
      %4484 = vmatmul.mubr.bf16.gmra.mxu0 %v4050
      %v4485 = vpop.f32.mrf.mxu0
      %v4486 = vadd.f32 0.0, %v4485
      %v4487 = vpop.f32.mrf.mxu0
      %v4488 = vpop.f32.mrf.mxu0
      %v4489 = vadd.f32 0.0, %v4488
      %v4490 = vpop.f32.mrf.mxu0
      %4491 = vmatprep.mubr.bf16.mxu0 %v4054
      %4492 = vmatmul.mubr.bf16.gmra.mxu0 %v4053
      %v4493 = vpop.f32.mrf.mxu0
      %v4494 = vadd.f32 0.0, %v4493
      %v4495 = vpop.f32.mrf.mxu0
      %v4496 = vpop.f32.mrf.mxu0
      %v4497 = vadd.f32 0.0, %v4496
      %v4498 = vpop.f32.mrf.mxu0
      %4499 = vmatprep.mubr.bf16.mxu0 %v4057
      %4500 = vmatmul.mubr.bf16.gmra.mxu0 %v4056
      %v4501 = vpop.f32.mrf.mxu0
      %v4502 = vadd.f32 0.0, %v4501
      %v4503 = vpop.f32.mrf.mxu0
      %v4504 = vpop.f32.mrf.mxu0
      %v4505 = vadd.f32 0.0, %v4504
      %v4506 = vpop.f32.mrf.mxu0
      %4507 = vdwg.mxu0
      %4508 = vmatprep.subr.bf16.mxu0 0
      %4509 = vmatpush1.bf16.msra.mxu0 0
      %4510 = vmatprep.subr.bf16.mxu0 0
      %4511 = vmatpush1.bf16.msra.mxu0 0
      %4512 = vmatprep.subr.bf16.mxu0 0
      %4513 = vmatpush1.bf16.msra.mxu0 0
      %4514 = vmatprep.subr.bf16.mxu0 0
      %4515 = vmatpush1.bf16.msra.mxu0 0
      %4516 = vmatprep.subr.bf16.mxu0 0
      %4517 = vmatpush1.bf16.msra.mxu0 0
      %4518 = vmatprep.subr.bf16.mxu0 0
      %4519 = vmatpush1.bf16.msra.mxu0 0
      %4520 = vmatprep.subr.bf16.mxu0 0
      %4521 = vmatpush1.bf16.msra.mxu0 %v946
      %4522 = vmatprep.subr.bf16.mxu0 0
      %4523 = vmatpush1.bf16.msra.mxu0 %v942
      %4524 = vmatprep.subr.bf16.mxu0 0
      %4525 = vmatpush2.bf16.msra.mxu0 0
      %4526 = vmatprep.subr.bf16.mxu0 0
      %4527 = vmatpush2.bf16.msra.mxu0 0
      %4528 = vmatprep.subr.bf16.mxu0 0
      %4529 = vmatpush2.bf16.msra.mxu0 0
      %4530 = vmatprep.subr.bf16.mxu0 0
      %4531 = vmatpush2.bf16.msra.mxu0 0
      %4532 = vmatprep.subr.bf16.mxu0 0
      %4533 = vmatpush2.bf16.msra.mxu0 0
      %4534 = vmatprep.subr.bf16.mxu0 0
      %4535 = vmatpush2.bf16.msra.mxu0 0
      %4536 = vmatprep.subr.bf16.mxu0 0
      %4537 = vmatpush2.bf16.msra.mxu0 0
      %4538 = vmatprep.subr.bf16.mxu0 0
      %4539 = vmatpush2.bf16.msra.mxu0 0
      %4540 = vmatprep.mubr.bf16.mxu0 0
      %4541 = vmatmul.mubr.bf16.gmra.mxu0 %v4124
      %v4542 = vpop.f32.mrf.mxu0
      %v4543 = vadd.f32 %v4254, %v4542
      %v4544 = vpop.f32.mrf.mxu0
      %v4545 = vpop.f32.mrf.mxu0
      %v4546 = vadd.f32 %v4257, %v4545
      %v4547 = vpop.f32.mrf.mxu0
      %4548 = vmatprep.mubr.bf16.mxu0 0
      %4549 = vmatmul.mubr.bf16.gmra.mxu0 %v4127
      %v4550 = vpop.f32.mrf.mxu0
      %v4551 = vadd.f32 %v4262, %v4550
      %v4552 = vpop.f32.mrf.mxu0
      %v4553 = vpop.f32.mrf.mxu0
      %v4554 = vadd.f32 %v4265, %v4553
      %v4555 = vpop.f32.mrf.mxu0
      %4556 = vmatprep.mubr.bf16.mxu0 0
      %4557 = vmatmul.mubr.bf16.gmra.mxu0 %v4130
      %v4558 = vpop.f32.mrf.mxu0
      %v4559 = vadd.f32 %v4270, %v4558
      %v4560 = vpop.f32.mrf.mxu0
      %v4561 = vpop.f32.mrf.mxu0
      %v4562 = vadd.f32 %v4273, %v4561
      %v4563 = vpop.f32.mrf.mxu0
      %4564 = vmatprep.mubr.bf16.mxu0 0
      %4565 = vmatmul.mubr.bf16.gmra.mxu0 %v4133
      %v4566 = vpop.f32.mrf.mxu0
      %v4567 = vadd.f32 %v4278, %v4566
      %v4568 = vpop.f32.mrf.mxu0
      %v4569 = vpop.f32.mrf.mxu0
      %v4570 = vadd.f32 %v4281, %v4569
      %v4571 = vpop.f32.mrf.mxu0
      %4572 = vmatprep.mubr.bf16.mxu0 0
      %4573 = vmatmul.mubr.bf16.gmra.mxu0 %v4136
      %v4574 = vpop.f32.mrf.mxu0
      %v4575 = vadd.f32 %v4286, %v4574
      %v4576 = vpop.f32.mrf.mxu0
      %v4577 = vpop.f32.mrf.mxu0
      %v4578 = vadd.f32 %v4289, %v4577
      %v4579 = vpop.f32.mrf.mxu0
      %4580 = vmatprep.mubr.bf16.mxu0 0
      %4581 = vmatmul.mubr.bf16.gmra.mxu0 %v4139
      %v4582 = vpop.f32.mrf.mxu0
      %v4583 = vadd.f32 %v4294, %v4582
      %v4584 = vpop.f32.mrf.mxu0
      %v4585 = vpop.f32.mrf.mxu0
      %v4586 = vadd.f32 %v4297, %v4585
      %v4587 = vpop.f32.mrf.mxu0
      %4588 = vmatprep.mubr.bf16.mxu0 0
      %4589 = vmatmul.mubr.bf16.gmra.mxu0 %v4142
      %v4590 = vpop.f32.mrf.mxu0
      %v4591 = vadd.f32 %v4302, %v4590
      %v4592 = vpop.f32.mrf.mxu0
      %v4593 = vpop.f32.mrf.mxu0
      %v4594 = vadd.f32 %v4305, %v4593
      %v4595 = vpop.f32.mrf.mxu0
      %4596 = vmatprep.mubr.bf16.mxu0 0
      %4597 = vmatmul.mubr.bf16.gmra.mxu0 %v4145
      %v4598 = vpop.f32.mrf.mxu0
      %v4599 = vadd.f32 %v4310, %v4598
      %v4600 = vpop.f32.mrf.mxu0
      %v4601 = vpop.f32.mrf.mxu0
      %v4602 = vadd.f32 %v4313, %v4601
      %v4603 = vpop.f32.mrf.mxu0
      %4604 = vmatprep.mubr.bf16.mxu0 0
      %4605 = vmatmul.mubr.bf16.gmra.mxu0 %v4148
      %v4606 = vpop.f32.mrf.mxu0
      %v4607 = vadd.f32 %v4318, %v4606
      %v4608 = vpop.f32.mrf.mxu0
      %v4609 = vpop.f32.mrf.mxu0
      %v4610 = vadd.f32 %v4321, %v4609
      %v4611 = vpop.f32.mrf.mxu0
      %4612 = vmatprep.mubr.bf16.mxu0 0
      %4613 = vmatmul.mubr.bf16.gmra.mxu0 %v4151
      %v4614 = vpop.f32.mrf.mxu0
      %v4615 = vadd.f32 %v4326, %v4614
      %v4616 = vpop.f32.mrf.mxu0
      %v4617 = vpop.f32.mrf.mxu0
      %v4618 = vadd.f32 %v4329, %v4617
      %v4619 = vpop.f32.mrf.mxu0
      %4620 = vmatprep.mubr.bf16.mxu0 0
      %4621 = vmatmul.mubr.bf16.gmra.mxu0 %v4154
      %v4622 = vpop.f32.mrf.mxu0
      %v4623 = vadd.f32 %v4334, %v4622
      %v4624 = vpop.f32.mrf.mxu0
      %v4625 = vpop.f32.mrf.mxu0
      %v4626 = vadd.f32 %v4337, %v4625
      %v4627 = vpop.f32.mrf.mxu0
      %4628 = vmatprep.mubr.bf16.mxu0 0
      %4629 = vmatmul.mubr.bf16.gmra.mxu0 %v4157
      %v4630 = vpop.f32.mrf.mxu0
      %v4631 = vadd.f32 %v4342, %v4630
      %v4632 = vpop.f32.mrf.mxu0
      %v4633 = vpop.f32.mrf.mxu0
      %v4634 = vadd.f32 %v4345, %v4633
      %v4635 = vpop.f32.mrf.mxu0
      %4636 = vmatprep.mubr.bf16.mxu0 0
      %4637 = vmatmul.mubr.bf16.gmra.mxu0 %v4160
      %v4638 = vpop.f32.mrf.mxu0
      %v4639 = vadd.f32 %v4350, %v4638
      %v4640 = vpop.f32.mrf.mxu0
      %v4641 = vpop.f32.mrf.mxu0
      %v4642 = vadd.f32 %v4353, %v4641
      %v4643 = vpop.f32.mrf.mxu0
      %4644 = vmatprep.mubr.bf16.mxu0 0
      %4645 = vmatmul.mubr.bf16.gmra.mxu0 %v4163
      %v4646 = vpop.f32.mrf.mxu0
      %v4647 = vadd.f32 %v4358, %v4646
      %v4648 = vpop.f32.mrf.mxu0
      %v4649 = vpop.f32.mrf.mxu0
      %v4650 = vadd.f32 %v4361, %v4649
      %v4651 = vpop.f32.mrf.mxu0
      %4652 = vmatprep.mubr.bf16.mxu0 0
      %4653 = vmatmul.mubr.bf16.gmra.mxu0 %v4166
      %v4654 = vpop.f32.mrf.mxu0
      %v4655 = vadd.f32 %v4366, %v4654
      %v4656 = vpop.f32.mrf.mxu0
      %v4657 = vpop.f32.mrf.mxu0
      %v4658 = vadd.f32 %v4369, %v4657
      %v4659 = vpop.f32.mrf.mxu0
      %4660 = vmatprep.mubr.bf16.mxu0 0
      %4661 = vmatmul.mubr.bf16.gmra.mxu0 %v4169
      %v4662 = vpop.f32.mrf.mxu0
      %v4663 = vadd.f32 %v4374, %v4662
      %v4664 = vpop.f32.mrf.mxu0
      %v4665 = vpop.f32.mrf.mxu0
      %v4666 = vadd.f32 %v4377, %v4665
      %v4667 = vpop.f32.mrf.mxu0
      %4668 = vmatprep.mubr.bf16.mxu0 0
      %4669 = vmatmul.mubr.bf16.gmra.mxu0 %v4172
      %v4670 = vpop.f32.mrf.mxu0
      %v4671 = vadd.f32 %v4382, %v4670
      %v4672 = vpop.f32.mrf.mxu0
      %v4673 = vpop.f32.mrf.mxu0
      %v4674 = vadd.f32 %v4385, %v4673
      %v4675 = vpop.f32.mrf.mxu0
      %4676 = vmatprep.mubr.bf16.mxu0 0
      %4677 = vmatmul.mubr.bf16.gmra.mxu0 %v4175
      %v4678 = vpop.f32.mrf.mxu0
      %v4679 = vadd.f32 %v4390, %v4678
      %v4680 = vpop.f32.mrf.mxu0
      %v4681 = vpop.f32.mrf.mxu0
      %v4682 = vadd.f32 %v4393, %v4681
      %v4683 = vpop.f32.mrf.mxu0
      %4684 = vmatprep.mubr.bf16.mxu0 0
      %4685 = vmatmul.mubr.bf16.gmra.mxu0 %v4178
      %v4686 = vpop.f32.mrf.mxu0
      %v4687 = vadd.f32 %v4398, %v4686
      %v4688 = vpop.f32.mrf.mxu0
      %v4689 = vpop.f32.mrf.mxu0
      %v4690 = vadd.f32 %v4401, %v4689
      %v4691 = vpop.f32.mrf.mxu0
      %4692 = vmatprep.mubr.bf16.mxu0 0
      %4693 = vmatmul.mubr.bf16.gmra.mxu0 %v4181
      %v4694 = vpop.f32.mrf.mxu0
      %v4695 = vadd.f32 %v4406, %v4694
      %v4696 = vpop.f32.mrf.mxu0
      %v4697 = vpop.f32.mrf.mxu0
      %v4698 = vadd.f32 %v4409, %v4697
      %v4699 = vpop.f32.mrf.mxu0
      %4700 = vmatprep.mubr.bf16.mxu0 0
      %4701 = vmatmul.mubr.bf16.gmra.mxu0 %v4184
      %v4702 = vpop.f32.mrf.mxu0
      %v4703 = vadd.f32 %v4414, %v4702
      %v4704 = vpop.f32.mrf.mxu0
      %v4705 = vpop.f32.mrf.mxu0
      %v4706 = vadd.f32 %v4417, %v4705
      %v4707 = vpop.f32.mrf.mxu0
      %4708 = vmatprep.mubr.bf16.mxu0 0
      %4709 = vmatmul.mubr.bf16.gmra.mxu0 %v4187
      %v4710 = vpop.f32.mrf.mxu0
      %v4711 = vadd.f32 %v4422, %v4710
      %v4712 = vpop.f32.mrf.mxu0
      %v4713 = vpop.f32.mrf.mxu0
      %v4714 = vadd.f32 %v4425, %v4713
      %v4715 = vpop.f32.mrf.mxu0
      %4716 = vmatprep.mubr.bf16.mxu0 0
      %4717 = vmatmul.mubr.bf16.gmra.mxu0 %v4190
      %v4718 = vpop.f32.mrf.mxu0
      %v4719 = vadd.f32 %v4430, %v4718
      %v4720 = vpop.f32.mrf.mxu0
      %v4721 = vpop.f32.mrf.mxu0
      %v4722 = vadd.f32 %v4433, %v4721
      %v4723 = vpop.f32.mrf.mxu0
      %4724 = vmatprep.mubr.bf16.mxu0 0
      %4725 = vmatmul.mubr.bf16.gmra.mxu0 %v4193
      %v4726 = vpop.f32.mrf.mxu0
      %v4727 = vadd.f32 %v4438, %v4726
      %v4728 = vpop.f32.mrf.mxu0
      %v4729 = vpop.f32.mrf.mxu0
      %v4730 = vadd.f32 %v4441, %v4729
      %v4731 = vpop.f32.mrf.mxu0
      %4732 = vmatprep.mubr.bf16.mxu0 0
      %4733 = vmatmul.mubr.bf16.gmra.mxu0 %v4196
      %v4734 = vpop.f32.mrf.mxu0
      %v4735 = vadd.f32 %v4446, %v4734
      %v4736 = vpop.f32.mrf.mxu0
      %v4737 = vpop.f32.mrf.mxu0
      %v4738 = vadd.f32 %v4449, %v4737
      %v4739 = vpop.f32.mrf.mxu0
      %4740 = vmatprep.mubr.bf16.mxu0 0
      %4741 = vmatmul.mubr.bf16.gmra.mxu0 %v4199
      %v4742 = vpop.f32.mrf.mxu0
      %v4743 = vadd.f32 %v4454, %v4742
      %v4744 = vpop.f32.mrf.mxu0
      %v4745 = vpop.f32.mrf.mxu0
      %v4746 = vadd.f32 %v4457, %v4745
      %v4747 = vpop.f32.mrf.mxu0
      %4748 = vmatprep.mubr.bf16.mxu0 0
      %4749 = vmatmul.mubr.bf16.gmra.mxu0 %v4202
      %v4750 = vpop.f32.mrf.mxu0
      %v4751 = vadd.f32 %v4462, %v4750
      %v4752 = vpop.f32.mrf.mxu0
      %v4753 = vpop.f32.mrf.mxu0
      %v4754 = vadd.f32 %v4465, %v4753
      %v4755 = vpop.f32.mrf.mxu0
      %4756 = vmatprep.mubr.bf16.mxu0 0
      %4757 = vmatmul.mubr.bf16.gmra.mxu0 %v4205
      %v4758 = vpop.f32.mrf.mxu0
      %v4759 = vadd.f32 %v4470, %v4758
      %v4760 = vpop.f32.mrf.mxu0
      %v4761 = vpop.f32.mrf.mxu0
      %v4762 = vadd.f32 %v4473, %v4761
      %v4763 = vpop.f32.mrf.mxu0
      %4764 = vmatprep.mubr.bf16.mxu0 0
      %4765 = vmatmul.mubr.bf16.gmra.mxu0 %v4208
      %v4766 = vpop.f32.mrf.mxu0
      %v4767 = vadd.f32 %v4478, %v4766
      %v4768 = vpop.f32.mrf.mxu0
      %v4769 = vpop.f32.mrf.mxu0
      %v4770 = vadd.f32 %v4481, %v4769
      %v4771 = vpop.f32.mrf.mxu0
      %4772 = vmatprep.mubr.bf16.mxu0 0
      %4773 = vmatmul.mubr.bf16.gmra.mxu0 %v4211
      %v4774 = vpop.f32.mrf.mxu0
      %v4775 = vadd.f32 %v4486, %v4774
      %v4776 = vpop.f32.mrf.mxu0
      %v4777 = vpop.f32.mrf.mxu0
      %v4778 = vadd.f32 %v4489, %v4777
      %v4779 = vpop.f32.mrf.mxu0
      %4780 = vmatprep.mubr.bf16.mxu0 0
      %4781 = vmatmul.mubr.bf16.gmra.mxu0 %v4214
      %v4782 = vpop.f32.mrf.mxu0
      %v4783 = vadd.f32 %v4494, %v4782
      %v4784 = vpop.f32.mrf.mxu0
      %v4785 = vpop.f32.mrf.mxu0
      %v4786 = vadd.f32 %v4497, %v4785
      %v4787 = vpop.f32.mrf.mxu0
      %4788 = vmatprep.mubr.bf16.mxu0 0
      %4789 = vmatmul.mubr.bf16.gmra.mxu0 %v4217
      %v4790 = vpop.f32.mrf.mxu0
      %v4791 = vadd.f32 %v4502, %v4790
      %v4792 = vpop.f32.mrf.mxu0
      %v4793 = vpop.f32.mrf.mxu0
      %v4794 = vadd.f32 %v4505, %v4793
      %v4795 = vpop.f32.mrf.mxu0
      %4796 = vdwg.mxu0
      %v4797 = vadd.f32 %v3260, %v4543
      %v4798 = vadd.f32 %v3263, %v4546
      %v4799 = vadd.f32 %v3268, %v4551
      %v4800 = vadd.f32 %v3271, %v4554
      %v4801 = vadd.f32 %v3276, %v4559
      %v4802 = vadd.f32 %v3279, %v4562
      %v4803 = vadd.f32 %v3284, %v4567
      %v4804 = vadd.f32 %v3287, %v4570
      %v4805 = vadd.f32 %v3292, %v4575
      %v4806 = vadd.f32 %v3295, %v4578
      %v4807 = vadd.f32 %v3300, %v4583
      %v4808 = vadd.f32 %v3303, %v4586
      %v4809 = vadd.f32 %v3308, %v4591
      %v4810 = vadd.f32 %v3311, %v4594
      %v4811 = vadd.f32 %v3316, %v4599
      %v4812 = vadd.f32 %v3319, %v4602
      %v4813 = vadd.f32 %v3324, %v4607
      %v4814 = vadd.f32 %v3327, %v4610
      %v4815 = vadd.f32 %v3332, %v4615
      %v4816 = vadd.f32 %v3335, %v4618
      %v4817 = vadd.f32 %v3340, %v4623
      %v4818 = vadd.f32 %v3343, %v4626
      %v4819 = vadd.f32 %v3348, %v4631
      %v4820 = vadd.f32 %v3351, %v4634
      %v4821 = vadd.f32 %v3356, %v4639
      %v4822 = vadd.f32 %v3359, %v4642
      %v4823 = vadd.f32 %v3364, %v4647
      %v4824 = vadd.f32 %v3367, %v4650
      %v4825 = vadd.f32 %v3372, %v4655
      %v4826 = vadd.f32 %v3375, %v4658
      %v4827 = vadd.f32 %v3380, %v4663
      %v4828 = vadd.f32 %v3383, %v4666
      %v4829 = vadd.f32 %v3388, %v4671
      %v4830 = vadd.f32 %v3391, %v4674
      %v4831 = vadd.f32 %v3396, %v4679
      %v4832 = vadd.f32 %v3399, %v4682
      %v4833 = vadd.f32 %v3404, %v4687
      %v4834 = vadd.f32 %v3407, %v4690
      %v4835 = vadd.f32 %v3412, %v4695
      %v4836 = vadd.f32 %v3415, %v4698
      %v4837 = vadd.f32 %v3420, %v4703
      %v4838 = vadd.f32 %v3423, %v4706
      %v4839 = vadd.f32 %v3428, %v4711
      %v4840 = vadd.f32 %v3431, %v4714
      %v4841 = vadd.f32 %v3436, %v4719
      %v4842 = vadd.f32 %v3439, %v4722
      %v4843 = vadd.f32 %v3444, %v4727
      %v4844 = vadd.f32 %v3447, %v4730
      %v4845 = vadd.f32 %v3452, %v4735
      %v4846 = vadd.f32 %v3455, %v4738
      %v4847 = vadd.f32 %v3460, %v4743
      %v4848 = vadd.f32 %v3463, %v4746
      %v4849 = vadd.f32 %v3468, %v4751
      %v4850 = vadd.f32 %v3471, %v4754
      %v4851 = vadd.f32 %v3476, %v4759
      %v4852 = vadd.f32 %v3479, %v4762
      %v4853 = vadd.f32 %v3484, %v4767
      %v4854 = vadd.f32 %v3487, %v4770
      %v4855 = vadd.f32 %v3492, %v4775
      %v4856 = vadd.f32 %v3495, %v4778
      %v4857 = vadd.f32 %v3500, %v4783
      %v4858 = vadd.f32 %v3503, %v4786
      %v4859 = vadd.f32 %v3508, %v4791
      %v4860 = vadd.f32 %v3511, %v4794
      %4862 = vset.pattern.permute.xlu0 0
      %4863 = vperm.xlu0 %4862, %v343
      %v4864 = vpop.permute.xlu0 %4863
      %4867 = vset.pattern.permute.xlu0 0
      %4868 = vperm.xlu0 %4867, %v344
      %v4869 = vpop.permute.xlu0 %4868
      %4872 = vset.pattern.permute.xlu0 0
      %4873 = vperm.xlu0 %4872, %v345
      %v4874 = vpop.permute.xlu0 %4873
      %4877 = vset.pattern.permute.xlu0 0
      %4878 = vperm.xlu0 %4877, %v346
      %v4879 = vpop.permute.xlu0 %4878
      %4882 = vset.pattern.permute.xlu0 0
      %4883 = vperm.xlu0 %4882, %v347
      %v4884 = vpop.permute.xlu0 %4883
      %4887 = vset.pattern.permute.xlu0 0
      %4888 = vperm.xlu0 %4887, %v348
      %v4889 = vpop.permute.xlu0 %4888
      %4892 = vset.pattern.permute.xlu0 0
      %4893 = vperm.xlu0 %4892, %v349
      %v4894 = vpop.permute.xlu0 %4893
      %4897 = vset.pattern.permute.xlu0 0
      %4898 = vperm.xlu0 %4897, %v350
      %v4899 = vpop.permute.xlu0 %4898
      %4902 = vset.pattern.permute.xlu0 0
      %4903 = vperm.xlu0 %4902, %v351
      %v4904 = vpop.permute.xlu0 %4903
      %4907 = vset.pattern.permute.xlu0 0
      %4908 = vperm.xlu0 %4907, %v352
      %v4909 = vpop.permute.xlu0 %4908
      %4912 = vset.pattern.permute.xlu0 0
      %4913 = vperm.xlu0 %4912, %v353
      %v4914 = vpop.permute.xlu0 %4913
      %4917 = vset.pattern.permute.xlu0 0
      %4918 = vperm.xlu0 %4917, %v354
      %v4919 = vpop.permute.xlu0 %4918
      %4922 = vset.pattern.permute.xlu0 0
      %4923 = vperm.xlu0 %4922, %v355
      %v4924 = vpop.permute.xlu0 %4923
      %4927 = vset.pattern.permute.xlu0 0
      %4928 = vperm.xlu0 %4927, %v356
      %v4929 = vpop.permute.xlu0 %4928
      %4932 = vset.pattern.permute.xlu0 0
      %4933 = vperm.xlu0 %4932, %v357
      %v4934 = vpop.permute.xlu0 %4933
      %4937 = vset.pattern.permute.xlu0 0
      %4938 = vperm.xlu0 %4937, %v358
      %v4939 = vpop.permute.xlu0 %4938
      %4942 = vset.pattern.permute.xlu0 0
      %4943 = vperm.xlu0 %4942, %v359
      %v4944 = vpop.permute.xlu0 %4943
      %4947 = vset.pattern.permute.xlu0 0
      %4948 = vperm.xlu0 %4947, %v360
      %v4949 = vpop.permute.xlu0 %4948
      %4952 = vset.pattern.permute.xlu0 0
      %4953 = vperm.xlu0 %4952, %v361
      %v4954 = vpop.permute.xlu0 %4953
      %4957 = vset.pattern.permute.xlu0 0
      %4958 = vperm.xlu0 %4957, %v362
      %v4959 = vpop.permute.xlu0 %4958
      %4962 = vset.pattern.permute.xlu0 0
      %4963 = vperm.xlu0 %4962, %v363
      %v4964 = vpop.permute.xlu0 %4963
      %4967 = vset.pattern.permute.xlu0 0
      %4968 = vperm.xlu0 %4967, %v364
      %v4969 = vpop.permute.xlu0 %4968
      %4972 = vset.pattern.permute.xlu0 0
      %4973 = vperm.xlu0 %4972, %v365
      %v4974 = vpop.permute.xlu0 %4973
      %4977 = vset.pattern.permute.xlu0 0
      %4978 = vperm.xlu0 %4977, %v366
      %v4979 = vpop.permute.xlu0 %4978
      %4982 = vset.pattern.permute.xlu0 0
      %4983 = vperm.xlu0 %4982, %v367
      %v4984 = vpop.permute.xlu0 %4983
      %4987 = vset.pattern.permute.xlu0 0
      %4988 = vperm.xlu0 %4987, %v368
      %v4989 = vpop.permute.xlu0 %4988
      %4992 = vset.pattern.permute.xlu0 0
      %4993 = vperm.xlu0 %4992, %v369
      %v4994 = vpop.permute.xlu0 %4993
      %4997 = vset.pattern.permute.xlu0 0
      %4998 = vperm.xlu0 %4997, %v370
      %v4999 = vpop.permute.xlu0 %4998
      %5002 = vset.pattern.permute.xlu0 0
      %5003 = vperm.xlu0 %5002, %v371
      %v5004 = vpop.permute.xlu0 %5003
      %5007 = vset.pattern.permute.xlu0 0
      %5008 = vperm.xlu0 %5007, %v372
      %v5009 = vpop.permute.xlu0 %5008
      %5012 = vset.pattern.permute.xlu0 0
      %5013 = vperm.xlu0 %5012, %v373
      %v5014 = vpop.permute.xlu0 %5013
      %5017 = vset.pattern.permute.xlu0 0
      %5018 = vperm.xlu0 %5017, %v374
      %v5019 = vpop.permute.xlu0 %5018
      %5022 = vset.pattern.permute.xlu0 0
      %5023 = vperm.xlu0 %5022, %v375
      %v5024 = vpop.permute.xlu0 %5023
      %5027 = vset.pattern.permute.xlu0 0
      %5028 = vperm.xlu0 %5027, %v376
      %v5029 = vpop.permute.xlu0 %5028
      %5032 = vset.pattern.permute.xlu0 0
      %5033 = vperm.xlu0 %5032, %v377
      %v5034 = vpop.permute.xlu0 %5033
      %5037 = vset.pattern.permute.xlu0 0
      %5038 = vperm.xlu0 %5037, %v378
      %v5039 = vpop.permute.xlu0 %5038
      %5042 = vset.pattern.permute.xlu0 0
      %5043 = vperm.xlu0 %5042, %v379
      %v5044 = vpop.permute.xlu0 %5043
      %5047 = vset.pattern.permute.xlu0 0
      %5048 = vperm.xlu0 %5047, %v380
      %v5049 = vpop.permute.xlu0 %5048
      %5052 = vset.pattern.permute.xlu0 0
      %5053 = vperm.xlu0 %5052, %v381
      %v5054 = vpop.permute.xlu0 %5053
      %5057 = vset.pattern.permute.xlu0 0
      %5058 = vperm.xlu0 %5057, %v382
      %v5059 = vpop.permute.xlu0 %5058
      %5062 = vset.pattern.permute.xlu0 0
      %5063 = vperm.xlu0 %5062, %v383
      %v5064 = vpop.permute.xlu0 %5063
      %5067 = vset.pattern.permute.xlu0 0
      %5068 = vperm.xlu0 %5067, %v384
      %v5069 = vpop.permute.xlu0 %5068
      %5072 = vset.pattern.permute.xlu0 0
      %5073 = vperm.xlu0 %5072, %v385
      %v5074 = vpop.permute.xlu0 %5073
      %5077 = vset.pattern.permute.xlu0 0
      %5078 = vperm.xlu0 %5077, %v386
      %v5079 = vpop.permute.xlu0 %5078
      %5082 = vset.pattern.permute.xlu0 0
      %5083 = vperm.xlu0 %5082, %v387
      %v5084 = vpop.permute.xlu0 %5083
      %5087 = vset.pattern.permute.xlu0 0
      %5088 = vperm.xlu0 %5087, %v388
      %v5089 = vpop.permute.xlu0 %5088
      %5092 = vset.pattern.permute.xlu0 0
      %5093 = vperm.xlu0 %5092, %v389
      %v5094 = vpop.permute.xlu0 %5093
      %5097 = vset.pattern.permute.xlu0 0
      %5098 = vperm.xlu0 %5097, %v390
      %v5099 = vpop.permute.xlu0 %5098
      %5102 = vset.pattern.permute.xlu0 0
      %5103 = vperm.xlu0 %5102, %v391
      %v5104 = vpop.permute.xlu0 %5103
      %5107 = vset.pattern.permute.xlu0 0
      %5108 = vperm.xlu0 %5107, %v392
      %v5109 = vpop.permute.xlu0 %5108
      %5112 = vset.pattern.permute.xlu0 0
      %5113 = vperm.xlu0 %5112, %v393
      %v5114 = vpop.permute.xlu0 %5113
      %5117 = vset.pattern.permute.xlu0 0
      %5118 = vperm.xlu0 %5117, %v394
      %v5119 = vpop.permute.xlu0 %5118
      %5122 = vset.pattern.permute.xlu0 0
      %5123 = vperm.xlu0 %5122, %v395
      %v5124 = vpop.permute.xlu0 %5123
      %5127 = vset.pattern.permute.xlu0 0
      %5128 = vperm.xlu0 %5127, %v396
      %v5129 = vpop.permute.xlu0 %5128
      %5132 = vset.pattern.permute.xlu0 0
      %5133 = vperm.xlu0 %5132, %v397
      %v5134 = vpop.permute.xlu0 %5133
      %5137 = vset.pattern.permute.xlu0 0
      %5138 = vperm.xlu0 %5137, %v398
      %v5139 = vpop.permute.xlu0 %5138
      %5142 = vset.pattern.permute.xlu0 0
      %5143 = vperm.xlu0 %5142, %v399
      %v5144 = vpop.permute.xlu0 %5143
      %5147 = vset.pattern.permute.xlu0 0
      %5148 = vperm.xlu0 %5147, %v400
      %v5149 = vpop.permute.xlu0 %5148
      %5152 = vset.pattern.permute.xlu0 0
      %5153 = vperm.xlu0 %5152, %v401
      %v5154 = vpop.permute.xlu0 %5153
      %5157 = vset.pattern.permute.xlu0 0
      %5158 = vperm.xlu0 %5157, %v402
      %v5159 = vpop.permute.xlu0 %5158
      %5162 = vset.pattern.permute.xlu0 0
      %5163 = vperm.xlu0 %5162, %v403
      %v5164 = vpop.permute.xlu0 %5163
      %5167 = vset.pattern.permute.xlu0 0
      %5168 = vperm.xlu0 %5167, %v404
      %v5169 = vpop.permute.xlu0 %5168
      %5172 = vset.pattern.permute.xlu0 0
      %5173 = vperm.xlu0 %5172, %v405
      %v5174 = vpop.permute.xlu0 %5173
      %5177 = vset.pattern.permute.xlu0 0
      %5178 = vperm.xlu0 %5177, %v406
      %v5179 = vpop.permute.xlu0 %5178
      %v5181 = vadd.f32 %v4797, %v4864
      %v5182 = vadd.f32 %v4798, %v4869
      %v5183 = vadd.f32 %v4799, %v4874
      %v5184 = vadd.f32 %v4800, %v4879
      %v5185 = vadd.f32 %v4801, %v4884
      %v5186 = vadd.f32 %v4802, %v4889
      %v5187 = vadd.f32 %v4803, %v4894
      %v5188 = vadd.f32 %v4804, %v4899
      %v5189 = vadd.f32 %v4805, %v4904
      %v5190 = vadd.f32 %v4806, %v4909
      %v5191 = vadd.f32 %v4807, %v4914
      %v5192 = vadd.f32 %v4808, %v4919
      %v5193 = vadd.f32 %v4809, %v4924
      %v5194 = vadd.f32 %v4810, %v4929
      %v5195 = vadd.f32 %v4811, %v4934
      %v5196 = vadd.f32 %v4812, %v4939
      %v5197 = vadd.f32 %v4813, %v4944
      %v5198 = vadd.f32 %v4814, %v4949
      %v5199 = vadd.f32 %v4815, %v4954
      %v5200 = vadd.f32 %v4816, %v4959
      %v5201 = vadd.f32 %v4817, %v4964
      %v5202 = vadd.f32 %v4818, %v4969
      %v5203 = vadd.f32 %v4819, %v4974
      %v5204 = vadd.f32 %v4820, %v4979
      %v5205 = vadd.f32 %v4821, %v4984
      %v5206 = vadd.f32 %v4822, %v4989
      %v5207 = vadd.f32 %v4823, %v4994
      %v5208 = vadd.f32 %v4824, %v4999
      %v5209 = vadd.f32 %v4825, %v5004
      %v5210 = vadd.f32 %v4826, %v5009
      %v5211 = vadd.f32 %v4827, %v5014
      %v5212 = vadd.f32 %v4828, %v5019
      %v5213 = vadd.f32 %v4829, %v5024
      %v5214 = vadd.f32 %v4830, %v5029
      %v5215 = vadd.f32 %v4831, %v5034
      %v5216 = vadd.f32 %v4832, %v5039
      %v5217 = vadd.f32 %v4833, %v5044
      %v5218 = vadd.f32 %v4834, %v5049
      %v5219 = vadd.f32 %v4835, %v5054
      %v5220 = vadd.f32 %v4836, %v5059
      %v5221 = vadd.f32 %v4837, %v5064
      %v5222 = vadd.f32 %v4838, %v5069
      %v5223 = vadd.f32 %v4839, %v5074
      %v5224 = vadd.f32 %v4840, %v5079
      %v5225 = vadd.f32 %v4841, %v5084
      %v5226 = vadd.f32 %v4842, %v5089
      %v5227 = vadd.f32 %v4843, %v5094
      %v5228 = vadd.f32 %v4844, %v5099
      %v5229 = vadd.f32 %v4845, %v5104
      %v5230 = vadd.f32 %v4846, %v5109
      %v5231 = vadd.f32 %v4847, %v5114
      %v5232 = vadd.f32 %v4848, %v5119
      %v5233 = vadd.f32 %v4849, %v5124
      %v5234 = vadd.f32 %v4850, %v5129
      %v5235 = vadd.f32 %v4851, %v5134
      %v5236 = vadd.f32 %v4852, %v5139
      %v5237 = vadd.f32 %v4853, %v5144
      %v5238 = vadd.f32 %v4854, %v5149
      %v5239 = vadd.f32 %v4855, %v5154
      %v5240 = vadd.f32 %v4856, %v5159
      %v5241 = vadd.f32 %v4857, %v5164
      %v5242 = vadd.f32 %v4858, %v5169
      %v5243 = vadd.f32 %v4859, %v5174
      %v5244 = vadd.f32 %v4860, %v5179
      %v5245 = vmax.f32 %v5181, 0.0
      %v5246 = vmax.f32 %v5182, 0.0
      %v5247 = vmax.f32 %v5183, 0.0
      %v5248 = vmax.f32 %v5184, 0.0
      %v5249 = vmax.f32 %v5185, 0.0
      %v5250 = vmax.f32 %v5186, 0.0
      %v5251 = vmax.f32 %v5187, 0.0
      %v5252 = vmax.f32 %v5188, 0.0
      %v5253 = vmax.f32 %v5189, 0.0
      %v5254 = vmax.f32 %v5190, 0.0
      %v5255 = vmax.f32 %v5191, 0.0
      %v5256 = vmax.f32 %v5192, 0.0
      %v5257 = vmax.f32 %v5193, 0.0
      %v5258 = vmax.f32 %v5194, 0.0
      %v5259 = vmax.f32 %v5195, 0.0
      %v5260 = vmax.f32 %v5196, 0.0
      %v5261 = vmax.f32 %v5197, 0.0
      %v5262 = vmax.f32 %v5198, 0.0
      %v5263 = vmax.f32 %v5199, 0.0
      %v5264 = vmax.f32 %v5200, 0.0
      %v5265 = vmax.f32 %v5201, 0.0
      %v5266 = vmax.f32 %v5202, 0.0
      %v5267 = vmax.f32 %v5203, 0.0
      %v5268 = vmax.f32 %v5204, 0.0
      %v5269 = vmax.f32 %v5205, 0.0
      %v5270 = vmax.f32 %v5206, 0.0
      %v5271 = vmax.f32 %v5207, 0.0
      %v5272 = vmax.f32 %v5208, 0.0
      %v5273 = vmax.f32 %v5209, 0.0
      %v5274 = vmax.f32 %v5210, 0.0
      %v5275 = vmax.f32 %v5211, 0.0
      %v5276 = vmax.f32 %v5212, 0.0
      %v5277 = vmax.f32 %v5213, 0.0
      %v5278 = vmax.f32 %v5214, 0.0
      %v5279 = vmax.f32 %v5215, 0.0
      %v5280 = vmax.f32 %v5216, 0.0
      %v5281 = vmax.f32 %v5217, 0.0
      %v5282 = vmax.f32 %v5218, 0.0
      %v5283 = vmax.f32 %v5219, 0.0
      %v5284 = vmax.f32 %v5220, 0.0
      %v5285 = vmax.f32 %v5221, 0.0
      %v5286 = vmax.f32 %v5222, 0.0
      %v5287 = vmax.f32 %v5223, 0.0
      %v5288 = vmax.f32 %v5224, 0.0
      %v5289 = vmax.f32 %v5225, 0.0
      %v5290 = vmax.f32 %v5226, 0.0
      %v5291 = vmax.f32 %v5227, 0.0
      %v5292 = vmax.f32 %v5228, 0.0
      %v5293 = vmax.f32 %v5229, 0.0
      %v5294 = vmax.f32 %v5230, 0.0
      %v5295 = vmax.f32 %v5231, 0.0
      %v5296 = vmax.f32 %v5232, 0.0
      %v5297 = vmax.f32 %v5233, 0.0
      %v5298 = vmax.f32 %v5234, 0.0
      %v5299 = vmax.f32 %v5235, 0.0
      %v5300 = vmax.f32 %v5236, 0.0
      %v5301 = vmax.f32 %v5237, 0.0
      %v5302 = vmax.f32 %v5238, 0.0
      %v5303 = vmax.f32 %v5239, 0.0
      %v5304 = vmax.f32 %v5240, 0.0
      %v5305 = vmax.f32 %v5241, 0.0
      %v5306 = vmax.f32 %v5242, 0.0
      %v5307 = vmax.f32 %v5243, 0.0
      %v5308 = vmax.f32 %v5244, 0.0
      %5373 = vrot.lane.b32.xlu0 %v5245, 64
      %v5374 = vpop.permute.xlu0 %5373
      %5375 = vrot.lane.b32.xlu0 %v5246, 64
      %v5376 = vpop.permute.xlu0 %5375
      %5377 = vrot.lane.b32.xlu0 %v5247, 64
      %v5378 = vpop.permute.xlu0 %5377
      %5379 = vrot.lane.b32.xlu0 %v5248, 64
      %v5380 = vpop.permute.xlu0 %5379
      %5381 = vrot.lane.b32.xlu0 %v5249, 64
      %v5382 = vpop.permute.xlu0 %5381
      %5383 = vrot.lane.b32.xlu0 %v5250, 64
      %v5384 = vpop.permute.xlu0 %5383
      %5385 = vrot.lane.b32.xlu0 %v5251, 64
      %v5386 = vpop.permute.xlu0 %5385
      %5387 = vrot.lane.b32.xlu0 %v5252, 64
      %v5388 = vpop.permute.xlu0 %5387
      %5389 = vrot.lane.b32.xlu0 %v5253, 64
      %v5390 = vpop.permute.xlu0 %5389
      %5391 = vrot.lane.b32.xlu0 %v5254, 64
      %v5392 = vpop.permute.xlu0 %5391
      %5393 = vrot.lane.b32.xlu0 %v5255, 64
      %v5394 = vpop.permute.xlu0 %5393
      %5395 = vrot.lane.b32.xlu0 %v5256, 64
      %v5396 = vpop.permute.xlu0 %5395
      %5397 = vrot.lane.b32.xlu0 %v5257, 64
      %v5398 = vpop.permute.xlu0 %5397
      %5399 = vrot.lane.b32.xlu0 %v5258, 64
      %v5400 = vpop.permute.xlu0 %5399
      %5401 = vrot.lane.b32.xlu0 %v5259, 64
      %v5402 = vpop.permute.xlu0 %5401
      %5403 = vrot.lane.b32.xlu0 %v5260, 64
      %v5404 = vpop.permute.xlu0 %5403
      %5405 = vrot.lane.b32.xlu0 %v5261, 64
      %v5406 = vpop.permute.xlu0 %5405
      %5407 = vrot.lane.b32.xlu0 %v5262, 64
      %v5408 = vpop.permute.xlu0 %5407
      %5409 = vrot.lane.b32.xlu0 %v5263, 64
      %v5410 = vpop.permute.xlu0 %5409
      %5411 = vrot.lane.b32.xlu0 %v5264, 64
      %v5412 = vpop.permute.xlu0 %5411
      %5413 = vrot.lane.b32.xlu0 %v5265, 64
      %v5414 = vpop.permute.xlu0 %5413
      %5415 = vrot.lane.b32.xlu0 %v5266, 64
      %v5416 = vpop.permute.xlu0 %5415
      %5417 = vrot.lane.b32.xlu0 %v5267, 64
      %v5418 = vpop.permute.xlu0 %5417
      %5419 = vrot.lane.b32.xlu0 %v5268, 64
      %v5420 = vpop.permute.xlu0 %5419
      %5421 = vrot.lane.b32.xlu0 %v5269, 64
      %v5422 = vpop.permute.xlu0 %5421
      %5423 = vrot.lane.b32.xlu0 %v5270, 64
      %v5424 = vpop.permute.xlu0 %5423
      %5425 = vrot.lane.b32.xlu0 %v5271, 64
      %v5426 = vpop.permute.xlu0 %5425
      %5427 = vrot.lane.b32.xlu0 %v5272, 64
      %v5428 = vpop.permute.xlu0 %5427
      %5429 = vrot.lane.b32.xlu0 %v5273, 64
      %v5430 = vpop.permute.xlu0 %5429
      %5431 = vrot.lane.b32.xlu0 %v5274, 64
      %v5432 = vpop.permute.xlu0 %5431
      %5433 = vrot.lane.b32.xlu0 %v5275, 64
      %v5434 = vpop.permute.xlu0 %5433
      %5435 = vrot.lane.b32.xlu0 %v5276, 64
      %v5436 = vpop.permute.xlu0 %5435
      %5437 = vrot.lane.b32.xlu0 %v5277, 64
      %v5438 = vpop.permute.xlu0 %5437
      %5439 = vrot.lane.b32.xlu0 %v5278, 64
      %v5440 = vpop.permute.xlu0 %5439
      %5441 = vrot.lane.b32.xlu0 %v5279, 64
      %v5442 = vpop.permute.xlu0 %5441
      %5443 = vrot.lane.b32.xlu0 %v5280, 64
      %v5444 = vpop.permute.xlu0 %5443
      %5445 = vrot.lane.b32.xlu0 %v5281, 64
      %v5446 = vpop.permute.xlu0 %5445
      %5447 = vrot.lane.b32.xlu0 %v5282, 64
      %v5448 = vpop.permute.xlu0 %5447
      %5449 = vrot.lane.b32.xlu0 %v5283, 64
      %v5450 = vpop.permute.xlu0 %5449
      %5451 = vrot.lane.b32.xlu0 %v5284, 64
      %v5452 = vpop.permute.xlu0 %5451
      %5453 = vrot.lane.b32.xlu0 %v5285, 64
      %v5454 = vpop.permute.xlu0 %5453
      %5455 = vrot.lane.b32.xlu0 %v5286, 64
      %v5456 = vpop.permute.xlu0 %5455
      %5457 = vrot.lane.b32.xlu0 %v5287, 64
      %v5458 = vpop.permute.xlu0 %5457
      %5459 = vrot.lane.b32.xlu0 %v5288, 64
      %v5460 = vpop.permute.xlu0 %5459
      %5461 = vrot.lane.b32.xlu0 %v5289, 64
      %v5462 = vpop.permute.xlu0 %5461
      %5463 = vrot.lane.b32.xlu0 %v5290, 64
      %v5464 = vpop.permute.xlu0 %5463
      %5465 = vrot.lane.b32.xlu0 %v5291, 64
      %v5466 = vpop.permute.xlu0 %5465
      %5467 = vrot.lane.b32.xlu0 %v5292, 64
      %v5468 = vpop.permute.xlu0 %5467
      %5469 = vrot.lane.b32.xlu0 %v5293, 64
      %v5470 = vpop.permute.xlu0 %5469
      %5471 = vrot.lane.b32.xlu0 %v5294, 64
      %v5472 = vpop.permute.xlu0 %5471
      %5473 = vrot.lane.b32.xlu0 %v5295, 64
      %v5474 = vpop.permute.xlu0 %5473
      %5475 = vrot.lane.b32.xlu0 %v5296, 64
      %v5476 = vpop.permute.xlu0 %5475
      %5477 = vrot.lane.b32.xlu0 %v5297, 64
      %v5478 = vpop.permute.xlu0 %5477
      %5479 = vrot.lane.b32.xlu0 %v5298, 64
      %v5480 = vpop.permute.xlu0 %5479
      %5481 = vrot.lane.b32.xlu0 %v5299, 64
      %v5482 = vpop.permute.xlu0 %5481
      %5483 = vrot.lane.b32.xlu0 %v5300, 64
      %v5484 = vpop.permute.xlu0 %5483
      %5485 = vrot.lane.b32.xlu0 %v5301, 64
      %v5486 = vpop.permute.xlu0 %5485
      %5487 = vrot.lane.b32.xlu0 %v5302, 64
      %v5488 = vpop.permute.xlu0 %5487
      %5489 = vrot.lane.b32.xlu0 %v5303, 64
      %v5490 = vpop.permute.xlu0 %5489
      %5491 = vrot.lane.b32.xlu0 %v5304, 64
      %v5492 = vpop.permute.xlu0 %5491
      %5493 = vrot.lane.b32.xlu0 %v5305, 64
      %v5494 = vpop.permute.xlu0 %5493
      %5495 = vrot.lane.b32.xlu0 %v5306, 64
      %v5496 = vpop.permute.xlu0 %5495
      %5497 = vrot.lane.b32.xlu0 %v5307, 64
      %v5498 = vpop.permute.xlu0 %5497
      %5499 = vrot.lane.b32.xlu0 %v5308, 64
      %v5500 = vpop.permute.xlu0 %5499
      %v5565 = vmax.f32 %v5245, %v5374
      %v5566 = vmax.f32 %v5246, %v5376
      %v5567 = vmax.f32 %v5247, %v5378
      %v5568 = vmax.f32 %v5248, %v5380
      %v5569 = vmax.f32 %v5249, %v5382
      %v5570 = vmax.f32 %v5250, %v5384
      %v5571 = vmax.f32 %v5251, %v5386
      %v5572 = vmax.f32 %v5252, %v5388
      %v5573 = vmax.f32 %v5253, %v5390
      %v5574 = vmax.f32 %v5254, %v5392
      %v5575 = vmax.f32 %v5255, %v5394
      %v5576 = vmax.f32 %v5256, %v5396
      %v5577 = vmax.f32 %v5257, %v5398
      %v5578 = vmax.f32 %v5258, %v5400
      %v5579 = vmax.f32 %v5259, %v5402
      %v5580 = vmax.f32 %v5260, %v5404
      %v5581 = vmax.f32 %v5261, %v5406
      %v5582 = vmax.f32 %v5262, %v5408
      %v5583 = vmax.f32 %v5263, %v5410
      %v5584 = vmax.f32 %v5264, %v5412
      %v5585 = vmax.f32 %v5265, %v5414
      %v5586 = vmax.f32 %v5266, %v5416
      %v5587 = vmax.f32 %v5267, %v5418
      %v5588 = vmax.f32 %v5268, %v5420
      %v5589 = vmax.f32 %v5269, %v5422
      %v5590 = vmax.f32 %v5270, %v5424
      %v5591 = vmax.f32 %v5271, %v5426
      %v5592 = vmax.f32 %v5272, %v5428
      %v5593 = vmax.f32 %v5273, %v5430
      %v5594 = vmax.f32 %v5274, %v5432
      %v5595 = vmax.f32 %v5275, %v5434
      %v5596 = vmax.f32 %v5276, %v5436
      %v5597 = vmax.f32 %v5277, %v5438
      %v5598 = vmax.f32 %v5278, %v5440
      %v5599 = vmax.f32 %v5279, %v5442
      %v5600 = vmax.f32 %v5280, %v5444
      %v5601 = vmax.f32 %v5281, %v5446
      %v5602 = vmax.f32 %v5282, %v5448
      %v5603 = vmax.f32 %v5283, %v5450
      %v5604 = vmax.f32 %v5284, %v5452
      %v5605 = vmax.f32 %v5285, %v5454
      %v5606 = vmax.f32 %v5286, %v5456
      %v5607 = vmax.f32 %v5287, %v5458
      %v5608 = vmax.f32 %v5288, %v5460
      %v5609 = vmax.f32 %v5289, %v5462
      %v5610 = vmax.f32 %v5290, %v5464
      %v5611 = vmax.f32 %v5291, %v5466
      %v5612 = vmax.f32 %v5292, %v5468
      %v5613 = vmax.f32 %v5293, %v5470
      %v5614 = vmax.f32 %v5294, %v5472
      %v5615 = vmax.f32 %v5295, %v5474
      %v5616 = vmax.f32 %v5296, %v5476
      %v5617 = vmax.f32 %v5297, %v5478
      %v5618 = vmax.f32 %v5298, %v5480
      %v5619 = vmax.f32 %v5299, %v5482
      %v5620 = vmax.f32 %v5300, %v5484
      %v5621 = vmax.f32 %v5301, %v5486
      %v5622 = vmax.f32 %v5302, %v5488
      %v5623 = vmax.f32 %v5303, %v5490
      %v5624 = vmax.f32 %v5304, %v5492
      %v5625 = vmax.f32 %v5305, %v5494
      %v5626 = vmax.f32 %v5306, %v5496
      %v5627 = vmax.f32 %v5307, %v5498
      %v5628 = vmax.f32 %v5308, %v5500
      %v5629 = vmax.f32 %v5565, %v5597
      %v5630 = vmax.f32 %v5566, %v5598
      %v5631 = vmax.f32 %v5567, %v5599
      %v5632 = vmax.f32 %v5568, %v5600
      %v5633 = vmax.f32 %v5569, %v5601
      %v5634 = vmax.f32 %v5570, %v5602
      %v5635 = vmax.f32 %v5571, %v5603
      %v5636 = vmax.f32 %v5572, %v5604
      %v5637 = vmax.f32 %v5573, %v5605
      %v5638 = vmax.f32 %v5574, %v5606
      %v5639 = vmax.f32 %v5575, %v5607
      %v5640 = vmax.f32 %v5576, %v5608
      %v5641 = vmax.f32 %v5577, %v5609
      %v5642 = vmax.f32 %v5578, %v5610
      %v5643 = vmax.f32 %v5579, %v5611
      %v5644 = vmax.f32 %v5580, %v5612
      %v5645 = vmax.f32 %v5581, %v5613
      %v5646 = vmax.f32 %v5582, %v5614
      %v5647 = vmax.f32 %v5583, %v5615
      %v5648 = vmax.f32 %v5584, %v5616
      %v5649 = vmax.f32 %v5585, %v5617
      %v5650 = vmax.f32 %v5586, %v5618
      %v5651 = vmax.f32 %v5587, %v5619
      %v5652 = vmax.f32 %v5588, %v5620
      %v5653 = vmax.f32 %v5589, %v5621
      %v5654 = vmax.f32 %v5590, %v5622
      %v5655 = vmax.f32 %v5591, %v5623
      %v5656 = vmax.f32 %v5592, %v5624
      %v5657 = vmax.f32 %v5593, %v5625
      %v5658 = vmax.f32 %v5594, %v5626
      %v5659 = vmax.f32 %v5595, %v5627
      %v5660 = vmax.f32 %v5596, %v5628
      %p5661 = scmp.eq.s32.totalorder %s23, 0
      // Predicated region
      $region41: #{baseline_cnn_forward.3} parent=39 // pred_check
        %p5662 = pneg %p5661
      $region42: #{baseline_cnn_forward.3} parent=39 // pred_check_branch
        %5664 = sbr.rel (%p5662) target = $region44
      $region43: #{baseline_cnn_forward.3} parent=39 // pred_region
        %5665 = vst.msk [vmem:[#allocation2] sm:$0xff] %vm623, 0.0
        %5666 = vst.msk [vmem:[#allocation2 + $0x8] sm:$0xff] %vm623, 0.0
        %5667 = vst.msk [vmem:[#allocation2 + $0x10] sm:$0xff] %vm623, 0.0
        %5668 = vst.msk [vmem:[#allocation2 + $0x18] sm:$0xff] %vm623, 0.0
        %5669 = vst.msk [vmem:[#allocation2 + $0x20] sm:$0xff] %vm623, 0.0
        %5670 = vst.msk [vmem:[#allocation2 + $0x28] sm:$0xff] %vm623, 0.0
        %5671 = vst.msk [vmem:[#allocation2 + $0x30] sm:$0xff] %vm623, 0.0
        %5672 = vst.msk [vmem:[#allocation2 + $0x38] sm:$0xff] %vm623, 0.0
        %5673 = vst.msk [vmem:[#allocation2 + $0x40] sm:$0xff] %vm623, 0.0
        %5674 = vst.msk [vmem:[#allocation2 + $0x48] sm:$0xff] %vm623, 0.0
        %5675 = vst.msk [vmem:[#allocation2 + $0x50] sm:$0xff] %vm623, 0.0
        %5676 = vst.msk [vmem:[#allocation2 + $0x58] sm:$0xff] %vm623, 0.0
        %5677 = vst.msk [vmem:[#allocation2 + $0x60] sm:$0xff] %vm623, 0.0
        %5678 = vst.msk [vmem:[#allocation2 + $0x68] sm:$0xff] %vm623, 0.0
        %5679 = vst.msk [vmem:[#allocation2 + $0x70] sm:$0xff] %vm623, 0.0
        %5680 = vst.msk [vmem:[#allocation2 + $0x78] sm:$0xff] %vm623, 0.0
        %5681 = vst.msk [vmem:[#allocation2 + $0x80] sm:$0xff] %vm623, 0.0
        %5682 = vst.msk [vmem:[#allocation2 + $0x88] sm:$0xff] %vm623, 0.0
        %5683 = vst.msk [vmem:[#allocation2 + $0x90] sm:$0xff] %vm623, 0.0
        %5684 = vst.msk [vmem:[#allocation2 + $0x98] sm:$0xff] %vm623, 0.0
        %5685 = vst.msk [vmem:[#allocation2 + $0xa0] sm:$0xff] %vm623, 0.0
        %5686 = vst.msk [vmem:[#allocation2 + $0xa8] sm:$0xff] %vm623, 0.0
        %5687 = vst.msk [vmem:[#allocation2 + $0xb0] sm:$0xff] %vm623, 0.0
        %5688 = vst.msk [vmem:[#allocation2 + $0xb8] sm:$0xff] %vm623, 0.0
        %5689 = vst.msk [vmem:[#allocation2 + $0xc0] sm:$0xff] %vm623, 0.0
        %5690 = vst.msk [vmem:[#allocation2 + $0xc8] sm:$0xff] %vm623, 0.0
        %5691 = vst.msk [vmem:[#allocation2 + $0xd0] sm:$0xff] %vm623, 0.0
        %5692 = vst.msk [vmem:[#allocation2 + $0xd8] sm:$0xff] %vm623, 0.0
        %5693 = vst.msk [vmem:[#allocation2 + $0xe0] sm:$0xff] %vm623, 0.0
        %5694 = vst.msk [vmem:[#allocation2 + $0xe8] sm:$0xff] %vm623, 0.0
        %5695 = vst.msk [vmem:[#allocation2 + $0xf0] sm:$0xff] %vm623, 0.0
        %5696 = vst.msk [vmem:[#allocation2 + $0xf8] sm:$0xff] %vm623, 0.0
        %5697 = vst [vmem:[%s268] sm:$0x1] 0.0
      $region44: #{baseline_cnn_forward.3} parent=39 // pred_fallthru
        _
      %v5698 = vld [vmem:[#allocation2] sm:$0xff]
      %v5699 = vld [vmem:[#allocation2 + $0x8] sm:$0xff]
      %v5700 = vld [vmem:[#allocation2 + $0x10] sm:$0xff]
      %v5701 = vld [vmem:[#allocation2 + $0x18] sm:$0xff]
      %v5702 = vld [vmem:[#allocation2 + $0x20] sm:$0xff]
      %v5703 = vld [vmem:[#allocation2 + $0x28] sm:$0xff]
      %v5704 = vld [vmem:[#allocation2 + $0x30] sm:$0xff]
      %v5705 = vld [vmem:[#allocation2 + $0x38] sm:$0xff]
      %v5706 = vld [vmem:[#allocation2 + $0x40] sm:$0xff]
      %v5707 = vld [vmem:[#allocation2 + $0x48] sm:$0xff]
      %v5708 = vld [vmem:[#allocation2 + $0x50] sm:$0xff]
      %v5709 = vld [vmem:[#allocation2 + $0x58] sm:$0xff]
      %v5710 = vld [vmem:[#allocation2 + $0x60] sm:$0xff]
      %v5711 = vld [vmem:[#allocation2 + $0x68] sm:$0xff]
      %v5712 = vld [vmem:[#allocation2 + $0x70] sm:$0xff]
      %v5713 = vld [vmem:[#allocation2 + $0x78] sm:$0xff]
      %v5714 = vld [vmem:[#allocation2 + $0x80] sm:$0xff]
      %v5715 = vld [vmem:[#allocation2 + $0x88] sm:$0xff]
      %v5716 = vld [vmem:[#allocation2 + $0x90] sm:$0xff]
      %v5717 = vld [vmem:[#allocation2 + $0x98] sm:$0xff]
      %v5718 = vld [vmem:[#allocation2 + $0xa0] sm:$0xff]
      %v5719 = vld [vmem:[#allocation2 + $0xa8] sm:$0xff]
      %v5720 = vld [vmem:[#allocation2 + $0xb0] sm:$0xff]
      %v5721 = vld [vmem:[#allocation2 + $0xb8] sm:$0xff]
      %v5722 = vld [vmem:[#allocation2 + $0xc0] sm:$0xff]
      %v5723 = vld [vmem:[#allocation2 + $0xc8] sm:$0xff]
      %v5724 = vld [vmem:[#allocation2 + $0xd0] sm:$0xff]
      %v5725 = vld [vmem:[#allocation2 + $0xd8] sm:$0xff]
      %v5726 = vld [vmem:[#allocation2 + $0xe0] sm:$0xff]
      %v5727 = vld [vmem:[#allocation2 + $0xe8] sm:$0xff]
      %v5728 = vld [vmem:[#allocation2 + $0xf0] sm:$0xff]
      %v5729 = vld [vmem:[#allocation2 + $0xf8] sm:$0xff]
      %v5730 = vld [vmem:[%s265] sm:$0xff]
      %v5731 = vld [vmem:[%s265 + $0x8] sm:$0xff]
      %v5732 = vld [vmem:[%s265 + $0x10] sm:$0xff]
      %v5733 = vld [vmem:[%s265 + $0x18] sm:$0xff]
      %v5734 = vld [vmem:[%s265 + $0x20] sm:$0xff]
      %v5735 = vld [vmem:[%s265 + $0x28] sm:$0xff]
      %v5736 = vld [vmem:[%s265 + $0x30] sm:$0xff]
      %v5737 = vld [vmem:[%s265 + $0x38] sm:$0xff]
      %v5738 = vld [vmem:[%s265 + $0x40] sm:$0xff]
      %v5739 = vld [vmem:[%s265 + $0x48] sm:$0xff]
      %v5740 = vld [vmem:[%s265 + $0x50] sm:$0xff]
      %v5741 = vld [vmem:[%s265 + $0x58] sm:$0xff]
      %v5742 = vld [vmem:[%s265 + $0x60] sm:$0xff]
      %v5743 = vld [vmem:[%s265 + $0x68] sm:$0xff]
      %v5744 = vld [vmem:[%s265 + $0x70] sm:$0xff]
      %v5745 = vld [vmem:[%s265 + $0x78] sm:$0xff]
      %v5746 = vld [vmem:[%s265 + $0x80] sm:$0xff]
      %v5747 = vld [vmem:[%s265 + $0x88] sm:$0xff]
      %v5748 = vld [vmem:[%s265 + $0x90] sm:$0xff]
      %v5749 = vld [vmem:[%s265 + $0x98] sm:$0xff]
      %v5750 = vld [vmem:[%s265 + $0xa0] sm:$0xff]
      %v5751 = vld [vmem:[%s265 + $0xa8] sm:$0xff]
      %v5752 = vld [vmem:[%s265 + $0xb0] sm:$0xff]
      %v5753 = vld [vmem:[%s265 + $0xb8] sm:$0xff]
      %v5754 = vld [vmem:[%s265 + $0xc0] sm:$0xff]
      %v5755 = vld [vmem:[%s265 + $0xc8] sm:$0xff]
      %v5756 = vld [vmem:[%s265 + $0xd0] sm:$0xff]
      %v5757 = vld [vmem:[%s265 + $0xd8] sm:$0xff]
      %v5758 = vld [vmem:[%s265 + $0xe0] sm:$0xff]
      %v5759 = vld [vmem:[%s265 + $0xe8] sm:$0xff]
      %v5760 = vld [vmem:[%s265 + $0xf0] sm:$0xff]
      %v5761 = vld [vmem:[%s265 + $0xf8] sm:$0xff]
      %v5762 = vmul.f32 %v5629, %v5730
      %v5763 = vmul.f32 %v5630, %v5731
      %v5764 = vmul.f32 %v5631, %v5732
      %v5765 = vmul.f32 %v5632, %v5733
      %v5766 = vmul.f32 %v5633, %v5734
      %v5767 = vmul.f32 %v5634, %v5735
      %v5768 = vmul.f32 %v5635, %v5736
      %v5769 = vmul.f32 %v5636, %v5737
      %v5770 = vmul.f32 %v5637, %v5738
      %v5771 = vmul.f32 %v5638, %v5739
      %v5772 = vmul.f32 %v5639, %v5740
      %v5773 = vmul.f32 %v5640, %v5741
      %v5774 = vmul.f32 %v5641, %v5742
      %v5775 = vmul.f32 %v5642, %v5743
      %v5776 = vmul.f32 %v5643, %v5744
      %v5777 = vmul.f32 %v5644, %v5745
      %v5778 = vmul.f32 %v5645, %v5746
      %v5779 = vmul.f32 %v5646, %v5747
      %v5780 = vmul.f32 %v5647, %v5748
      %v5781 = vmul.f32 %v5648, %v5749
      %v5782 = vmul.f32 %v5649, %v5750
      %v5783 = vmul.f32 %v5650, %v5751
      %v5784 = vmul.f32 %v5651, %v5752
      %v5785 = vmul.f32 %v5652, %v5753
      %v5786 = vmul.f32 %v5653, %v5754
      %v5787 = vmul.f32 %v5654, %v5755
      %v5788 = vmul.f32 %v5655, %v5756
      %v5789 = vmul.f32 %v5656, %v5757
      %v5790 = vmul.f32 %v5657, %v5758
      %v5791 = vmul.f32 %v5658, %v5759
      %v5792 = vmul.f32 %v5659, %v5760
      %v5793 = vmul.f32 %v5660, %v5761
      %v5794 = vadd.f32 %v5698, %v5762
      %v5795 = vadd.f32 %v5699, %v5763
      %v5796 = vadd.f32 %v5700, %v5764
      %v5797 = vadd.f32 %v5701, %v5765
      %v5798 = vadd.f32 %v5702, %v5766
      %v5799 = vadd.f32 %v5703, %v5767
      %v5800 = vadd.f32 %v5704, %v5768
      %v5801 = vadd.f32 %v5705, %v5769
      %v5802 = vadd.f32 %v5706, %v5770
      %v5803 = vadd.f32 %v5707, %v5771
      %v5804 = vadd.f32 %v5708, %v5772
      %v5805 = vadd.f32 %v5709, %v5773
      %v5806 = vadd.f32 %v5710, %v5774
      %v5807 = vadd.f32 %v5711, %v5775
      %v5808 = vadd.f32 %v5712, %v5776
      %v5809 = vadd.f32 %v5713, %v5777
      %v5810 = vadd.f32 %v5714, %v5778
      %v5811 = vadd.f32 %v5715, %v5779
      %v5812 = vadd.f32 %v5716, %v5780
      %v5813 = vadd.f32 %v5717, %v5781
      %v5814 = vadd.f32 %v5718, %v5782
      %v5815 = vadd.f32 %v5719, %v5783
      %v5816 = vadd.f32 %v5720, %v5784
      %v5817 = vadd.f32 %v5721, %v5785
      %v5818 = vadd.f32 %v5722, %v5786
      %v5819 = vadd.f32 %v5723, %v5787
      %v5820 = vadd.f32 %v5724, %v5788
      %v5821 = vadd.f32 %v5725, %v5789
      %v5822 = vadd.f32 %v5726, %v5790
      %v5823 = vadd.f32 %v5727, %v5791
      %v5824 = vadd.f32 %v5728, %v5792
      %v5825 = vadd.f32 %v5729, %v5793
      %5826 = vst.msk [vmem:[#allocation2] sm:$0xff] %vm623, %v5794
      %5827 = vst.msk [vmem:[#allocation2 + $0x8] sm:$0xff] %vm623, %v5795
      %5828 = vst.msk [vmem:[#allocation2 + $0x10] sm:$0xff] %vm623, %v5796
      %5829 = vst.msk [vmem:[#allocation2 + $0x18] sm:$0xff] %vm623, %v5797
      %5830 = vst.msk [vmem:[#allocation2 + $0x20] sm:$0xff] %vm623, %v5798
      %5831 = vst.msk [vmem:[#allocation2 + $0x28] sm:$0xff] %vm623, %v5799
      %5832 = vst.msk [vmem:[#allocation2 + $0x30] sm:$0xff] %vm623, %v5800
      %5833 = vst.msk [vmem:[#allocation2 + $0x38] sm:$0xff] %vm623, %v5801
      %5834 = vst.msk [vmem:[#allocation2 + $0x40] sm:$0xff] %vm623, %v5802
      %5835 = vst.msk [vmem:[#allocation2 + $0x48] sm:$0xff] %vm623, %v5803
      %5836 = vst.msk [vmem:[#allocation2 + $0x50] sm:$0xff] %vm623, %v5804
      %5837 = vst.msk [vmem:[#allocation2 + $0x58] sm:$0xff] %vm623, %v5805
      %5838 = vst.msk [vmem:[#allocation2 + $0x60] sm:$0xff] %vm623, %v5806
      %5839 = vst.msk [vmem:[#allocation2 + $0x68] sm:$0xff] %vm623, %v5807
      %5840 = vst.msk [vmem:[#allocation2 + $0x70] sm:$0xff] %vm623, %v5808
      %5841 = vst.msk [vmem:[#allocation2 + $0x78] sm:$0xff] %vm623, %v5809
      %5842 = vst.msk [vmem:[#allocation2 + $0x80] sm:$0xff] %vm623, %v5810
      %5843 = vst.msk [vmem:[#allocation2 + $0x88] sm:$0xff] %vm623, %v5811
      %5844 = vst.msk [vmem:[#allocation2 + $0x90] sm:$0xff] %vm623, %v5812
      %5845 = vst.msk [vmem:[#allocation2 + $0x98] sm:$0xff] %vm623, %v5813
      %5846 = vst.msk [vmem:[#allocation2 + $0xa0] sm:$0xff] %vm623, %v5814
      %5847 = vst.msk [vmem:[#allocation2 + $0xa8] sm:$0xff] %vm623, %v5815
      %5848 = vst.msk [vmem:[#allocation2 + $0xb0] sm:$0xff] %vm623, %v5816
      %5849 = vst.msk [vmem:[#allocation2 + $0xb8] sm:$0xff] %vm623, %v5817
      %5850 = vst.msk [vmem:[#allocation2 + $0xc0] sm:$0xff] %vm623, %v5818
      %5851 = vst.msk [vmem:[#allocation2 + $0xc8] sm:$0xff] %vm623, %v5819
      %5852 = vst.msk [vmem:[#allocation2 + $0xd0] sm:$0xff] %vm623, %v5820
      %5853 = vst.msk [vmem:[#allocation2 + $0xd8] sm:$0xff] %vm623, %v5821
      %5854 = vst.msk [vmem:[#allocation2 + $0xe0] sm:$0xff] %vm623, %v5822
      %5855 = vst.msk [vmem:[#allocation2 + $0xe8] sm:$0xff] %vm623, %v5823
      %5856 = vst.msk [vmem:[#allocation2 + $0xf0] sm:$0xff] %vm623, %v5824
      %5857 = vst.msk [vmem:[#allocation2 + $0xf8] sm:$0xff] %vm623, %v5825
      %p5858 = scmp.eq.s32.totalorder %s23, 7
      // Predicated region
      $region45: #{baseline_cnn_forward.3} parent=39 // pred_check
        %p5859 = pneg %p5858
      $region46: #{baseline_cnn_forward.3} parent=39 // pred_check_branch
        %5861 = sbr.rel (%p5859) target = $region48
      $region47: #{baseline_cnn_forward.3} parent=39 // pred_region
        %v5862 = vld [vmem:[%s268] sm:$0x1]
        %v5863 = vld [vmem:[#allocation2] sm:$0xff]
        %v5864 = vld [vmem:[#allocation2 + $0x8] sm:$0xff]
        %v5865 = vld [vmem:[#allocation2 + $0x10] sm:$0xff]
        %v5866 = vld [vmem:[#allocation2 + $0x18] sm:$0xff]
        %v5867 = vld [vmem:[#allocation2 + $0x20] sm:$0xff]
        %v5868 = vld [vmem:[#allocation2 + $0x28] sm:$0xff]
        %v5869 = vld [vmem:[#allocation2 + $0x30] sm:$0xff]
        %v5870 = vld [vmem:[#allocation2 + $0x38] sm:$0xff]
        %v5871 = vld [vmem:[#allocation2 + $0x40] sm:$0xff]
        %v5872 = vld [vmem:[#allocation2 + $0x48] sm:$0xff]
        %v5873 = vld [vmem:[#allocation2 + $0x50] sm:$0xff]
        %v5874 = vld [vmem:[#allocation2 + $0x58] sm:$0xff]
        %v5875 = vld [vmem:[#allocation2 + $0x60] sm:$0xff]
        %v5876 = vld [vmem:[#allocation2 + $0x68] sm:$0xff]
        %v5877 = vld [vmem:[#allocation2 + $0x70] sm:$0xff]
        %v5878 = vld [vmem:[#allocation2 + $0x78] sm:$0xff]
        %v5879 = vld [vmem:[#allocation2 + $0x80] sm:$0xff]
        %v5880 = vld [vmem:[#allocation2 + $0x88] sm:$0xff]
        %v5881 = vld [vmem:[#allocation2 + $0x90] sm:$0xff]
        %v5882 = vld [vmem:[#allocation2 + $0x98] sm:$0xff]
        %v5883 = vld [vmem:[#allocation2 + $0xa0] sm:$0xff]
        %v5884 = vld [vmem:[#allocation2 + $0xa8] sm:$0xff]
        %v5885 = vld [vmem:[#allocation2 + $0xb0] sm:$0xff]
        %v5886 = vld [vmem:[#allocation2 + $0xb8] sm:$0xff]
        %v5887 = vld [vmem:[#allocation2 + $0xc0] sm:$0xff]
        %v5888 = vld [vmem:[#allocation2 + $0xc8] sm:$0xff]
        %v5889 = vld [vmem:[#allocation2 + $0xd0] sm:$0xff]
        %v5890 = vld [vmem:[#allocation2 + $0xd8] sm:$0xff]
        %v5891 = vld [vmem:[#allocation2 + $0xe0] sm:$0xff]
        %v5892 = vld [vmem:[#allocation2 + $0xe8] sm:$0xff]
        %v5893 = vld [vmem:[#allocation2 + $0xf0] sm:$0xff]
        %v5894 = vld [vmem:[#allocation2 + $0xf8] sm:$0xff]
        %v5895 = vsel %vm623, %v5863, 0.0
        %v5896 = vsel %vm623, %v5864, 0.0
        %v5897 = vadd.f32 %v5895, %v5896
        %v5898 = vsel %vm623, %v5865, 0.0
        %v5899 = vadd.f32 %v5897, %v5898
        %v5900 = vsel %vm623, %v5866, 0.0
        %v5901 = vadd.f32 %v5899, %v5900
        %v5902 = vsel %vm623, %v5867, 0.0
        %v5903 = vadd.f32 %v5901, %v5902
        %v5904 = vsel %vm623, %v5868, 0.0
        %v5905 = vadd.f32 %v5903, %v5904
        %v5906 = vsel %vm623, %v5869, 0.0
        %v5907 = vadd.f32 %v5905, %v5906
        %v5908 = vsel %vm623, %v5870, 0.0
        %v5909 = vadd.f32 %v5907, %v5908
        %v5910 = vsel %vm623, %v5871, 0.0
        %v5911 = vadd.f32 %v5909, %v5910
        %v5912 = vsel %vm623, %v5872, 0.0
        %v5913 = vadd.f32 %v5911, %v5912
        %v5914 = vsel %vm623, %v5873, 0.0
        %v5915 = vadd.f32 %v5913, %v5914
        %v5916 = vsel %vm623, %v5874, 0.0
        %v5917 = vadd.f32 %v5915, %v5916
        %v5918 = vsel %vm623, %v5875, 0.0
        %v5919 = vadd.f32 %v5917, %v5918
        %v5920 = vsel %vm623, %v5876, 0.0
        %v5921 = vadd.f32 %v5919, %v5920
        %v5922 = vsel %vm623, %v5877, 0.0
        %v5923 = vadd.f32 %v5921, %v5922
        %v5924 = vsel %vm623, %v5878, 0.0
        %v5925 = vadd.f32 %v5923, %v5924
        %v5926 = vsel %vm623, %v5879, 0.0
        %v5927 = vadd.f32 %v5925, %v5926
        %v5928 = vsel %vm623, %v5880, 0.0
        %v5929 = vadd.f32 %v5927, %v5928
        %v5930 = vsel %vm623, %v5881, 0.0
        %v5931 = vadd.f32 %v5929, %v5930
        %v5932 = vsel %vm623, %v5882, 0.0
        %v5933 = vadd.f32 %v5931, %v5932
        %v5934 = vsel %vm623, %v5883, 0.0
        %v5935 = vadd.f32 %v5933, %v5934
        %v5936 = vsel %vm623, %v5884, 0.0
        %v5937 = vadd.f32 %v5935, %v5936
        %v5938 = vsel %vm623, %v5885, 0.0
        %v5939 = vadd.f32 %v5937, %v5938
        %v5940 = vsel %vm623, %v5886, 0.0
        %v5941 = vadd.f32 %v5939, %v5940
        %v5942 = vsel %vm623, %v5887, 0.0
        %v5943 = vadd.f32 %v5941, %v5942
        %v5944 = vsel %vm623, %v5888, 0.0
        %v5945 = vadd.f32 %v5943, %v5944
        %v5946 = vsel %vm623, %v5889, 0.0
        %v5947 = vadd.f32 %v5945, %v5946
        %v5948 = vsel %vm623, %v5890, 0.0
        %v5949 = vadd.f32 %v5947, %v5948
        %v5950 = vsel %vm623, %v5891, 0.0
        %v5951 = vadd.f32 %v5949, %v5950
        %v5952 = vsel %vm623, %v5892, 0.0
        %v5953 = vadd.f32 %v5951, %v5952
        %v5954 = vsel %vm623, %v5893, 0.0
        %v5955 = vadd.f32 %v5953, %v5954
        %v5956 = vsel %vm623, %v5894, 0.0
        %v5957 = vadd.f32 %v5955, %v5956
        %5958 = vadd.xlane.f32.xlu0 %v5957
        %v5959 = vpop.xlane.xlu0 %5958
        %v5960 = vrot.slane %v5959, 4
        %v5961 = vadd.f32 %v5959, %v5960
        %v5962 = vrot.slane %v5961, 2
        %v5963 = vadd.f32 %v5961, %v5962
        %v5964 = vrot.slane %v5963, 1
        %v5965 = vadd.f32 %v5963, %v5964
        %s5966 = vtos %v5965
        %v5967 = vld [vmem:[#allocation3] sm:$0x1]
        %s5968 = vtos %v5967
        %s5969 = sadd.f32 %s5966, %s5968
        %s5970 = smax.f32 %s5969, 0.0
        %v5971 = vstv %s5970
        %v5972 = vadd.f32 %v5862, %v5971
        %5973 = vst [vmem:[%s268] sm:$0x1] %v5972
      $region48: #{baseline_cnn_forward.3} parent=39 // pred_fallthru
        _
      %p5974 = scmp.lt.s32.totalorder %s22, 1
      %s5975 = scalar_select %p5974, %s22, 1
      %s5976 = scalar_lea.vmem %s5, %s5975
      // Predicated region
      $region49: #{baseline_cnn_forward.3} parent=39 // pred_check
        %p5977 = pneg %p165
      $region50: #{baseline_cnn_forward.3} parent=39 // pred_check_branch
        %5979 = sbr.rel (%p5977) target = $region52
      $region51: #{baseline_cnn_forward.3} parent=39 // pred_region
        _
      $region52: #{baseline_cnn_forward.3} parent=39 // pred_fallthru
        _
    $region40: #{baseline_cnn_forward.3} parent=5 // pred_fallthru
      _
    %p5980 = scmp.le.s32.totalorder 2, %s13
    // Predicated region
    $region53: #{baseline_cnn_forward.3} parent=5 // pred_check
      %p5981 = pneg %p5980
    $region54: #{baseline_cnn_forward.3} parent=5 // pred_check_branch
      %5983 = sbr.rel (%p5981) target = $region56
    $region55: #{baseline_cnn_forward.3} parent=5 // pred_region
      %s5984 = ssub.s32 %s13, 2
      // Predicated region
      $region57: #{baseline_cnn_forward.3} parent=55 // pred_check
        %p5985 = pneg %p171
      $region58: #{baseline_cnn_forward.3} parent=55 // pred_check_branch
        %5987 = sbr.rel (%p5985) target = $region60
      $region59: #{baseline_cnn_forward.3} parent=55 // pred_region
        %p5988 = scmp.lt.s32.totalorder %s24, 1
        %s5989 = scalar_select %p5988, %s24, 1
        %s5990 = scalar_lea.vmem %s5, %s5989
      $region60: #{baseline_cnn_forward.3} parent=55 // pred_fallthru
        _
    $region56: #{baseline_cnn_forward.3} parent=5 // pred_fallthru
      _
  $region6: #{baseline_cnn_forward.3} parent=0 // loop_footer
    %s17 = sadd.s32 1, %s13
  $region7: #{baseline_cnn_forward.3} parent=0 // loop_footer_branch
    %12 = sbr.rel target = $region3
  $region8: #{baseline_cnn_forward.3} parent=0 // loop_exit
    _

</llo_original>
